<compile_context>
chip_gen: v7x
topology: tpu7x:2x2x1
jax: 0.10.0
libtpu: 0.0.40
codegen_flags: <defaults>
</compile_context>

<pallas_src>
import functools

import numpy as np
import jax
import jax.numpy as jnp
from jax import lax
from jax.experimental import pallas as pl
from jax.experimental.pallas import tpu as pltpu


# ----------------------------------------------------------------------------- #
# Fused Pallas kernels
# ----------------------------------------------------------------------------- #
def _ln(h, g, b, eps):
    mu = jnp.mean(h, axis=-1, keepdims=True)
    var = jnp.mean((h - mu) * (h - mu), axis=-1, keepdims=True)
    return (h - mu) * lax.rsqrt(var + eps) * g + b


def _backbone_kernel(feats_ref, pe_ref, wproj_ref, bproj_ref,
                     wqkv_ref, bqkv_ref, wo_ref, bo_ref,
                     g1_ref, be1_ref, wf1_ref, bf1_ref,
                     wf2_ref, bf2_ref, g2_ref, be2_ref,
                     wc1_ref, bc1_ref, wc2_ref, bc2_ref,
                     feat_out_ref, score_ref, *, nhead, n_layers, eps):
    """feat_proj + n_layers post-norm self-attention layers + classify, fully fused."""
    f32 = jnp.float32
    pe = pe_ref[...]
    x = jnp.dot(feats_ref[...], wproj_ref[...], preferred_element_type=f32) + bproj_ref[...]
    D = x.shape[1]
    hd = D // nhead
    scale = 1.0 / float(np.sqrt(hd))

    # TODO(synk): TransformerSelfEncoderLayer source not provided; standard post-norm
    # self-attention + FFN layer with additive positional embedding (sa_val_has_pos_emb).
    for l in range(n_layers):
        wqkv = wqkv_ref[l]
        bqkv = bqkv_ref[l]
        wo = wo_ref[l]
        bo = bo_ref[l]

        xp = x + pe                                   # q/k (and v, sa_val_has_pos_emb)
        qkv = jnp.dot(xp, wqkv, preferred_element_type=f32) + bqkv   # (N, 3D)

        attn = jnp.zeros_like(x) + bo                 # accumulate per-head o_h @ W_o[h]
        for h in range(nhead):
            q_h = qkv[:, h * hd:(h + 1) * hd] * scale
            k_h = qkv[:, D + h * hd:D + (h + 1) * hd]
            v_h = qkv[:, 2 * D + h * hd:2 * D + (h + 1) * hd]
            s = lax.dot_general(q_h, k_h, (((1,), (1,)), ((), ())),
                                preferred_element_type=f32)          # (N, N), no k.T
            s = s - jnp.max(s, axis=-1, keepdims=True)
            p = jnp.exp(s)
            p = p * pl.reciprocal(jnp.sum(p, axis=-1, keepdims=True), approx=True)
            o_h = jnp.dot(p, v_h, preferred_element_type=f32)        # (N, hd)
            attn = attn + jnp.dot(o_h, wo[h * hd:(h + 1) * hd, :],
                                  preferred_element_type=f32)

        x = _ln(x + attn, g1_ref[l], be1_ref[l], eps)
        ff = jnp.maximum(jnp.dot(x, wf1_ref[l], preferred_element_type=f32) + bf1_ref[l], 0.0)
        ff = jnp.dot(ff, wf2_ref[l], preferred_element_type=f32) + bf2_ref[l]
        x = _ln(x + ff, g2_ref[l], be2_ref[l], eps)

    feat_out_ref[...] = x

    # classify: Linear -> ReLU -> Linear(padded to 128 lanes) -> Sigmoid
    h1 = jnp.maximum(jnp.dot(x, wc1_ref[...], preferred_element_type=f32) + bc1_ref[...], 0.0)
    logits = jnp.dot(h1, wc2_ref[...], preferred_element_type=f32) + bc2_ref[...]
    score_ref[...] = jax.nn.sigmoid(logits)           # lane-dense (N, 128) slab


def _folding_kernel(x_ref, *refs, n_layers):
    """8-layer folding MLP fused; activations stay in VMEM/vregs for this row tile."""
    w_refs = refs[:n_layers]
    b_refs = refs[n_layers:2 * n_layers]
    o_ref = refs[2 * n_layers]
    x = x_ref[...]
    for i in range(n_layers):
        x = jnp.dot(x, w_refs[i][...], preferred_element_type=jnp.float32) + b_refs[i][...]
        if i < n_layers - 1:
            x = jnp.maximum(x, 0.0)
    o_ref[...] = x                                    # lane-dense (TM, 128) slab


# ----------------------------------------------------------------------------- #
# Kernel wrappers
# ----------------------------------------------------------------------------- #
def _fullspec(a):
    nd = a.ndim
    return pl.BlockSpec(a.shape, lambda i: (0,) * nd)


def backbone_forward(params, feats, pe, nhead, n_layers):
    """Returns (score_pred (N,1), feats (N,D)) via one fused pallas_call."""
    N = feats.shape[0]
    d_embed = pe.shape[1]
    L = params["layers"]
    inputs = [feats, pe,
              params["feat_proj"][0], params["feat_proj"][1],
              L["wqkv"], L["bqkv"], L["wo"], L["bo"],
              L["g1"], L["be1"], L["wf1"], L["bf1"],
              L["wf2"], L["bf2"], L["g2"], L["be2"],
              params["cls"][0], params["cls"][1], params["cls"][2], params["cls"][3]]

    feats_out, score_slab = pl.pallas_call(
        functools.partial(_backbone_kernel, nhead=nhead, n_layers=n_layers, eps=1e-5),
        out_shape=(jax.ShapeDtypeStruct((N, d_embed), jnp.float32),
                   jax.ShapeDtypeStruct((N, 128), jnp.float32)),
        grid=(1,),
        in_specs=[_fullspec(a) for a in inputs],
        out_specs=(pl.BlockSpec((N, d_embed), lambda i: (0, 0)),
                   pl.BlockSpec((N, 128), lambda i: (0, 0))),
    )(*inputs)
    return score_slab[:, :1], feats_out


def folding_forward(params, fold_in, out_dim=3, tile_rows=512):
    """Fused, row-tiled folding MLP.  fold_in: (M, d_embed+2) -> (M, 3)."""
    ws, bs = params["folding"]
    n_layers = len(ws)
    M, cin = fold_in.shape
    m_pad = max(int(np.ceil(M / tile_rows)), 1) * tile_rows   # bucket row count
    if m_pad != M:
        fold_in = jnp.pad(fold_in, ((0, m_pad - M), (0, 0)))

    in_specs = [pl.BlockSpec((tile_rows, cin), lambda i: (i, 0))]
    in_specs += [_fullspec(w) for w in ws]
    in_specs += [_fullspec(b) for b in bs]

    out_slab = pl.pallas_call(
        functools.partial(_folding_kernel, n_layers=n_layers),
        out_shape=jax.ShapeDtypeStruct((m_pad, 128), jnp.float32),
        grid=(m_pad // tile_rows,),
        in_specs=in_specs,
        out_specs=pl.BlockSpec((tile_rows, 128), lambda i: (i, 0)),
        compiler_params=pltpu.CompilerParams(dimension_semantics=("parallel",)),
    )(fold_in, *ws, *bs)
    return out_slab[:M, :out_dim]


# ----------------------------------------------------------------------------- #
# Plain-JAX / host glue
# ----------------------------------------------------------------------------- #
def pos_embed_sine(xyz, d_model, scale):
    """PositionEmbeddingCoordsSine(3, d_model, scale)."""
    # TODO(synk): exact PositionEmbeddingCoordsSine source not provided; standard
    # RegTR-style sin/cos-per-coordinate formulation with zero padding.
    n_dim = xyz.shape[-1]
    num_pos_feats = (d_model // n_dim // 2) * 2
    padding = d_model - num_pos_feats * n_dim
    dim_idx = jnp.arange(num_pos_feats, dtype=jnp.int32)
    dim_t = 10000.0 ** (2.0 * (dim_idx // 2).astype(jnp.float32) / num_pos_feats)
    xyz = xyz * (scale * 2.0 * np.pi)
    pos_div = xyz[..., None] / dim_t
    pos_sin = jnp.sin(pos_div[..., 0::2])
    pos_cos = jnp.cos(pos_div[..., 1::2])
    pos = jnp.stack([pos_sin, pos_cos], axis=-1).reshape(xyz.shape[0], -1)
    return jnp.pad(pos, ((0, 0), (0, padding)))


def halton_2d(n):
    """Deterministic 2-D Halton sequence (bases 2, 3)."""
    # TODO(synk): ghalton.GeneralizedHalton (scrambled) not available; plain Halton used.
    def vdc(i, base):
        f, r = 1.0, 0.0
        while i > 0:
            f /= base
            r += f * (i % base)
            i //= base
        return r
    return np.array([[vdc(i + 1, 2), vdc(i + 1, 3)] for i in range(n)], dtype=np.float32)


def _init_linear(key, cin, cout):
    k1, k2 = jax.random.split(key)
    bound = 1.0 / float(np.sqrt(cin))
    w = jax.random.uniform(k1, (cin, cout), jnp.float32, -bound, bound)
    b = jax.random.uniform(k2, (cout,), jnp.float32, -bound, bound)
    return w, b


def init_params(key, enc_dim, d_embed, d_ff, n_layers):
    params = {}
    key, k = jax.random.split(key)
    wp, bp = _init_linear(k, enc_dim, d_embed)
    params["feat_proj"] = (wp, bp.reshape(1, d_embed))

    lists = {n: [] for n in ["wqkv", "bqkv", "wo", "bo", "g1", "be1",
                             "wf1", "bf1", "wf2", "bf2", "g2", "be2"]}
    for _ in range(n_layers):
        key, kq = jax.random.split(key); wq, bq = _init_linear(kq, d_embed, d_embed)
        key, kk = jax.random.split(key); wk, bk = _init_linear(kk, d_embed, d_embed)
        key, kv = jax.random.split(key); wv, bv = _init_linear(kv, d_embed, d_embed)
        lists["wqkv"].append(jnp.concatenate([wq, wk, wv], axis=1))
        lists["bqkv"].append(jnp.concatenate([bq, bk, bv]).reshape(1, 3 * d_embed))
        key, ko = jax.random.split(key); w, b = _init_linear(ko, d_embed, d_embed)
        lists["wo"].append(w); lists["bo"].append(b.reshape(1, d_embed))
        lists["g1"].append(jnp.ones((1, d_embed), jnp.float32))
        lists["be1"].append(jnp.zeros((1, d_embed), jnp.float32))
        key, k1 = jax.random.split(key); w, b = _init_linear(k1, d_embed, d_ff)
        lists["wf1"].append(w); lists["bf1"].append(b.reshape(1, d_ff))
        key, k2 = jax.random.split(key); w, b = _init_linear(k2, d_ff, d_embed)
        lists["wf2"].append(w); lists["bf2"].append(b.reshape(1, d_embed))
        lists["g2"].append(jnp.ones((1, d_embed), jnp.float32))
        lists["be2"].append(jnp.zeros((1, d_embed), jnp.float32))
    params["layers"] = {n: jnp.stack(v, axis=0) for n, v in lists.items()}

    key, k = jax.random.split(key); wc1, bc1 = _init_linear(k, d_embed, d_embed)
    key, k = jax.random.split(key); wc2, bc2 = _init_linear(k, d_embed, 1)
    wc2p = jnp.zeros((d_embed, 128), jnp.float32).at[:, :1].set(wc2)
    bc2p = jnp.zeros((1, 128), jnp.float32).at[:, :1].set(bc2.reshape(1, 1))
    params["cls"] = (wc1, bc1.reshape(1, d_embed), wc2p, bc2p)

    fold_dims = [d_embed + 2, 64, 64, 32, 32, 16, 16, 8, 3]
    fold_w, fold_b = [], []
    n_fold = len(fold_dims) - 1
    for i, (ci, co) in enumerate(zip(fold_dims[:-1], fold_dims[1:])):
        key, k = jax.random.split(key)
        w, b = _init_linear(k, ci, co)
        if i == n_fold - 1:  # pad final (8,3) layer to 128 lanes for a dense store
            w = jnp.zeros((ci, 128), jnp.float32).at[:, :co].set(w)
            b = jnp.zeros((1, 128), jnp.float32).at[:, :co].set(b.reshape(1, co))
            fold_w.append(w); fold_b.append(b)
        else:
            fold_w.append(w); fold_b.append(b.reshape(1, co))
    params["folding"] = (tuple(fold_w), tuple(fold_b))
    return params


def ggnet_forward(params, batch, d_embed, nhead, n_layers, pos_scale):
    feats = batch["features"]                  # encoder-output features (N1, enc_dim)
    pts = batch["points"][-1]                  # (N1, 3)
    pe = pos_embed_sine(pts, d_embed, pos_scale).astype(jnp.float32)
    return backbone_forward(params, feats, pe, nhead, n_layers)


def ggfoldingnet_forward(params, batch, d_embed, nhead, n_layers, pos_scale,
                         maxn=12000, ratio=1.0, n=None):
    score_pred, feats = ggnet_forward(params, batch, d_embed, nhead, n_layers, pos_scale)

    # TODO(synk): data-dependent boolean selection kept on host (dynamic row count);
    # the fold row count is bucketed to multiples of the folding row tile to keep the
    # set of compiled folding shapes small.
    score_np = np.asarray(jax.device_get(score_pred)).reshape(-1)
    feats_np = np.asarray(jax.device_get(feats))
    mask = score_np > 0.5
    if not np.any(mask):                        # demo-only guard for random init
        mask[np.argsort(-score_np)[:8]] = True
    base_feats = feats_np[mask]                 # (F, d_embed)

    if n is None:
        n = int(np.asarray(jax.device_get(batch["ground_mask"][0])).astype(np.int32).sum())
        n = min(n, maxn)
    n_per_feat = max(n // base_feats.shape[0], 1)

    b_rnd = halton_2d(base_feats.shape[0] * n_per_feat)
    b_rnd = (b_rnd * ratio - ratio / 2.0) * 2.0

    rep = np.repeat(base_feats, n_per_feat, axis=0)          # (F*n_per_feat, d_embed)
    fold_in = jnp.asarray(np.concatenate([rep, b_rnd], axis=1), jnp.float32)

    ground_generation = folding_forward(params, fold_in)     # (F*n_per_feat, 3)
    return ground_generation, score_pred


# ----------------------------------------------------------------------------- #
# Main
# ----------------------------------------------------------------------------- #
if __name__ == "__main__":
    # Small synthetic config consistent with GGNet/GGFoldingNet shapes.
    N0, N1 = 256, 64          # original points, last-level (downsampled) points
    ENC_DIM = 32              # encoder_skip_dims[-1] * 2
    D_EMBED = 32              # config.d_embed
    NHEAD = 4                 # config.nhead
    D_FF = 64                 # config.d_feedforward
    N_LAYERS = 2              # config.num_encoder_layers
    POS_SCALE = 1.0           # config.pos_emb_scaling
    MAXN = 12000

    key = jax.random.PRNGKey(0)
    keys = jax.random.split(key, 6)
    pts0 = jax.random.normal(keys[0], (N0, 3), jnp.float32)
    pts1 = jax.random.normal(keys[1], (N1, 3), jnp.float32)
    feats_enc = jax.random.normal(keys[2], (N1, ENC_DIM), jnp.float32)
    ground_mask = (jax.random.uniform(keys[3], (N0,)) > 0.5).astype(jnp.int32)

    batch = {
        "points": [pts0, pts1],
        "features": feats_enc,
        "ground_mask": [ground_mask],
    }

    params = init_params(keys[4], ENC_DIM, D_EMBED, D_FF, N_LAYERS)

    ground_generation, score_pred = ggfoldingnet_forward(
        params, batch, D_EMBED, NHEAD, N_LAYERS, POS_SCALE, maxn=MAXN, ratio=1.0)

    jax.block_until_ready(ground_generation)
    jax.block_until_ready(score_pred)

    assert ground_generation.shape[-1] == 3
    assert score_pred.shape == (N1, 1)
    assert bool(jnp.all(jnp.isfinite(ground_generation)))
    assert bool(jnp.all((score_pred >= 0.0) & (score_pred <= 1.0)))
    print("KERNEL_OK")
</pallas_src>

<mosaic_0001>
module attributes {stable_mosaic.version = 11 : i64} {
  func.func @_backbone_kernel(%arg0: i32, %arg1: memref<64x32xf32, #tpu.memory_space<vmem>>, %arg2: memref<64x32xf32, #tpu.memory_space<vmem>>, %arg3: memref<32x32xf32, #tpu.memory_space<vmem>>, %arg4: memref<1x32xf32, #tpu.memory_space<vmem>>, %arg5: memref<2x32x96xf32, #tpu.memory_space<vmem>>, %arg6: memref<2x1x96xf32, #tpu.memory_space<vmem>>, %arg7: memref<2x32x32xf32, #tpu.memory_space<vmem>>, %arg8: memref<2x1x32xf32, #tpu.memory_space<vmem>>, %arg9: memref<2x1x32xf32, #tpu.memory_space<vmem>>, %arg10: memref<2x1x32xf32, #tpu.memory_space<vmem>>, %arg11: memref<2x32x64xf32, #tpu.memory_space<vmem>>, %arg12: memref<2x1x64xf32, #tpu.memory_space<vmem>>, %arg13: memref<2x64x32xf32, #tpu.memory_space<vmem>>, %arg14: memref<2x1x32xf32, #tpu.memory_space<vmem>>, %arg15: memref<2x1x32xf32, #tpu.memory_space<vmem>>, %arg16: memref<2x1x32xf32, #tpu.memory_space<vmem>>, %arg17: memref<32x32xf32, #tpu.memory_space<vmem>>, %arg18: memref<1x32xf32, #tpu.memory_space<vmem>>, %arg19: memref<32x128xf32, #tpu.memory_space<vmem>>, %arg20: memref<1x128xf32, #tpu.memory_space<vmem>>, %arg21: memref<64x32xf32, #tpu.memory_space<vmem>>, %arg22: memref<64x128xf32, #tpu.memory_space<vmem>>) attributes {dimension_semantics = [#tpu.dimension_semantics<arbitrary>], iteration_bounds = array<i64: 1>, scalar_prefetch = 0 : i64, scratch_operands = 0 : i64, tpu.core_type = #tpu.core_type<tc>, window_params = [{pipeline_mode = #tpu.pipeline_mode<synchronous>, transform_indices = @transform_0, window_bounds = array<i64: 64, 32>}, {pipeline_mode = #tpu.pipeline_mode<synchronous>, transform_indices = @transform_1, window_bounds = array<i64: 64, 32>}, {pipeline_mode = #tpu.pipeline_mode<synchronous>, transform_indices = @transform_2, window_bounds = array<i64: 32, 32>}, {pipeline_mode = #tpu.pipeline_mode<synchronous>, transform_indices = @transform_3, window_bounds = array<i64: 1, 32>}, {pipeline_mode = #tpu.pipeline_mode<synchronous>, transform_indices = @transform_4, window_bounds = array<i64: 2, 32, 96>}, {pipeline_mode = #tpu.pipeline_mode<synchronous>, transform_indices = @transform_5, window_bounds = array<i64: 2, 1, 96>}, {pipeline_mode = #tpu.pipeline_mode<synchronous>, transform_indices = @transform_6, window_bounds = array<i64: 2, 32, 32>}, {pipeline_mode = #tpu.pipeline_mode<synchronous>, transform_indices = @transform_7, window_bounds = array<i64: 2, 1, 32>}, {pipeline_mode = #tpu.pipeline_mode<synchronous>, transform_indices = @transform_8, window_bounds = array<i64: 2, 1, 32>}, {pipeline_mode = #tpu.pipeline_mode<synchronous>, transform_indices = @transform_9, window_bounds = array<i64: 2, 1, 32>}, {pipeline_mode = #tpu.pipeline_mode<synchronous>, transform_indices = @transform_10, window_bounds = array<i64: 2, 32, 64>}, {pipeline_mode = #tpu.pipeline_mode<synchronous>, transform_indices = @transform_11, window_bounds = array<i64: 2, 1, 64>}, {pipeline_mode = #tpu.pipeline_mode<synchronous>, transform_indices = @transform_12, window_bounds = array<i64: 2, 64, 32>}, {pipeline_mode = #tpu.pipeline_mode<synchronous>, transform_indices = @transform_13, window_bounds = array<i64: 2, 1, 32>}, {pipeline_mode = #tpu.pipeline_mode<synchronous>, transform_indices = @transform_14, window_bounds = array<i64: 2, 1, 32>}, {pipeline_mode = #tpu.pipeline_mode<synchronous>, transform_indices = @transform_15, window_bounds = array<i64: 2, 1, 32>}, {pipeline_mode = #tpu.pipeline_mode<synchronous>, transform_indices = @transform_16, window_bounds = array<i64: 32, 32>}, {pipeline_mode = #tpu.pipeline_mode<synchronous>, transform_indices = @transform_17, window_bounds = array<i64: 1, 32>}, {pipeline_mode = #tpu.pipeline_mode<synchronous>, transform_indices = @transform_18, window_bounds = array<i64: 32, 128>}, {pipeline_mode = #tpu.pipeline_mode<synchronous>, transform_indices = @transform_19, window_bounds = array<i64: 1, 128>}, {pipeline_mode = #tpu.pipeline_mode<synchronous>, transform_indices = @transform_20, window_bounds = array<i64: 64, 32>}, {pipeline_mode = #tpu.pipeline_mode<synchronous>, transform_indices = @transform_21, window_bounds = array<i64: 64, 128>}]} {
    %c0 = arith.constant 0 : index
    %c0_0 = arith.constant 0 : index
    %0 = vector.load %arg2[%c0, %c0_0] : memref<64x32xf32, #tpu.memory_space<vmem>>, vector<64x32xf32>
    %c0_1 = arith.constant 0 : index
    %c0_2 = arith.constant 0 : index
    %1 = vector.load %arg1[%c0_1, %c0_2] : memref<64x32xf32, #tpu.memory_space<vmem>>, vector<64x32xf32>
    %c0_3 = arith.constant 0 : index
    %c0_4 = arith.constant 0 : index
    %2 = vector.load %arg3[%c0_3, %c0_4] : memref<32x32xf32, #tpu.memory_space<vmem>>, vector<32x32xf32>
    %cst = arith.constant dense<0.000000e+00> : vector<64x32xf32>
    %3 = tpu.matmul %1, %2, %cst {dimension_numbers = #tpu.dot_dimension_numbers<[1], [0], [0], [1], [0, 0, 1, 1], [], []>} : vector<64x32xf32>, vector<32x32xf32>, vector<64x32xf32> -> vector<64x32xf32>
    %c0_5 = arith.constant 0 : index
    %c0_6 = arith.constant 0 : index
    %4 = vector.load %arg4[%c0_5, %c0_6] : memref<1x32xf32, #tpu.memory_space<vmem>>, vector<1x32xf32>
    %5 = vector.broadcast %4 : vector<1x32xf32> to vector<64x32xf32>
    %6 = arith.addf %3, %5 : vector<64x32xf32>
    %c0_7 = arith.constant 0 : index
    %c0_8 = arith.constant 0 : index
    %c0_9 = arith.constant 0 : index
    %7 = vector.load %arg5[%c0_7, %c0_8, %c0_9] : memref<2x32x96xf32, #tpu.memory_space<vmem>>, vector<1x32x96xf32>
    %8 = vector.shape_cast %7 : vector<1x32x96xf32> to vector<32x96xf32>
    %c0_10 = arith.constant 0 : index
    %c0_11 = arith.constant 0 : index
    %c0_12 = arith.constant 0 : index
    %9 = vector.load %arg6[%c0_10, %c0_11, %c0_12] : memref<2x1x96xf32, #tpu.memory_space<vmem>>, vector<1x1x96xf32>
    %10 = vector.shape_cast %9 : vector<1x1x96xf32> to vector<1x96xf32>
    %c0_13 = arith.constant 0 : index
    %c0_14 = arith.constant 0 : index
    %c0_15 = arith.constant 0 : index
    %11 = vector.load %arg7[%c0_13, %c0_14, %c0_15] : memref<2x32x32xf32, #tpu.memory_space<vmem>>, vector<1x32x32xf32>
    %12 = vector.shape_cast %11 : vector<1x32x32xf32> to vector<32x32xf32>
    %c0_16 = arith.constant 0 : index
    %c0_17 = arith.constant 0 : index
    %c0_18 = arith.constant 0 : index
    %13 = vector.load %arg8[%c0_16, %c0_17, %c0_18] : memref<2x1x32xf32, #tpu.memory_space<vmem>>, vector<1x1x32xf32>
    %14 = vector.shape_cast %13 : vector<1x1x32xf32> to vector<1x32xf32>
    %15 = arith.addf %6, %0 : vector<64x32xf32>
    %cst_19 = arith.constant dense<0.000000e+00> : vector<64x96xf32>
    %16 = tpu.matmul %15, %8, %cst_19 {dimension_numbers = #tpu.dot_dimension_numbers<[1], [0], [0], [1], [0, 0, 1, 1], [], []>} : vector<64x32xf32>, vector<32x96xf32>, vector<64x96xf32> -> vector<64x96xf32>
    %17 = vector.broadcast %10 : vector<1x96xf32> to vector<64x96xf32>
    %18 = arith.addf %16, %17 : vector<64x96xf32>
    %cst_20 = arith.constant 0.000000e+00 : f32
    %19 = vector.broadcast %cst_20 : f32 to vector<64x32xf32>
    %20 = vector.broadcast %14 : vector<1x32xf32> to vector<64x32xf32>
    %21 = arith.addf %19, %20 : vector<64x32xf32>
    %22 = vector.extract_strided_slice %18 {offsets = [0, 0], sizes = [64, 8], strides = [1, 1]} : vector<64x96xf32> to vector<64x8xf32>
    %cst_21 = arith.constant 0.353553385 : f32
    %23 = vector.broadcast %cst_21 : f32 to vector<64x8xf32>
    %24 = arith.mulf %22, %23 : vector<64x8xf32>
    %25 = vector.extract_strided_slice %18 {offsets = [0, 32], sizes = [64, 8], strides = [1, 1]} : vector<64x96xf32> to vector<64x8xf32>
    %26 = vector.extract_strided_slice %18 {offsets = [0, 64], sizes = [64, 8], strides = [1, 1]} : vector<64x96xf32> to vector<64x8xf32>
    %cst_22 = arith.constant dense<0.000000e+00> : vector<64x64xf32>
    %27 = tpu.matmul %24, %25, %cst_22 {dimension_numbers = #tpu.dot_dimension_numbers<[1], [1], [0], [0], [0, 0, 1, 0], [], []>} : vector<64x8xf32>, vector<64x8xf32>, vector<64x64xf32> -> vector<64x64xf32>
    %cst_23 = arith.constant dense<0xFF800000> : vector<64xf32>
    %28 = vector.multi_reduction <maximumf>, %27, %cst_23 [1] : vector<64x64xf32> to vector<64xf32>
    %29 = vector.shape_cast %28 : vector<64xf32> to vector<64x1xf32>
    %30 = vector.broadcast %29 : vector<64x1xf32> to vector<64x64xf32>
    %31 = arith.subf %27, %30 : vector<64x64xf32>
    %32 = math.exp %31 : vector<64x64xf32>
    %cst_24 = arith.constant dense<0.000000e+00> : vector<64xf32>
    %33 = vector.multi_reduction <add>, %32, %cst_24 [1] : vector<64x64xf32> to vector<64xf32>
    %34 = vector.shape_cast %33 : vector<64xf32> to vector<64x1xf32>
    %35 = tpu.reciprocal %34 {approx = true} : vector<64x1xf32> -> vector<64x1xf32>
    %36 = vector.broadcast %35 : vector<64x1xf32> to vector<64x64xf32>
    %37 = arith.mulf %32, %36 : vector<64x64xf32>
    %cst_25 = arith.constant dense<0.000000e+00> : vector<64x8xf32>
    %38 = tpu.matmul %37, %26, %cst_25 {dimension_numbers = #tpu.dot_dimension_numbers<[1], [0], [0], [1], [0, 0, 1, 1], [], []>} : vector<64x64xf32>, vector<64x8xf32>, vector<64x8xf32> -> vector<64x8xf32>
    %39 = vector.extract_strided_slice %12 {offsets = [0, 0], sizes = [8, 32], strides = [1, 1]} : vector<32x32xf32> to vector<8x32xf32>
    %cst_26 = arith.constant dense<0.000000e+00> : vector<64x32xf32>
    %40 = tpu.matmul %38, %39, %cst_26 {dimension_numbers = #tpu.dot_dimension_numbers<[1], [0], [0], [1], [0, 0, 1, 1], [], []>} : vector<64x8xf32>, vector<8x32xf32>, vector<64x32xf32> -> vector<64x32xf32>
    %41 = arith.addf %21, %40 : vector<64x32xf32>
    %42 = vector.extract_strided_slice %18 {offsets = [0, 8], sizes = [64, 8], strides = [1, 1]} : vector<64x96xf32> to vector<64x8xf32>
    %cst_27 = arith.constant 0.353553385 : f32
    %43 = vector.broadcast %cst_27 : f32 to vector<64x8xf32>
    %44 = arith.mulf %42, %43 : vector<64x8xf32>
    %45 = vector.extract_strided_slice %18 {offsets = [0, 40], sizes = [64, 8], strides = [1, 1]} : vector<64x96xf32> to vector<64x8xf32>
    %46 = vector.extract_strided_slice %18 {offsets = [0, 72], sizes = [64, 8], strides = [1, 1]} : vector<64x96xf32> to vector<64x8xf32>
    %cst_28 = arith.constant dense<0.000000e+00> : vector<64x64xf32>
    %47 = tpu.matmul %44, %45, %cst_28 {dimension_numbers = #tpu.dot_dimension_numbers<[1], [1], [0], [0], [0, 0, 1, 0], [], []>} : vector<64x8xf32>, vector<64x8xf32>, vector<64x64xf32> -> vector<64x64xf32>
    %cst_29 = arith.constant dense<0xFF800000> : vector<64xf32>
    %48 = vector.multi_reduction <maximumf>, %47, %cst_29 [1] : vector<64x64xf32> to vector<64xf32>
    %49 = vector.shape_cast %48 : vector<64xf32> to vector<64x1xf32>
    %50 = vector.broadcast %49 : vector<64x1xf32> to vector<64x64xf32>
    %51 = arith.subf %47, %50 : vector<64x64xf32>
    %52 = math.exp %51 : vector<64x64xf32>
    %cst_30 = arith.constant dense<0.000000e+00> : vector<64xf32>
    %53 = vector.multi_reduction <add>, %52, %cst_30 [1] : vector<64x64xf32> to vector<64xf32>
    %54 = vector.shape_cast %53 : vector<64xf32> to vector<64x1xf32>
    %55 = tpu.reciprocal %54 {approx = true} : vector<64x1xf32> -> vector<64x1xf32>
    %56 = vector.broadcast %55 : vector<64x1xf32> to vector<64x64xf32>
    %57 = arith.mulf %52, %56 : vector<64x64xf32>
    %cst_31 = arith.constant dense<0.000000e+00> : vector<64x8xf32>
    %58 = tpu.matmul %57, %46, %cst_31 {dimension_numbers = #tpu.dot_dimension_numbers<[1], [0], [0], [1], [0, 0, 1, 1], [], []>} : vector<64x64xf32>, vector<64x8xf32>, vector<64x8xf32> -> vector<64x8xf32>
    %59 = vector.extract_strided_slice %12 {offsets = [8, 0], sizes = [8, 32], strides = [1, 1]} : vector<32x32xf32> to vector<8x32xf32>
    %cst_32 = arith.constant dense<0.000000e+00> : vector<64x32xf32>
    %60 = tpu.matmul %58, %59, %cst_32 {dimension_numbers = #tpu.dot_dimension_numbers<[1], [0], [0], [1], [0, 0, 1, 1], [], []>} : vector<64x8xf32>, vector<8x32xf32>, vector<64x32xf32> -> vector<64x32xf32>
    %61 = arith.addf %41, %60 : vector<64x32xf32>
    %62 = vector.extract_strided_slice %18 {offsets = [0, 16], sizes = [64, 8], strides = [1, 1]} : vector<64x96xf32> to vector<64x8xf32>
    %cst_33 = arith.constant 0.353553385 : f32
    %63 = vector.broadcast %cst_33 : f32 to vector<64x8xf32>
    %64 = arith.mulf %62, %63 : vector<64x8xf32>
    %65 = vector.extract_strided_slice %18 {offsets = [0, 48], sizes = [64, 8], strides = [1, 1]} : vector<64x96xf32> to vector<64x8xf32>
    %66 = vector.extract_strided_slice %18 {offsets = [0, 80], sizes = [64, 8], strides = [1, 1]} : vector<64x96xf32> to vector<64x8xf32>
    %cst_34 = arith.constant dense<0.000000e+00> : vector<64x64xf32>
    %67 = tpu.matmul %64, %65, %cst_34 {dimension_numbers = #tpu.dot_dimension_numbers<[1], [1], [0], [0], [0, 0, 1, 0], [], []>} : vector<64x8xf32>, vector<64x8xf32>, vector<64x64xf32> -> vector<64x64xf32>
    %cst_35 = arith.constant dense<0xFF800000> : vector<64xf32>
    %68 = vector.multi_reduction <maximumf>, %67, %cst_35 [1] : vector<64x64xf32> to vector<64xf32>
    %69 = vector.shape_cast %68 : vector<64xf32> to vector<64x1xf32>
    %70 = vector.broadcast %69 : vector<64x1xf32> to vector<64x64xf32>
    %71 = arith.subf %67, %70 : vector<64x64xf32>
    %72 = math.exp %71 : vector<64x64xf32>
    %cst_36 = arith.constant dense<0.000000e+00> : vector<64xf32>
    %73 = vector.multi_reduction <add>, %72, %cst_36 [1] : vector<64x64xf32> to vector<64xf32>
    %74 = vector.shape_cast %73 : vector<64xf32> to vector<64x1xf32>
    %75 = tpu.reciprocal %74 {approx = true} : vector<64x1xf32> -> vector<64x1xf32>
    %76 = vector.broadcast %75 : vector<64x1xf32> to vector<64x64xf32>
    %77 = arith.mulf %72, %76 : vector<64x64xf32>
    %cst_37 = arith.constant dense<0.000000e+00> : vector<64x8xf32>
    %78 = tpu.matmul %77, %66, %cst_37 {dimension_numbers = #tpu.dot_dimension_numbers<[1], [0], [0], [1], [0, 0, 1, 1], [], []>} : vector<64x64xf32>, vector<64x8xf32>, vector<64x8xf32> -> vector<64x8xf32>
    %79 = vector.extract_strided_slice %12 {offsets = [16, 0], sizes = [8, 32], strides = [1, 1]} : vector<32x32xf32> to vector<8x32xf32>
    %cst_38 = arith.constant dense<0.000000e+00> : vector<64x32xf32>
    %80 = tpu.matmul %78, %79, %cst_38 {dimension_numbers = #tpu.dot_dimension_numbers<[1], [0], [0], [1], [0, 0, 1, 1], [], []>} : vector<64x8xf32>, vector<8x32xf32>, vector<64x32xf32> -> vector<64x32xf32>
    %81 = arith.addf %61, %80 : vector<64x32xf32>
    %82 = vector.extract_strided_slice %18 {offsets = [0, 24], sizes = [64, 8], strides = [1, 1]} : vector<64x96xf32> to vector<64x8xf32>
    %cst_39 = arith.constant 0.353553385 : f32
    %83 = vector.broadcast %cst_39 : f32 to vector<64x8xf32>
    %84 = arith.mulf %82, %83 : vector<64x8xf32>
    %85 = vector.extract_strided_slice %18 {offsets = [0, 56], sizes = [64, 8], strides = [1, 1]} : vector<64x96xf32> to vector<64x8xf32>
    %86 = vector.extract_strided_slice %18 {offsets = [0, 88], sizes = [64, 8], strides = [1, 1]} : vector<64x96xf32> to vector<64x8xf32>
    %cst_40 = arith.constant dense<0.000000e+00> : vector<64x64xf32>
    %87 = tpu.matmul %84, %85, %cst_40 {dimension_numbers = #tpu.dot_dimension_numbers<[1], [1], [0], [0], [0, 0, 1, 0], [], []>} : vector<64x8xf32>, vector<64x8xf32>, vector<64x64xf32> -> vector<64x64xf32>
    %cst_41 = arith.constant dense<0xFF800000> : vector<64xf32>
    %88 = vector.multi_reduction <maximumf>, %87, %cst_41 [1] : vector<64x64xf32> to vector<64xf32>
    %89 = vector.shape_cast %88 : vector<64xf32> to vector<64x1xf32>
    %90 = vector.broadcast %89 : vector<64x1xf32> to vector<64x64xf32>
    %91 = arith.subf %87, %90 : vector<64x64xf32>
    %92 = math.exp %91 : vector<64x64xf32>
    %cst_42 = arith.constant dense<0.000000e+00> : vector<64xf32>
    %93 = vector.multi_reduction <add>, %92, %cst_42 [1] : vector<64x64xf32> to vector<64xf32>
    %94 = vector.shape_cast %93 : vector<64xf32> to vector<64x1xf32>
    %95 = tpu.reciprocal %94 {approx = true} : vector<64x1xf32> -> vector<64x1xf32>
    %96 = vector.broadcast %95 : vector<64x1xf32> to vector<64x64xf32>
    %97 = arith.mulf %92, %96 : vector<64x64xf32>
    %cst_43 = arith.constant dense<0.000000e+00> : vector<64x8xf32>
    %98 = tpu.matmul %97, %86, %cst_43 {dimension_numbers = #tpu.dot_dimension_numbers<[1], [0], [0], [1], [0, 0, 1, 1], [], []>} : vector<64x64xf32>, vector<64x8xf32>, vector<64x8xf32> -> vector<64x8xf32>
    %99 = vector.extract_strided_slice %12 {offsets = [24, 0], sizes = [8, 32], strides = [1, 1]} : vector<32x32xf32> to vector<8x32xf32>
    %cst_44 = arith.constant dense<0.000000e+00> : vector<64x32xf32>
    %100 = tpu.matmul %98, %99, %cst_44 {dimension_numbers = #tpu.dot_dimension_numbers<[1], [0], [0], [1], [0, 0, 1, 1], [], []>} : vector<64x8xf32>, vector<8x32xf32>, vector<64x32xf32> -> vector<64x32xf32>
    %101 = arith.addf %81, %100 : vector<64x32xf32>
    %102 = arith.addf %6, %101 : vector<64x32xf32>
    %c0_45 = arith.constant 0 : index
    %c0_46 = arith.constant 0 : index
    %c0_47 = arith.constant 0 : index
    %103 = vector.load %arg9[%c0_45, %c0_46, %c0_47] : memref<2x1x32xf32, #tpu.memory_space<vmem>>, vector<1x1x32xf32>
    %104 = vector.shape_cast %103 : vector<1x1x32xf32> to vector<1x32xf32>
    %c0_48 = arith.constant 0 : index
    %c0_49 = arith.constant 0 : index
    %c0_50 = arith.constant 0 : index
    %105 = vector.load %arg10[%c0_48, %c0_49, %c0_50] : memref<2x1x32xf32, #tpu.memory_space<vmem>>, vector<1x1x32xf32>
    %106 = vector.shape_cast %105 : vector<1x1x32xf32> to vector<1x32xf32>
    %cst_51 = arith.constant dense<0.000000e+00> : vector<64xf32>
    %107 = vector.multi_reduction <add>, %102, %cst_51 [1] : vector<64x32xf32> to vector<64xf32>
    %108 = vector.shape_cast %107 : vector<64xf32> to vector<64x1xf32>
    %cst_52 = arith.constant 3.200000e+01 : f32
    %109 = vector.broadcast %cst_52 : f32 to vector<64x1xf32>
    %110 = arith.divf %108, %109 : vector<64x1xf32>
    %111 = vector.broadcast %110 : vector<64x1xf32> to vector<64x32xf32>
    %112 = arith.subf %102, %111 : vector<64x32xf32>
    %113 = vector.broadcast %110 : vector<64x1xf32> to vector<64x32xf32>
    %114 = arith.subf %102, %113 : vector<64x32xf32>
    %115 = arith.mulf %112, %114 : vector<64x32xf32>
    %cst_53 = arith.constant dense<0.000000e+00> : vector<64xf32>
    %116 = vector.multi_reduction <add>, %115, %cst_53 [1] : vector<64x32xf32> to vector<64xf32>
    %117 = vector.shape_cast %116 : vector<64xf32> to vector<64x1xf32>
    %cst_54 = arith.constant 3.200000e+01 : f32
    %118 = vector.broadcast %cst_54 : f32 to vector<64x1xf32>
    %119 = arith.divf %117, %118 : vector<64x1xf32>
    %120 = vector.broadcast %110 : vector<64x1xf32> to vector<64x32xf32>
    %121 = arith.subf %102, %120 : vector<64x32xf32>
    %cst_55 = arith.constant 9.99999974E-6 : f32
    %122 = vector.broadcast %cst_55 : f32 to vector<64x1xf32>
    %123 = arith.addf %119, %122 : vector<64x1xf32>
    %124 = math.rsqrt %123 : vector<64x1xf32>
    %125 = vector.broadcast %124 : vector<64x1xf32> to vector<64x32xf32>
    %126 = arith.mulf %121, %125 : vector<64x32xf32>
    %127 = vector.broadcast %104 : vector<1x32xf32> to vector<64x32xf32>
    %128 = arith.mulf %126, %127 : vector<64x32xf32>
    %129 = vector.broadcast %106 : vector<1x32xf32> to vector<64x32xf32>
    %130 = arith.addf %128, %129 : vector<64x32xf32>
    %c0_56 = arith.constant 0 : index
    %c0_57 = arith.constant 0 : index
    %c0_58 = arith.constant 0 : index
    %131 = vector.load %arg11[%c0_56, %c0_57, %c0_58] : memref<2x32x64xf32, #tpu.memory_space<vmem>>, vector<1x32x64xf32>
    %132 = vector.shape_cast %131 : vector<1x32x64xf32> to vector<32x64xf32>
    %cst_59 = arith.constant dense<0.000000e+00> : vector<64x64xf32>
    %133 = tpu.matmul %130, %132, %cst_59 {dimension_numbers = #tpu.dot_dimension_numbers<[1], [0], [0], [1], [0, 0, 1, 1], [], []>} : vector<64x32xf32>, vector<32x64xf32>, vector<64x64xf32> -> vector<64x64xf32>
    %c0_60 = arith.constant 0 : index
    %c0_61 = arith.constant 0 : index
    %c0_62 = arith.constant 0 : index
    %134 = vector.load %arg12[%c0_60, %c0_61, %c0_62] : memref<2x1x64xf32, #tpu.memory_space<vmem>>, vector<1x1x64xf32>
    %135 = vector.shape_cast %134 : vector<1x1x64xf32> to vector<1x64xf32>
    %136 = vector.broadcast %135 : vector<1x64xf32> to vector<64x64xf32>
    %137 = arith.addf %133, %136 : vector<64x64xf32>
    %cst_63 = arith.constant 0.000000e+00 : f32
    %138 = vector.broadcast %cst_63 : f32 to vector<64x64xf32>
    %139 = arith.maximumf %137, %138 : vector<64x64xf32>
    %c0_64 = arith.constant 0 : index
    %c0_65 = arith.constant 0 : index
    %c0_66 = arith.constant 0 : index
    %140 = vector.load %arg13[%c0_64, %c0_65, %c0_66] : memref<2x64x32xf32, #tpu.memory_space<vmem>>, vector<1x64x32xf32>
    %141 = vector.shape_cast %140 : vector<1x64x32xf32> to vector<64x32xf32>
    %cst_67 = arith.constant dense<0.000000e+00> : vector<64x32xf32>
    %142 = tpu.matmul %139, %141, %cst_67 {dimension_numbers = #tpu.dot_dimension_numbers<[1], [0], [0], [1], [0, 0, 1, 1], [], []>} : vector<64x64xf32>, vector<64x32xf32>, vector<64x32xf32> -> vector<64x32xf32>
    %c0_68 = arith.constant 0 : index
    %c0_69 = arith.constant 0 : index
    %c0_70 = arith.constant 0 : index
    %143 = vector.load %arg14[%c0_68, %c0_69, %c0_70] : memref<2x1x32xf32, #tpu.memory_space<vmem>>, vector<1x1x32xf32>
    %144 = vector.shape_cast %143 : vector<1x1x32xf32> to vector<1x32xf32>
    %145 = vector.broadcast %144 : vector<1x32xf32> to vector<64x32xf32>
    %146 = arith.addf %142, %145 : vector<64x32xf32>
    %147 = arith.addf %130, %146 : vector<64x32xf32>
    %c0_71 = arith.constant 0 : index
    %c0_72 = arith.constant 0 : index
    %c0_73 = arith.constant 0 : index
    %148 = vector.load %arg15[%c0_71, %c0_72, %c0_73] : memref<2x1x32xf32, #tpu.memory_space<vmem>>, vector<1x1x32xf32>
    %149 = vector.shape_cast %148 : vector<1x1x32xf32> to vector<1x32xf32>
    %c0_74 = arith.constant 0 : index
    %c0_75 = arith.constant 0 : index
    %c0_76 = arith.constant 0 : index
    %150 = vector.load %arg16[%c0_74, %c0_75, %c0_76] : memref<2x1x32xf32, #tpu.memory_space<vmem>>, vector<1x1x32xf32>
    %151 = vector.shape_cast %150 : vector<1x1x32xf32> to vector<1x32xf32>
    %cst_77 = arith.constant dense<0.000000e+00> : vector<64xf32>
    %152 = vector.multi_reduction <add>, %147, %cst_77 [1] : vector<64x32xf32> to vector<64xf32>
    %153 = vector.shape_cast %152 : vector<64xf32> to vector<64x1xf32>
    %cst_78 = arith.constant 3.200000e+01 : f32
    %154 = vector.broadcast %cst_78 : f32 to vector<64x1xf32>
    %155 = arith.divf %153, %154 : vector<64x1xf32>
    %156 = vector.broadcast %155 : vector<64x1xf32> to vector<64x32xf32>
    %157 = arith.subf %147, %156 : vector<64x32xf32>
    %158 = vector.broadcast %155 : vector<64x1xf32> to vector<64x32xf32>
    %159 = arith.subf %147, %158 : vector<64x32xf32>
    %160 = arith.mulf %157, %159 : vector<64x32xf32>
    %cst_79 = arith.constant dense<0.000000e+00> : vector<64xf32>
    %161 = vector.multi_reduction <add>, %160, %cst_79 [1] : vector<64x32xf32> to vector<64xf32>
    %162 = vector.shape_cast %161 : vector<64xf32> to vector<64x1xf32>
    %cst_80 = arith.constant 3.200000e+01 : f32
    %163 = vector.broadcast %cst_80 : f32 to vector<64x1xf32>
    %164 = arith.divf %162, %163 : vector<64x1xf32>
    %165 = vector.broadcast %155 : vector<64x1xf32> to vector<64x32xf32>
    %166 = arith.subf %147, %165 : vector<64x32xf32>
    %cst_81 = arith.constant 9.99999974E-6 : f32
    %167 = vector.broadcast %cst_81 : f32 to vector<64x1xf32>
    %168 = arith.addf %164, %167 : vector<64x1xf32>
    %169 = math.rsqrt %168 : vector<64x1xf32>
    %170 = vector.broadcast %169 : vector<64x1xf32> to vector<64x32xf32>
    %171 = arith.mulf %166, %170 : vector<64x32xf32>
    %172 = vector.broadcast %149 : vector<1x32xf32> to vector<64x32xf32>
    %173 = arith.mulf %171, %172 : vector<64x32xf32>
    %174 = vector.broadcast %151 : vector<1x32xf32> to vector<64x32xf32>
    %175 = arith.addf %173, %174 : vector<64x32xf32>
    %c1 = arith.constant 1 : index
    %c0_82 = arith.constant 0 : index
    %c0_83 = arith.constant 0 : index
    %176 = vector.load %arg5[%c1, %c0_82, %c0_83] : memref<2x32x96xf32, #tpu.memory_space<vmem>>, vector<1x32x96xf32>
    %177 = vector.shape_cast %176 : vector<1x32x96xf32> to vector<32x96xf32>
    %c1_84 = arith.constant 1 : index
    %c0_85 = arith.constant 0 : index
    %c0_86 = arith.constant 0 : index
    %178 = vector.load %arg6[%c1_84, %c0_85, %c0_86] : memref<2x1x96xf32, #tpu.memory_space<vmem>>, vector<1x1x96xf32>
    %179 = vector.shape_cast %178 : vector<1x1x96xf32> to vector<1x96xf32>
    %c1_87 = arith.constant 1 : index
    %c0_88 = arith.constant 0 : index
    %c0_89 = arith.constant 0 : index
    %180 = vector.load %arg7[%c1_87, %c0_88, %c0_89] : memref<2x32x32xf32, #tpu.memory_space<vmem>>, vector<1x32x32xf32>
    %181 = vector.shape_cast %180 : vector<1x32x32xf32> to vector<32x32xf32>
    %c1_90 = arith.constant 1 : index
    %c0_91 = arith.constant 0 : index
    %c0_92 = arith.constant 0 : index
    %182 = vector.load %arg8[%c1_90, %c0_91, %c0_92] : memref<2x1x32xf32, #tpu.memory_space<vmem>>, vector<1x1x32xf32>
    %183 = vector.shape_cast %182 : vector<1x1x32xf32> to vector<1x32xf32>
    %184 = arith.addf %175, %0 : vector<64x32xf32>
    %cst_93 = arith.constant dense<0.000000e+00> : vector<64x96xf32>
    %185 = tpu.matmul %184, %177, %cst_93 {dimension_numbers = #tpu.dot_dimension_numbers<[1], [0], [0], [1], [0, 0, 1, 1], [], []>} : vector<64x32xf32>, vector<32x96xf32>, vector<64x96xf32> -> vector<64x96xf32>
    %186 = vector.broadcast %179 : vector<1x96xf32> to vector<64x96xf32>
    %187 = arith.addf %185, %186 : vector<64x96xf32>
    %cst_94 = arith.constant 0.000000e+00 : f32
    %188 = vector.broadcast %cst_94 : f32 to vector<64x32xf32>
    %189 = vector.broadcast %183 : vector<1x32xf32> to vector<64x32xf32>
    %190 = arith.addf %188, %189 : vector<64x32xf32>
    %191 = vector.extract_strided_slice %187 {offsets = [0, 0], sizes = [64, 8], strides = [1, 1]} : vector<64x96xf32> to vector<64x8xf32>
    %cst_95 = arith.constant 0.353553385 : f32
    %192 = vector.broadcast %cst_95 : f32 to vector<64x8xf32>
    %193 = arith.mulf %191, %192 : vector<64x8xf32>
    %194 = vector.extract_strided_slice %187 {offsets = [0, 32], sizes = [64, 8], strides = [1, 1]} : vector<64x96xf32> to vector<64x8xf32>
    %195 = vector.extract_strided_slice %187 {offsets = [0, 64], sizes = [64, 8], strides = [1, 1]} : vector<64x96xf32> to vector<64x8xf32>
    %cst_96 = arith.constant dense<0.000000e+00> : vector<64x64xf32>
    %196 = tpu.matmul %193, %194, %cst_96 {dimension_numbers = #tpu.dot_dimension_numbers<[1], [1], [0], [0], [0, 0, 1, 0], [], []>} : vector<64x8xf32>, vector<64x8xf32>, vector<64x64xf32> -> vector<64x64xf32>
    %cst_97 = arith.constant dense<0xFF800000> : vector<64xf32>
    %197 = vector.multi_reduction <maximumf>, %196, %cst_97 [1] : vector<64x64xf32> to vector<64xf32>
    %198 = vector.shape_cast %197 : vector<64xf32> to vector<64x1xf32>
    %199 = vector.broadcast %198 : vector<64x1xf32> to vector<64x64xf32>
    %200 = arith.subf %196, %199 : vector<64x64xf32>
    %201 = math.exp %200 : vector<64x64xf32>
    %cst_98 = arith.constant dense<0.000000e+00> : vector<64xf32>
    %202 = vector.multi_reduction <add>, %201, %cst_98 [1] : vector<64x64xf32> to vector<64xf32>
    %203 = vector.shape_cast %202 : vector<64xf32> to vector<64x1xf32>
    %204 = tpu.reciprocal %203 {approx = true} : vector<64x1xf32> -> vector<64x1xf32>
    %205 = vector.broadcast %204 : vector<64x1xf32> to vector<64x64xf32>
    %206 = arith.mulf %201, %205 : vector<64x64xf32>
    %cst_99 = arith.constant dense<0.000000e+00> : vector<64x8xf32>
    %207 = tpu.matmul %206, %195, %cst_99 {dimension_numbers = #tpu.dot_dimension_numbers<[1], [0], [0], [1], [0, 0, 1, 1], [], []>} : vector<64x64xf32>, vector<64x8xf32>, vector<64x8xf32> -> vector<64x8xf32>
    %208 = vector.extract_strided_slice %181 {offsets = [0, 0], sizes = [8, 32], strides = [1, 1]} : vector<32x32xf32> to vector<8x32xf32>
    %cst_100 = arith.constant dense<0.000000e+00> : vector<64x32xf32>
    %209 = tpu.matmul %207, %208, %cst_100 {dimension_numbers = #tpu.dot_dimension_numbers<[1], [0], [0], [1], [0, 0, 1, 1], [], []>} : vector<64x8xf32>, vector<8x32xf32>, vector<64x32xf32> -> vector<64x32xf32>
    %210 = arith.addf %190, %209 : vector<64x32xf32>
    %211 = vector.extract_strided_slice %187 {offsets = [0, 8], sizes = [64, 8], strides = [1, 1]} : vector<64x96xf32> to vector<64x8xf32>
    %cst_101 = arith.constant 0.353553385 : f32
    %212 = vector.broadcast %cst_101 : f32 to vector<64x8xf32>
    %213 = arith.mulf %211, %212 : vector<64x8xf32>
    %214 = vector.extract_strided_slice %187 {offsets = [0, 40], sizes = [64, 8], strides = [1, 1]} : vector<64x96xf32> to vector<64x8xf32>
    %215 = vector.extract_strided_slice %187 {offsets = [0, 72], sizes = [64, 8], strides = [1, 1]} : vector<64x96xf32> to vector<64x8xf32>
    %cst_102 = arith.constant dense<0.000000e+00> : vector<64x64xf32>
    %216 = tpu.matmul %213, %214, %cst_102 {dimension_numbers = #tpu.dot_dimension_numbers<[1], [1], [0], [0], [0, 0, 1, 0], [], []>} : vector<64x8xf32>, vector<64x8xf32>, vector<64x64xf32> -> vector<64x64xf32>
    %cst_103 = arith.constant dense<0xFF800000> : vector<64xf32>
    %217 = vector.multi_reduction <maximumf>, %216, %cst_103 [1] : vector<64x64xf32> to vector<64xf32>
    %218 = vector.shape_cast %217 : vector<64xf32> to vector<64x1xf32>
    %219 = vector.broadcast %218 : vector<64x1xf32> to vector<64x64xf32>
    %220 = arith.subf %216, %219 : vector<64x64xf32>
    %221 = math.exp %220 : vector<64x64xf32>
    %cst_104 = arith.constant dense<0.000000e+00> : vector<64xf32>
    %222 = vector.multi_reduction <add>, %221, %cst_104 [1] : vector<64x64xf32> to vector<64xf32>
    %223 = vector.shape_cast %222 : vector<64xf32> to vector<64x1xf32>
    %224 = tpu.reciprocal %223 {approx = true} : vector<64x1xf32> -> vector<64x1xf32>
    %225 = vector.broadcast %224 : vector<64x1xf32> to vector<64x64xf32>
    %226 = arith.mulf %221, %225 : vector<64x64xf32>
    %cst_105 = arith.constant dense<0.000000e+00> : vector<64x8xf32>
    %227 = tpu.matmul %226, %215, %cst_105 {dimension_numbers = #tpu.dot_dimension_numbers<[1], [0], [0], [1], [0, 0, 1, 1], [], []>} : vector<64x64xf32>, vector<64x8xf32>, vector<64x8xf32> -> vector<64x8xf32>
    %228 = vector.extract_strided_slice %181 {offsets = [8, 0], sizes = [8, 32], strides = [1, 1]} : vector<32x32xf32> to vector<8x32xf32>
    %cst_106 = arith.constant dense<0.000000e+00> : vector<64x32xf32>
    %229 = tpu.matmul %227, %228, %cst_106 {dimension_numbers = #tpu.dot_dimension_numbers<[1], [0], [0], [1], [0, 0, 1, 1], [], []>} : vector<64x8xf32>, vector<8x32xf32>, vector<64x32xf32> -> vector<64x32xf32>
    %230 = arith.addf %210, %229 : vector<64x32xf32>
    %231 = vector.extract_strided_slice %187 {offsets = [0, 16], sizes = [64, 8], strides = [1, 1]} : vector<64x96xf32> to vector<64x8xf32>
    %cst_107 = arith.constant 0.353553385 : f32
    %232 = vector.broadcast %cst_107 : f32 to vector<64x8xf32>
    %233 = arith.mulf %231, %232 : vector<64x8xf32>
    %234 = vector.extract_strided_slice %187 {offsets = [0, 48], sizes = [64, 8], strides = [1, 1]} : vector<64x96xf32> to vector<64x8xf32>
    %235 = vector.extract_strided_slice %187 {offsets = [0, 80], sizes = [64, 8], strides = [1, 1]} : vector<64x96xf32> to vector<64x8xf32>
    %cst_108 = arith.constant dense<0.000000e+00> : vector<64x64xf32>
    %236 = tpu.matmul %233, %234, %cst_108 {dimension_numbers = #tpu.dot_dimension_numbers<[1], [1], [0], [0], [0, 0, 1, 0], [], []>} : vector<64x8xf32>, vector<64x8xf32>, vector<64x64xf32> -> vector<64x64xf32>
    %cst_109 = arith.constant dense<0xFF800000> : vector<64xf32>
    %237 = vector.multi_reduction <maximumf>, %236, %cst_109 [1] : vector<64x64xf32> to vector<64xf32>
    %238 = vector.shape_cast %237 : vector<64xf32> to vector<64x1xf32>
    %239 = vector.broadcast %238 : vector<64x1xf32> to vector<64x64xf32>
    %240 = arith.subf %236, %239 : vector<64x64xf32>
    %241 = math.exp %240 : vector<64x64xf32>
    %cst_110 = arith.constant dense<0.000000e+00> : vector<64xf32>
    %242 = vector.multi_reduction <add>, %241, %cst_110 [1] : vector<64x64xf32> to vector<64xf32>
    %243 = vector.shape_cast %242 : vector<64xf32> to vector<64x1xf32>
    %244 = tpu.reciprocal %243 {approx = true} : vector<64x1xf32> -> vector<64x1xf32>
    %245 = vector.broadcast %244 : vector<64x1xf32> to vector<64x64xf32>
    %246 = arith.mulf %241, %245 : vector<64x64xf32>
    %cst_111 = arith.constant dense<0.000000e+00> : vector<64x8xf32>
    %247 = tpu.matmul %246, %235, %cst_111 {dimension_numbers = #tpu.dot_dimension_numbers<[1], [0], [0], [1], [0, 0, 1, 1], [], []>} : vector<64x64xf32>, vector<64x8xf32>, vector<64x8xf32> -> vector<64x8xf32>
    %248 = vector.extract_strided_slice %181 {offsets = [16, 0], sizes = [8, 32], strides = [1, 1]} : vector<32x32xf32> to vector<8x32xf32>
    %cst_112 = arith.constant dense<0.000000e+00> : vector<64x32xf32>
    %249 = tpu.matmul %247, %248, %cst_112 {dimension_numbers = #tpu.dot_dimension_numbers<[1], [0], [0], [1], [0, 0, 1, 1], [], []>} : vector<64x8xf32>, vector<8x32xf32>, vector<64x32xf32> -> vector<64x32xf32>
    %250 = arith.addf %230, %249 : vector<64x32xf32>
    %251 = vector.extract_strided_slice %187 {offsets = [0, 24], sizes = [64, 8], strides = [1, 1]} : vector<64x96xf32> to vector<64x8xf32>
    %cst_113 = arith.constant 0.353553385 : f32
    %252 = vector.broadcast %cst_113 : f32 to vector<64x8xf32>
    %253 = arith.mulf %251, %252 : vector<64x8xf32>
    %254 = vector.extract_strided_slice %187 {offsets = [0, 56], sizes = [64, 8], strides = [1, 1]} : vector<64x96xf32> to vector<64x8xf32>
    %255 = vector.extract_strided_slice %187 {offsets = [0, 88], sizes = [64, 8], strides = [1, 1]} : vector<64x96xf32> to vector<64x8xf32>
    %cst_114 = arith.constant dense<0.000000e+00> : vector<64x64xf32>
    %256 = tpu.matmul %253, %254, %cst_114 {dimension_numbers = #tpu.dot_dimension_numbers<[1], [1], [0], [0], [0, 0, 1, 0], [], []>} : vector<64x8xf32>, vector<64x8xf32>, vector<64x64xf32> -> vector<64x64xf32>
    %cst_115 = arith.constant dense<0xFF800000> : vector<64xf32>
    %257 = vector.multi_reduction <maximumf>, %256, %cst_115 [1] : vector<64x64xf32> to vector<64xf32>
    %258 = vector.shape_cast %257 : vector<64xf32> to vector<64x1xf32>
    %259 = vector.broadcast %258 : vector<64x1xf32> to vector<64x64xf32>
    %260 = arith.subf %256, %259 : vector<64x64xf32>
    %261 = math.exp %260 : vector<64x64xf32>
    %cst_116 = arith.constant dense<0.000000e+00> : vector<64xf32>
    %262 = vector.multi_reduction <add>, %261, %cst_116 [1] : vector<64x64xf32> to vector<64xf32>
    %263 = vector.shape_cast %262 : vector<64xf32> to vector<64x1xf32>
    %264 = tpu.reciprocal %263 {approx = true} : vector<64x1xf32> -> vector<64x1xf32>
    %265 = vector.broadcast %264 : vector<64x1xf32> to vector<64x64xf32>
    %266 = arith.mulf %261, %265 : vector<64x64xf32>
    %cst_117 = arith.constant dense<0.000000e+00> : vector<64x8xf32>
    %267 = tpu.matmul %266, %255, %cst_117 {dimension_numbers = #tpu.dot_dimension_numbers<[1], [0], [0], [1], [0, 0, 1, 1], [], []>} : vector<64x64xf32>, vector<64x8xf32>, vector<64x8xf32> -> vector<64x8xf32>
    %268 = vector.extract_strided_slice %181 {offsets = [24, 0], sizes = [8, 32], strides = [1, 1]} : vector<32x32xf32> to vector<8x32xf32>
    %cst_118 = arith.constant dense<0.000000e+00> : vector<64x32xf32>
    %269 = tpu.matmul %267, %268, %cst_118 {dimension_numbers = #tpu.dot_dimension_numbers<[1], [0], [0], [1], [0, 0, 1, 1], [], []>} : vector<64x8xf32>, vector<8x32xf32>, vector<64x32xf32> -> vector<64x32xf32>
    %270 = arith.addf %250, %269 : vector<64x32xf32>
    %271 = arith.addf %175, %270 : vector<64x32xf32>
    %c1_119 = arith.constant 1 : index
    %c0_120 = arith.constant 0 : index
    %c0_121 = arith.constant 0 : index
    %272 = vector.load %arg9[%c1_119, %c0_120, %c0_121] : memref<2x1x32xf32, #tpu.memory_space<vmem>>, vector<1x1x32xf32>
    %273 = vector.shape_cast %272 : vector<1x1x32xf32> to vector<1x32xf32>
    %c1_122 = arith.constant 1 : index
    %c0_123 = arith.constant 0 : index
    %c0_124 = arith.constant 0 : index
    %274 = vector.load %arg10[%c1_122, %c0_123, %c0_124] : memref<2x1x32xf32, #tpu.memory_space<vmem>>, vector<1x1x32xf32>
    %275 = vector.shape_cast %274 : vector<1x1x32xf32> to vector<1x32xf32>
    %cst_125 = arith.constant dense<0.000000e+00> : vector<64xf32>
    %276 = vector.multi_reduction <add>, %271, %cst_125 [1] : vector<64x32xf32> to vector<64xf32>
    %277 = vector.shape_cast %276 : vector<64xf32> to vector<64x1xf32>
    %cst_126 = arith.constant 3.200000e+01 : f32
    %278 = vector.broadcast %cst_126 : f32 to vector<64x1xf32>
    %279 = arith.divf %277, %278 : vector<64x1xf32>
    %280 = vector.broadcast %279 : vector<64x1xf32> to vector<64x32xf32>
    %281 = arith.subf %271, %280 : vector<64x32xf32>
    %282 = vector.broadcast %279 : vector<64x1xf32> to vector<64x32xf32>
    %283 = arith.subf %271, %282 : vector<64x32xf32>
    %284 = arith.mulf %281, %283 : vector<64x32xf32>
    %cst_127 = arith.constant dense<0.000000e+00> : vector<64xf32>
    %285 = vector.multi_reduction <add>, %284, %cst_127 [1] : vector<64x32xf32> to vector<64xf32>
    %286 = vector.shape_cast %285 : vector<64xf32> to vector<64x1xf32>
    %cst_128 = arith.constant 3.200000e+01 : f32
    %287 = vector.broadcast %cst_128 : f32 to vector<64x1xf32>
    %288 = arith.divf %286, %287 : vector<64x1xf32>
    %289 = vector.broadcast %279 : vector<64x1xf32> to vector<64x32xf32>
    %290 = arith.subf %271, %289 : vector<64x32xf32>
    %cst_129 = arith.constant 9.99999974E-6 : f32
    %291 = vector.broadcast %cst_129 : f32 to vector<64x1xf32>
    %292 = arith.addf %288, %291 : vector<64x1xf32>
    %293 = math.rsqrt %292 : vector<64x1xf32>
    %294 = vector.broadcast %293 : vector<64x1xf32> to vector<64x32xf32>
    %295 = arith.mulf %290, %294 : vector<64x32xf32>
    %296 = vector.broadcast %273 : vector<1x32xf32> to vector<64x32xf32>
    %297 = arith.mulf %295, %296 : vector<64x32xf32>
    %298 = vector.broadcast %275 : vector<1x32xf32> to vector<64x32xf32>
    %299 = arith.addf %297, %298 : vector<64x32xf32>
    %c1_130 = arith.constant 1 : index
    %c0_131 = arith.constant 0 : index
    %c0_132 = arith.constant 0 : index
    %300 = vector.load %arg11[%c1_130, %c0_131, %c0_132] : memref<2x32x64xf32, #tpu.memory_space<vmem>>, vector<1x32x64xf32>
    %301 = vector.shape_cast %300 : vector<1x32x64xf32> to vector<32x64xf32>
    %cst_133 = arith.constant dense<0.000000e+00> : vector<64x64xf32>
    %302 = tpu.matmul %299, %301, %cst_133 {dimension_numbers = #tpu.dot_dimension_numbers<[1], [0], [0], [1], [0, 0, 1, 1], [], []>} : vector<64x32xf32>, vector<32x64xf32>, vector<64x64xf32> -> vector<64x64xf32>
    %c1_134 = arith.constant 1 : index
    %c0_135 = arith.constant 0 : index
    %c0_136 = arith.constant 0 : index
    %303 = vector.load %arg12[%c1_134, %c0_135, %c0_136] : memref<2x1x64xf32, #tpu.memory_space<vmem>>, vector<1x1x64xf32>
    %304 = vector.shape_cast %303 : vector<1x1x64xf32> to vector<1x64xf32>
    %305 = vector.broadcast %304 : vector<1x64xf32> to vector<64x64xf32>
    %306 = arith.addf %302, %305 : vector<64x64xf32>
    %cst_137 = arith.constant 0.000000e+00 : f32
    %307 = vector.broadcast %cst_137 : f32 to vector<64x64xf32>
    %308 = arith.maximumf %306, %307 : vector<64x64xf32>
    %c1_138 = arith.constant 1 : index
    %c0_139 = arith.constant 0 : index
    %c0_140 = arith.constant 0 : index
    %309 = vector.load %arg13[%c1_138, %c0_139, %c0_140] : memref<2x64x32xf32, #tpu.memory_space<vmem>>, vector<1x64x32xf32>
    %310 = vector.shape_cast %309 : vector<1x64x32xf32> to vector<64x32xf32>
    %cst_141 = arith.constant dense<0.000000e+00> : vector<64x32xf32>
    %311 = tpu.matmul %308, %310, %cst_141 {dimension_numbers = #tpu.dot_dimension_numbers<[1], [0], [0], [1], [0, 0, 1, 1], [], []>} : vector<64x64xf32>, vector<64x32xf32>, vector<64x32xf32> -> vector<64x32xf32>
    %c1_142 = arith.constant 1 : index
    %c0_143 = arith.constant 0 : index
    %c0_144 = arith.constant 0 : index
    %312 = vector.load %arg14[%c1_142, %c0_143, %c0_144] : memref<2x1x32xf32, #tpu.memory_space<vmem>>, vector<1x1x32xf32>
    %313 = vector.shape_cast %312 : vector<1x1x32xf32> to vector<1x32xf32>
    %314 = vector.broadcast %313 : vector<1x32xf32> to vector<64x32xf32>
    %315 = arith.addf %311, %314 : vector<64x32xf32>
    %316 = arith.addf %299, %315 : vector<64x32xf32>
    %c1_145 = arith.constant 1 : index
    %c0_146 = arith.constant 0 : index
    %c0_147 = arith.constant 0 : index
    %317 = vector.load %arg15[%c1_145, %c0_146, %c0_147] : memref<2x1x32xf32, #tpu.memory_space<vmem>>, vector<1x1x32xf32>
    %318 = vector.shape_cast %317 : vector<1x1x32xf32> to vector<1x32xf32>
    %c1_148 = arith.constant 1 : index
    %c0_149 = arith.constant 0 : index
    %c0_150 = arith.constant 0 : index
    %319 = vector.load %arg16[%c1_148, %c0_149, %c0_150] : memref<2x1x32xf32, #tpu.memory_space<vmem>>, vector<1x1x32xf32>
    %320 = vector.shape_cast %319 : vector<1x1x32xf32> to vector<1x32xf32>
    %cst_151 = arith.constant dense<0.000000e+00> : vector<64xf32>
    %321 = vector.multi_reduction <add>, %316, %cst_151 [1] : vector<64x32xf32> to vector<64xf32>
    %322 = vector.shape_cast %321 : vector<64xf32> to vector<64x1xf32>
    %cst_152 = arith.constant 3.200000e+01 : f32
    %323 = vector.broadcast %cst_152 : f32 to vector<64x1xf32>
    %324 = arith.divf %322, %323 : vector<64x1xf32>
    %325 = vector.broadcast %324 : vector<64x1xf32> to vector<64x32xf32>
    %326 = arith.subf %316, %325 : vector<64x32xf32>
    %327 = vector.broadcast %324 : vector<64x1xf32> to vector<64x32xf32>
    %328 = arith.subf %316, %327 : vector<64x32xf32>
    %329 = arith.mulf %326, %328 : vector<64x32xf32>
    %cst_153 = arith.constant dense<0.000000e+00> : vector<64xf32>
    %330 = vector.multi_reduction <add>, %329, %cst_153 [1] : vector<64x32xf32> to vector<64xf32>
    %331 = vector.shape_cast %330 : vector<64xf32> to vector<64x1xf32>
    %cst_154 = arith.constant 3.200000e+01 : f32
    %332 = vector.broadcast %cst_154 : f32 to vector<64x1xf32>
    %333 = arith.divf %331, %332 : vector<64x1xf32>
    %334 = vector.broadcast %324 : vector<64x1xf32> to vector<64x32xf32>
    %335 = arith.subf %316, %334 : vector<64x32xf32>
    %cst_155 = arith.constant 9.99999974E-6 : f32
    %336 = vector.broadcast %cst_155 : f32 to vector<64x1xf32>
    %337 = arith.addf %333, %336 : vector<64x1xf32>
    %338 = math.rsqrt %337 : vector<64x1xf32>
    %339 = vector.broadcast %338 : vector<64x1xf32> to vector<64x32xf32>
    %340 = arith.mulf %335, %339 : vector<64x32xf32>
    %341 = vector.broadcast %318 : vector<1x32xf32> to vector<64x32xf32>
    %342 = arith.mulf %340, %341 : vector<64x32xf32>
    %343 = vector.broadcast %320 : vector<1x32xf32> to vector<64x32xf32>
    %344 = arith.addf %342, %343 : vector<64x32xf32>
    %c0_156 = arith.constant 0 : index
    %c0_157 = arith.constant 0 : index
    %345 = vector.load %arg21[%c0_156, %c0_157] : memref<64x32xf32, #tpu.memory_space<vmem>>, vector<64x32xf32>
    tpu.vector_store %arg21[%c0_156, %c0_157], %344 {strides = array<i32>} : memref<64x32xf32, #tpu.memory_space<vmem>>, vector<64x32xf32>,
    %c0_158 = arith.constant 0 : index
    %c0_159 = arith.constant 0 : index
    %346 = vector.load %arg17[%c0_158, %c0_159] : memref<32x32xf32, #tpu.memory_space<vmem>>, vector<32x32xf32>
    %cst_160 = arith.constant dense<0.000000e+00> : vector<64x32xf32>
    %347 = tpu.matmul %344, %346, %cst_160 {dimension_numbers = #tpu.dot_dimension_numbers<[1], [0], [0], [1], [0, 0, 1, 1], [], []>} : vector<64x32xf32>, vector<32x32xf32>, vector<64x32xf32> -> vector<64x32xf32>
    %c0_161 = arith.constant 0 : index
    %c0_162 = arith.constant 0 : index
    %348 = vector.load %arg18[%c0_161, %c0_162] : memref<1x32xf32, #tpu.memory_space<vmem>>, vector<1x32xf32>
    %349 = vector.broadcast %348 : vector<1x32xf32> to vector<64x32xf32>
    %350 = arith.addf %347, %349 : vector<64x32xf32>
    %cst_163 = arith.constant 0.000000e+00 : f32
    %351 = vector.broadcast %cst_163 : f32 to vector<64x32xf32>
    %352 = arith.maximumf %350, %351 : vector<64x32xf32>
    %c0_164 = arith.constant 0 : index
    %c0_165 = arith.constant 0 : index
    %353 = vector.load %arg19[%c0_164, %c0_165] : memref<32x128xf32, #tpu.memory_space<vmem>>, vector<32x128xf32>
    %cst_166 = arith.constant dense<0.000000e+00> : vector<64x128xf32>
    %354 = tpu.matmul %352, %353, %cst_166 {dimension_numbers = #tpu.dot_dimension_numbers<[1], [0], [0], [1], [0, 0, 1, 1], [], []>} : vector<64x32xf32>, vector<32x128xf32>, vector<64x128xf32> -> vector<64x128xf32>
    %c0_167 = arith.constant 0 : index
    %c0_168 = arith.constant 0 : index
    %355 = vector.load %arg20[%c0_167, %c0_168] : memref<1x128xf32, #tpu.memory_space<vmem>>, vector<1x128xf32>
    %356 = vector.broadcast %355 : vector<1x128xf32> to vector<64x128xf32>
    %357 = arith.addf %354, %356 : vector<64x128xf32>
    %358 = arith.negf %357 : vector<64x128xf32>
    %359 = math.exp %358 : vector<64x128xf32>
    %cst_169 = arith.constant 1.000000e+00 : f32
    %360 = vector.broadcast %cst_169 : f32 to vector<64x128xf32>
    %361 = arith.addf %360, %359 : vector<64x128xf32>
    %362 = arith.divf %360, %361 : vector<64x128xf32>
    %c0_170 = arith.constant 0 : index
    %c0_171 = arith.constant 0 : index
    %363 = vector.load %arg22[%c0_170, %c0_171] : memref<64x128xf32, #tpu.memory_space<vmem>>, vector<64x128xf32>
    tpu.vector_store %arg22[%c0_170, %c0_171], %362 {strides = array<i32>} : memref<64x128xf32, #tpu.memory_space<vmem>>, vector<64x128xf32>,
    return
  }
  func.func @transform_0(%arg0: i32) -> (i32, i32) {
    %c0_i32 = arith.constant 0 : i32
    %c0_i32_0 = arith.constant 0 : i32
    %c0_i32_1 = arith.constant 0 : i32
    return %c0_i32, %c0_i32_0 : i32, i32
  }
  func.func @transform_1(%arg0: i32) -> (i32, i32) {
    %c0_i32 = arith.constant 0 : i32
    %c0_i32_0 = arith.constant 0 : i32
    %c0_i32_1 = arith.constant 0 : i32
    return %c0_i32, %c0_i32_0 : i32, i32
  }
  func.func @transform_2(%arg0: i32) -> (i32, i32) {
    %c0_i32 = arith.constant 0 : i32
    %c0_i32_0 = arith.constant 0 : i32
    %c0_i32_1 = arith.constant 0 : i32
    return %c0_i32, %c0_i32_0 : i32, i32
  }
  func.func @transform_3(%arg0: i32) -> (i32, i32) {
    %c0_i32 = arith.constant 0 : i32
    %c0_i32_0 = arith.constant 0 : i32
    %c0_i32_1 = arith.constant 0 : i32
    return %c0_i32, %c0_i32_0 : i32, i32
  }
  func.func @transform_4(%arg0: i32) -> (i32, i32, i32) {
    %c0_i32 = arith.constant 0 : i32
    %c0_i32_0 = arith.constant 0 : i32
    %c0_i32_1 = arith.constant 0 : i32
    %c0_i32_2 = arith.constant 0 : i32
    return %c0_i32, %c0_i32_0, %c0_i32_1 : i32, i32, i32
  }
  func.func @transform_5(%arg0: i32) -> (i32, i32, i32) {
    %c0_i32 = arith.constant 0 : i32
    %c0_i32_0 = arith.constant 0 : i32
    %c0_i32_1 = arith.constant 0 : i32
    %c0_i32_2 = arith.constant 0 : i32
    return %c0_i32, %c0_i32_0, %c0_i32_1 : i32, i32, i32
  }
  func.func @transform_6(%arg0: i32) -> (i32, i32, i32) {
    %c0_i32 = arith.constant 0 : i32
    %c0_i32_0 = arith.constant 0 : i32
    %c0_i32_1 = arith.constant 0 : i32
    %c0_i32_2 = arith.constant 0 : i32
    return %c0_i32, %c0_i32_0, %c0_i32_1 : i32, i32, i32
  }
  func.func @transform_7(%arg0: i32) -> (i32, i32, i32) {
    %c0_i32 = arith.constant 0 : i32
    %c0_i32_0 = arith.constant 0 : i32
    %c0_i32_1 = arith.constant 0 : i32
    %c0_i32_2 = arith.constant 0 : i32
    return %c0_i32, %c0_i32_0, %c0_i32_1 : i32, i32, i32
  }
  func.func @transform_8(%arg0: i32) -> (i32, i32, i32) {
    %c0_i32 = arith.constant 0 : i32
    %c0_i32_0 = arith.constant 0 : i32
    %c0_i32_1 = arith.constant 0 : i32
    %c0_i32_2 = arith.constant 0 : i32
    return %c0_i32, %c0_i32_0, %c0_i32_1 : i32, i32, i32
  }
  func.func @transform_9(%arg0: i32) -> (i32, i32, i32) {
    %c0_i32 = arith.constant 0 : i32
    %c0_i32_0 = arith.constant 0 : i32
    %c0_i32_1 = arith.constant 0 : i32
    %c0_i32_2 = arith.constant 0 : i32
    return %c0_i32, %c0_i32_0, %c0_i32_1 : i32, i32, i32
  }
  func.func @transform_10(%arg0: i32) -> (i32, i32, i32) {
    %c0_i32 = arith.constant 0 : i32
    %c0_i32_0 = arith.constant 0 : i32
    %c0_i32_1 = arith.constant 0 : i32
    %c0_i32_2 = arith.constant 0 : i32
    return %c0_i32, %c0_i32_0, %c0_i32_1 : i32, i32, i32
  }
  func.func @transform_11(%arg0: i32) -> (i32, i32, i32) {
    %c0_i32 = arith.constant 0 : i32
    %c0_i32_0 = arith.constant 0 : i32
    %c0_i32_1 = arith.constant 0 : i32
    %c0_i32_2 = arith.constant 0 : i32
    return %c0_i32, %c0_i32_0, %c0_i32_1 : i32, i32, i32
  }
  func.func @transform_12(%arg0: i32) -> (i32, i32, i32) {
    %c0_i32 = arith.constant 0 : i32
    %c0_i32_0 = arith.constant 0 : i32
    %c0_i32_1 = arith.constant 0 : i32
    %c0_i32_2 = arith.constant 0 : i32
    return %c0_i32, %c0_i32_0, %c0_i32_1 : i32, i32, i32
  }
  func.func @transform_13(%arg0: i32) -> (i32, i32, i32) {
    %c0_i32 = arith.constant 0 : i32
    %c0_i32_0 = arith.constant 0 : i32
    %c0_i32_1 = arith.constant 0 : i32
    %c0_i32_2 = arith.constant 0 : i32
    return %c0_i32, %c0_i32_0, %c0_i32_1 : i32, i32, i32
  }
  func.func @transform_14(%arg0: i32) -> (i32, i32, i32) {
    %c0_i32 = arith.constant 0 : i32
    %c0_i32_0 = arith.constant 0 : i32
    %c0_i32_1 = arith.constant 0 : i32
    %c0_i32_2 = arith.constant 0 : i32
    return %c0_i32, %c0_i32_0, %c0_i32_1 : i32, i32, i32
  }
  func.func @transform_15(%arg0: i32) -> (i32, i32, i32) {
    %c0_i32 = arith.constant 0 : i32
    %c0_i32_0 = arith.constant 0 : i32
    %c0_i32_1 = arith.constant 0 : i32
    %c0_i32_2 = arith.constant 0 : i32
    return %c0_i32, %c0_i32_0, %c0_i32_1 : i32, i32, i32
  }
  func.func @transform_16(%arg0: i32) -> (i32, i32) {
    %c0_i32 = arith.constant 0 : i32
    %c0_i32_0 = arith.constant 0 : i32
    %c0_i32_1 = arith.constant 0 : i32
    return %c0_i32, %c0_i32_0 : i32, i32
  }
  func.func @transform_17(%arg0: i32) -> (i32, i32) {
    %c0_i32 = arith.constant 0 : i32
    %c0_i32_0 = arith.constant 0 : i32
    %c0_i32_1 = arith.constant 0 : i32
    return %c0_i32, %c0_i32_0 : i32, i32
  }
  func.func @transform_18(%arg0: i32) -> (i32, i32) {
    %c0_i32 = arith.constant 0 : i32
    %c0_i32_0 = arith.constant 0 : i32
    %c0_i32_1 = arith.constant 0 : i32
    return %c0_i32, %c0_i32_0 : i32, i32
  }
  func.func @transform_19(%arg0: i32) -> (i32, i32) {
    %c0_i32 = arith.constant 0 : i32
    %c0_i32_0 = arith.constant 0 : i32
    %c0_i32_1 = arith.constant 0 : i32
    return %c0_i32, %c0_i32_0 : i32, i32
  }
  func.func @transform_20(%arg0: i32) -> (i32, i32) {
    %c0_i32 = arith.constant 0 : i32
    %c0_i32_0 = arith.constant 0 : i32
    %c0_i32_1 = arith.constant 0 : i32
    return %c0_i32, %c0_i32_0 : i32, i32
  }
  func.func @transform_21(%arg0: i32) -> (i32, i32) {
    %c0_i32 = arith.constant 0 : i32
    %c0_i32_0 = arith.constant 0 : i32
    %c0_i32_1 = arith.constant 0 : i32
    return %c0_i32, %c0_i32_0 : i32, i32
  }
}

</mosaic_0001>

<llo_original>
// kernel: tpu_custom_call.1
$region0: #{tpu_custom_call.1}
  #allocation0 [shape = 'u32[]', space=smem, size = 0x4, offset = 0x4, fixed_abs, tag = 'smem constant byte address 0x4 - core index']
  #allocation1 [shape = 'u32[144,128]{1,0:T(1,128)}', space=vmem, size = 0x12000, scoped, tag = 'internal scratch']
  %s0 = inlined_call_operand.vmem [shape: f32[64,32], index: 0, kind: input, shape index: {}]
  %s1 = inlined_call_operand.vmem [shape: f32[64,32], index: 1, kind: input, shape index: {}]
  %s2 = inlined_call_operand.vmem [shape: f32[32,32], index: 2, kind: input, shape index: {}]
  %s3 = inlined_call_operand.vmem [shape: f32[1,32], index: 3, kind: input, shape index: {}]
  %s4 = inlined_call_operand.vmem [shape: f32[2,32,96], index: 4, kind: input, shape index: {}]
  %s5 = inlined_call_operand.vmem [shape: f32[2,1,96], index: 5, kind: input, shape index: {}]
  %s6 = inlined_call_operand.vmem [shape: f32[2,32,32], index: 6, kind: input, shape index: {}]
  %s7 = inlined_call_operand.vmem [shape: f32[2,1,32], index: 7, kind: input, shape index: {}]
  %s8 = inlined_call_operand.vmem [shape: f32[2,1,32], index: 8, kind: input, shape index: {}]
  %s9 = inlined_call_operand.vmem [shape: f32[2,1,32], index: 9, kind: input, shape index: {}]
  %s10 = inlined_call_operand.vmem [shape: f32[2,32,64], index: 10, kind: input, shape index: {}]
  %s11 = inlined_call_operand.vmem [shape: f32[2,1,64], index: 11, kind: input, shape index: {}]
  %s12 = inlined_call_operand.vmem [shape: f32[2,64,32], index: 12, kind: input, shape index: {}]
  %s13 = inlined_call_operand.vmem [shape: f32[2,1,32], index: 13, kind: input, shape index: {}]
  %s14 = inlined_call_operand.vmem [shape: f32[2,1,32], index: 14, kind: input, shape index: {}]
  %s15 = inlined_call_operand.vmem [shape: f32[2,1,32], index: 15, kind: input, shape index: {}]
  %s16 = inlined_call_operand.vmem [shape: f32[32,32], index: 16, kind: input, shape index: {}]
  %s17 = inlined_call_operand.vmem [shape: f32[1,32], index: 17, kind: input, shape index: {}]
  %s18 = inlined_call_operand.vmem [shape: f32[32,128], index: 18, kind: input, shape index: {}]
  %s19 = inlined_call_operand.vmem [shape: f32[1,128], index: 19, kind: input, shape index: {}]
  %s20 = inlined_call_operand.vmem [shape: f32[64,32], index: 20, kind: output, shape index: {0}]
  %s21 = inlined_call_operand.hbm [shape: f32[64,128], index: 21, kind: output, shape index: {1}]
  %22 = xla_tuple %s20, %s21
  %s23 = sld [smem:[#allocation0]]
  $region98: #{tpu_custom_call.1} parent=0
    _
  %s25 = ssub.s32 1, %s23
  %s26 = scalar_select 0, %s25, %s23
  $region1: #{tpu_custom_call.1} parent=0
    #allocation2 [shape = 'u8[32768]{0}', space=vmem, size = 0x8000, scoped, tag = 'output window, operand 1, single buffered']
    #allocation3 [shape = 's32[1]{0}', space=sflag, size = 0x4, scoped, tag = 'scoped memory for tpu_custom_call.1']
    %27 = vsyncpa [#allocation3], 0
    // Predicated region
    $region2: #{tpu_custom_call.1} parent=1 // pred_check
      _
    $region3: #{tpu_custom_call.1} parent=1 // pred_check_branch
      %29 = sbr.rel (0) target = $region5
    $region4: #{tpu_custom_call.1} parent=1 // pred_region
      _
    $region5: #{tpu_custom_call.1} parent=1 // pred_fallthru
      _
    // Predicated region
    $region6: #{tpu_custom_call.1} parent=1 // pred_check
      _
    $region7: #{tpu_custom_call.1} parent=1 // pred_check_branch
      %31 = sbr.rel (0) target = $region9
    $region8: #{tpu_custom_call.1} parent=1 // pred_region
      _
    $region9: #{tpu_custom_call.1} parent=1 // pred_fallthru
      _
    // Predicated region
    $region10: #{tpu_custom_call.1} parent=1 // pred_check
      _
    $region11: #{tpu_custom_call.1} parent=1 // pred_check_branch
      %33 = sbr.rel (0) target = $region13
    $region12: #{tpu_custom_call.1} parent=1 // pred_region
      _
    $region13: #{tpu_custom_call.1} parent=1 // pred_fallthru
      _
    // Predicated region
    $region14: #{tpu_custom_call.1} parent=1 // pred_check
      _
    $region15: #{tpu_custom_call.1} parent=1 // pred_check_branch
      %35 = sbr.rel (0) target = $region17
    $region16: #{tpu_custom_call.1} parent=1 // pred_region
      _
    $region17: #{tpu_custom_call.1} parent=1 // pred_fallthru
      _
    // Predicated region
    $region18: #{tpu_custom_call.1} parent=1 // pred_check
      _
    $region19: #{tpu_custom_call.1} parent=1 // pred_check_branch
      %37 = sbr.rel (0) target = $region21
    $region20: #{tpu_custom_call.1} parent=1 // pred_region
      _
    $region21: #{tpu_custom_call.1} parent=1 // pred_fallthru
      _
    // Predicated region
    $region22: #{tpu_custom_call.1} parent=1 // pred_check
      _
    $region23: #{tpu_custom_call.1} parent=1 // pred_check_branch
      %39 = sbr.rel (0) target = $region25
    $region24: #{tpu_custom_call.1} parent=1 // pred_region
      _
    $region25: #{tpu_custom_call.1} parent=1 // pred_fallthru
      _
    // Predicated region
    $region26: #{tpu_custom_call.1} parent=1 // pred_check
      _
    $region27: #{tpu_custom_call.1} parent=1 // pred_check_branch
      %41 = sbr.rel (0) target = $region29
    $region28: #{tpu_custom_call.1} parent=1 // pred_region
      _
    $region29: #{tpu_custom_call.1} parent=1 // pred_fallthru
      _
    // Predicated region
    $region30: #{tpu_custom_call.1} parent=1 // pred_check
      _
    $region31: #{tpu_custom_call.1} parent=1 // pred_check_branch
      %43 = sbr.rel (0) target = $region33
    $region32: #{tpu_custom_call.1} parent=1 // pred_region
      _
    $region33: #{tpu_custom_call.1} parent=1 // pred_fallthru
      _
    // Predicated region
    $region34: #{tpu_custom_call.1} parent=1 // pred_check
      _
    $region35: #{tpu_custom_call.1} parent=1 // pred_check_branch
      %45 = sbr.rel (0) target = $region37
    $region36: #{tpu_custom_call.1} parent=1 // pred_region
      _
    $region37: #{tpu_custom_call.1} parent=1 // pred_fallthru
      _
    // Predicated region
    $region38: #{tpu_custom_call.1} parent=1 // pred_check
      _
    $region39: #{tpu_custom_call.1} parent=1 // pred_check_branch
      %47 = sbr.rel (0) target = $region41
    $region40: #{tpu_custom_call.1} parent=1 // pred_region
      _
    $region41: #{tpu_custom_call.1} parent=1 // pred_fallthru
      _
    // Predicated region
    $region42: #{tpu_custom_call.1} parent=1 // pred_check
      _
    $region43: #{tpu_custom_call.1} parent=1 // pred_check_branch
      %49 = sbr.rel (0) target = $region45
    $region44: #{tpu_custom_call.1} parent=1 // pred_region
      _
    $region45: #{tpu_custom_call.1} parent=1 // pred_fallthru
      _
    // Predicated region
    $region46: #{tpu_custom_call.1} parent=1 // pred_check
      _
    $region47: #{tpu_custom_call.1} parent=1 // pred_check_branch
      %51 = sbr.rel (0) target = $region49
    $region48: #{tpu_custom_call.1} parent=1 // pred_region
      _
    $region49: #{tpu_custom_call.1} parent=1 // pred_fallthru
      _
    // Predicated region
    $region50: #{tpu_custom_call.1} parent=1 // pred_check
      _
    $region51: #{tpu_custom_call.1} parent=1 // pred_check_branch
      %53 = sbr.rel (0) target = $region53
    $region52: #{tpu_custom_call.1} parent=1 // pred_region
      _
    $region53: #{tpu_custom_call.1} parent=1 // pred_fallthru
      _
    // Predicated region
    $region54: #{tpu_custom_call.1} parent=1 // pred_check
      _
    $region55: #{tpu_custom_call.1} parent=1 // pred_check_branch
      %55 = sbr.rel (0) target = $region57
    $region56: #{tpu_custom_call.1} parent=1 // pred_region
      _
    $region57: #{tpu_custom_call.1} parent=1 // pred_fallthru
      _
    // Predicated region
    $region58: #{tpu_custom_call.1} parent=1 // pred_check
      _
    $region59: #{tpu_custom_call.1} parent=1 // pred_check_branch
      %57 = sbr.rel (0) target = $region61
    $region60: #{tpu_custom_call.1} parent=1 // pred_region
      _
    $region61: #{tpu_custom_call.1} parent=1 // pred_fallthru
      _
    // Predicated region
    $region62: #{tpu_custom_call.1} parent=1 // pred_check
      _
    $region63: #{tpu_custom_call.1} parent=1 // pred_check_branch
      %59 = sbr.rel (0) target = $region65
    $region64: #{tpu_custom_call.1} parent=1 // pred_region
      _
    $region65: #{tpu_custom_call.1} parent=1 // pred_fallthru
      _
    // Predicated region
    $region66: #{tpu_custom_call.1} parent=1 // pred_check
      _
    $region67: #{tpu_custom_call.1} parent=1 // pred_check_branch
      %61 = sbr.rel (0) target = $region69
    $region68: #{tpu_custom_call.1} parent=1 // pred_region
      _
    $region69: #{tpu_custom_call.1} parent=1 // pred_fallthru
      _
    // Predicated region
    $region70: #{tpu_custom_call.1} parent=1 // pred_check
      _
    $region71: #{tpu_custom_call.1} parent=1 // pred_check_branch
      %63 = sbr.rel (0) target = $region73
    $region72: #{tpu_custom_call.1} parent=1 // pred_region
      _
    $region73: #{tpu_custom_call.1} parent=1 // pred_fallthru
      _
    // Predicated region
    $region74: #{tpu_custom_call.1} parent=1 // pred_check
      _
    $region75: #{tpu_custom_call.1} parent=1 // pred_check_branch
      %65 = sbr.rel (0) target = $region77
    $region76: #{tpu_custom_call.1} parent=1 // pred_region
      _
    $region77: #{tpu_custom_call.1} parent=1 // pred_fallthru
      _
    // Predicated region
    $region78: #{tpu_custom_call.1} parent=1 // pred_check
      _
    $region79: #{tpu_custom_call.1} parent=1 // pred_check_branch
      %67 = sbr.rel (0) target = $region81
    $region80: #{tpu_custom_call.1} parent=1 // pred_region
      _
    $region81: #{tpu_custom_call.1} parent=1 // pred_fallthru
      _
    %v68 = vld [vmem:[%s1] sm:$0xff]
    %v69 = vld [vmem:[%s1 + $0x8] sm:$0xff]
    %v70 = vld [vmem:[%s1 + $0x10] sm:$0xff]
    %v71 = vld [vmem:[%s1 + $0x18] sm:$0xff]
    %v72 = vld [vmem:[%s1 + $0x20] sm:$0xff]
    %v73 = vld [vmem:[%s1 + $0x28] sm:$0xff]
    %v74 = vld [vmem:[%s1 + $0x30] sm:$0xff]
    %v75 = vld [vmem:[%s1 + $0x38] sm:$0xff]
    %v76 = vld [vmem:[%s0] sm:$0xff]
    %v77 = vld [vmem:[%s0 + $0x8] sm:$0xff]
    %v78 = vld [vmem:[%s0 + $0x10] sm:$0xff]
    %v79 = vld [vmem:[%s0 + $0x18] sm:$0xff]
    %v80 = vld [vmem:[%s0 + $0x20] sm:$0xff]
    %v81 = vld [vmem:[%s0 + $0x28] sm:$0xff]
    %v82 = vld [vmem:[%s0 + $0x30] sm:$0xff]
    %v83 = vld [vmem:[%s0 + $0x38] sm:$0xff]
    %v84 = vld [vmem:[%s2] sm:$0xff]
    %v85 = vld [vmem:[%s2 + $0x8] sm:$0xff]
    %v86 = vld [vmem:[%s2 + $0x10] sm:$0xff]
    %v87 = vld [vmem:[%s2 + $0x18] sm:$0xff]
    %v88 = vld [vmem:[%s3] sm:$0x1]
    %v90 = vlaneseq
    %v91 = vshrl.u32 %v90, 7
    %v92 = vsub.s32 0, %v91
    %v93 = vrot.slane %v88, %v92
    %vm95 = vcmask 261120
    %v97 = vsel %vm95, %v76, 0
    %v100 = vsel %vm95, %v77, 0
    %v103 = vsel %vm95, %v78, 0
    %v106 = vsel %vm95, %v79, 0
    %v109 = vsel %vm95, %v80, 0
    %v112 = vsel %vm95, %v81, 0
    %v115 = vsel %vm95, %v82, 0
    %v118 = vsel %vm95, %v83, 0
    %120 = vmatprep.subr.mxu0 0.0
    %121 = vmatpush1.msra.mxu0 %v84
    %122 = vmatprep.subr.mxu0 0.0
    %123 = vmatpush1.msra.mxu0 %v85
    %124 = vmatprep.subr.mxu0 0.0
    %125 = vmatpush1.msra.mxu0 %v86
    %126 = vmatprep.subr.mxu0 0.0
    %127 = vmatpush1.msra.mxu0 %v87
    %128 = vmatprep.subr.mxu0 0.0
    %129 = vmatpush1.msra.mxu0 0.0
    %130 = vmatprep.subr.mxu0 0.0
    %131 = vmatpush1.msra.mxu0 0.0
    %132 = vmatprep.subr.mxu0 0.0
    %133 = vmatpush1.msra.mxu0 0.0
    %134 = vmatprep.subr.mxu0 0.0
    %135 = vmatpush1.msra.mxu0 0.0
    %136 = vmatprep.subr.mxu0 0.0
    %137 = vmatpush1.msra.mxu0 0.0
    %138 = vmatprep.subr.mxu0 0.0
    %139 = vmatpush1.msra.mxu0 0.0
    %140 = vmatprep.subr.mxu0 0.0
    %141 = vmatpush1.msra.mxu0 0.0
    %142 = vmatprep.subr.mxu0 0.0
    %143 = vmatpush1.msra.mxu0 0.0
    %144 = vmatprep.subr.mxu0 0.0
    %145 = vmatpush1.msra.mxu0 0.0
    %146 = vmatprep.subr.mxu0 0.0
    %147 = vmatpush1.msra.mxu0 0.0
    %148 = vmatprep.subr.mxu0 0.0
    %149 = vmatpush1.msra.mxu0 0.0
    %150 = vmatprep.subr.mxu0 0.0
    %151 = vmatpush1.msra.mxu0 0.0
    %152 = vmatprep.subr.mxu0 0.0
    %153 = vmatpush1.msra.mxu0 0.0
    %154 = vmatprep.subr.mxu0 0.0
    %155 = vmatpush1.msra.mxu0 0.0
    %156 = vmatprep.subr.mxu0 0.0
    %157 = vmatpush1.msra.mxu0 0.0
    %158 = vmatprep.subr.mxu0 0.0
    %159 = vmatpush1.msra.mxu0 0.0
    %160 = vmatprep.subr.mxu0 0.0
    %161 = vmatpush1.msra.mxu0 0.0
    %162 = vmatprep.subr.mxu0 0.0
    %163 = vmatpush1.msra.mxu0 0.0
    %164 = vmatprep.subr.mxu0 0.0
    %165 = vmatpush1.msra.mxu0 0.0
    %166 = vmatprep.subr.mxu0 0.0
    %167 = vmatpush1.msra.mxu0 0.0
    %168 = vmatprep.subr.mxu0 0.0
    %169 = vmatpush1.msra.mxu0 0.0
    %170 = vmatprep.subr.mxu0 0.0
    %171 = vmatpush1.msra.mxu0 0.0
    %172 = vmatprep.subr.mxu0 0.0
    %173 = vmatpush1.msra.mxu0 0.0
    %174 = vmatprep.subr.mxu0 0.0
    %175 = vmatpush1.msra.mxu0 0.0
    %176 = vmatprep.subr.mxu0 0.0
    %177 = vmatpush1.msra.mxu0 0.0
    %178 = vmatprep.subr.mxu0 0.0
    %179 = vmatpush1.msra.mxu0 0.0
    %180 = vmatprep.subr.mxu0 0.0
    %181 = vmatpush1.msra.mxu0 0.0
    %182 = vmatprep.subr.mxu0 0.0
    %183 = vmatpush1.msra.mxu0 0.0
    %184 = vmatprep.mubr.f32.mxu0 0.0
    %185 = vmatmul.mubr.f32.gmra.mrb[0].mxu0 %v97
    %v186 = vpop.f32.mrb[0].mxu0
    %v187 = vadd.f32 %v93, %v186
    %v188 = vpop.f32.mrb[0].mxu0
    %189 = vmatprep.mubr.f32.mxu0 0.0
    %190 = vmatmul.mubr.f32.gmra.mrb[0].mxu0 %v100
    %v191 = vpop.f32.mrb[0].mxu0
    %v192 = vadd.f32 %v93, %v191
    %v193 = vpop.f32.mrb[0].mxu0
    %194 = vmatprep.mubr.f32.mxu0 0.0
    %195 = vmatmul.mubr.f32.gmra.mrb[0].mxu0 %v103
    %v196 = vpop.f32.mrb[0].mxu0
    %v197 = vadd.f32 %v93, %v196
    %v198 = vpop.f32.mrb[0].mxu0
    %199 = vmatprep.mubr.f32.mxu0 0.0
    %200 = vmatmul.mubr.f32.gmra.mrb[0].mxu0 %v106
    %v201 = vpop.f32.mrb[0].mxu0
    %v202 = vadd.f32 %v93, %v201
    %v203 = vpop.f32.mrb[0].mxu0
    %204 = vmatprep.mubr.f32.mxu0 0.0
    %205 = vmatmul.mubr.f32.gmra.mrb[0].mxu0 %v109
    %v206 = vpop.f32.mrb[0].mxu0
    %v207 = vadd.f32 %v93, %v206
    %v208 = vpop.f32.mrb[0].mxu0
    %209 = vmatprep.mubr.f32.mxu0 0.0
    %210 = vmatmul.mubr.f32.gmra.mrb[0].mxu0 %v112
    %v211 = vpop.f32.mrb[0].mxu0
    %v212 = vadd.f32 %v93, %v211
    %v213 = vpop.f32.mrb[0].mxu0
    %214 = vmatprep.mubr.f32.mxu0 0.0
    %215 = vmatmul.mubr.f32.gmra.mrb[0].mxu0 %v115
    %v216 = vpop.f32.mrb[0].mxu0
    %v217 = vadd.f32 %v93, %v216
    %v218 = vpop.f32.mrb[0].mxu0
    %219 = vmatprep.mubr.f32.mxu0 0.0
    %220 = vmatmul.mubr.f32.gmra.mrb[0].mxu0 %v118
    %v221 = vpop.f32.mrb[0].mxu0
    %v222 = vadd.f32 %v93, %v221
    %v223 = vpop.f32.mrb[0].mxu0
    %224 = vdwg.mxu0
    %v225 = vld [vmem:[%s4] sm:$0xff]
    %v226 = vld [vmem:[%s4 + $0x8] sm:$0xff]
    %v227 = vld [vmem:[%s4 + $0x10] sm:$0xff]
    %v228 = vld [vmem:[%s4 + $0x18] sm:$0xff]
    %v229 = vld [vmem:[%s5] sm:$0x1]
    %v230 = vld [vmem:[%s6] sm:$0xff]
    %v231 = vld [vmem:[%s6 + $0x8] sm:$0xff]
    %v232 = vld [vmem:[%s6 + $0x10] sm:$0xff]
    %v233 = vld [vmem:[%s6 + $0x18] sm:$0xff]
    %v234 = vld [vmem:[%s7] sm:$0x1]
    %v235 = vadd.f32 %v187, %v68
    %v236 = vadd.f32 %v192, %v69
    %v237 = vadd.f32 %v197, %v70
    %v238 = vadd.f32 %v202, %v71
    %v239 = vadd.f32 %v207, %v72
    %v240 = vadd.f32 %v212, %v73
    %v241 = vadd.f32 %v217, %v74
    %v242 = vadd.f32 %v222, %v75
    %v244 = vlaneseq
    %v245 = vshrl.u32 %v244, 7
    %v246 = vsub.s32 0, %v245
    %v247 = vrot.slane %v229, %v246
    %v250 = vsel %vm95, %v235, 0
    %v253 = vsel %vm95, %v236, 0
    %v256 = vsel %vm95, %v237, 0
    %v259 = vsel %vm95, %v238, 0
    %v262 = vsel %vm95, %v239, 0
    %v265 = vsel %vm95, %v240, 0
    %v268 = vsel %vm95, %v241, 0
    %v271 = vsel %vm95, %v242, 0
    %273 = vmatprep.subr.mxu0 0.0
    %274 = vmatpush1.msra.mxu0 %v225
    %275 = vmatprep.subr.mxu0 0.0
    %276 = vmatpush1.msra.mxu0 %v226
    %277 = vmatprep.subr.mxu0 0.0
    %278 = vmatpush1.msra.mxu0 %v227
    %279 = vmatprep.subr.mxu0 0.0
    %280 = vmatpush1.msra.mxu0 %v228
    %281 = vmatprep.subr.mxu0 0.0
    %282 = vmatpush1.msra.mxu0 0.0
    %283 = vmatprep.subr.mxu0 0.0
    %284 = vmatpush1.msra.mxu0 0.0
    %285 = vmatprep.subr.mxu0 0.0
    %286 = vmatpush1.msra.mxu0 0.0
    %287 = vmatprep.subr.mxu0 0.0
    %288 = vmatpush1.msra.mxu0 0.0
    %289 = vmatprep.subr.mxu0 0.0
    %290 = vmatpush1.msra.mxu0 0.0
    %291 = vmatprep.subr.mxu0 0.0
    %292 = vmatpush1.msra.mxu0 0.0
    %293 = vmatprep.subr.mxu0 0.0
    %294 = vmatpush1.msra.mxu0 0.0
    %295 = vmatprep.subr.mxu0 0.0
    %296 = vmatpush1.msra.mxu0 0.0
    %297 = vmatprep.subr.mxu0 0.0
    %298 = vmatpush1.msra.mxu0 0.0
    %299 = vmatprep.subr.mxu0 0.0
    %300 = vmatpush1.msra.mxu0 0.0
    %301 = vmatprep.subr.mxu0 0.0
    %302 = vmatpush1.msra.mxu0 0.0
    %303 = vmatprep.subr.mxu0 0.0
    %304 = vmatpush1.msra.mxu0 0.0
    %305 = vmatprep.subr.mxu0 0.0
    %306 = vmatpush1.msra.mxu0 0.0
    %307 = vmatprep.subr.mxu0 0.0
    %308 = vmatpush1.msra.mxu0 0.0
    %309 = vmatprep.subr.mxu0 0.0
    %310 = vmatpush1.msra.mxu0 0.0
    %311 = vmatprep.subr.mxu0 0.0
    %312 = vmatpush1.msra.mxu0 0.0
    %313 = vmatprep.subr.mxu0 0.0
    %314 = vmatpush1.msra.mxu0 0.0
    %315 = vmatprep.subr.mxu0 0.0
    %316 = vmatpush1.msra.mxu0 0.0
    %317 = vmatprep.subr.mxu0 0.0
    %318 = vmatpush1.msra.mxu0 0.0
    %319 = vmatprep.subr.mxu0 0.0
    %320 = vmatpush1.msra.mxu0 0.0
    %321 = vmatprep.subr.mxu0 0.0
    %322 = vmatpush1.msra.mxu0 0.0
    %323 = vmatprep.subr.mxu0 0.0
    %324 = vmatpush1.msra.mxu0 0.0
    %325 = vmatprep.subr.mxu0 0.0
    %326 = vmatpush1.msra.mxu0 0.0
    %327 = vmatprep.subr.mxu0 0.0
    %328 = vmatpush1.msra.mxu0 0.0
    %329 = vmatprep.subr.mxu0 0.0
    %330 = vmatpush1.msra.mxu0 0.0
    %331 = vmatprep.subr.mxu0 0.0
    %332 = vmatpush1.msra.mxu0 0.0
    %333 = vmatprep.subr.mxu0 0.0
    %334 = vmatpush1.msra.mxu0 0.0
    %335 = vmatprep.subr.mxu0 0.0
    %336 = vmatpush1.msra.mxu0 0.0
    %337 = vmatprep.mubr.f32.mxu0 0.0
    %338 = vmatmul.mubr.f32.gmra.mrb[0].mxu0 %v250
    %v339 = vpop.f32.mrb[0].mxu0
    %v340 = vadd.f32 %v247, %v339
    %v341 = vpop.f32.mrb[0].mxu0
    %342 = vmatprep.mubr.f32.mxu0 0.0
    %343 = vmatmul.mubr.f32.gmra.mrb[0].mxu0 %v253
    %v344 = vpop.f32.mrb[0].mxu0
    %v345 = vadd.f32 %v247, %v344
    %v346 = vpop.f32.mrb[0].mxu0
    %347 = vmatprep.mubr.f32.mxu0 0.0
    %348 = vmatmul.mubr.f32.gmra.mrb[0].mxu0 %v256
    %v349 = vpop.f32.mrb[0].mxu0
    %v350 = vadd.f32 %v247, %v349
    %v351 = vpop.f32.mrb[0].mxu0
    %352 = vmatprep.mubr.f32.mxu0 0.0
    %353 = vmatmul.mubr.f32.gmra.mrb[0].mxu0 %v259
    %v354 = vpop.f32.mrb[0].mxu0
    %v355 = vadd.f32 %v247, %v354
    %v356 = vpop.f32.mrb[0].mxu0
    %357 = vmatprep.mubr.f32.mxu0 0.0
    %358 = vmatmul.mubr.f32.gmra.mrb[0].mxu0 %v262
    %v359 = vpop.f32.mrb[0].mxu0
    %v360 = vadd.f32 %v247, %v359
    %v361 = vpop.f32.mrb[0].mxu0
    %362 = vmatprep.mubr.f32.mxu0 0.0
    %363 = vmatmul.mubr.f32.gmra.mrb[0].mxu0 %v265
    %v364 = vpop.f32.mrb[0].mxu0
    %v365 = vadd.f32 %v247, %v364
    %v366 = vpop.f32.mrb[0].mxu0
    %367 = vmatprep.mubr.f32.mxu0 0.0
    %368 = vmatmul.mubr.f32.gmra.mrb[0].mxu0 %v268
    %v369 = vpop.f32.mrb[0].mxu0
    %v370 = vadd.f32 %v247, %v369
    %v371 = vpop.f32.mrb[0].mxu0
    %372 = vmatprep.mubr.f32.mxu0 0.0
    %373 = vmatmul.mubr.f32.gmra.mrb[0].mxu0 %v271
    %v374 = vpop.f32.mrb[0].mxu0
    %v375 = vadd.f32 %v247, %v374
    %v376 = vpop.f32.mrb[0].mxu0
    %377 = vdwg.mxu0
    %v379 = vlaneseq
    %v380 = vshrl.u32 %v379, 7
    %v381 = vsub.s32 0, %v380
    %v382 = vrot.slane %v234, %v381
    %v384 = vadd.f32 %v382, 0.0
    %v385 = vmul.f32 %v340, 0.35355338
    %v386 = vmul.f32 %v345, 0.35355338
    %v387 = vmul.f32 %v350, 0.35355338
    %v388 = vmul.f32 %v355, 0.35355338
    %v389 = vmul.f32 %v360, 0.35355338
    %v390 = vmul.f32 %v365, 0.35355338
    %v391 = vmul.f32 %v370, 0.35355338
    %v392 = vmul.f32 %v375, 0.35355338
    %401 = vrot.lane.b32.xlu0 %v340, 96
    %v402 = vpop.permute.xlu0 %401
    %403 = vrot.lane.b32.xlu0 %v345, 96
    %v404 = vpop.permute.xlu0 %403
    %405 = vrot.lane.b32.xlu0 %v350, 96
    %v406 = vpop.permute.xlu0 %405
    %407 = vrot.lane.b32.xlu0 %v355, 96
    %v408 = vpop.permute.xlu0 %407
    %409 = vrot.lane.b32.xlu0 %v360, 96
    %v410 = vpop.permute.xlu0 %409
    %411 = vrot.lane.b32.xlu0 %v365, 96
    %v412 = vpop.permute.xlu0 %411
    %413 = vrot.lane.b32.xlu0 %v370, 96
    %v414 = vpop.permute.xlu0 %413
    %415 = vrot.lane.b32.xlu0 %v375, 96
    %v416 = vpop.permute.xlu0 %415
    %vm417 = vcmask 64512
    %v419 = vsel %vm417, %v385, 0
    %v422 = vsel %vm417, %v386, 0
    %v425 = vsel %vm417, %v387, 0
    %v428 = vsel %vm417, %v388, 0
    %v431 = vsel %vm417, %v389, 0
    %v434 = vsel %vm417, %v390, 0
    %v437 = vsel %vm417, %v391, 0
    %v440 = vsel %vm417, %v392, 0
    %v442 = vsel %vm417, %v402, 0
    %v444 = vsel %vm417, %v404, 0
    %v446 = vsel %vm417, %v406, 0
    %v448 = vsel %vm417, %v408, 0
    %v450 = vsel %vm417, %v410, 0
    %v452 = vsel %vm417, %v412, 0
    %v454 = vsel %vm417, %v414, 0
    %v456 = vsel %vm417, %v416, 0
    %458 = vmatprep.subr.mxu0 0.0
    %459 = vmatpush1.xpose.msra.mxu0 %v442
    %460 = vmatprep.subr.mxu0 0.0
    %461 = vmatpush1.xpose.msra.mxu0 %v444
    %462 = vmatprep.subr.mxu0 0.0
    %463 = vmatpush1.xpose.msra.mxu0 %v446
    %464 = vmatprep.subr.mxu0 0.0
    %465 = vmatpush1.xpose.msra.mxu0 %v448
    %466 = vmatprep.subr.mxu0 0.0
    %467 = vmatpush1.xpose.msra.mxu0 %v450
    %468 = vmatprep.subr.mxu0 0.0
    %469 = vmatpush1.xpose.msra.mxu0 %v452
    %470 = vmatprep.subr.mxu0 0.0
    %471 = vmatpush1.xpose.msra.mxu0 %v454
    %472 = vmatprep.subr.mxu0 0.0
    %473 = vmatpush1.xpose.msra.mxu0 %v456
    %474 = vmatprep.subr.mxu0 0.0
    %475 = vmatpush1.xpose.msra.mxu0 0.0
    %476 = vmatprep.subr.mxu0 0.0
    %477 = vmatpush1.xpose.msra.mxu0 0.0
    %478 = vmatprep.subr.mxu0 0.0
    %479 = vmatpush1.xpose.msra.mxu0 0.0
    %480 = vmatprep.subr.mxu0 0.0
    %481 = vmatpush1.xpose.msra.mxu0 0.0
    %482 = vmatprep.subr.mxu0 0.0
    %483 = vmatpush1.xpose.msra.mxu0 0.0
    %484 = vmatprep.subr.mxu0 0.0
    %485 = vmatpush1.xpose.msra.mxu0 0.0
    %486 = vmatprep.subr.mxu0 0.0
    %487 = vmatpush1.xpose.msra.mxu0 0.0
    %488 = vmatprep.subr.mxu0 0.0
    %489 = vmatpush1.xpose.msra.mxu0 0.0
    %490 = vmatprep.subr.mxu0 0.0
    %491 = vmatpush1.xpose.msra.mxu0 0.0
    %492 = vmatprep.subr.mxu0 0.0
    %493 = vmatpush1.xpose.msra.mxu0 0.0
    %494 = vmatprep.subr.mxu0 0.0
    %495 = vmatpush1.xpose.msra.mxu0 0.0
    %496 = vmatprep.subr.mxu0 0.0
    %497 = vmatpush1.xpose.msra.mxu0 0.0
    %498 = vmatprep.subr.mxu0 0.0
    %499 = vmatpush1.xpose.msra.mxu0 0.0
    %500 = vmatprep.subr.mxu0 0.0
    %501 = vmatpush1.xpose.msra.mxu0 0.0
    %502 = vmatprep.subr.mxu0 0.0
    %503 = vmatpush1.xpose.msra.mxu0 0.0
    %504 = vmatprep.subr.mxu0 0.0
    %505 = vmatpush1.xpose.msra.mxu0 0.0
    %506 = vmatprep.subr.mxu0 0.0
    %507 = vmatpush1.xpose.msra.mxu0 0.0
    %508 = vmatprep.subr.mxu0 0.0
    %509 = vmatpush1.xpose.msra.mxu0 0.0
    %510 = vmatprep.subr.mxu0 0.0
    %511 = vmatpush1.xpose.msra.mxu0 0.0
    %512 = vmatprep.subr.mxu0 0.0
    %513 = vmatpush1.xpose.msra.mxu0 0.0
    %514 = vmatprep.subr.mxu0 0.0
    %515 = vmatpush1.xpose.msra.mxu0 0.0
    %516 = vmatprep.subr.mxu0 0.0
    %517 = vmatpush1.xpose.msra.mxu0 0.0
    %518 = vmatprep.subr.mxu0 0.0
    %519 = vmatpush1.xpose.msra.mxu0 0.0
    %520 = vmatprep.subr.mxu0 0.0
    %521 = vmatpush1.xpose.msra.mxu0 0.0
    %522 = vmatprep.mubr.f32.mxu0 0.0
    %523 = vmatmul.mubr.f32.gmra.mrb[0].mxu0 %v419
    %v524 = vpop.f32.mrb[0].mxu0
    %v525 = vadd.f32 0.0, %v524
    %v526 = vpop.f32.mrb[0].mxu0
    %527 = vmatprep.mubr.f32.mxu0 0.0
    %528 = vmatmul.mubr.f32.gmra.mrb[0].mxu0 %v422
    %v529 = vpop.f32.mrb[0].mxu0
    %v530 = vadd.f32 0.0, %v529
    %v531 = vpop.f32.mrb[0].mxu0
    %532 = vmatprep.mubr.f32.mxu0 0.0
    %533 = vmatmul.mubr.f32.gmra.mrb[0].mxu0 %v425
    %v534 = vpop.f32.mrb[0].mxu0
    %v535 = vadd.f32 0.0, %v534
    %v536 = vpop.f32.mrb[0].mxu0
    %537 = vmatprep.mubr.f32.mxu0 0.0
    %538 = vmatmul.mubr.f32.gmra.mrb[0].mxu0 %v428
    %v539 = vpop.f32.mrb[0].mxu0
    %v540 = vadd.f32 0.0, %v539
    %v541 = vpop.f32.mrb[0].mxu0
    %542 = vmatprep.mubr.f32.mxu0 0.0
    %543 = vmatmul.mubr.f32.gmra.mrb[0].mxu0 %v431
    %v544 = vpop.f32.mrb[0].mxu0
    %v545 = vadd.f32 0.0, %v544
    %v546 = vpop.f32.mrb[0].mxu0
    %547 = vmatprep.mubr.f32.mxu0 0.0
    %548 = vmatmul.mubr.f32.gmra.mrb[0].mxu0 %v434
    %v549 = vpop.f32.mrb[0].mxu0
    %v550 = vadd.f32 0.0, %v549
    %v551 = vpop.f32.mrb[0].mxu0
    %552 = vmatprep.mubr.f32.mxu0 0.0
    %553 = vmatmul.mubr.f32.gmra.mrb[0].mxu0 %v437
    %v554 = vpop.f32.mrb[0].mxu0
    %v555 = vadd.f32 0.0, %v554
    %v556 = vpop.f32.mrb[0].mxu0
    %557 = vmatprep.mubr.f32.mxu0 0.0
    %558 = vmatmul.mubr.f32.gmra.mrb[0].mxu0 %v440
    %v559 = vpop.f32.mrb[0].mxu0
    %v560 = vadd.f32 0.0, %v559
    %v561 = vpop.f32.mrb[0].mxu0
    %562 = vdwg.mxu0
    %vm563 = vcmask 523264
    %v564 = vsel %vm563, %v525, -inf
    %565 = vmax.xlane.f32.xlu0 %v564
    %v566 = vpop.xlane.xlu0 %565
    %v567 = vsel %vm563, %v530, -inf
    %568 = vmax.xlane.f32.xlu0 %v567
    %v569 = vpop.xlane.xlu0 %568
    %v570 = vsel %vm563, %v535, -inf
    %571 = vmax.xlane.f32.xlu0 %v570
    %v572 = vpop.xlane.xlu0 %571
    %v573 = vsel %vm563, %v540, -inf
    %574 = vmax.xlane.f32.xlu0 %v573
    %v575 = vpop.xlane.xlu0 %574
    %v576 = vsel %vm563, %v545, -inf
    %577 = vmax.xlane.f32.xlu0 %v576
    %v578 = vpop.xlane.xlu0 %577
    %v579 = vsel %vm563, %v550, -inf
    %580 = vmax.xlane.f32.xlu0 %v579
    %v581 = vpop.xlane.xlu0 %580
    %v582 = vsel %vm563, %v555, -inf
    %583 = vmax.xlane.f32.xlu0 %v582
    %v584 = vpop.xlane.xlu0 %583
    %v585 = vsel %vm563, %v560, -inf
    %586 = vmax.xlane.f32.xlu0 %v585
    %v587 = vpop.xlane.xlu0 %586
    %v588 = vsub.f32 %v525, %v566
    %v589 = vsub.f32 %v530, %v569
    %v590 = vsub.f32 %v535, %v572
    %v591 = vsub.f32 %v540, %v575
    %v592 = vsub.f32 %v545, %v578
    %v593 = vsub.f32 %v550, %v581
    %v594 = vsub.f32 %v555, %v584
    %v595 = vsub.f32 %v560, %v587
    %v596 = vmul.f32 %v588, 1.442695
    %v597 = vpow.pop %v596
    %v598 = vmul.f32 %v589, 1.442695
    %v599 = vpow.pop %v598
    %v600 = vmul.f32 %v590, 1.442695
    %v601 = vpow.pop %v600
    %v602 = vmul.f32 %v591, 1.442695
    %v603 = vpow.pop %v602
    %v604 = vmul.f32 %v592, 1.442695
    %v605 = vpow.pop %v604
    %v606 = vmul.f32 %v593, 1.442695
    %v607 = vpow.pop %v606
    %v608 = vmul.f32 %v594, 1.442695
    %v609 = vpow.pop %v608
    %v610 = vmul.f32 %v595, 1.442695
    %v611 = vpow.pop %v610
    %v612 = vsel %vm563, %v597, 0.0
    %613 = vadd.xlane.f32.xlu0 %v612
    %v614 = vpop.xlane.xlu0 %613
    %v615 = vsel %vm563, %v599, 0.0
    %616 = vadd.xlane.f32.xlu0 %v615
    %v617 = vpop.xlane.xlu0 %616
    %v618 = vsel %vm563, %v601, 0.0
    %619 = vadd.xlane.f32.xlu0 %v618
    %v620 = vpop.xlane.xlu0 %619
    %v621 = vsel %vm563, %v603, 0.0
    %622 = vadd.xlane.f32.xlu0 %v621
    %v623 = vpop.xlane.xlu0 %622
    %v624 = vsel %vm563, %v605, 0.0
    %625 = vadd.xlane.f32.xlu0 %v624
    %v626 = vpop.xlane.xlu0 %625
    %v627 = vsel %vm563, %v607, 0.0
    %628 = vadd.xlane.f32.xlu0 %v627
    %v629 = vpop.xlane.xlu0 %628
    %v630 = vsel %vm563, %v609, 0.0
    %631 = vadd.xlane.f32.xlu0 %v630
    %v632 = vpop.xlane.xlu0 %631
    %v633 = vsel %vm563, %v611, 0.0
    %634 = vadd.xlane.f32.xlu0 %v633
    %v635 = vpop.xlane.xlu0 %634
    %v636 = vrcp.pop %v614
    %v637 = vrcp.pop %v617
    %v638 = vrcp.pop %v620
    %v639 = vrcp.pop %v623
    %v640 = vrcp.pop %v626
    %v641 = vrcp.pop %v629
    %v642 = vrcp.pop %v632
    %v643 = vrcp.pop %v635
    %v644 = vmul.f32 %v597, %v636
    %v645 = vmul.f32 %v599, %v637
    %v646 = vmul.f32 %v601, %v638
    %v647 = vmul.f32 %v603, %v639
    %v648 = vmul.f32 %v605, %v640
    %v649 = vmul.f32 %v607, %v641
    %v650 = vmul.f32 %v609, %v642
    %v651 = vmul.f32 %v611, %v643
    %652 = vrot.lane.b32.xlu0 %v340, 64
    %v653 = vpop.permute.xlu0 %652
    %654 = vrot.lane.b32.xlu0 %v345, 64
    %v655 = vpop.permute.xlu0 %654
    %656 = vrot.lane.b32.xlu0 %v350, 64
    %v657 = vpop.permute.xlu0 %656
    %658 = vrot.lane.b32.xlu0 %v355, 64
    %v659 = vpop.permute.xlu0 %658
    %660 = vrot.lane.b32.xlu0 %v360, 64
    %v661 = vpop.permute.xlu0 %660
    %662 = vrot.lane.b32.xlu0 %v365, 64
    %v663 = vpop.permute.xlu0 %662
    %664 = vrot.lane.b32.xlu0 %v370, 64
    %v665 = vpop.permute.xlu0 %664
    %666 = vrot.lane.b32.xlu0 %v375, 64
    %v667 = vpop.permute.xlu0 %666
    %v677 = vsel %vm563, %v644, 0
    %v680 = vsel %vm563, %v645, 0
    %v683 = vsel %vm563, %v646, 0
    %v686 = vsel %vm563, %v647, 0
    %v689 = vsel %vm563, %v648, 0
    %v692 = vsel %vm563, %v649, 0
    %v695 = vsel %vm563, %v650, 0
    %v698 = vsel %vm563, %v651, 0
    %700 = vmatprep.subr.mxu0 0.0
    %701 = vmatpush1.msra.mxu0 %v653
    %702 = vmatprep.subr.mxu0 0.0
    %703 = vmatpush1.msra.mxu0 %v655
    %704 = vmatprep.subr.mxu0 0.0
    %705 = vmatpush1.msra.mxu0 %v657
    %706 = vmatprep.subr.mxu0 0.0
    %707 = vmatpush1.msra.mxu0 %v659
    %708 = vmatprep.subr.mxu0 0.0
    %709 = vmatpush1.msra.mxu0 %v661
    %710 = vmatprep.subr.mxu0 0.0
    %711 = vmatpush1.msra.mxu0 %v663
    %712 = vmatprep.subr.mxu0 0.0
    %713 = vmatpush1.msra.mxu0 %v665
    %714 = vmatprep.subr.mxu0 0.0
    %715 = vmatpush1.msra.mxu0 %v667
    %716 = vmatprep.subr.mxu0 0.0
    %717 = vmatpush1.msra.mxu0 0.0
    %718 = vmatprep.subr.mxu0 0.0
    %719 = vmatpush1.msra.mxu0 0.0
    %720 = vmatprep.subr.mxu0 0.0
    %721 = vmatpush1.msra.mxu0 0.0
    %722 = vmatprep.subr.mxu0 0.0
    %723 = vmatpush1.msra.mxu0 0.0
    %724 = vmatprep.subr.mxu0 0.0
    %725 = vmatpush1.msra.mxu0 0.0
    %726 = vmatprep.subr.mxu0 0.0
    %727 = vmatpush1.msra.mxu0 0.0
    %728 = vmatprep.subr.mxu0 0.0
    %729 = vmatpush1.msra.mxu0 0.0
    %730 = vmatprep.subr.mxu0 0.0
    %731 = vmatpush1.msra.mxu0 0.0
    %732 = vmatprep.subr.mxu0 0.0
    %733 = vmatpush1.msra.mxu0 0.0
    %734 = vmatprep.subr.mxu0 0.0
    %735 = vmatpush1.msra.mxu0 0.0
    %736 = vmatprep.subr.mxu0 0.0
    %737 = vmatpush1.msra.mxu0 0.0
    %738 = vmatprep.subr.mxu0 0.0
    %739 = vmatpush1.msra.mxu0 0.0
    %740 = vmatprep.subr.mxu0 0.0
    %741 = vmatpush1.msra.mxu0 0.0
    %742 = vmatprep.subr.mxu0 0.0
    %743 = vmatpush1.msra.mxu0 0.0
    %744 = vmatprep.subr.mxu0 0.0
    %745 = vmatpush1.msra.mxu0 0.0
    %746 = vmatprep.subr.mxu0 0.0
    %747 = vmatpush1.msra.mxu0 0.0
    %748 = vmatprep.subr.mxu0 0.0
    %749 = vmatpush1.msra.mxu0 0.0
    %750 = vmatprep.subr.mxu0 0.0
    %751 = vmatpush1.msra.mxu0 0.0
    %752 = vmatprep.subr.mxu0 0.0
    %753 = vmatpush1.msra.mxu0 0.0
    %754 = vmatprep.subr.mxu0 0.0
    %755 = vmatpush1.msra.mxu0 0.0
    %756 = vmatprep.subr.mxu0 0.0
    %757 = vmatpush1.msra.mxu0 0.0
    %758 = vmatprep.subr.mxu0 0.0
    %759 = vmatpush1.msra.mxu0 0.0
    %760 = vmatprep.subr.mxu0 0.0
    %761 = vmatpush1.msra.mxu0 0.0
    %762 = vmatprep.subr.mxu0 0.0
    %763 = vmatpush1.msra.mxu0 0.0
    %764 = vmatprep.mubr.f32.mxu0 0.0
    %765 = vmatmul.mubr.f32.gmra.mrb[0].mxu0 %v677
    %v766 = vpop.f32.mrb[0].mxu0
    %v767 = vadd.f32 0.0, %v766
    %v768 = vpop.f32.mrb[0].mxu0
    %769 = vmatprep.mubr.f32.mxu0 0.0
    %770 = vmatmul.mubr.f32.gmra.mrb[0].mxu0 %v680
    %v771 = vpop.f32.mrb[0].mxu0
    %v772 = vadd.f32 0.0, %v771
    %v773 = vpop.f32.mrb[0].mxu0
    %774 = vmatprep.mubr.f32.mxu0 0.0
    %775 = vmatmul.mubr.f32.gmra.mrb[0].mxu0 %v683
    %v776 = vpop.f32.mrb[0].mxu0
    %v777 = vadd.f32 0.0, %v776
    %v778 = vpop.f32.mrb[0].mxu0
    %779 = vmatprep.mubr.f32.mxu0 0.0
    %780 = vmatmul.mubr.f32.gmra.mrb[0].mxu0 %v686
    %v781 = vpop.f32.mrb[0].mxu0
    %v782 = vadd.f32 0.0, %v781
    %v783 = vpop.f32.mrb[0].mxu0
    %784 = vmatprep.mubr.f32.mxu0 0.0
    %785 = vmatmul.mubr.f32.gmra.mrb[0].mxu0 %v689
    %v786 = vpop.f32.mrb[0].mxu0
    %v787 = vadd.f32 0.0, %v786
    %v788 = vpop.f32.mrb[0].mxu0
    %789 = vmatprep.mubr.f32.mxu0 0.0
    %790 = vmatmul.mubr.f32.gmra.mrb[0].mxu0 %v692
    %v791 = vpop.f32.mrb[0].mxu0
    %v792 = vadd.f32 0.0, %v791
    %v793 = vpop.f32.mrb[0].mxu0
    %794 = vmatprep.mubr.f32.mxu0 0.0
    %795 = vmatmul.mubr.f32.gmra.mrb[0].mxu0 %v695
    %v796 = vpop.f32.mrb[0].mxu0
    %v797 = vadd.f32 0.0, %v796
    %v798 = vpop.f32.mrb[0].mxu0
    %799 = vmatprep.mubr.f32.mxu0 0.0
    %800 = vmatmul.mubr.f32.gmra.mrb[0].mxu0 %v698
    %v801 = vpop.f32.mrb[0].mxu0
    %v802 = vadd.f32 0.0, %v801
    %v803 = vpop.f32.mrb[0].mxu0
    %804 = vdwg.mxu0
    %v806 = vsel %vm417, %v767, 0
    %v809 = vsel %vm417, %v772, 0
    %v812 = vsel %vm417, %v777, 0
    %v815 = vsel %vm417, %v782, 0
    %v818 = vsel %vm417, %v787, 0
    %v821 = vsel %vm417, %v792, 0
    %v824 = vsel %vm417, %v797, 0
    %v827 = vsel %vm417, %v802, 0
    %829 = vmatprep.subr.mxu0 0.0
    %830 = vmatpush1.msra.mxu0 %v230
    %831 = vmatprep.subr.mxu0 0.0
    %832 = vmatpush1.msra.mxu0 0.0
    %833 = vmatprep.subr.mxu0 0.0
    %834 = vmatpush1.msra.mxu0 0.0
    %835 = vmatprep.subr.mxu0 0.0
    %836 = vmatpush1.msra.mxu0 0.0
    %837 = vmatprep.subr.mxu0 0.0
    %838 = vmatpush1.msra.mxu0 0.0
    %839 = vmatprep.subr.mxu0 0.0
    %840 = vmatpush1.msra.mxu0 0.0
    %841 = vmatprep.subr.mxu0 0.0
    %842 = vmatpush1.msra.mxu0 0.0
    %843 = vmatprep.subr.mxu0 0.0
    %844 = vmatpush1.msra.mxu0 0.0
    %845 = vmatprep.subr.mxu0 0.0
    %846 = vmatpush1.msra.mxu0 0.0
    %847 = vmatprep.subr.mxu0 0.0
    %848 = vmatpush1.msra.mxu0 0.0
    %849 = vmatprep.subr.mxu0 0.0
    %850 = vmatpush1.msra.mxu0 0.0
    %851 = vmatprep.subr.mxu0 0.0
    %852 = vmatpush1.msra.mxu0 0.0
    %853 = vmatprep.subr.mxu0 0.0
    %854 = vmatpush1.msra.mxu0 0.0
    %855 = vmatprep.subr.mxu0 0.0
    %856 = vmatpush1.msra.mxu0 0.0
    %857 = vmatprep.subr.mxu0 0.0
    %858 = vmatpush1.msra.mxu0 0.0
    %859 = vmatprep.subr.mxu0 0.0
    %860 = vmatpush1.msra.mxu0 0.0
    %861 = vmatprep.subr.mxu0 0.0
    %862 = vmatpush1.msra.mxu0 0.0
    %863 = vmatprep.subr.mxu0 0.0
    %864 = vmatpush1.msra.mxu0 0.0
    %865 = vmatprep.subr.mxu0 0.0
    %866 = vmatpush1.msra.mxu0 0.0
    %867 = vmatprep.subr.mxu0 0.0
    %868 = vmatpush1.msra.mxu0 0.0
    %869 = vmatprep.subr.mxu0 0.0
    %870 = vmatpush1.msra.mxu0 0.0
    %871 = vmatprep.subr.mxu0 0.0
    %872 = vmatpush1.msra.mxu0 0.0
    %873 = vmatprep.subr.mxu0 0.0
    %874 = vmatpush1.msra.mxu0 0.0
    %875 = vmatprep.subr.mxu0 0.0
    %876 = vmatpush1.msra.mxu0 0.0
    %877 = vmatprep.subr.mxu0 0.0
    %878 = vmatpush1.msra.mxu0 0.0
    %879 = vmatprep.subr.mxu0 0.0
    %880 = vmatpush1.msra.mxu0 0.0
    %881 = vmatprep.subr.mxu0 0.0
    %882 = vmatpush1.msra.mxu0 0.0
    %883 = vmatprep.subr.mxu0 0.0
    %884 = vmatpush1.msra.mxu0 0.0
    %885 = vmatprep.subr.mxu0 0.0
    %886 = vmatpush1.msra.mxu0 0.0
    %887 = vmatprep.subr.mxu0 0.0
    %888 = vmatpush1.msra.mxu0 0.0
    %889 = vmatprep.subr.mxu0 0.0
    %890 = vmatpush1.msra.mxu0 0.0
    %891 = vmatprep.subr.mxu0 0.0
    %892 = vmatpush1.msra.mxu0 0.0
    %893 = vmatprep.mubr.f32.mxu0 0.0
    %894 = vmatmul.mubr.f32.gmra.mrb[0].mxu0 %v806
    %v895 = vpop.f32.mrb[0].mxu0
    %v896 = vadd.f32 0.0, %v895
    %v897 = vpop.f32.mrb[0].mxu0
    %898 = vmatprep.mubr.f32.mxu0 0.0
    %899 = vmatmul.mubr.f32.gmra.mrb[0].mxu0 %v809
    %v900 = vpop.f32.mrb[0].mxu0
    %v901 = vadd.f32 0.0, %v900
    %v902 = vpop.f32.mrb[0].mxu0
    %903 = vmatprep.mubr.f32.mxu0 0.0
    %904 = vmatmul.mubr.f32.gmra.mrb[0].mxu0 %v812
    %v905 = vpop.f32.mrb[0].mxu0
    %v906 = vadd.f32 0.0, %v905
    %v907 = vpop.f32.mrb[0].mxu0
    %908 = vmatprep.mubr.f32.mxu0 0.0
    %909 = vmatmul.mubr.f32.gmra.mrb[0].mxu0 %v815
    %v910 = vpop.f32.mrb[0].mxu0
    %v911 = vadd.f32 0.0, %v910
    %v912 = vpop.f32.mrb[0].mxu0
    %913 = vmatprep.mubr.f32.mxu0 0.0
    %914 = vmatmul.mubr.f32.gmra.mrb[0].mxu0 %v818
    %v915 = vpop.f32.mrb[0].mxu0
    %v916 = vadd.f32 0.0, %v915
    %v917 = vpop.f32.mrb[0].mxu0
    %918 = vmatprep.mubr.f32.mxu0 0.0
    %919 = vmatmul.mubr.f32.gmra.mrb[0].mxu0 %v821
    %v920 = vpop.f32.mrb[0].mxu0
    %v921 = vadd.f32 0.0, %v920
    %v922 = vpop.f32.mrb[0].mxu0
    %923 = vmatprep.mubr.f32.mxu0 0.0
    %924 = vmatmul.mubr.f32.gmra.mrb[0].mxu0 %v824
    %v925 = vpop.f32.mrb[0].mxu0
    %v926 = vadd.f32 0.0, %v925
    %v927 = vpop.f32.mrb[0].mxu0
    %928 = vmatprep.mubr.f32.mxu0 0.0
    %929 = vmatmul.mubr.f32.gmra.mrb[0].mxu0 %v827
    %v930 = vpop.f32.mrb[0].mxu0
    %v931 = vadd.f32 0.0, %v930
    %v932 = vpop.f32.mrb[0].mxu0
    %933 = vdwg.mxu0
    %v934 = vadd.f32 %v384, %v896
    %v935 = vadd.f32 %v384, %v901
    %v936 = vadd.f32 %v384, %v906
    %v937 = vadd.f32 %v384, %v911
    %v938 = vadd.f32 %v384, %v916
    %v939 = vadd.f32 %v384, %v921
    %v940 = vadd.f32 %v384, %v926
    %v941 = vadd.f32 %v384, %v931
    %942 = vrot.lane.b32.xlu0 %v385, 120
    %v943 = vpop.permute.xlu0 %942
    %944 = vrot.lane.b32.xlu0 %v386, 120
    %v945 = vpop.permute.xlu0 %944
    %946 = vrot.lane.b32.xlu0 %v387, 120
    %v947 = vpop.permute.xlu0 %946
    %948 = vrot.lane.b32.xlu0 %v388, 120
    %v949 = vpop.permute.xlu0 %948
    %950 = vrot.lane.b32.xlu0 %v389, 120
    %v951 = vpop.permute.xlu0 %950
    %952 = vrot.lane.b32.xlu0 %v390, 120
    %v953 = vpop.permute.xlu0 %952
    %954 = vrot.lane.b32.xlu0 %v391, 120
    %v955 = vpop.permute.xlu0 %954
    %956 = vrot.lane.b32.xlu0 %v392, 120
    %v957 = vpop.permute.xlu0 %956
    %958 = vrot.lane.b32.xlu0 %v340, 88
    %v959 = vpop.permute.xlu0 %958
    %960 = vrot.lane.b32.xlu0 %v345, 88
    %v961 = vpop.permute.xlu0 %960
    %962 = vrot.lane.b32.xlu0 %v350, 88
    %v963 = vpop.permute.xlu0 %962
    %964 = vrot.lane.b32.xlu0 %v355, 88
    %v965 = vpop.permute.xlu0 %964
    %966 = vrot.lane.b32.xlu0 %v360, 88
    %v967 = vpop.permute.xlu0 %966
    %968 = vrot.lane.b32.xlu0 %v365, 88
    %v969 = vpop.permute.xlu0 %968
    %970 = vrot.lane.b32.xlu0 %v370, 88
    %v971 = vpop.permute.xlu0 %970
    %972 = vrot.lane.b32.xlu0 %v375, 88
    %v973 = vpop.permute.xlu0 %972
    %v974 = vsel %vm417, %v943, 0
    %v976 = vsel %vm417, %v945, 0
    %v978 = vsel %vm417, %v947, 0
    %v980 = vsel %vm417, %v949, 0
    %v982 = vsel %vm417, %v951, 0
    %v984 = vsel %vm417, %v953, 0
    %v986 = vsel %vm417, %v955, 0
    %v988 = vsel %vm417, %v957, 0
    %v990 = vsel %vm417, %v959, 0
    %v992 = vsel %vm417, %v961, 0
    %v994 = vsel %vm417, %v963, 0
    %v996 = vsel %vm417, %v965, 0
    %v998 = vsel %vm417, %v967, 0
    %v1000 = vsel %vm417, %v969, 0
    %v1002 = vsel %vm417, %v971, 0
    %v1004 = vsel %vm417, %v973, 0
    %1006 = vmatprep.subr.mxu0 0.0
    %1007 = vmatpush1.xpose.msra.mxu0 %v990
    %1008 = vmatprep.subr.mxu0 0.0
    %1009 = vmatpush1.xpose.msra.mxu0 %v992
    %1010 = vmatprep.subr.mxu0 0.0
    %1011 = vmatpush1.xpose.msra.mxu0 %v994
    %1012 = vmatprep.subr.mxu0 0.0
    %1013 = vmatpush1.xpose.msra.mxu0 %v996
    %1014 = vmatprep.subr.mxu0 0.0
    %1015 = vmatpush1.xpose.msra.mxu0 %v998
    %1016 = vmatprep.subr.mxu0 0.0
    %1017 = vmatpush1.xpose.msra.mxu0 %v1000
    %1018 = vmatprep.subr.mxu0 0.0
    %1019 = vmatpush1.xpose.msra.mxu0 %v1002
    %1020 = vmatprep.subr.mxu0 0.0
    %1021 = vmatpush1.xpose.msra.mxu0 %v1004
    %1022 = vmatprep.subr.mxu0 0.0
    %1023 = vmatpush1.xpose.msra.mxu0 0.0
    %1024 = vmatprep.subr.mxu0 0.0
    %1025 = vmatpush1.xpose.msra.mxu0 0.0
    %1026 = vmatprep.subr.mxu0 0.0
    %1027 = vmatpush1.xpose.msra.mxu0 0.0
    %1028 = vmatprep.subr.mxu0 0.0
    %1029 = vmatpush1.xpose.msra.mxu0 0.0
    %1030 = vmatprep.subr.mxu0 0.0
    %1031 = vmatpush1.xpose.msra.mxu0 0.0
    %1032 = vmatprep.subr.mxu0 0.0
    %1033 = vmatpush1.xpose.msra.mxu0 0.0
    %1034 = vmatprep.subr.mxu0 0.0
    %1035 = vmatpush1.xpose.msra.mxu0 0.0
    %1036 = vmatprep.subr.mxu0 0.0
    %1037 = vmatpush1.xpose.msra.mxu0 0.0
    %1038 = vmatprep.subr.mxu0 0.0
    %1039 = vmatpush1.xpose.msra.mxu0 0.0
    %1040 = vmatprep.subr.mxu0 0.0
    %1041 = vmatpush1.xpose.msra.mxu0 0.0
    %1042 = vmatprep.subr.mxu0 0.0
    %1043 = vmatpush1.xpose.msra.mxu0 0.0
    %1044 = vmatprep.subr.mxu0 0.0
    %1045 = vmatpush1.xpose.msra.mxu0 0.0
    %1046 = vmatprep.subr.mxu0 0.0
    %1047 = vmatpush1.xpose.msra.mxu0 0.0
    %1048 = vmatprep.subr.mxu0 0.0
    %1049 = vmatpush1.xpose.msra.mxu0 0.0
    %1050 = vmatprep.subr.mxu0 0.0
    %1051 = vmatpush1.xpose.msra.mxu0 0.0
    %1052 = vmatprep.subr.mxu0 0.0
    %1053 = vmatpush1.xpose.msra.mxu0 0.0
    %1054 = vmatprep.subr.mxu0 0.0
    %1055 = vmatpush1.xpose.msra.mxu0 0.0
    %1056 = vmatprep.subr.mxu0 0.0
    %1057 = vmatpush1.xpose.msra.mxu0 0.0
    %1058 = vmatprep.subr.mxu0 0.0
    %1059 = vmatpush1.xpose.msra.mxu0 0.0
    %1060 = vmatprep.subr.mxu0 0.0
    %1061 = vmatpush1.xpose.msra.mxu0 0.0
    %1062 = vmatprep.subr.mxu0 0.0
    %1063 = vmatpush1.xpose.msra.mxu0 0.0
    %1064 = vmatprep.subr.mxu0 0.0
    %1065 = vmatpush1.xpose.msra.mxu0 0.0
    %1066 = vmatprep.subr.mxu0 0.0
    %1067 = vmatpush1.xpose.msra.mxu0 0.0
    %1068 = vmatprep.subr.mxu0 0.0
    %1069 = vmatpush1.xpose.msra.mxu0 0.0
    %1070 = vmatprep.mubr.f32.mxu0 0.0
    %1071 = vmatmul.mubr.f32.gmra.mrb[0].mxu0 %v974
    %v1072 = vpop.f32.mrb[0].mxu0
    %v1073 = vadd.f32 0.0, %v1072
    %v1074 = vpop.f32.mrb[0].mxu0
    %1075 = vmatprep.mubr.f32.mxu0 0.0
    %1076 = vmatmul.mubr.f32.gmra.mrb[0].mxu0 %v976
    %v1077 = vpop.f32.mrb[0].mxu0
    %v1078 = vadd.f32 0.0, %v1077
    %v1079 = vpop.f32.mrb[0].mxu0
    %1080 = vmatprep.mubr.f32.mxu0 0.0
    %1081 = vmatmul.mubr.f32.gmra.mrb[0].mxu0 %v978
    %v1082 = vpop.f32.mrb[0].mxu0
    %v1083 = vadd.f32 0.0, %v1082
    %v1084 = vpop.f32.mrb[0].mxu0
    %1085 = vmatprep.mubr.f32.mxu0 0.0
    %1086 = vmatmul.mubr.f32.gmra.mrb[0].mxu0 %v980
    %v1087 = vpop.f32.mrb[0].mxu0
    %v1088 = vadd.f32 0.0, %v1087
    %v1089 = vpop.f32.mrb[0].mxu0
    %1090 = vmatprep.mubr.f32.mxu0 0.0
    %1091 = vmatmul.mubr.f32.gmra.mrb[0].mxu0 %v982
    %v1092 = vpop.f32.mrb[0].mxu0
    %v1093 = vadd.f32 0.0, %v1092
    %v1094 = vpop.f32.mrb[0].mxu0
    %1095 = vmatprep.mubr.f32.mxu0 0.0
    %1096 = vmatmul.mubr.f32.gmra.mrb[0].mxu0 %v984
    %v1097 = vpop.f32.mrb[0].mxu0
    %v1098 = vadd.f32 0.0, %v1097
    %v1099 = vpop.f32.mrb[0].mxu0
    %1100 = vmatprep.mubr.f32.mxu0 0.0
    %1101 = vmatmul.mubr.f32.gmra.mrb[0].mxu0 %v986
    %v1102 = vpop.f32.mrb[0].mxu0
    %v1103 = vadd.f32 0.0, %v1102
    %v1104 = vpop.f32.mrb[0].mxu0
    %1105 = vmatprep.mubr.f32.mxu0 0.0
    %1106 = vmatmul.mubr.f32.gmra.mrb[0].mxu0 %v988
    %v1107 = vpop.f32.mrb[0].mxu0
    %v1108 = vadd.f32 0.0, %v1107
    %v1109 = vpop.f32.mrb[0].mxu0
    %1110 = vdwg.mxu0
    %v1111 = vsel %vm563, %v1073, -inf
    %1112 = vmax.xlane.f32.xlu0 %v1111
    %v1113 = vpop.xlane.xlu0 %1112
    %v1114 = vsel %vm563, %v1078, -inf
    %1115 = vmax.xlane.f32.xlu0 %v1114
    %v1116 = vpop.xlane.xlu0 %1115
    %v1117 = vsel %vm563, %v1083, -inf
    %1118 = vmax.xlane.f32.xlu0 %v1117
    %v1119 = vpop.xlane.xlu0 %1118
    %v1120 = vsel %vm563, %v1088, -inf
    %1121 = vmax.xlane.f32.xlu0 %v1120
    %v1122 = vpop.xlane.xlu0 %1121
    %v1123 = vsel %vm563, %v1093, -inf
    %1124 = vmax.xlane.f32.xlu0 %v1123
    %v1125 = vpop.xlane.xlu0 %1124
    %v1126 = vsel %vm563, %v1098, -inf
    %1127 = vmax.xlane.f32.xlu0 %v1126
    %v1128 = vpop.xlane.xlu0 %1127
    %v1129 = vsel %vm563, %v1103, -inf
    %1130 = vmax.xlane.f32.xlu0 %v1129
    %v1131 = vpop.xlane.xlu0 %1130
    %v1132 = vsel %vm563, %v1108, -inf
    %1133 = vmax.xlane.f32.xlu0 %v1132
    %v1134 = vpop.xlane.xlu0 %1133
    %v1135 = vsub.f32 %v1073, %v1113
    %v1136 = vsub.f32 %v1078, %v1116
    %v1137 = vsub.f32 %v1083, %v1119
    %v1138 = vsub.f32 %v1088, %v1122
    %v1139 = vsub.f32 %v1093, %v1125
    %v1140 = vsub.f32 %v1098, %v1128
    %v1141 = vsub.f32 %v1103, %v1131
    %v1142 = vsub.f32 %v1108, %v1134
    %v1143 = vmul.f32 %v1135, 1.442695
    %v1144 = vpow.pop %v1143
    %v1145 = vmul.f32 %v1136, 1.442695
    %v1146 = vpow.pop %v1145
    %v1147 = vmul.f32 %v1137, 1.442695
    %v1148 = vpow.pop %v1147
    %v1149 = vmul.f32 %v1138, 1.442695
    %v1150 = vpow.pop %v1149
    %v1151 = vmul.f32 %v1139, 1.442695
    %v1152 = vpow.pop %v1151
    %v1153 = vmul.f32 %v1140, 1.442695
    %v1154 = vpow.pop %v1153
    %v1155 = vmul.f32 %v1141, 1.442695
    %v1156 = vpow.pop %v1155
    %v1157 = vmul.f32 %v1142, 1.442695
    %v1158 = vpow.pop %v1157
    %v1159 = vsel %vm563, %v1144, 0.0
    %1160 = vadd.xlane.f32.xlu0 %v1159
    %v1161 = vpop.xlane.xlu0 %1160
    %v1162 = vsel %vm563, %v1146, 0.0
    %1163 = vadd.xlane.f32.xlu0 %v1162
    %v1164 = vpop.xlane.xlu0 %1163
    %v1165 = vsel %vm563, %v1148, 0.0
    %1166 = vadd.xlane.f32.xlu0 %v1165
    %v1167 = vpop.xlane.xlu0 %1166
    %v1168 = vsel %vm563, %v1150, 0.0
    %1169 = vadd.xlane.f32.xlu0 %v1168
    %v1170 = vpop.xlane.xlu0 %1169
    %v1171 = vsel %vm563, %v1152, 0.0
    %1172 = vadd.xlane.f32.xlu0 %v1171
    %v1173 = vpop.xlane.xlu0 %1172
    %v1174 = vsel %vm563, %v1154, 0.0
    %1175 = vadd.xlane.f32.xlu0 %v1174
    %v1176 = vpop.xlane.xlu0 %1175
    %v1177 = vsel %vm563, %v1156, 0.0
    %1178 = vadd.xlane.f32.xlu0 %v1177
    %v1179 = vpop.xlane.xlu0 %1178
    %v1180 = vsel %vm563, %v1158, 0.0
    %1181 = vadd.xlane.f32.xlu0 %v1180
    %v1182 = vpop.xlane.xlu0 %1181
    %v1183 = vrcp.pop %v1161
    %v1184 = vrcp.pop %v1164
    %v1185 = vrcp.pop %v1167
    %v1186 = vrcp.pop %v1170
    %v1187 = vrcp.pop %v1173
    %v1188 = vrcp.pop %v1176
    %v1189 = vrcp.pop %v1179
    %v1190 = vrcp.pop %v1182
    %v1191 = vmul.f32 %v1144, %v1183
    %v1192 = vmul.f32 %v1146, %v1184
    %v1193 = vmul.f32 %v1148, %v1185
    %v1194 = vmul.f32 %v1150, %v1186
    %v1195 = vmul.f32 %v1152, %v1187
    %v1196 = vmul.f32 %v1154, %v1188
    %v1197 = vmul.f32 %v1156, %v1189
    %v1198 = vmul.f32 %v1158, %v1190
    %1199 = vrot.lane.b32.xlu0 %v340, 56
    %v1200 = vpop.permute.xlu0 %1199
    %1201 = vrot.lane.b32.xlu0 %v345, 56
    %v1202 = vpop.permute.xlu0 %1201
    %1203 = vrot.lane.b32.xlu0 %v350, 56
    %v1204 = vpop.permute.xlu0 %1203
    %1205 = vrot.lane.b32.xlu0 %v355, 56
    %v1206 = vpop.permute.xlu0 %1205
    %1207 = vrot.lane.b32.xlu0 %v360, 56
    %v1208 = vpop.permute.xlu0 %1207
    %1209 = vrot.lane.b32.xlu0 %v365, 56
    %v1210 = vpop.permute.xlu0 %1209
    %1211 = vrot.lane.b32.xlu0 %v370, 56
    %v1212 = vpop.permute.xlu0 %1211
    %1213 = vrot.lane.b32.xlu0 %v375, 56
    %v1214 = vpop.permute.xlu0 %1213
    %v1224 = vsel %vm563, %v1191, 0
    %v1227 = vsel %vm563, %v1192, 0
    %v1230 = vsel %vm563, %v1193, 0
    %v1233 = vsel %vm563, %v1194, 0
    %v1236 = vsel %vm563, %v1195, 0
    %v1239 = vsel %vm563, %v1196, 0
    %v1242 = vsel %vm563, %v1197, 0
    %v1245 = vsel %vm563, %v1198, 0
    %1247 = vmatprep.subr.mxu0 0.0
    %1248 = vmatpush1.msra.mxu0 %v1200
    %1249 = vmatprep.subr.mxu0 0.0
    %1250 = vmatpush1.msra.mxu0 %v1202
    %1251 = vmatprep.subr.mxu0 0.0
    %1252 = vmatpush1.msra.mxu0 %v1204
    %1253 = vmatprep.subr.mxu0 0.0
    %1254 = vmatpush1.msra.mxu0 %v1206
    %1255 = vmatprep.subr.mxu0 0.0
    %1256 = vmatpush1.msra.mxu0 %v1208
    %1257 = vmatprep.subr.mxu0 0.0
    %1258 = vmatpush1.msra.mxu0 %v1210
    %1259 = vmatprep.subr.mxu0 0.0
    %1260 = vmatpush1.msra.mxu0 %v1212
    %1261 = vmatprep.subr.mxu0 0.0
    %1262 = vmatpush1.msra.mxu0 %v1214
    %1263 = vmatprep.subr.mxu0 0.0
    %1264 = vmatpush1.msra.mxu0 0.0
    %1265 = vmatprep.subr.mxu0 0.0
    %1266 = vmatpush1.msra.mxu0 0.0
    %1267 = vmatprep.subr.mxu0 0.0
    %1268 = vmatpush1.msra.mxu0 0.0
    %1269 = vmatprep.subr.mxu0 0.0
    %1270 = vmatpush1.msra.mxu0 0.0
    %1271 = vmatprep.subr.mxu0 0.0
    %1272 = vmatpush1.msra.mxu0 0.0
    %1273 = vmatprep.subr.mxu0 0.0
    %1274 = vmatpush1.msra.mxu0 0.0
    %1275 = vmatprep.subr.mxu0 0.0
    %1276 = vmatpush1.msra.mxu0 0.0
    %1277 = vmatprep.subr.mxu0 0.0
    %1278 = vmatpush1.msra.mxu0 0.0
    %1279 = vmatprep.subr.mxu0 0.0
    %1280 = vmatpush1.msra.mxu0 0.0
    %1281 = vmatprep.subr.mxu0 0.0
    %1282 = vmatpush1.msra.mxu0 0.0
    %1283 = vmatprep.subr.mxu0 0.0
    %1284 = vmatpush1.msra.mxu0 0.0
    %1285 = vmatprep.subr.mxu0 0.0
    %1286 = vmatpush1.msra.mxu0 0.0
    %1287 = vmatprep.subr.mxu0 0.0
    %1288 = vmatpush1.msra.mxu0 0.0
    %1289 = vmatprep.subr.mxu0 0.0
    %1290 = vmatpush1.msra.mxu0 0.0
    %1291 = vmatprep.subr.mxu0 0.0
    %1292 = vmatpush1.msra.mxu0 0.0
    %1293 = vmatprep.subr.mxu0 0.0
    %1294 = vmatpush1.msra.mxu0 0.0
    %1295 = vmatprep.subr.mxu0 0.0
    %1296 = vmatpush1.msra.mxu0 0.0
    %1297 = vmatprep.subr.mxu0 0.0
    %1298 = vmatpush1.msra.mxu0 0.0
    %1299 = vmatprep.subr.mxu0 0.0
    %1300 = vmatpush1.msra.mxu0 0.0
    %1301 = vmatprep.subr.mxu0 0.0
    %1302 = vmatpush1.msra.mxu0 0.0
    %1303 = vmatprep.subr.mxu0 0.0
    %1304 = vmatpush1.msra.mxu0 0.0
    %1305 = vmatprep.subr.mxu0 0.0
    %1306 = vmatpush1.msra.mxu0 0.0
    %1307 = vmatprep.subr.mxu0 0.0
    %1308 = vmatpush1.msra.mxu0 0.0
    %1309 = vmatprep.subr.mxu0 0.0
    %1310 = vmatpush1.msra.mxu0 0.0
    %1311 = vmatprep.mubr.f32.mxu0 0.0
    %1312 = vmatmul.mubr.f32.gmra.mrb[0].mxu0 %v1224
    %v1313 = vpop.f32.mrb[0].mxu0
    %v1314 = vadd.f32 0.0, %v1313
    %v1315 = vpop.f32.mrb[0].mxu0
    %1316 = vmatprep.mubr.f32.mxu0 0.0
    %1317 = vmatmul.mubr.f32.gmra.mrb[0].mxu0 %v1227
    %v1318 = vpop.f32.mrb[0].mxu0
    %v1319 = vadd.f32 0.0, %v1318
    %v1320 = vpop.f32.mrb[0].mxu0
    %1321 = vmatprep.mubr.f32.mxu0 0.0
    %1322 = vmatmul.mubr.f32.gmra.mrb[0].mxu0 %v1230
    %v1323 = vpop.f32.mrb[0].mxu0
    %v1324 = vadd.f32 0.0, %v1323
    %v1325 = vpop.f32.mrb[0].mxu0
    %1326 = vmatprep.mubr.f32.mxu0 0.0
    %1327 = vmatmul.mubr.f32.gmra.mrb[0].mxu0 %v1233
    %v1328 = vpop.f32.mrb[0].mxu0
    %v1329 = vadd.f32 0.0, %v1328
    %v1330 = vpop.f32.mrb[0].mxu0
    %1331 = vmatprep.mubr.f32.mxu0 0.0
    %1332 = vmatmul.mubr.f32.gmra.mrb[0].mxu0 %v1236
    %v1333 = vpop.f32.mrb[0].mxu0
    %v1334 = vadd.f32 0.0, %v1333
    %v1335 = vpop.f32.mrb[0].mxu0
    %1336 = vmatprep.mubr.f32.mxu0 0.0
    %1337 = vmatmul.mubr.f32.gmra.mrb[0].mxu0 %v1239
    %v1338 = vpop.f32.mrb[0].mxu0
    %v1339 = vadd.f32 0.0, %v1338
    %v1340 = vpop.f32.mrb[0].mxu0
    %1341 = vmatprep.mubr.f32.mxu0 0.0
    %1342 = vmatmul.mubr.f32.gmra.mrb[0].mxu0 %v1242
    %v1343 = vpop.f32.mrb[0].mxu0
    %v1344 = vadd.f32 0.0, %v1343
    %v1345 = vpop.f32.mrb[0].mxu0
    %1346 = vmatprep.mubr.f32.mxu0 0.0
    %1347 = vmatmul.mubr.f32.gmra.mrb[0].mxu0 %v1245
    %v1348 = vpop.f32.mrb[0].mxu0
    %v1349 = vadd.f32 0.0, %v1348
    %v1350 = vpop.f32.mrb[0].mxu0
    %1351 = vdwg.mxu0
    %v1353 = vsel %vm417, %v1314, 0
    %v1356 = vsel %vm417, %v1319, 0
    %v1359 = vsel %vm417, %v1324, 0
    %v1362 = vsel %vm417, %v1329, 0
    %v1365 = vsel %vm417, %v1334, 0
    %v1368 = vsel %vm417, %v1339, 0
    %v1371 = vsel %vm417, %v1344, 0
    %v1374 = vsel %vm417, %v1349, 0
    %1376 = vmatprep.subr.mxu0 0.0
    %1377 = vmatpush1.msra.mxu0 %v231
    %1378 = vmatprep.subr.mxu0 0.0
    %1379 = vmatpush1.msra.mxu0 0.0
    %1380 = vmatprep.subr.mxu0 0.0
    %1381 = vmatpush1.msra.mxu0 0.0
    %1382 = vmatprep.subr.mxu0 0.0
    %1383 = vmatpush1.msra.mxu0 0.0
    %1384 = vmatprep.subr.mxu0 0.0
    %1385 = vmatpush1.msra.mxu0 0.0
    %1386 = vmatprep.subr.mxu0 0.0
    %1387 = vmatpush1.msra.mxu0 0.0
    %1388 = vmatprep.subr.mxu0 0.0
    %1389 = vmatpush1.msra.mxu0 0.0
    %1390 = vmatprep.subr.mxu0 0.0
    %1391 = vmatpush1.msra.mxu0 0.0
    %1392 = vmatprep.subr.mxu0 0.0
    %1393 = vmatpush1.msra.mxu0 0.0
    %1394 = vmatprep.subr.mxu0 0.0
    %1395 = vmatpush1.msra.mxu0 0.0
    %1396 = vmatprep.subr.mxu0 0.0
    %1397 = vmatpush1.msra.mxu0 0.0
    %1398 = vmatprep.subr.mxu0 0.0
    %1399 = vmatpush1.msra.mxu0 0.0
    %1400 = vmatprep.subr.mxu0 0.0
    %1401 = vmatpush1.msra.mxu0 0.0
    %1402 = vmatprep.subr.mxu0 0.0
    %1403 = vmatpush1.msra.mxu0 0.0
    %1404 = vmatprep.subr.mxu0 0.0
    %1405 = vmatpush1.msra.mxu0 0.0
    %1406 = vmatprep.subr.mxu0 0.0
    %1407 = vmatpush1.msra.mxu0 0.0
    %1408 = vmatprep.subr.mxu0 0.0
    %1409 = vmatpush1.msra.mxu0 0.0
    %1410 = vmatprep.subr.mxu0 0.0
    %1411 = vmatpush1.msra.mxu0 0.0
    %1412 = vmatprep.subr.mxu0 0.0
    %1413 = vmatpush1.msra.mxu0 0.0
    %1414 = vmatprep.subr.mxu0 0.0
    %1415 = vmatpush1.msra.mxu0 0.0
    %1416 = vmatprep.subr.mxu0 0.0
    %1417 = vmatpush1.msra.mxu0 0.0
    %1418 = vmatprep.subr.mxu0 0.0
    %1419 = vmatpush1.msra.mxu0 0.0
    %1420 = vmatprep.subr.mxu0 0.0
    %1421 = vmatpush1.msra.mxu0 0.0
    %1422 = vmatprep.subr.mxu0 0.0
    %1423 = vmatpush1.msra.mxu0 0.0
    %1424 = vmatprep.subr.mxu0 0.0
    %1425 = vmatpush1.msra.mxu0 0.0
    %1426 = vmatprep.subr.mxu0 0.0
    %1427 = vmatpush1.msra.mxu0 0.0
    %1428 = vmatprep.subr.mxu0 0.0
    %1429 = vmatpush1.msra.mxu0 0.0
    %1430 = vmatprep.subr.mxu0 0.0
    %1431 = vmatpush1.msra.mxu0 0.0
    %1432 = vmatprep.subr.mxu0 0.0
    %1433 = vmatpush1.msra.mxu0 0.0
    %1434 = vmatprep.subr.mxu0 0.0
    %1435 = vmatpush1.msra.mxu0 0.0
    %1436 = vmatprep.subr.mxu0 0.0
    %1437 = vmatpush1.msra.mxu0 0.0
    %1438 = vmatprep.subr.mxu0 0.0
    %1439 = vmatpush1.msra.mxu0 0.0
    %1440 = vmatprep.mubr.f32.mxu0 0.0
    %1441 = vmatmul.mubr.f32.gmra.mrb[0].mxu0 %v1353
    %v1442 = vpop.f32.mrb[0].mxu0
    %v1443 = vadd.f32 0.0, %v1442
    %v1444 = vpop.f32.mrb[0].mxu0
    %1445 = vmatprep.mubr.f32.mxu0 0.0
    %1446 = vmatmul.mubr.f32.gmra.mrb[0].mxu0 %v1356
    %v1447 = vpop.f32.mrb[0].mxu0
    %v1448 = vadd.f32 0.0, %v1447
    %v1449 = vpop.f32.mrb[0].mxu0
    %1450 = vmatprep.mubr.f32.mxu0 0.0
    %1451 = vmatmul.mubr.f32.gmra.mrb[0].mxu0 %v1359
    %v1452 = vpop.f32.mrb[0].mxu0
    %v1453 = vadd.f32 0.0, %v1452
    %v1454 = vpop.f32.mrb[0].mxu0
    %1455 = vmatprep.mubr.f32.mxu0 0.0
    %1456 = vmatmul.mubr.f32.gmra.mrb[0].mxu0 %v1362
    %v1457 = vpop.f32.mrb[0].mxu0
    %v1458 = vadd.f32 0.0, %v1457
    %v1459 = vpop.f32.mrb[0].mxu0
    %1460 = vmatprep.mubr.f32.mxu0 0.0
    %1461 = vmatmul.mubr.f32.gmra.mrb[0].mxu0 %v1365
    %v1462 = vpop.f32.mrb[0].mxu0
    %v1463 = vadd.f32 0.0, %v1462
    %v1464 = vpop.f32.mrb[0].mxu0
    %1465 = vmatprep.mubr.f32.mxu0 0.0
    %1466 = vmatmul.mubr.f32.gmra.mrb[0].mxu0 %v1368
    %v1467 = vpop.f32.mrb[0].mxu0
    %v1468 = vadd.f32 0.0, %v1467
    %v1469 = vpop.f32.mrb[0].mxu0
    %1470 = vmatprep.mubr.f32.mxu0 0.0
    %1471 = vmatmul.mubr.f32.gmra.mrb[0].mxu0 %v1371
    %v1472 = vpop.f32.mrb[0].mxu0
    %v1473 = vadd.f32 0.0, %v1472
    %v1474 = vpop.f32.mrb[0].mxu0
    %1475 = vmatprep.mubr.f32.mxu0 0.0
    %1476 = vmatmul.mubr.f32.gmra.mrb[0].mxu0 %v1374
    %v1477 = vpop.f32.mrb[0].mxu0
    %v1478 = vadd.f32 0.0, %v1477
    %v1479 = vpop.f32.mrb[0].mxu0
    %1480 = vdwg.mxu0
    %v1481 = vadd.f32 %v934, %v1443
    %v1482 = vadd.f32 %v935, %v1448
    %v1483 = vadd.f32 %v936, %v1453
    %v1484 = vadd.f32 %v937, %v1458
    %v1485 = vadd.f32 %v938, %v1463
    %v1486 = vadd.f32 %v939, %v1468
    %v1487 = vadd.f32 %v940, %v1473
    %v1488 = vadd.f32 %v941, %v1478
    %1489 = vrot.lane.b32.xlu0 %v385, 112
    %v1490 = vpop.permute.xlu0 %1489
    %1491 = vrot.lane.b32.xlu0 %v386, 112
    %v1492 = vpop.permute.xlu0 %1491
    %1493 = vrot.lane.b32.xlu0 %v387, 112
    %v1494 = vpop.permute.xlu0 %1493
    %1495 = vrot.lane.b32.xlu0 %v388, 112
    %v1496 = vpop.permute.xlu0 %1495
    %1497 = vrot.lane.b32.xlu0 %v389, 112
    %v1498 = vpop.permute.xlu0 %1497
    %1499 = vrot.lane.b32.xlu0 %v390, 112
    %v1500 = vpop.permute.xlu0 %1499
    %1501 = vrot.lane.b32.xlu0 %v391, 112
    %v1502 = vpop.permute.xlu0 %1501
    %1503 = vrot.lane.b32.xlu0 %v392, 112
    %v1504 = vpop.permute.xlu0 %1503
    %1505 = vrot.lane.b32.xlu0 %v340, 80
    %v1506 = vpop.permute.xlu0 %1505
    %1507 = vrot.lane.b32.xlu0 %v345, 80
    %v1508 = vpop.permute.xlu0 %1507
    %1509 = vrot.lane.b32.xlu0 %v350, 80
    %v1510 = vpop.permute.xlu0 %1509
    %1511 = vrot.lane.b32.xlu0 %v355, 80
    %v1512 = vpop.permute.xlu0 %1511
    %1513 = vrot.lane.b32.xlu0 %v360, 80
    %v1514 = vpop.permute.xlu0 %1513
    %1515 = vrot.lane.b32.xlu0 %v365, 80
    %v1516 = vpop.permute.xlu0 %1515
    %1517 = vrot.lane.b32.xlu0 %v370, 80
    %v1518 = vpop.permute.xlu0 %1517
    %1519 = vrot.lane.b32.xlu0 %v375, 80
    %v1520 = vpop.permute.xlu0 %1519
    %v1521 = vsel %vm417, %v1490, 0
    %v1523 = vsel %vm417, %v1492, 0
    %v1525 = vsel %vm417, %v1494, 0
    %v1527 = vsel %vm417, %v1496, 0
    %v1529 = vsel %vm417, %v1498, 0
    %v1531 = vsel %vm417, %v1500, 0
    %v1533 = vsel %vm417, %v1502, 0
    %v1535 = vsel %vm417, %v1504, 0
    %v1537 = vsel %vm417, %v1506, 0
    %v1539 = vsel %vm417, %v1508, 0
    %v1541 = vsel %vm417, %v1510, 0
    %v1543 = vsel %vm417, %v1512, 0
    %v1545 = vsel %vm417, %v1514, 0
    %v1547 = vsel %vm417, %v1516, 0
    %v1549 = vsel %vm417, %v1518, 0
    %v1551 = vsel %vm417, %v1520, 0
    %1553 = vmatprep.subr.mxu0 0.0
    %1554 = vmatpush1.xpose.msra.mxu0 %v1537
    %1555 = vmatprep.subr.mxu0 0.0
    %1556 = vmatpush1.xpose.msra.mxu0 %v1539
    %1557 = vmatprep.subr.mxu0 0.0
    %1558 = vmatpush1.xpose.msra.mxu0 %v1541
    %1559 = vmatprep.subr.mxu0 0.0
    %1560 = vmatpush1.xpose.msra.mxu0 %v1543
    %1561 = vmatprep.subr.mxu0 0.0
    %1562 = vmatpush1.xpose.msra.mxu0 %v1545
    %1563 = vmatprep.subr.mxu0 0.0
    %1564 = vmatpush1.xpose.msra.mxu0 %v1547
    %1565 = vmatprep.subr.mxu0 0.0
    %1566 = vmatpush1.xpose.msra.mxu0 %v1549
    %1567 = vmatprep.subr.mxu0 0.0
    %1568 = vmatpush1.xpose.msra.mxu0 %v1551
    %1569 = vmatprep.subr.mxu0 0.0
    %1570 = vmatpush1.xpose.msra.mxu0 0.0
    %1571 = vmatprep.subr.mxu0 0.0
    %1572 = vmatpush1.xpose.msra.mxu0 0.0
    %1573 = vmatprep.subr.mxu0 0.0
    %1574 = vmatpush1.xpose.msra.mxu0 0.0
    %1575 = vmatprep.subr.mxu0 0.0
    %1576 = vmatpush1.xpose.msra.mxu0 0.0
    %1577 = vmatprep.subr.mxu0 0.0
    %1578 = vmatpush1.xpose.msra.mxu0 0.0
    %1579 = vmatprep.subr.mxu0 0.0
    %1580 = vmatpush1.xpose.msra.mxu0 0.0
    %1581 = vmatprep.subr.mxu0 0.0
    %1582 = vmatpush1.xpose.msra.mxu0 0.0
    %1583 = vmatprep.subr.mxu0 0.0
    %1584 = vmatpush1.xpose.msra.mxu0 0.0
    %1585 = vmatprep.subr.mxu0 0.0
    %1586 = vmatpush1.xpose.msra.mxu0 0.0
    %1587 = vmatprep.subr.mxu0 0.0
    %1588 = vmatpush1.xpose.msra.mxu0 0.0
    %1589 = vmatprep.subr.mxu0 0.0
    %1590 = vmatpush1.xpose.msra.mxu0 0.0
    %1591 = vmatprep.subr.mxu0 0.0
    %1592 = vmatpush1.xpose.msra.mxu0 0.0
    %1593 = vmatprep.subr.mxu0 0.0
    %1594 = vmatpush1.xpose.msra.mxu0 0.0
    %1595 = vmatprep.subr.mxu0 0.0
    %1596 = vmatpush1.xpose.msra.mxu0 0.0
    %1597 = vmatprep.subr.mxu0 0.0
    %1598 = vmatpush1.xpose.msra.mxu0 0.0
    %1599 = vmatprep.subr.mxu0 0.0
    %1600 = vmatpush1.xpose.msra.mxu0 0.0
    %1601 = vmatprep.subr.mxu0 0.0
    %1602 = vmatpush1.xpose.msra.mxu0 0.0
    %1603 = vmatprep.subr.mxu0 0.0
    %1604 = vmatpush1.xpose.msra.mxu0 0.0
    %1605 = vmatprep.subr.mxu0 0.0
    %1606 = vmatpush1.xpose.msra.mxu0 0.0
    %1607 = vmatprep.subr.mxu0 0.0
    %1608 = vmatpush1.xpose.msra.mxu0 0.0
    %1609 = vmatprep.subr.mxu0 0.0
    %1610 = vmatpush1.xpose.msra.mxu0 0.0
    %1611 = vmatprep.subr.mxu0 0.0
    %1612 = vmatpush1.xpose.msra.mxu0 0.0
    %1613 = vmatprep.subr.mxu0 0.0
    %1614 = vmatpush1.xpose.msra.mxu0 0.0
    %1615 = vmatprep.subr.mxu0 0.0
    %1616 = vmatpush1.xpose.msra.mxu0 0.0
    %1617 = vmatprep.mubr.f32.mxu0 0.0
    %1618 = vmatmul.mubr.f32.gmra.mrb[0].mxu0 %v1521
    %v1619 = vpop.f32.mrb[0].mxu0
    %v1620 = vadd.f32 0.0, %v1619
    %v1621 = vpop.f32.mrb[0].mxu0
    %1622 = vmatprep.mubr.f32.mxu0 0.0
    %1623 = vmatmul.mubr.f32.gmra.mrb[0].mxu0 %v1523
    %v1624 = vpop.f32.mrb[0].mxu0
    %v1625 = vadd.f32 0.0, %v1624
    %v1626 = vpop.f32.mrb[0].mxu0
    %1627 = vmatprep.mubr.f32.mxu0 0.0
    %1628 = vmatmul.mubr.f32.gmra.mrb[0].mxu0 %v1525
    %v1629 = vpop.f32.mrb[0].mxu0
    %v1630 = vadd.f32 0.0, %v1629
    %v1631 = vpop.f32.mrb[0].mxu0
    %1632 = vmatprep.mubr.f32.mxu0 0.0
    %1633 = vmatmul.mubr.f32.gmra.mrb[0].mxu0 %v1527
    %v1634 = vpop.f32.mrb[0].mxu0
    %v1635 = vadd.f32 0.0, %v1634
    %v1636 = vpop.f32.mrb[0].mxu0
    %1637 = vmatprep.mubr.f32.mxu0 0.0
    %1638 = vmatmul.mubr.f32.gmra.mrb[0].mxu0 %v1529
    %v1639 = vpop.f32.mrb[0].mxu0
    %v1640 = vadd.f32 0.0, %v1639
    %v1641 = vpop.f32.mrb[0].mxu0
    %1642 = vmatprep.mubr.f32.mxu0 0.0
    %1643 = vmatmul.mubr.f32.gmra.mrb[0].mxu0 %v1531
    %v1644 = vpop.f32.mrb[0].mxu0
    %v1645 = vadd.f32 0.0, %v1644
    %v1646 = vpop.f32.mrb[0].mxu0
    %1647 = vmatprep.mubr.f32.mxu0 0.0
    %1648 = vmatmul.mubr.f32.gmra.mrb[0].mxu0 %v1533
    %v1649 = vpop.f32.mrb[0].mxu0
    %v1650 = vadd.f32 0.0, %v1649
    %v1651 = vpop.f32.mrb[0].mxu0
    %1652 = vmatprep.mubr.f32.mxu0 0.0
    %1653 = vmatmul.mubr.f32.gmra.mrb[0].mxu0 %v1535
    %v1654 = vpop.f32.mrb[0].mxu0
    %v1655 = vadd.f32 0.0, %v1654
    %v1656 = vpop.f32.mrb[0].mxu0
    %1657 = vdwg.mxu0
    %v1658 = vsel %vm563, %v1620, -inf
    %1659 = vmax.xlane.f32.xlu0 %v1658
    %v1660 = vpop.xlane.xlu0 %1659
    %v1661 = vsel %vm563, %v1625, -inf
    %1662 = vmax.xlane.f32.xlu0 %v1661
    %v1663 = vpop.xlane.xlu0 %1662
    %v1664 = vsel %vm563, %v1630, -inf
    %1665 = vmax.xlane.f32.xlu0 %v1664
    %v1666 = vpop.xlane.xlu0 %1665
    %v1667 = vsel %vm563, %v1635, -inf
    %1668 = vmax.xlane.f32.xlu0 %v1667
    %v1669 = vpop.xlane.xlu0 %1668
    %v1670 = vsel %vm563, %v1640, -inf
    %1671 = vmax.xlane.f32.xlu0 %v1670
    %v1672 = vpop.xlane.xlu0 %1671
    %v1673 = vsel %vm563, %v1645, -inf
    %1674 = vmax.xlane.f32.xlu0 %v1673
    %v1675 = vpop.xlane.xlu0 %1674
    %v1676 = vsel %vm563, %v1650, -inf
    %1677 = vmax.xlane.f32.xlu0 %v1676
    %v1678 = vpop.xlane.xlu0 %1677
    %v1679 = vsel %vm563, %v1655, -inf
    %1680 = vmax.xlane.f32.xlu0 %v1679
    %v1681 = vpop.xlane.xlu0 %1680
    %v1682 = vsub.f32 %v1620, %v1660
    %v1683 = vsub.f32 %v1625, %v1663
    %v1684 = vsub.f32 %v1630, %v1666
    %v1685 = vsub.f32 %v1635, %v1669
    %v1686 = vsub.f32 %v1640, %v1672
    %v1687 = vsub.f32 %v1645, %v1675
    %v1688 = vsub.f32 %v1650, %v1678
    %v1689 = vsub.f32 %v1655, %v1681
    %v1690 = vmul.f32 %v1682, 1.442695
    %v1691 = vpow.pop %v1690
    %v1692 = vmul.f32 %v1683, 1.442695
    %v1693 = vpow.pop %v1692
    %v1694 = vmul.f32 %v1684, 1.442695
    %v1695 = vpow.pop %v1694
    %v1696 = vmul.f32 %v1685, 1.442695
    %v1697 = vpow.pop %v1696
    %v1698 = vmul.f32 %v1686, 1.442695
    %v1699 = vpow.pop %v1698
    %v1700 = vmul.f32 %v1687, 1.442695
    %v1701 = vpow.pop %v1700
    %v1702 = vmul.f32 %v1688, 1.442695
    %v1703 = vpow.pop %v1702
    %v1704 = vmul.f32 %v1689, 1.442695
    %v1705 = vpow.pop %v1704
    %v1706 = vsel %vm563, %v1691, 0.0
    %1707 = vadd.xlane.f32.xlu0 %v1706
    %v1708 = vpop.xlane.xlu0 %1707
    %v1709 = vsel %vm563, %v1693, 0.0
    %1710 = vadd.xlane.f32.xlu0 %v1709
    %v1711 = vpop.xlane.xlu0 %1710
    %v1712 = vsel %vm563, %v1695, 0.0
    %1713 = vadd.xlane.f32.xlu0 %v1712
    %v1714 = vpop.xlane.xlu0 %1713
    %v1715 = vsel %vm563, %v1697, 0.0
    %1716 = vadd.xlane.f32.xlu0 %v1715
    %v1717 = vpop.xlane.xlu0 %1716
    %v1718 = vsel %vm563, %v1699, 0.0
    %1719 = vadd.xlane.f32.xlu0 %v1718
    %v1720 = vpop.xlane.xlu0 %1719
    %v1721 = vsel %vm563, %v1701, 0.0
    %1722 = vadd.xlane.f32.xlu0 %v1721
    %v1723 = vpop.xlane.xlu0 %1722
    %v1724 = vsel %vm563, %v1703, 0.0
    %1725 = vadd.xlane.f32.xlu0 %v1724
    %v1726 = vpop.xlane.xlu0 %1725
    %v1727 = vsel %vm563, %v1705, 0.0
    %1728 = vadd.xlane.f32.xlu0 %v1727
    %v1729 = vpop.xlane.xlu0 %1728
    %v1730 = vrcp.pop %v1708
    %v1731 = vrcp.pop %v1711
    %v1732 = vrcp.pop %v1714
    %v1733 = vrcp.pop %v1717
    %v1734 = vrcp.pop %v1720
    %v1735 = vrcp.pop %v1723
    %v1736 = vrcp.pop %v1726
    %v1737 = vrcp.pop %v1729
    %v1738 = vmul.f32 %v1691, %v1730
    %v1739 = vmul.f32 %v1693, %v1731
    %v1740 = vmul.f32 %v1695, %v1732
    %v1741 = vmul.f32 %v1697, %v1733
    %v1742 = vmul.f32 %v1699, %v1734
    %v1743 = vmul.f32 %v1701, %v1735
    %v1744 = vmul.f32 %v1703, %v1736
    %v1745 = vmul.f32 %v1705, %v1737
    %1746 = vrot.lane.b32.xlu0 %v340, 48
    %v1747 = vpop.permute.xlu0 %1746
    %1748 = vrot.lane.b32.xlu0 %v345, 48
    %v1749 = vpop.permute.xlu0 %1748
    %1750 = vrot.lane.b32.xlu0 %v350, 48
    %v1751 = vpop.permute.xlu0 %1750
    %1752 = vrot.lane.b32.xlu0 %v355, 48
    %v1753 = vpop.permute.xlu0 %1752
    %1754 = vrot.lane.b32.xlu0 %v360, 48
    %v1755 = vpop.permute.xlu0 %1754
    %1756 = vrot.lane.b32.xlu0 %v365, 48
    %v1757 = vpop.permute.xlu0 %1756
    %1758 = vrot.lane.b32.xlu0 %v370, 48
    %v1759 = vpop.permute.xlu0 %1758
    %1760 = vrot.lane.b32.xlu0 %v375, 48
    %v1761 = vpop.permute.xlu0 %1760
    %v1771 = vsel %vm563, %v1738, 0
    %v1774 = vsel %vm563, %v1739, 0
    %v1777 = vsel %vm563, %v1740, 0
    %v1780 = vsel %vm563, %v1741, 0
    %v1783 = vsel %vm563, %v1742, 0
    %v1786 = vsel %vm563, %v1743, 0
    %v1789 = vsel %vm563, %v1744, 0
    %v1792 = vsel %vm563, %v1745, 0
    %1794 = vmatprep.subr.mxu0 0.0
    %1795 = vmatpush1.msra.mxu0 %v1747
    %1796 = vmatprep.subr.mxu0 0.0
    %1797 = vmatpush1.msra.mxu0 %v1749
    %1798 = vmatprep.subr.mxu0 0.0
    %1799 = vmatpush1.msra.mxu0 %v1751
    %1800 = vmatprep.subr.mxu0 0.0
    %1801 = vmatpush1.msra.mxu0 %v1753
    %1802 = vmatprep.subr.mxu0 0.0
    %1803 = vmatpush1.msra.mxu0 %v1755
    %1804 = vmatprep.subr.mxu0 0.0
    %1805 = vmatpush1.msra.mxu0 %v1757
    %1806 = vmatprep.subr.mxu0 0.0
    %1807 = vmatpush1.msra.mxu0 %v1759
    %1808 = vmatprep.subr.mxu0 0.0
    %1809 = vmatpush1.msra.mxu0 %v1761
    %1810 = vmatprep.subr.mxu0 0.0
    %1811 = vmatpush1.msra.mxu0 0.0
    %1812 = vmatprep.subr.mxu0 0.0
    %1813 = vmatpush1.msra.mxu0 0.0
    %1814 = vmatprep.subr.mxu0 0.0
    %1815 = vmatpush1.msra.mxu0 0.0
    %1816 = vmatprep.subr.mxu0 0.0
    %1817 = vmatpush1.msra.mxu0 0.0
    %1818 = vmatprep.subr.mxu0 0.0
    %1819 = vmatpush1.msra.mxu0 0.0
    %1820 = vmatprep.subr.mxu0 0.0
    %1821 = vmatpush1.msra.mxu0 0.0
    %1822 = vmatprep.subr.mxu0 0.0
    %1823 = vmatpush1.msra.mxu0 0.0
    %1824 = vmatprep.subr.mxu0 0.0
    %1825 = vmatpush1.msra.mxu0 0.0
    %1826 = vmatprep.subr.mxu0 0.0
    %1827 = vmatpush1.msra.mxu0 0.0
    %1828 = vmatprep.subr.mxu0 0.0
    %1829 = vmatpush1.msra.mxu0 0.0
    %1830 = vmatprep.subr.mxu0 0.0
    %1831 = vmatpush1.msra.mxu0 0.0
    %1832 = vmatprep.subr.mxu0 0.0
    %1833 = vmatpush1.msra.mxu0 0.0
    %1834 = vmatprep.subr.mxu0 0.0
    %1835 = vmatpush1.msra.mxu0 0.0
    %1836 = vmatprep.subr.mxu0 0.0
    %1837 = vmatpush1.msra.mxu0 0.0
    %1838 = vmatprep.subr.mxu0 0.0
    %1839 = vmatpush1.msra.mxu0 0.0
    %1840 = vmatprep.subr.mxu0 0.0
    %1841 = vmatpush1.msra.mxu0 0.0
    %1842 = vmatprep.subr.mxu0 0.0
    %1843 = vmatpush1.msra.mxu0 0.0
    %1844 = vmatprep.subr.mxu0 0.0
    %1845 = vmatpush1.msra.mxu0 0.0
    %1846 = vmatprep.subr.mxu0 0.0
    %1847 = vmatpush1.msra.mxu0 0.0
    %1848 = vmatprep.subr.mxu0 0.0
    %1849 = vmatpush1.msra.mxu0 0.0
    %1850 = vmatprep.subr.mxu0 0.0
    %1851 = vmatpush1.msra.mxu0 0.0
    %1852 = vmatprep.subr.mxu0 0.0
    %1853 = vmatpush1.msra.mxu0 0.0
    %1854 = vmatprep.subr.mxu0 0.0
    %1855 = vmatpush1.msra.mxu0 0.0
    %1856 = vmatprep.subr.mxu0 0.0
    %1857 = vmatpush1.msra.mxu0 0.0
    %1858 = vmatprep.mubr.f32.mxu0 0.0
    %1859 = vmatmul.mubr.f32.gmra.mrb[0].mxu0 %v1771
    %v1860 = vpop.f32.mrb[0].mxu0
    %v1861 = vadd.f32 0.0, %v1860
    %v1862 = vpop.f32.mrb[0].mxu0
    %1863 = vmatprep.mubr.f32.mxu0 0.0
    %1864 = vmatmul.mubr.f32.gmra.mrb[0].mxu0 %v1774
    %v1865 = vpop.f32.mrb[0].mxu0
    %v1866 = vadd.f32 0.0, %v1865
    %v1867 = vpop.f32.mrb[0].mxu0
    %1868 = vmatprep.mubr.f32.mxu0 0.0
    %1869 = vmatmul.mubr.f32.gmra.mrb[0].mxu0 %v1777
    %v1870 = vpop.f32.mrb[0].mxu0
    %v1871 = vadd.f32 0.0, %v1870
    %v1872 = vpop.f32.mrb[0].mxu0
    %1873 = vmatprep.mubr.f32.mxu0 0.0
    %1874 = vmatmul.mubr.f32.gmra.mrb[0].mxu0 %v1780
    %v1875 = vpop.f32.mrb[0].mxu0
    %v1876 = vadd.f32 0.0, %v1875
    %v1877 = vpop.f32.mrb[0].mxu0
    %1878 = vmatprep.mubr.f32.mxu0 0.0
    %1879 = vmatmul.mubr.f32.gmra.mrb[0].mxu0 %v1783
    %v1880 = vpop.f32.mrb[0].mxu0
    %v1881 = vadd.f32 0.0, %v1880
    %v1882 = vpop.f32.mrb[0].mxu0
    %1883 = vmatprep.mubr.f32.mxu0 0.0
    %1884 = vmatmul.mubr.f32.gmra.mrb[0].mxu0 %v1786
    %v1885 = vpop.f32.mrb[0].mxu0
    %v1886 = vadd.f32 0.0, %v1885
    %v1887 = vpop.f32.mrb[0].mxu0
    %1888 = vmatprep.mubr.f32.mxu0 0.0
    %1889 = vmatmul.mubr.f32.gmra.mrb[0].mxu0 %v1789
    %v1890 = vpop.f32.mrb[0].mxu0
    %v1891 = vadd.f32 0.0, %v1890
    %v1892 = vpop.f32.mrb[0].mxu0
    %1893 = vmatprep.mubr.f32.mxu0 0.0
    %1894 = vmatmul.mubr.f32.gmra.mrb[0].mxu0 %v1792
    %v1895 = vpop.f32.mrb[0].mxu0
    %v1896 = vadd.f32 0.0, %v1895
    %v1897 = vpop.f32.mrb[0].mxu0
    %1898 = vdwg.mxu0
    %v1900 = vsel %vm417, %v1861, 0
    %v1903 = vsel %vm417, %v1866, 0
    %v1906 = vsel %vm417, %v1871, 0
    %v1909 = vsel %vm417, %v1876, 0
    %v1912 = vsel %vm417, %v1881, 0
    %v1915 = vsel %vm417, %v1886, 0
    %v1918 = vsel %vm417, %v1891, 0
    %v1921 = vsel %vm417, %v1896, 0
    %1923 = vmatprep.subr.mxu0 0.0
    %1924 = vmatpush1.msra.mxu0 %v232
    %1925 = vmatprep.subr.mxu0 0.0
    %1926 = vmatpush1.msra.mxu0 0.0
    %1927 = vmatprep.subr.mxu0 0.0
    %1928 = vmatpush1.msra.mxu0 0.0
    %1929 = vmatprep.subr.mxu0 0.0
    %1930 = vmatpush1.msra.mxu0 0.0
    %1931 = vmatprep.subr.mxu0 0.0
    %1932 = vmatpush1.msra.mxu0 0.0
    %1933 = vmatprep.subr.mxu0 0.0
    %1934 = vmatpush1.msra.mxu0 0.0
    %1935 = vmatprep.subr.mxu0 0.0
    %1936 = vmatpush1.msra.mxu0 0.0
    %1937 = vmatprep.subr.mxu0 0.0
    %1938 = vmatpush1.msra.mxu0 0.0
    %1939 = vmatprep.subr.mxu0 0.0
    %1940 = vmatpush1.msra.mxu0 0.0
    %1941 = vmatprep.subr.mxu0 0.0
    %1942 = vmatpush1.msra.mxu0 0.0
    %1943 = vmatprep.subr.mxu0 0.0
    %1944 = vmatpush1.msra.mxu0 0.0
    %1945 = vmatprep.subr.mxu0 0.0
    %1946 = vmatpush1.msra.mxu0 0.0
    %1947 = vmatprep.subr.mxu0 0.0
    %1948 = vmatpush1.msra.mxu0 0.0
    %1949 = vmatprep.subr.mxu0 0.0
    %1950 = vmatpush1.msra.mxu0 0.0
    %1951 = vmatprep.subr.mxu0 0.0
    %1952 = vmatpush1.msra.mxu0 0.0
    %1953 = vmatprep.subr.mxu0 0.0
    %1954 = vmatpush1.msra.mxu0 0.0
    %1955 = vmatprep.subr.mxu0 0.0
    %1956 = vmatpush1.msra.mxu0 0.0
    %1957 = vmatprep.subr.mxu0 0.0
    %1958 = vmatpush1.msra.mxu0 0.0
    %1959 = vmatprep.subr.mxu0 0.0
    %1960 = vmatpush1.msra.mxu0 0.0
    %1961 = vmatprep.subr.mxu0 0.0
    %1962 = vmatpush1.msra.mxu0 0.0
    %1963 = vmatprep.subr.mxu0 0.0
    %1964 = vmatpush1.msra.mxu0 0.0
    %1965 = vmatprep.subr.mxu0 0.0
    %1966 = vmatpush1.msra.mxu0 0.0
    %1967 = vmatprep.subr.mxu0 0.0
    %1968 = vmatpush1.msra.mxu0 0.0
    %1969 = vmatprep.subr.mxu0 0.0
    %1970 = vmatpush1.msra.mxu0 0.0
    %1971 = vmatprep.subr.mxu0 0.0
    %1972 = vmatpush1.msra.mxu0 0.0
    %1973 = vmatprep.subr.mxu0 0.0
    %1974 = vmatpush1.msra.mxu0 0.0
    %1975 = vmatprep.subr.mxu0 0.0
    %1976 = vmatpush1.msra.mxu0 0.0
    %1977 = vmatprep.subr.mxu0 0.0
    %1978 = vmatpush1.msra.mxu0 0.0
    %1979 = vmatprep.subr.mxu0 0.0
    %1980 = vmatpush1.msra.mxu0 0.0
    %1981 = vmatprep.subr.mxu0 0.0
    %1982 = vmatpush1.msra.mxu0 0.0
    %1983 = vmatprep.subr.mxu0 0.0
    %1984 = vmatpush1.msra.mxu0 0.0
    %1985 = vmatprep.subr.mxu0 0.0
    %1986 = vmatpush1.msra.mxu0 0.0
    %1987 = vmatprep.mubr.f32.mxu0 0.0
    %1988 = vmatmul.mubr.f32.gmra.mrb[0].mxu0 %v1900
    %v1989 = vpop.f32.mrb[0].mxu0
    %v1990 = vadd.f32 0.0, %v1989
    %v1991 = vpop.f32.mrb[0].mxu0
    %1992 = vmatprep.mubr.f32.mxu0 0.0
    %1993 = vmatmul.mubr.f32.gmra.mrb[0].mxu0 %v1903
    %v1994 = vpop.f32.mrb[0].mxu0
    %v1995 = vadd.f32 0.0, %v1994
    %v1996 = vpop.f32.mrb[0].mxu0
    %1997 = vmatprep.mubr.f32.mxu0 0.0
    %1998 = vmatmul.mubr.f32.gmra.mrb[0].mxu0 %v1906
    %v1999 = vpop.f32.mrb[0].mxu0
    %v2000 = vadd.f32 0.0, %v1999
    %v2001 = vpop.f32.mrb[0].mxu0
    %2002 = vmatprep.mubr.f32.mxu0 0.0
    %2003 = vmatmul.mubr.f32.gmra.mrb[0].mxu0 %v1909
    %v2004 = vpop.f32.mrb[0].mxu0
    %v2005 = vadd.f32 0.0, %v2004
    %v2006 = vpop.f32.mrb[0].mxu0
    %2007 = vmatprep.mubr.f32.mxu0 0.0
    %2008 = vmatmul.mubr.f32.gmra.mrb[0].mxu0 %v1912
    %v2009 = vpop.f32.mrb[0].mxu0
    %v2010 = vadd.f32 0.0, %v2009
    %v2011 = vpop.f32.mrb[0].mxu0
    %2012 = vmatprep.mubr.f32.mxu0 0.0
    %2013 = vmatmul.mubr.f32.gmra.mrb[0].mxu0 %v1915
    %v2014 = vpop.f32.mrb[0].mxu0
    %v2015 = vadd.f32 0.0, %v2014
    %v2016 = vpop.f32.mrb[0].mxu0
    %2017 = vmatprep.mubr.f32.mxu0 0.0
    %2018 = vmatmul.mubr.f32.gmra.mrb[0].mxu0 %v1918
    %v2019 = vpop.f32.mrb[0].mxu0
    %v2020 = vadd.f32 0.0, %v2019
    %v2021 = vpop.f32.mrb[0].mxu0
    %2022 = vmatprep.mubr.f32.mxu0 0.0
    %2023 = vmatmul.mubr.f32.gmra.mrb[0].mxu0 %v1921
    %v2024 = vpop.f32.mrb[0].mxu0
    %v2025 = vadd.f32 0.0, %v2024
    %v2026 = vpop.f32.mrb[0].mxu0
    %2027 = vdwg.mxu0
    %v2028 = vadd.f32 %v1481, %v1990
    %v2029 = vadd.f32 %v1482, %v1995
    %v2030 = vadd.f32 %v1483, %v2000
    %v2031 = vadd.f32 %v1484, %v2005
    %v2032 = vadd.f32 %v1485, %v2010
    %v2033 = vadd.f32 %v1486, %v2015
    %v2034 = vadd.f32 %v1487, %v2020
    %v2035 = vadd.f32 %v1488, %v2025
    %2036 = vrot.lane.b32.xlu0 %v385, 104
    %v2037 = vpop.permute.xlu0 %2036
    %2038 = vrot.lane.b32.xlu0 %v386, 104
    %v2039 = vpop.permute.xlu0 %2038
    %2040 = vrot.lane.b32.xlu0 %v387, 104
    %v2041 = vpop.permute.xlu0 %2040
    %2042 = vrot.lane.b32.xlu0 %v388, 104
    %v2043 = vpop.permute.xlu0 %2042
    %2044 = vrot.lane.b32.xlu0 %v389, 104
    %v2045 = vpop.permute.xlu0 %2044
    %2046 = vrot.lane.b32.xlu0 %v390, 104
    %v2047 = vpop.permute.xlu0 %2046
    %2048 = vrot.lane.b32.xlu0 %v391, 104
    %v2049 = vpop.permute.xlu0 %2048
    %2050 = vrot.lane.b32.xlu0 %v392, 104
    %v2051 = vpop.permute.xlu0 %2050
    %2052 = vrot.lane.b32.xlu0 %v340, 72
    %v2053 = vpop.permute.xlu0 %2052
    %2054 = vrot.lane.b32.xlu0 %v345, 72
    %v2055 = vpop.permute.xlu0 %2054
    %2056 = vrot.lane.b32.xlu0 %v350, 72
    %v2057 = vpop.permute.xlu0 %2056
    %2058 = vrot.lane.b32.xlu0 %v355, 72
    %v2059 = vpop.permute.xlu0 %2058
    %2060 = vrot.lane.b32.xlu0 %v360, 72
    %v2061 = vpop.permute.xlu0 %2060
    %2062 = vrot.lane.b32.xlu0 %v365, 72
    %v2063 = vpop.permute.xlu0 %2062
    %2064 = vrot.lane.b32.xlu0 %v370, 72
    %v2065 = vpop.permute.xlu0 %2064
    %2066 = vrot.lane.b32.xlu0 %v375, 72
    %v2067 = vpop.permute.xlu0 %2066
    %v2068 = vsel %vm417, %v2037, 0
    %v2070 = vsel %vm417, %v2039, 0
    %v2072 = vsel %vm417, %v2041, 0
    %v2074 = vsel %vm417, %v2043, 0
    %v2076 = vsel %vm417, %v2045, 0
    %v2078 = vsel %vm417, %v2047, 0
    %v2080 = vsel %vm417, %v2049, 0
    %v2082 = vsel %vm417, %v2051, 0
    %v2084 = vsel %vm417, %v2053, 0
    %v2086 = vsel %vm417, %v2055, 0
    %v2088 = vsel %vm417, %v2057, 0
    %v2090 = vsel %vm417, %v2059, 0
    %v2092 = vsel %vm417, %v2061, 0
    %v2094 = vsel %vm417, %v2063, 0
    %v2096 = vsel %vm417, %v2065, 0
    %v2098 = vsel %vm417, %v2067, 0
    %2100 = vmatprep.subr.mxu0 0.0
    %2101 = vmatpush1.xpose.msra.mxu0 %v2084
    %2102 = vmatprep.subr.mxu0 0.0
    %2103 = vmatpush1.xpose.msra.mxu0 %v2086
    %2104 = vmatprep.subr.mxu0 0.0
    %2105 = vmatpush1.xpose.msra.mxu0 %v2088
    %2106 = vmatprep.subr.mxu0 0.0
    %2107 = vmatpush1.xpose.msra.mxu0 %v2090
    %2108 = vmatprep.subr.mxu0 0.0
    %2109 = vmatpush1.xpose.msra.mxu0 %v2092
    %2110 = vmatprep.subr.mxu0 0.0
    %2111 = vmatpush1.xpose.msra.mxu0 %v2094
    %2112 = vmatprep.subr.mxu0 0.0
    %2113 = vmatpush1.xpose.msra.mxu0 %v2096
    %2114 = vmatprep.subr.mxu0 0.0
    %2115 = vmatpush1.xpose.msra.mxu0 %v2098
    %2116 = vmatprep.subr.mxu0 0.0
    %2117 = vmatpush1.xpose.msra.mxu0 0.0
    %2118 = vmatprep.subr.mxu0 0.0
    %2119 = vmatpush1.xpose.msra.mxu0 0.0
    %2120 = vmatprep.subr.mxu0 0.0
    %2121 = vmatpush1.xpose.msra.mxu0 0.0
    %2122 = vmatprep.subr.mxu0 0.0
    %2123 = vmatpush1.xpose.msra.mxu0 0.0
    %2124 = vmatprep.subr.mxu0 0.0
    %2125 = vmatpush1.xpose.msra.mxu0 0.0
    %2126 = vmatprep.subr.mxu0 0.0
    %2127 = vmatpush1.xpose.msra.mxu0 0.0
    %2128 = vmatprep.subr.mxu0 0.0
    %2129 = vmatpush1.xpose.msra.mxu0 0.0
    %2130 = vmatprep.subr.mxu0 0.0
    %2131 = vmatpush1.xpose.msra.mxu0 0.0
    %2132 = vmatprep.subr.mxu0 0.0
    %2133 = vmatpush1.xpose.msra.mxu0 0.0
    %2134 = vmatprep.subr.mxu0 0.0
    %2135 = vmatpush1.xpose.msra.mxu0 0.0
    %2136 = vmatprep.subr.mxu0 0.0
    %2137 = vmatpush1.xpose.msra.mxu0 0.0
    %2138 = vmatprep.subr.mxu0 0.0
    %2139 = vmatpush1.xpose.msra.mxu0 0.0
    %2140 = vmatprep.subr.mxu0 0.0
    %2141 = vmatpush1.xpose.msra.mxu0 0.0
    %2142 = vmatprep.subr.mxu0 0.0
    %2143 = vmatpush1.xpose.msra.mxu0 0.0
    %2144 = vmatprep.subr.mxu0 0.0
    %2145 = vmatpush1.xpose.msra.mxu0 0.0
    %2146 = vmatprep.subr.mxu0 0.0
    %2147 = vmatpush1.xpose.msra.mxu0 0.0
    %2148 = vmatprep.subr.mxu0 0.0
    %2149 = vmatpush1.xpose.msra.mxu0 0.0
    %2150 = vmatprep.subr.mxu0 0.0
    %2151 = vmatpush1.xpose.msra.mxu0 0.0
    %2152 = vmatprep.subr.mxu0 0.0
    %2153 = vmatpush1.xpose.msra.mxu0 0.0
    %2154 = vmatprep.subr.mxu0 0.0
    %2155 = vmatpush1.xpose.msra.mxu0 0.0
    %2156 = vmatprep.subr.mxu0 0.0
    %2157 = vmatpush1.xpose.msra.mxu0 0.0
    %2158 = vmatprep.subr.mxu0 0.0
    %2159 = vmatpush1.xpose.msra.mxu0 0.0
    %2160 = vmatprep.subr.mxu0 0.0
    %2161 = vmatpush1.xpose.msra.mxu0 0.0
    %2162 = vmatprep.subr.mxu0 0.0
    %2163 = vmatpush1.xpose.msra.mxu0 0.0
    %2164 = vmatprep.mubr.f32.mxu0 0.0
    %2165 = vmatmul.mubr.f32.gmra.mrb[0].mxu0 %v2068
    %v2166 = vpop.f32.mrb[0].mxu0
    %v2167 = vadd.f32 0.0, %v2166
    %v2168 = vpop.f32.mrb[0].mxu0
    %2169 = vmatprep.mubr.f32.mxu0 0.0
    %2170 = vmatmul.mubr.f32.gmra.mrb[0].mxu0 %v2070
    %v2171 = vpop.f32.mrb[0].mxu0
    %v2172 = vadd.f32 0.0, %v2171
    %v2173 = vpop.f32.mrb[0].mxu0
    %2174 = vmatprep.mubr.f32.mxu0 0.0
    %2175 = vmatmul.mubr.f32.gmra.mrb[0].mxu0 %v2072
    %v2176 = vpop.f32.mrb[0].mxu0
    %v2177 = vadd.f32 0.0, %v2176
    %v2178 = vpop.f32.mrb[0].mxu0
    %2179 = vmatprep.mubr.f32.mxu0 0.0
    %2180 = vmatmul.mubr.f32.gmra.mrb[0].mxu0 %v2074
    %v2181 = vpop.f32.mrb[0].mxu0
    %v2182 = vadd.f32 0.0, %v2181
    %v2183 = vpop.f32.mrb[0].mxu0
    %2184 = vmatprep.mubr.f32.mxu0 0.0
    %2185 = vmatmul.mubr.f32.gmra.mrb[0].mxu0 %v2076
    %v2186 = vpop.f32.mrb[0].mxu0
    %v2187 = vadd.f32 0.0, %v2186
    %v2188 = vpop.f32.mrb[0].mxu0
    %2189 = vmatprep.mubr.f32.mxu0 0.0
    %2190 = vmatmul.mubr.f32.gmra.mrb[0].mxu0 %v2078
    %v2191 = vpop.f32.mrb[0].mxu0
    %v2192 = vadd.f32 0.0, %v2191
    %v2193 = vpop.f32.mrb[0].mxu0
    %2194 = vmatprep.mubr.f32.mxu0 0.0
    %2195 = vmatmul.mubr.f32.gmra.mrb[0].mxu0 %v2080
    %v2196 = vpop.f32.mrb[0].mxu0
    %v2197 = vadd.f32 0.0, %v2196
    %v2198 = vpop.f32.mrb[0].mxu0
    %2199 = vmatprep.mubr.f32.mxu0 0.0
    %2200 = vmatmul.mubr.f32.gmra.mrb[0].mxu0 %v2082
    %v2201 = vpop.f32.mrb[0].mxu0
    %v2202 = vadd.f32 0.0, %v2201
    %v2203 = vpop.f32.mrb[0].mxu0
    %2204 = vdwg.mxu0
    %v2205 = vsel %vm563, %v2167, -inf
    %2206 = vmax.xlane.f32.xlu0 %v2205
    %v2207 = vpop.xlane.xlu0 %2206
    %v2208 = vsel %vm563, %v2172, -inf
    %2209 = vmax.xlane.f32.xlu0 %v2208
    %v2210 = vpop.xlane.xlu0 %2209
    %v2211 = vsel %vm563, %v2177, -inf
    %2212 = vmax.xlane.f32.xlu0 %v2211
    %v2213 = vpop.xlane.xlu0 %2212
    %v2214 = vsel %vm563, %v2182, -inf
    %2215 = vmax.xlane.f32.xlu0 %v2214
    %v2216 = vpop.xlane.xlu0 %2215
    %v2217 = vsel %vm563, %v2187, -inf
    %2218 = vmax.xlane.f32.xlu0 %v2217
    %v2219 = vpop.xlane.xlu0 %2218
    %v2220 = vsel %vm563, %v2192, -inf
    %2221 = vmax.xlane.f32.xlu0 %v2220
    %v2222 = vpop.xlane.xlu0 %2221
    %v2223 = vsel %vm563, %v2197, -inf
    %2224 = vmax.xlane.f32.xlu0 %v2223
    %v2225 = vpop.xlane.xlu0 %2224
    %v2226 = vsel %vm563, %v2202, -inf
    %2227 = vmax.xlane.f32.xlu0 %v2226
    %v2228 = vpop.xlane.xlu0 %2227
    %v2229 = vsub.f32 %v2167, %v2207
    %v2230 = vsub.f32 %v2172, %v2210
    %v2231 = vsub.f32 %v2177, %v2213
    %v2232 = vsub.f32 %v2182, %v2216
    %v2233 = vsub.f32 %v2187, %v2219
    %v2234 = vsub.f32 %v2192, %v2222
    %v2235 = vsub.f32 %v2197, %v2225
    %v2236 = vsub.f32 %v2202, %v2228
    %v2237 = vmul.f32 %v2229, 1.442695
    %v2238 = vpow.pop %v2237
    %v2239 = vmul.f32 %v2230, 1.442695
    %v2240 = vpow.pop %v2239
    %v2241 = vmul.f32 %v2231, 1.442695
    %v2242 = vpow.pop %v2241
    %v2243 = vmul.f32 %v2232, 1.442695
    %v2244 = vpow.pop %v2243
    %v2245 = vmul.f32 %v2233, 1.442695
    %v2246 = vpow.pop %v2245
    %v2247 = vmul.f32 %v2234, 1.442695
    %v2248 = vpow.pop %v2247
    %v2249 = vmul.f32 %v2235, 1.442695
    %v2250 = vpow.pop %v2249
    %v2251 = vmul.f32 %v2236, 1.442695
    %v2252 = vpow.pop %v2251
    %v2253 = vsel %vm563, %v2238, 0.0
    %2254 = vadd.xlane.f32.xlu0 %v2253
    %v2255 = vpop.xlane.xlu0 %2254
    %v2256 = vsel %vm563, %v2240, 0.0
    %2257 = vadd.xlane.f32.xlu0 %v2256
    %v2258 = vpop.xlane.xlu0 %2257
    %v2259 = vsel %vm563, %v2242, 0.0
    %2260 = vadd.xlane.f32.xlu0 %v2259
    %v2261 = vpop.xlane.xlu0 %2260
    %v2262 = vsel %vm563, %v2244, 0.0
    %2263 = vadd.xlane.f32.xlu0 %v2262
    %v2264 = vpop.xlane.xlu0 %2263
    %v2265 = vsel %vm563, %v2246, 0.0
    %2266 = vadd.xlane.f32.xlu0 %v2265
    %v2267 = vpop.xlane.xlu0 %2266
    %v2268 = vsel %vm563, %v2248, 0.0
    %2269 = vadd.xlane.f32.xlu0 %v2268
    %v2270 = vpop.xlane.xlu0 %2269
    %v2271 = vsel %vm563, %v2250, 0.0
    %2272 = vadd.xlane.f32.xlu0 %v2271
    %v2273 = vpop.xlane.xlu0 %2272
    %v2274 = vsel %vm563, %v2252, 0.0
    %2275 = vadd.xlane.f32.xlu0 %v2274
    %v2276 = vpop.xlane.xlu0 %2275
    %v2277 = vrcp.pop %v2255
    %v2278 = vrcp.pop %v2258
    %v2279 = vrcp.pop %v2261
    %v2280 = vrcp.pop %v2264
    %v2281 = vrcp.pop %v2267
    %v2282 = vrcp.pop %v2270
    %v2283 = vrcp.pop %v2273
    %v2284 = vrcp.pop %v2276
    %v2285 = vmul.f32 %v2238, %v2277
    %v2286 = vmul.f32 %v2240, %v2278
    %v2287 = vmul.f32 %v2242, %v2279
    %v2288 = vmul.f32 %v2244, %v2280
    %v2289 = vmul.f32 %v2246, %v2281
    %v2290 = vmul.f32 %v2248, %v2282
    %v2291 = vmul.f32 %v2250, %v2283
    %v2292 = vmul.f32 %v2252, %v2284
    %2293 = vrot.lane.b32.xlu0 %v340, 40
    %v2294 = vpop.permute.xlu0 %2293
    %2295 = vrot.lane.b32.xlu0 %v345, 40
    %v2296 = vpop.permute.xlu0 %2295
    %2297 = vrot.lane.b32.xlu0 %v350, 40
    %v2298 = vpop.permute.xlu0 %2297
    %2299 = vrot.lane.b32.xlu0 %v355, 40
    %v2300 = vpop.permute.xlu0 %2299
    %2301 = vrot.lane.b32.xlu0 %v360, 40
    %v2302 = vpop.permute.xlu0 %2301
    %2303 = vrot.lane.b32.xlu0 %v365, 40
    %v2304 = vpop.permute.xlu0 %2303
    %2305 = vrot.lane.b32.xlu0 %v370, 40
    %v2306 = vpop.permute.xlu0 %2305
    %2307 = vrot.lane.b32.xlu0 %v375, 40
    %v2308 = vpop.permute.xlu0 %2307
    %v2318 = vsel %vm563, %v2285, 0
    %v2321 = vsel %vm563, %v2286, 0
    %v2324 = vsel %vm563, %v2287, 0
    %v2327 = vsel %vm563, %v2288, 0
    %v2330 = vsel %vm563, %v2289, 0
    %v2333 = vsel %vm563, %v2290, 0
    %v2336 = vsel %vm563, %v2291, 0
    %v2339 = vsel %vm563, %v2292, 0
    %2341 = vmatprep.subr.mxu0 0.0
    %2342 = vmatpush1.msra.mxu0 %v2294
    %2343 = vmatprep.subr.mxu0 0.0
    %2344 = vmatpush1.msra.mxu0 %v2296
    %2345 = vmatprep.subr.mxu0 0.0
    %2346 = vmatpush1.msra.mxu0 %v2298
    %2347 = vmatprep.subr.mxu0 0.0
    %2348 = vmatpush1.msra.mxu0 %v2300
    %2349 = vmatprep.subr.mxu0 0.0
    %2350 = vmatpush1.msra.mxu0 %v2302
    %2351 = vmatprep.subr.mxu0 0.0
    %2352 = vmatpush1.msra.mxu0 %v2304
    %2353 = vmatprep.subr.mxu0 0.0
    %2354 = vmatpush1.msra.mxu0 %v2306
    %2355 = vmatprep.subr.mxu0 0.0
    %2356 = vmatpush1.msra.mxu0 %v2308
    %2357 = vmatprep.subr.mxu0 0.0
    %2358 = vmatpush1.msra.mxu0 0.0
    %2359 = vmatprep.subr.mxu0 0.0
    %2360 = vmatpush1.msra.mxu0 0.0
    %2361 = vmatprep.subr.mxu0 0.0
    %2362 = vmatpush1.msra.mxu0 0.0
    %2363 = vmatprep.subr.mxu0 0.0
    %2364 = vmatpush1.msra.mxu0 0.0
    %2365 = vmatprep.subr.mxu0 0.0
    %2366 = vmatpush1.msra.mxu0 0.0
    %2367 = vmatprep.subr.mxu0 0.0
    %2368 = vmatpush1.msra.mxu0 0.0
    %2369 = vmatprep.subr.mxu0 0.0
    %2370 = vmatpush1.msra.mxu0 0.0
    %2371 = vmatprep.subr.mxu0 0.0
    %2372 = vmatpush1.msra.mxu0 0.0
    %2373 = vmatprep.subr.mxu0 0.0
    %2374 = vmatpush1.msra.mxu0 0.0
    %2375 = vmatprep.subr.mxu0 0.0
    %2376 = vmatpush1.msra.mxu0 0.0
    %2377 = vmatprep.subr.mxu0 0.0
    %2378 = vmatpush1.msra.mxu0 0.0
    %2379 = vmatprep.subr.mxu0 0.0
    %2380 = vmatpush1.msra.mxu0 0.0
    %2381 = vmatprep.subr.mxu0 0.0
    %2382 = vmatpush1.msra.mxu0 0.0
    %2383 = vmatprep.subr.mxu0 0.0
    %2384 = vmatpush1.msra.mxu0 0.0
    %2385 = vmatprep.subr.mxu0 0.0
    %2386 = vmatpush1.msra.mxu0 0.0
    %2387 = vmatprep.subr.mxu0 0.0
    %2388 = vmatpush1.msra.mxu0 0.0
    %2389 = vmatprep.subr.mxu0 0.0
    %2390 = vmatpush1.msra.mxu0 0.0
    %2391 = vmatprep.subr.mxu0 0.0
    %2392 = vmatpush1.msra.mxu0 0.0
    %2393 = vmatprep.subr.mxu0 0.0
    %2394 = vmatpush1.msra.mxu0 0.0
    %2395 = vmatprep.subr.mxu0 0.0
    %2396 = vmatpush1.msra.mxu0 0.0
    %2397 = vmatprep.subr.mxu0 0.0
    %2398 = vmatpush1.msra.mxu0 0.0
    %2399 = vmatprep.subr.mxu0 0.0
    %2400 = vmatpush1.msra.mxu0 0.0
    %2401 = vmatprep.subr.mxu0 0.0
    %2402 = vmatpush1.msra.mxu0 0.0
    %2403 = vmatprep.subr.mxu0 0.0
    %2404 = vmatpush1.msra.mxu0 0.0
    %2405 = vmatprep.mubr.f32.mxu0 0.0
    %2406 = vmatmul.mubr.f32.gmra.mrb[0].mxu0 %v2318
    %v2407 = vpop.f32.mrb[0].mxu0
    %v2408 = vadd.f32 0.0, %v2407
    %v2409 = vpop.f32.mrb[0].mxu0
    %2410 = vmatprep.mubr.f32.mxu0 0.0
    %2411 = vmatmul.mubr.f32.gmra.mrb[0].mxu0 %v2321
    %v2412 = vpop.f32.mrb[0].mxu0
    %v2413 = vadd.f32 0.0, %v2412
    %v2414 = vpop.f32.mrb[0].mxu0
    %2415 = vmatprep.mubr.f32.mxu0 0.0
    %2416 = vmatmul.mubr.f32.gmra.mrb[0].mxu0 %v2324
    %v2417 = vpop.f32.mrb[0].mxu0
    %v2418 = vadd.f32 0.0, %v2417
    %v2419 = vpop.f32.mrb[0].mxu0
    %2420 = vmatprep.mubr.f32.mxu0 0.0
    %2421 = vmatmul.mubr.f32.gmra.mrb[0].mxu0 %v2327
    %v2422 = vpop.f32.mrb[0].mxu0
    %v2423 = vadd.f32 0.0, %v2422
    %v2424 = vpop.f32.mrb[0].mxu0
    %2425 = vmatprep.mubr.f32.mxu0 0.0
    %2426 = vmatmul.mubr.f32.gmra.mrb[0].mxu0 %v2330
    %v2427 = vpop.f32.mrb[0].mxu0
    %v2428 = vadd.f32 0.0, %v2427
    %v2429 = vpop.f32.mrb[0].mxu0
    %2430 = vmatprep.mubr.f32.mxu0 0.0
    %2431 = vmatmul.mubr.f32.gmra.mrb[0].mxu0 %v2333
    %v2432 = vpop.f32.mrb[0].mxu0
    %v2433 = vadd.f32 0.0, %v2432
    %v2434 = vpop.f32.mrb[0].mxu0
    %2435 = vmatprep.mubr.f32.mxu0 0.0
    %2436 = vmatmul.mubr.f32.gmra.mrb[0].mxu0 %v2336
    %v2437 = vpop.f32.mrb[0].mxu0
    %v2438 = vadd.f32 0.0, %v2437
    %v2439 = vpop.f32.mrb[0].mxu0
    %2440 = vmatprep.mubr.f32.mxu0 0.0
    %2441 = vmatmul.mubr.f32.gmra.mrb[0].mxu0 %v2339
    %v2442 = vpop.f32.mrb[0].mxu0
    %v2443 = vadd.f32 0.0, %v2442
    %v2444 = vpop.f32.mrb[0].mxu0
    %2445 = vdwg.mxu0
    %v2447 = vsel %vm417, %v2408, 0
    %v2450 = vsel %vm417, %v2413, 0
    %v2453 = vsel %vm417, %v2418, 0
    %v2456 = vsel %vm417, %v2423, 0
    %v2459 = vsel %vm417, %v2428, 0
    %v2462 = vsel %vm417, %v2433, 0
    %v2465 = vsel %vm417, %v2438, 0
    %v2468 = vsel %vm417, %v2443, 0
    %2470 = vmatprep.subr.mxu0 0.0
    %2471 = vmatpush1.msra.mxu0 %v233
    %2472 = vmatprep.subr.mxu0 0.0
    %2473 = vmatpush1.msra.mxu0 0.0
    %2474 = vmatprep.subr.mxu0 0.0
    %2475 = vmatpush1.msra.mxu0 0.0
    %2476 = vmatprep.subr.mxu0 0.0
    %2477 = vmatpush1.msra.mxu0 0.0
    %2478 = vmatprep.subr.mxu0 0.0
    %2479 = vmatpush1.msra.mxu0 0.0
    %2480 = vmatprep.subr.mxu0 0.0
    %2481 = vmatpush1.msra.mxu0 0.0
    %2482 = vmatprep.subr.mxu0 0.0
    %2483 = vmatpush1.msra.mxu0 0.0
    %2484 = vmatprep.subr.mxu0 0.0
    %2485 = vmatpush1.msra.mxu0 0.0
    %2486 = vmatprep.subr.mxu0 0.0
    %2487 = vmatpush1.msra.mxu0 0.0
    %2488 = vmatprep.subr.mxu0 0.0
    %2489 = vmatpush1.msra.mxu0 0.0
    %2490 = vmatprep.subr.mxu0 0.0
    %2491 = vmatpush1.msra.mxu0 0.0
    %2492 = vmatprep.subr.mxu0 0.0
    %2493 = vmatpush1.msra.mxu0 0.0
    %2494 = vmatprep.subr.mxu0 0.0
    %2495 = vmatpush1.msra.mxu0 0.0
    %2496 = vmatprep.subr.mxu0 0.0
    %2497 = vmatpush1.msra.mxu0 0.0
    %2498 = vmatprep.subr.mxu0 0.0
    %2499 = vmatpush1.msra.mxu0 0.0
    %2500 = vmatprep.subr.mxu0 0.0
    %2501 = vmatpush1.msra.mxu0 0.0
    %2502 = vmatprep.subr.mxu0 0.0
    %2503 = vmatpush1.msra.mxu0 0.0
    %2504 = vmatprep.subr.mxu0 0.0
    %2505 = vmatpush1.msra.mxu0 0.0
    %2506 = vmatprep.subr.mxu0 0.0
    %2507 = vmatpush1.msra.mxu0 0.0
    %2508 = vmatprep.subr.mxu0 0.0
    %2509 = vmatpush1.msra.mxu0 0.0
    %2510 = vmatprep.subr.mxu0 0.0
    %2511 = vmatpush1.msra.mxu0 0.0
    %2512 = vmatprep.subr.mxu0 0.0
    %2513 = vmatpush1.msra.mxu0 0.0
    %2514 = vmatprep.subr.mxu0 0.0
    %2515 = vmatpush1.msra.mxu0 0.0
    %2516 = vmatprep.subr.mxu0 0.0
    %2517 = vmatpush1.msra.mxu0 0.0
    %2518 = vmatprep.subr.mxu0 0.0
    %2519 = vmatpush1.msra.mxu0 0.0
    %2520 = vmatprep.subr.mxu0 0.0
    %2521 = vmatpush1.msra.mxu0 0.0
    %2522 = vmatprep.subr.mxu0 0.0
    %2523 = vmatpush1.msra.mxu0 0.0
    %2524 = vmatprep.subr.mxu0 0.0
    %2525 = vmatpush1.msra.mxu0 0.0
    %2526 = vmatprep.subr.mxu0 0.0
    %2527 = vmatpush1.msra.mxu0 0.0
    %2528 = vmatprep.subr.mxu0 0.0
    %2529 = vmatpush1.msra.mxu0 0.0
    %2530 = vmatprep.subr.mxu0 0.0
    %2531 = vmatpush1.msra.mxu0 0.0
    %2532 = vmatprep.subr.mxu0 0.0
    %2533 = vmatpush1.msra.mxu0 0.0
    %2534 = vmatprep.mubr.f32.mxu0 0.0
    %2535 = vmatmul.mubr.f32.gmra.mrb[0].mxu0 %v2447
    %v2536 = vpop.f32.mrb[0].mxu0
    %v2537 = vadd.f32 0.0, %v2536
    %v2538 = vpop.f32.mrb[0].mxu0
    %2539 = vmatprep.mubr.f32.mxu0 0.0
    %2540 = vmatmul.mubr.f32.gmra.mrb[0].mxu0 %v2450
    %v2541 = vpop.f32.mrb[0].mxu0
    %v2542 = vadd.f32 0.0, %v2541
    %v2543 = vpop.f32.mrb[0].mxu0
    %2544 = vmatprep.mubr.f32.mxu0 0.0
    %2545 = vmatmul.mubr.f32.gmra.mrb[0].mxu0 %v2453
    %v2546 = vpop.f32.mrb[0].mxu0
    %v2547 = vadd.f32 0.0, %v2546
    %v2548 = vpop.f32.mrb[0].mxu0
    %2549 = vmatprep.mubr.f32.mxu0 0.0
    %2550 = vmatmul.mubr.f32.gmra.mrb[0].mxu0 %v2456
    %v2551 = vpop.f32.mrb[0].mxu0
    %v2552 = vadd.f32 0.0, %v2551
    %v2553 = vpop.f32.mrb[0].mxu0
    %2554 = vmatprep.mubr.f32.mxu0 0.0
    %2555 = vmatmul.mubr.f32.gmra.mrb[0].mxu0 %v2459
    %v2556 = vpop.f32.mrb[0].mxu0
    %v2557 = vadd.f32 0.0, %v2556
    %v2558 = vpop.f32.mrb[0].mxu0
    %2559 = vmatprep.mubr.f32.mxu0 0.0
    %2560 = vmatmul.mubr.f32.gmra.mrb[0].mxu0 %v2462
    %v2561 = vpop.f32.mrb[0].mxu0
    %v2562 = vadd.f32 0.0, %v2561
    %v2563 = vpop.f32.mrb[0].mxu0
    %2564 = vmatprep.mubr.f32.mxu0 0.0
    %2565 = vmatmul.mubr.f32.gmra.mrb[0].mxu0 %v2465
    %v2566 = vpop.f32.mrb[0].mxu0
    %v2567 = vadd.f32 0.0, %v2566
    %v2568 = vpop.f32.mrb[0].mxu0
    %2569 = vmatprep.mubr.f32.mxu0 0.0
    %2570 = vmatmul.mubr.f32.gmra.mrb[0].mxu0 %v2468
    %v2571 = vpop.f32.mrb[0].mxu0
    %v2572 = vadd.f32 0.0, %v2571
    %v2573 = vpop.f32.mrb[0].mxu0
    %2574 = vdwg.mxu0
    %v2575 = vadd.f32 %v2028, %v2537
    %v2576 = vadd.f32 %v2029, %v2542
    %v2577 = vadd.f32 %v2030, %v2547
    %v2578 = vadd.f32 %v2031, %v2552
    %v2579 = vadd.f32 %v2032, %v2557
    %v2580 = vadd.f32 %v2033, %v2562
    %v2581 = vadd.f32 %v2034, %v2567
    %v2582 = vadd.f32 %v2035, %v2572
    %v2583 = vadd.f32 %v187, %v2575
    %v2584 = vadd.f32 %v192, %v2576
    %v2585 = vadd.f32 %v197, %v2577
    %v2586 = vadd.f32 %v202, %v2578
    %v2587 = vadd.f32 %v207, %v2579
    %v2588 = vadd.f32 %v212, %v2580
    %v2589 = vadd.f32 %v217, %v2581
    %v2590 = vadd.f32 %v222, %v2582
    %v2591 = vld [vmem:[%s8] sm:$0x1]
    %v2592 = vld [vmem:[%s9] sm:$0x1]
    %v2593 = vsel %vm95, %v2583, 0.0
    %2594 = vadd.xlane.f32.xlu0 %v2593
    %v2595 = vpop.xlane.xlu0 %2594
    %v2596 = vsel %vm95, %v2584, 0.0
    %2597 = vadd.xlane.f32.xlu0 %v2596
    %v2598 = vpop.xlane.xlu0 %2597
    %v2599 = vsel %vm95, %v2585, 0.0
    %2600 = vadd.xlane.f32.xlu0 %v2599
    %v2601 = vpop.xlane.xlu0 %2600
    %v2602 = vsel %vm95, %v2586, 0.0
    %2603 = vadd.xlane.f32.xlu0 %v2602
    %v2604 = vpop.xlane.xlu0 %2603
    %v2605 = vsel %vm95, %v2587, 0.0
    %2606 = vadd.xlane.f32.xlu0 %v2605
    %v2607 = vpop.xlane.xlu0 %2606
    %v2608 = vsel %vm95, %v2588, 0.0
    %2609 = vadd.xlane.f32.xlu0 %v2608
    %v2610 = vpop.xlane.xlu0 %2609
    %v2611 = vsel %vm95, %v2589, 0.0
    %2612 = vadd.xlane.f32.xlu0 %v2611
    %v2613 = vpop.xlane.xlu0 %2612
    %v2614 = vsel %vm95, %v2590, 0.0
    %2615 = vadd.xlane.f32.xlu0 %v2614
    %v2616 = vpop.xlane.xlu0 %2615
    %v2617 = vrcp.pop 32.0
    %v2618 = vmul.f32 %v2595, %v2617
    %v2619 = vmul.f32 %v2598, %v2617
    %v2620 = vmul.f32 %v2601, %v2617
    %v2621 = vmul.f32 %v2604, %v2617
    %v2622 = vmul.f32 %v2607, %v2617
    %v2623 = vmul.f32 %v2610, %v2617
    %v2624 = vmul.f32 %v2613, %v2617
    %v2625 = vmul.f32 %v2616, %v2617
    %v2626 = vsub.f32 %v2583, %v2618
    %v2627 = vsub.f32 %v2584, %v2619
    %v2628 = vsub.f32 %v2585, %v2620
    %v2629 = vsub.f32 %v2586, %v2621
    %v2630 = vsub.f32 %v2587, %v2622
    %v2631 = vsub.f32 %v2588, %v2623
    %v2632 = vsub.f32 %v2589, %v2624
    %v2633 = vsub.f32 %v2590, %v2625
    %v2634 = vmul.f32 %v2626, %v2626
    %v2635 = vmul.f32 %v2627, %v2627
    %v2636 = vmul.f32 %v2628, %v2628
    %v2637 = vmul.f32 %v2629, %v2629
    %v2638 = vmul.f32 %v2630, %v2630
    %v2639 = vmul.f32 %v2631, %v2631
    %v2640 = vmul.f32 %v2632, %v2632
    %v2641 = vmul.f32 %v2633, %v2633
    %v2642 = vsel %vm95, %v2634, 0.0
    %2643 = vadd.xlane.f32.xlu0 %v2642
    %v2644 = vpop.xlane.xlu0 %2643
    %v2645 = vsel %vm95, %v2635, 0.0
    %2646 = vadd.xlane.f32.xlu0 %v2645
    %v2647 = vpop.xlane.xlu0 %2646
    %v2648 = vsel %vm95, %v2636, 0.0
    %2649 = vadd.xlane.f32.xlu0 %v2648
    %v2650 = vpop.xlane.xlu0 %2649
    %v2651 = vsel %vm95, %v2637, 0.0
    %2652 = vadd.xlane.f32.xlu0 %v2651
    %v2653 = vpop.xlane.xlu0 %2652
    %v2654 = vsel %vm95, %v2638, 0.0
    %2655 = vadd.xlane.f32.xlu0 %v2654
    %v2656 = vpop.xlane.xlu0 %2655
    %v2657 = vsel %vm95, %v2639, 0.0
    %2658 = vadd.xlane.f32.xlu0 %v2657
    %v2659 = vpop.xlane.xlu0 %2658
    %v2660 = vsel %vm95, %v2640, 0.0
    %2661 = vadd.xlane.f32.xlu0 %v2660
    %v2662 = vpop.xlane.xlu0 %2661
    %v2663 = vsel %vm95, %v2641, 0.0
    %2664 = vadd.xlane.f32.xlu0 %v2663
    %v2665 = vpop.xlane.xlu0 %2664
    %v2666 = vmul.f32 %v2644, %v2617
    %v2667 = vmul.f32 %v2647, %v2617
    %v2668 = vmul.f32 %v2650, %v2617
    %v2669 = vmul.f32 %v2653, %v2617
    %v2670 = vmul.f32 %v2656, %v2617
    %v2671 = vmul.f32 %v2659, %v2617
    %v2672 = vmul.f32 %v2662, %v2617
    %v2673 = vmul.f32 %v2665, %v2617
    %v2674 = vadd.f32 %v2666, 1e-05
    %v2675 = vadd.f32 %v2667, 1e-05
    %v2676 = vadd.f32 %v2668, 1e-05
    %v2677 = vadd.f32 %v2669, 1e-05
    %v2678 = vadd.f32 %v2670, 1e-05
    %v2679 = vadd.f32 %v2671, 1e-05
    %v2680 = vadd.f32 %v2672, 1e-05
    %v2681 = vadd.f32 %v2673, 1e-05
    %v2682 = vrsqrt.pop %v2674
    %v2683 = vrsqrt.pop %v2675
    %v2684 = vrsqrt.pop %v2676
    %v2685 = vrsqrt.pop %v2677
    %v2686 = vrsqrt.pop %v2678
    %v2687 = vrsqrt.pop %v2679
    %v2688 = vrsqrt.pop %v2680
    %v2689 = vrsqrt.pop %v2681
    %v2690 = vmul.f32 %v2626, %v2682
    %v2691 = vmul.f32 %v2627, %v2683
    %v2692 = vmul.f32 %v2628, %v2684
    %v2693 = vmul.f32 %v2629, %v2685
    %v2694 = vmul.f32 %v2630, %v2686
    %v2695 = vmul.f32 %v2631, %v2687
    %v2696 = vmul.f32 %v2632, %v2688
    %v2697 = vmul.f32 %v2633, %v2689
    %v2699 = vlaneseq
    %v2700 = vshrl.u32 %v2699, 7
    %v2701 = vsub.s32 0, %v2700
    %v2702 = vrot.slane %v2591, %v2701
    %v2704 = vmul.f32 %v2690, %v2702
    %v2705 = vmul.f32 %v2691, %v2702
    %v2706 = vmul.f32 %v2692, %v2702
    %v2707 = vmul.f32 %v2693, %v2702
    %v2708 = vmul.f32 %v2694, %v2702
    %v2709 = vmul.f32 %v2695, %v2702
    %v2710 = vmul.f32 %v2696, %v2702
    %v2711 = vmul.f32 %v2697, %v2702
    %v2713 = vlaneseq
    %v2714 = vshrl.u32 %v2713, 7
    %v2715 = vsub.s32 0, %v2714
    %v2716 = vrot.slane %v2592, %v2715
    %v2718 = vadd.f32 %v2704, %v2716
    %v2719 = vadd.f32 %v2705, %v2716
    %v2720 = vadd.f32 %v2706, %v2716
    %v2721 = vadd.f32 %v2707, %v2716
    %v2722 = vadd.f32 %v2708, %v2716
    %v2723 = vadd.f32 %v2709, %v2716
    %v2724 = vadd.f32 %v2710, %v2716
    %v2725 = vadd.f32 %v2711, %v2716
    %v2726 = vld [vmem:[%s10] sm:$0xff]
    %v2727 = vld [vmem:[%s10 + $0x8] sm:$0xff]
    %v2728 = vld [vmem:[%s10 + $0x10] sm:$0xff]
    %v2729 = vld [vmem:[%s10 + $0x18] sm:$0xff]
    %v2730 = vld [vmem:[%s11] sm:$0x1]
    %v2732 = vlaneseq
    %v2733 = vshrl.u32 %v2732, 7
    %v2734 = vsub.s32 0, %v2733
    %v2735 = vrot.slane %v2730, %v2734
    %v2738 = vsel %vm95, %v2718, 0
    %v2741 = vsel %vm95, %v2719, 0
    %v2744 = vsel %vm95, %v2720, 0
    %v2747 = vsel %vm95, %v2721, 0
    %v2750 = vsel %vm95, %v2722, 0
    %v2753 = vsel %vm95, %v2723, 0
    %v2756 = vsel %vm95, %v2724, 0
    %v2759 = vsel %vm95, %v2725, 0
    %2761 = vmatprep.subr.mxu0 0.0
    %2762 = vmatpush1.msra.mxu0 %v2726
    %2763 = vmatprep.subr.mxu0 0.0
    %2764 = vmatpush1.msra.mxu0 %v2727
    %2765 = vmatprep.subr.mxu0 0.0
    %2766 = vmatpush1.msra.mxu0 %v2728
    %2767 = vmatprep.subr.mxu0 0.0
    %2768 = vmatpush1.msra.mxu0 %v2729
    %2769 = vmatprep.subr.mxu0 0.0
    %2770 = vmatpush1.msra.mxu0 0.0
    %2771 = vmatprep.subr.mxu0 0.0
    %2772 = vmatpush1.msra.mxu0 0.0
    %2773 = vmatprep.subr.mxu0 0.0
    %2774 = vmatpush1.msra.mxu0 0.0
    %2775 = vmatprep.subr.mxu0 0.0
    %2776 = vmatpush1.msra.mxu0 0.0
    %2777 = vmatprep.subr.mxu0 0.0
    %2778 = vmatpush1.msra.mxu0 0.0
    %2779 = vmatprep.subr.mxu0 0.0
    %2780 = vmatpush1.msra.mxu0 0.0
    %2781 = vmatprep.subr.mxu0 0.0
    %2782 = vmatpush1.msra.mxu0 0.0
    %2783 = vmatprep.subr.mxu0 0.0
    %2784 = vmatpush1.msra.mxu0 0.0
    %2785 = vmatprep.subr.mxu0 0.0
    %2786 = vmatpush1.msra.mxu0 0.0
    %2787 = vmatprep.subr.mxu0 0.0
    %2788 = vmatpush1.msra.mxu0 0.0
    %2789 = vmatprep.subr.mxu0 0.0
    %2790 = vmatpush1.msra.mxu0 0.0
    %2791 = vmatprep.subr.mxu0 0.0
    %2792 = vmatpush1.msra.mxu0 0.0
    %2793 = vmatprep.subr.mxu0 0.0
    %2794 = vmatpush1.msra.mxu0 0.0
    %2795 = vmatprep.subr.mxu0 0.0
    %2796 = vmatpush1.msra.mxu0 0.0
    %2797 = vmatprep.subr.mxu0 0.0
    %2798 = vmatpush1.msra.mxu0 0.0
    %2799 = vmatprep.subr.mxu0 0.0
    %2800 = vmatpush1.msra.mxu0 0.0
    %2801 = vmatprep.subr.mxu0 0.0
    %2802 = vmatpush1.msra.mxu0 0.0
    %2803 = vmatprep.subr.mxu0 0.0
    %2804 = vmatpush1.msra.mxu0 0.0
    %2805 = vmatprep.subr.mxu0 0.0
    %2806 = vmatpush1.msra.mxu0 0.0
    %2807 = vmatprep.subr.mxu0 0.0
    %2808 = vmatpush1.msra.mxu0 0.0
    %2809 = vmatprep.subr.mxu0 0.0
    %2810 = vmatpush1.msra.mxu0 0.0
    %2811 = vmatprep.subr.mxu0 0.0
    %2812 = vmatpush1.msra.mxu0 0.0
    %2813 = vmatprep.subr.mxu0 0.0
    %2814 = vmatpush1.msra.mxu0 0.0
    %2815 = vmatprep.subr.mxu0 0.0
    %2816 = vmatpush1.msra.mxu0 0.0
    %2817 = vmatprep.subr.mxu0 0.0
    %2818 = vmatpush1.msra.mxu0 0.0
    %2819 = vmatprep.subr.mxu0 0.0
    %2820 = vmatpush1.msra.mxu0 0.0
    %2821 = vmatprep.subr.mxu0 0.0
    %2822 = vmatpush1.msra.mxu0 0.0
    %2823 = vmatprep.subr.mxu0 0.0
    %2824 = vmatpush1.msra.mxu0 0.0
    %2825 = vmatprep.mubr.f32.mxu0 0.0
    %2826 = vmatmul.mubr.f32.gmra.mrb[0].mxu0 %v2738
    %v2827 = vpop.f32.mrb[0].mxu0
    %v2828 = vadd.f32 %v2735, %v2827
    %v2829 = vpop.f32.mrb[0].mxu0
    %2830 = vmatprep.mubr.f32.mxu0 0.0
    %2831 = vmatmul.mubr.f32.gmra.mrb[0].mxu0 %v2741
    %v2832 = vpop.f32.mrb[0].mxu0
    %v2833 = vadd.f32 %v2735, %v2832
    %v2834 = vpop.f32.mrb[0].mxu0
    %2835 = vmatprep.mubr.f32.mxu0 0.0
    %2836 = vmatmul.mubr.f32.gmra.mrb[0].mxu0 %v2744
    %v2837 = vpop.f32.mrb[0].mxu0
    %v2838 = vadd.f32 %v2735, %v2837
    %v2839 = vpop.f32.mrb[0].mxu0
    %2840 = vmatprep.mubr.f32.mxu0 0.0
    %2841 = vmatmul.mubr.f32.gmra.mrb[0].mxu0 %v2747
    %v2842 = vpop.f32.mrb[0].mxu0
    %v2843 = vadd.f32 %v2735, %v2842
    %v2844 = vpop.f32.mrb[0].mxu0
    %2845 = vmatprep.mubr.f32.mxu0 0.0
    %2846 = vmatmul.mubr.f32.gmra.mrb[0].mxu0 %v2750
    %v2847 = vpop.f32.mrb[0].mxu0
    %v2848 = vadd.f32 %v2735, %v2847
    %v2849 = vpop.f32.mrb[0].mxu0
    %2850 = vmatprep.mubr.f32.mxu0 0.0
    %2851 = vmatmul.mubr.f32.gmra.mrb[0].mxu0 %v2753
    %v2852 = vpop.f32.mrb[0].mxu0
    %v2853 = vadd.f32 %v2735, %v2852
    %v2854 = vpop.f32.mrb[0].mxu0
    %2855 = vmatprep.mubr.f32.mxu0 0.0
    %2856 = vmatmul.mubr.f32.gmra.mrb[0].mxu0 %v2756
    %v2857 = vpop.f32.mrb[0].mxu0
    %v2858 = vadd.f32 %v2735, %v2857
    %v2859 = vpop.f32.mrb[0].mxu0
    %2860 = vmatprep.mubr.f32.mxu0 0.0
    %2861 = vmatmul.mubr.f32.gmra.mrb[0].mxu0 %v2759
    %v2862 = vpop.f32.mrb[0].mxu0
    %v2863 = vadd.f32 %v2735, %v2862
    %v2864 = vpop.f32.mrb[0].mxu0
    %2865 = vdwg.mxu0
    %v2866 = vmax.f32 %v2828, 0.0
    %v2867 = vmax.f32 %v2833, 0.0
    %v2868 = vmax.f32 %v2838, 0.0
    %v2869 = vmax.f32 %v2843, 0.0
    %v2870 = vmax.f32 %v2848, 0.0
    %v2871 = vmax.f32 %v2853, 0.0
    %v2872 = vmax.f32 %v2858, 0.0
    %v2873 = vmax.f32 %v2863, 0.0
    %v2874 = vld [vmem:[%s12] sm:$0xff]
    %v2875 = vld [vmem:[%s12 + $0x8] sm:$0xff]
    %v2876 = vld [vmem:[%s12 + $0x10] sm:$0xff]
    %v2877 = vld [vmem:[%s12 + $0x18] sm:$0xff]
    %v2878 = vld [vmem:[%s12 + $0x20] sm:$0xff]
    %v2879 = vld [vmem:[%s12 + $0x28] sm:$0xff]
    %v2880 = vld [vmem:[%s12 + $0x30] sm:$0xff]
    %v2881 = vld [vmem:[%s12 + $0x38] sm:$0xff]
    %v2882 = vld [vmem:[%s13] sm:$0x1]
    %v2884 = vlaneseq
    %v2885 = vshrl.u32 %v2884, 7
    %v2886 = vsub.s32 0, %v2885
    %v2887 = vrot.slane %v2882, %v2886
    %v2890 = vsel %vm563, %v2866, 0
    %v2893 = vsel %vm563, %v2867, 0
    %v2896 = vsel %vm563, %v2868, 0
    %v2899 = vsel %vm563, %v2869, 0
    %v2902 = vsel %vm563, %v2870, 0
    %v2905 = vsel %vm563, %v2871, 0
    %v2908 = vsel %vm563, %v2872, 0
    %v2911 = vsel %vm563, %v2873, 0
    %2913 = vmatprep.subr.mxu0 0.0
    %2914 = vmatpush1.msra.mxu0 %v2874
    %2915 = vmatprep.subr.mxu0 0.0
    %2916 = vmatpush1.msra.mxu0 %v2875
    %2917 = vmatprep.subr.mxu0 0.0
    %2918 = vmatpush1.msra.mxu0 %v2876
    %2919 = vmatprep.subr.mxu0 0.0
    %2920 = vmatpush1.msra.mxu0 %v2877
    %2921 = vmatprep.subr.mxu0 0.0
    %2922 = vmatpush1.msra.mxu0 %v2878
    %2923 = vmatprep.subr.mxu0 0.0
    %2924 = vmatpush1.msra.mxu0 %v2879
    %2925 = vmatprep.subr.mxu0 0.0
    %2926 = vmatpush1.msra.mxu0 %v2880
    %2927 = vmatprep.subr.mxu0 0.0
    %2928 = vmatpush1.msra.mxu0 %v2881
    %2929 = vmatprep.subr.mxu0 0.0
    %2930 = vmatpush1.msra.mxu0 0.0
    %2931 = vmatprep.subr.mxu0 0.0
    %2932 = vmatpush1.msra.mxu0 0.0
    %2933 = vmatprep.subr.mxu0 0.0
    %2934 = vmatpush1.msra.mxu0 0.0
    %2935 = vmatprep.subr.mxu0 0.0
    %2936 = vmatpush1.msra.mxu0 0.0
    %2937 = vmatprep.subr.mxu0 0.0
    %2938 = vmatpush1.msra.mxu0 0.0
    %2939 = vmatprep.subr.mxu0 0.0
    %2940 = vmatpush1.msra.mxu0 0.0
    %2941 = vmatprep.subr.mxu0 0.0
    %2942 = vmatpush1.msra.mxu0 0.0
    %2943 = vmatprep.subr.mxu0 0.0
    %2944 = vmatpush1.msra.mxu0 0.0
    %2945 = vmatprep.subr.mxu0 0.0
    %2946 = vmatpush1.msra.mxu0 0.0
    %2947 = vmatprep.subr.mxu0 0.0
    %2948 = vmatpush1.msra.mxu0 0.0
    %2949 = vmatprep.subr.mxu0 0.0
    %2950 = vmatpush1.msra.mxu0 0.0
    %2951 = vmatprep.subr.mxu0 0.0
    %2952 = vmatpush1.msra.mxu0 0.0
    %2953 = vmatprep.subr.mxu0 0.0
    %2954 = vmatpush1.msra.mxu0 0.0
    %2955 = vmatprep.subr.mxu0 0.0
    %2956 = vmatpush1.msra.mxu0 0.0
    %2957 = vmatprep.subr.mxu0 0.0
    %2958 = vmatpush1.msra.mxu0 0.0
    %2959 = vmatprep.subr.mxu0 0.0
    %2960 = vmatpush1.msra.mxu0 0.0
    %2961 = vmatprep.subr.mxu0 0.0
    %2962 = vmatpush1.msra.mxu0 0.0
    %2963 = vmatprep.subr.mxu0 0.0
    %2964 = vmatpush1.msra.mxu0 0.0
    %2965 = vmatprep.subr.mxu0 0.0
    %2966 = vmatpush1.msra.mxu0 0.0
    %2967 = vmatprep.subr.mxu0 0.0
    %2968 = vmatpush1.msra.mxu0 0.0
    %2969 = vmatprep.subr.mxu0 0.0
    %2970 = vmatpush1.msra.mxu0 0.0
    %2971 = vmatprep.subr.mxu0 0.0
    %2972 = vmatpush1.msra.mxu0 0.0
    %2973 = vmatprep.subr.mxu0 0.0
    %2974 = vmatpush1.msra.mxu0 0.0
    %2975 = vmatprep.subr.mxu0 0.0
    %2976 = vmatpush1.msra.mxu0 0.0
    %2977 = vmatprep.mubr.f32.mxu0 0.0
    %2978 = vmatmul.mubr.f32.gmra.mrb[0].mxu0 %v2890
    %v2979 = vpop.f32.mrb[0].mxu0
    %v2980 = vadd.f32 %v2887, %v2979
    %v2981 = vpop.f32.mrb[0].mxu0
    %2982 = vmatprep.mubr.f32.mxu0 0.0
    %2983 = vmatmul.mubr.f32.gmra.mrb[0].mxu0 %v2893
    %v2984 = vpop.f32.mrb[0].mxu0
    %v2985 = vadd.f32 %v2887, %v2984
    %v2986 = vpop.f32.mrb[0].mxu0
    %2987 = vmatprep.mubr.f32.mxu0 0.0
    %2988 = vmatmul.mubr.f32.gmra.mrb[0].mxu0 %v2896
    %v2989 = vpop.f32.mrb[0].mxu0
    %v2990 = vadd.f32 %v2887, %v2989
    %v2991 = vpop.f32.mrb[0].mxu0
    %2992 = vmatprep.mubr.f32.mxu0 0.0
    %2993 = vmatmul.mubr.f32.gmra.mrb[0].mxu0 %v2899
    %v2994 = vpop.f32.mrb[0].mxu0
    %v2995 = vadd.f32 %v2887, %v2994
    %v2996 = vpop.f32.mrb[0].mxu0
    %2997 = vmatprep.mubr.f32.mxu0 0.0
    %2998 = vmatmul.mubr.f32.gmra.mrb[0].mxu0 %v2902
    %v2999 = vpop.f32.mrb[0].mxu0
    %v3000 = vadd.f32 %v2887, %v2999
    %v3001 = vpop.f32.mrb[0].mxu0
    %3002 = vmatprep.mubr.f32.mxu0 0.0
    %3003 = vmatmul.mubr.f32.gmra.mrb[0].mxu0 %v2905
    %v3004 = vpop.f32.mrb[0].mxu0
    %v3005 = vadd.f32 %v2887, %v3004
    %v3006 = vpop.f32.mrb[0].mxu0
    %3007 = vmatprep.mubr.f32.mxu0 0.0
    %3008 = vmatmul.mubr.f32.gmra.mrb[0].mxu0 %v2908
    %v3009 = vpop.f32.mrb[0].mxu0
    %v3010 = vadd.f32 %v2887, %v3009
    %v3011 = vpop.f32.mrb[0].mxu0
    %3012 = vmatprep.mubr.f32.mxu0 0.0
    %3013 = vmatmul.mubr.f32.gmra.mrb[0].mxu0 %v2911
    %v3014 = vpop.f32.mrb[0].mxu0
    %v3015 = vadd.f32 %v2887, %v3014
    %v3016 = vpop.f32.mrb[0].mxu0
    %3017 = vdwg.mxu0
    %v3018 = vadd.f32 %v2718, %v2980
    %v3019 = vadd.f32 %v2719, %v2985
    %v3020 = vadd.f32 %v2720, %v2990
    %v3021 = vadd.f32 %v2721, %v2995
    %v3022 = vadd.f32 %v2722, %v3000
    %v3023 = vadd.f32 %v2723, %v3005
    %v3024 = vadd.f32 %v2724, %v3010
    %v3025 = vadd.f32 %v2725, %v3015
    %v3026 = vld [vmem:[%s14] sm:$0x1]
    %v3027 = vld [vmem:[%s15] sm:$0x1]
    %v3028 = vsel %vm95, %v3018, 0.0
    %3029 = vadd.xlane.f32.xlu0 %v3028
    %v3030 = vpop.xlane.xlu0 %3029
    %v3031 = vsel %vm95, %v3019, 0.0
    %3032 = vadd.xlane.f32.xlu0 %v3031
    %v3033 = vpop.xlane.xlu0 %3032
    %v3034 = vsel %vm95, %v3020, 0.0
    %3035 = vadd.xlane.f32.xlu0 %v3034
    %v3036 = vpop.xlane.xlu0 %3035
    %v3037 = vsel %vm95, %v3021, 0.0
    %3038 = vadd.xlane.f32.xlu0 %v3037
    %v3039 = vpop.xlane.xlu0 %3038
    %v3040 = vsel %vm95, %v3022, 0.0
    %3041 = vadd.xlane.f32.xlu0 %v3040
    %v3042 = vpop.xlane.xlu0 %3041
    %v3043 = vsel %vm95, %v3023, 0.0
    %3044 = vadd.xlane.f32.xlu0 %v3043
    %v3045 = vpop.xlane.xlu0 %3044
    %v3046 = vsel %vm95, %v3024, 0.0
    %3047 = vadd.xlane.f32.xlu0 %v3046
    %v3048 = vpop.xlane.xlu0 %3047
    %v3049 = vsel %vm95, %v3025, 0.0
    %3050 = vadd.xlane.f32.xlu0 %v3049
    %v3051 = vpop.xlane.xlu0 %3050
    %v3052 = vmul.f32 %v3030, %v2617
    %v3053 = vmul.f32 %v3033, %v2617
    %v3054 = vmul.f32 %v3036, %v2617
    %v3055 = vmul.f32 %v3039, %v2617
    %v3056 = vmul.f32 %v3042, %v2617
    %v3057 = vmul.f32 %v3045, %v2617
    %v3058 = vmul.f32 %v3048, %v2617
    %v3059 = vmul.f32 %v3051, %v2617
    %v3060 = vsub.f32 %v3018, %v3052
    %v3061 = vsub.f32 %v3019, %v3053
    %v3062 = vsub.f32 %v3020, %v3054
    %v3063 = vsub.f32 %v3021, %v3055
    %v3064 = vsub.f32 %v3022, %v3056
    %v3065 = vsub.f32 %v3023, %v3057
    %v3066 = vsub.f32 %v3024, %v3058
    %v3067 = vsub.f32 %v3025, %v3059
    %v3068 = vmul.f32 %v3060, %v3060
    %v3069 = vmul.f32 %v3061, %v3061
    %v3070 = vmul.f32 %v3062, %v3062
    %v3071 = vmul.f32 %v3063, %v3063
    %v3072 = vmul.f32 %v3064, %v3064
    %v3073 = vmul.f32 %v3065, %v3065
    %v3074 = vmul.f32 %v3066, %v3066
    %v3075 = vmul.f32 %v3067, %v3067
    %v3076 = vsel %vm95, %v3068, 0.0
    %3077 = vadd.xlane.f32.xlu0 %v3076
    %v3078 = vpop.xlane.xlu0 %3077
    %v3079 = vsel %vm95, %v3069, 0.0
    %3080 = vadd.xlane.f32.xlu0 %v3079
    %v3081 = vpop.xlane.xlu0 %3080
    %v3082 = vsel %vm95, %v3070, 0.0
    %3083 = vadd.xlane.f32.xlu0 %v3082
    %v3084 = vpop.xlane.xlu0 %3083
    %v3085 = vsel %vm95, %v3071, 0.0
    %3086 = vadd.xlane.f32.xlu0 %v3085
    %v3087 = vpop.xlane.xlu0 %3086
    %v3088 = vsel %vm95, %v3072, 0.0
    %3089 = vadd.xlane.f32.xlu0 %v3088
    %v3090 = vpop.xlane.xlu0 %3089
    %v3091 = vsel %vm95, %v3073, 0.0
    %3092 = vadd.xlane.f32.xlu0 %v3091
    %v3093 = vpop.xlane.xlu0 %3092
    %v3094 = vsel %vm95, %v3074, 0.0
    %3095 = vadd.xlane.f32.xlu0 %v3094
    %v3096 = vpop.xlane.xlu0 %3095
    %v3097 = vsel %vm95, %v3075, 0.0
    %3098 = vadd.xlane.f32.xlu0 %v3097
    %v3099 = vpop.xlane.xlu0 %3098
    %v3100 = vmul.f32 %v3078, %v2617
    %v3101 = vmul.f32 %v3081, %v2617
    %v3102 = vmul.f32 %v3084, %v2617
    %v3103 = vmul.f32 %v3087, %v2617
    %v3104 = vmul.f32 %v3090, %v2617
    %v3105 = vmul.f32 %v3093, %v2617
    %v3106 = vmul.f32 %v3096, %v2617
    %v3107 = vmul.f32 %v3099, %v2617
    %v3108 = vadd.f32 %v3100, 1e-05
    %v3109 = vadd.f32 %v3101, 1e-05
    %v3110 = vadd.f32 %v3102, 1e-05
    %v3111 = vadd.f32 %v3103, 1e-05
    %v3112 = vadd.f32 %v3104, 1e-05
    %v3113 = vadd.f32 %v3105, 1e-05
    %v3114 = vadd.f32 %v3106, 1e-05
    %v3115 = vadd.f32 %v3107, 1e-05
    %v3116 = vrsqrt.pop %v3108
    %v3117 = vrsqrt.pop %v3109
    %v3118 = vrsqrt.pop %v3110
    %v3119 = vrsqrt.pop %v3111
    %v3120 = vrsqrt.pop %v3112
    %v3121 = vrsqrt.pop %v3113
    %v3122 = vrsqrt.pop %v3114
    %v3123 = vrsqrt.pop %v3115
    %v3124 = vmul.f32 %v3060, %v3116
    %v3125 = vmul.f32 %v3061, %v3117
    %v3126 = vmul.f32 %v3062, %v3118
    %v3127 = vmul.f32 %v3063, %v3119
    %v3128 = vmul.f32 %v3064, %v3120
    %v3129 = vmul.f32 %v3065, %v3121
    %v3130 = vmul.f32 %v3066, %v3122
    %v3131 = vmul.f32 %v3067, %v3123
    %v3133 = vlaneseq
    %v3134 = vshrl.u32 %v3133, 7
    %v3135 = vsub.s32 0, %v3134
    %v3136 = vrot.slane %v3026, %v3135
    %v3138 = vmul.f32 %v3124, %v3136
    %v3139 = vmul.f32 %v3125, %v3136
    %v3140 = vmul.f32 %v3126, %v3136
    %v3141 = vmul.f32 %v3127, %v3136
    %v3142 = vmul.f32 %v3128, %v3136
    %v3143 = vmul.f32 %v3129, %v3136
    %v3144 = vmul.f32 %v3130, %v3136
    %v3145 = vmul.f32 %v3131, %v3136
    %v3147 = vlaneseq
    %v3148 = vshrl.u32 %v3147, 7
    %v3149 = vsub.s32 0, %v3148
    %v3150 = vrot.slane %v3027, %v3149
    %v3152 = vadd.f32 %v3138, %v3150
    %v3153 = vadd.f32 %v3139, %v3150
    %v3154 = vadd.f32 %v3140, %v3150
    %v3155 = vadd.f32 %v3141, %v3150
    %v3156 = vadd.f32 %v3142, %v3150
    %v3157 = vadd.f32 %v3143, %v3150
    %v3158 = vadd.f32 %v3144, %v3150
    %v3159 = vadd.f32 %v3145, %v3150
    %s3160 = scalar_lea.vmem %s4, 32
    %v3161 = vld [vmem:[%s3160] sm:$0xff]
    %v3162 = vld [vmem:[%s3160 + $0x8] sm:$0xff]
    %v3163 = vld [vmem:[%s3160 + $0x10] sm:$0xff]
    %v3164 = vld [vmem:[%s3160 + $0x18] sm:$0xff]
    %s3165 = scalar_lea.vmem %s5, 1
    %v3166 = vld [vmem:[%s3165] sm:$0x1]
    %s3167 = scalar_lea.vmem %s6, 32
    %v3168 = vld [vmem:[%s3167] sm:$0xff]
    %v3169 = vld [vmem:[%s3167 + $0x8] sm:$0xff]
    %v3170 = vld [vmem:[%s3167 + $0x10] sm:$0xff]
    %v3171 = vld [vmem:[%s3167 + $0x18] sm:$0xff]
    %s3172 = scalar_lea.vmem %s7, 1
    %v3173 = vld [vmem:[%s3172] sm:$0x1]
    %v3174 = vadd.f32 %v3152, %v68
    %v3175 = vadd.f32 %v3153, %v69
    %v3176 = vadd.f32 %v3154, %v70
    %v3177 = vadd.f32 %v3155, %v71
    %v3178 = vadd.f32 %v3156, %v72
    %v3179 = vadd.f32 %v3157, %v73
    %v3180 = vadd.f32 %v3158, %v74
    %v3181 = vadd.f32 %v3159, %v75
    %v3183 = vlaneseq
    %v3184 = vshrl.u32 %v3183, 7
    %v3185 = vsub.s32 0, %v3184
    %v3186 = vrot.slane %v3166, %v3185
    %v3189 = vsel %vm95, %v3174, 0
    %v3192 = vsel %vm95, %v3175, 0
    %v3195 = vsel %vm95, %v3176, 0
    %v3198 = vsel %vm95, %v3177, 0
    %v3201 = vsel %vm95, %v3178, 0
    %v3204 = vsel %vm95, %v3179, 0
    %v3207 = vsel %vm95, %v3180, 0
    %v3210 = vsel %vm95, %v3181, 0
    %3212 = vmatprep.subr.mxu0 0.0
    %3213 = vmatpush1.msra.mxu0 %v3161
    %3214 = vmatprep.subr.mxu0 0.0
    %3215 = vmatpush1.msra.mxu0 %v3162
    %3216 = vmatprep.subr.mxu0 0.0
    %3217 = vmatpush1.msra.mxu0 %v3163
    %3218 = vmatprep.subr.mxu0 0.0
    %3219 = vmatpush1.msra.mxu0 %v3164
    %3220 = vmatprep.subr.mxu0 0.0
    %3221 = vmatpush1.msra.mxu0 0.0
    %3222 = vmatprep.subr.mxu0 0.0
    %3223 = vmatpush1.msra.mxu0 0.0
    %3224 = vmatprep.subr.mxu0 0.0
    %3225 = vmatpush1.msra.mxu0 0.0
    %3226 = vmatprep.subr.mxu0 0.0
    %3227 = vmatpush1.msra.mxu0 0.0
    %3228 = vmatprep.subr.mxu0 0.0
    %3229 = vmatpush1.msra.mxu0 0.0
    %3230 = vmatprep.subr.mxu0 0.0
    %3231 = vmatpush1.msra.mxu0 0.0
    %3232 = vmatprep.subr.mxu0 0.0
    %3233 = vmatpush1.msra.mxu0 0.0
    %3234 = vmatprep.subr.mxu0 0.0
    %3235 = vmatpush1.msra.mxu0 0.0
    %3236 = vmatprep.subr.mxu0 0.0
    %3237 = vmatpush1.msra.mxu0 0.0
    %3238 = vmatprep.subr.mxu0 0.0
    %3239 = vmatpush1.msra.mxu0 0.0
    %3240 = vmatprep.subr.mxu0 0.0
    %3241 = vmatpush1.msra.mxu0 0.0
    %3242 = vmatprep.subr.mxu0 0.0
    %3243 = vmatpush1.msra.mxu0 0.0
    %3244 = vmatprep.subr.mxu0 0.0
    %3245 = vmatpush1.msra.mxu0 0.0
    %3246 = vmatprep.subr.mxu0 0.0
    %3247 = vmatpush1.msra.mxu0 0.0
    %3248 = vmatprep.subr.mxu0 0.0
    %3249 = vmatpush1.msra.mxu0 0.0
    %3250 = vmatprep.subr.mxu0 0.0
    %3251 = vmatpush1.msra.mxu0 0.0
    %3252 = vmatprep.subr.mxu0 0.0
    %3253 = vmatpush1.msra.mxu0 0.0
    %3254 = vmatprep.subr.mxu0 0.0
    %3255 = vmatpush1.msra.mxu0 0.0
    %3256 = vmatprep.subr.mxu0 0.0
    %3257 = vmatpush1.msra.mxu0 0.0
    %3258 = vmatprep.subr.mxu0 0.0
    %3259 = vmatpush1.msra.mxu0 0.0
    %3260 = vmatprep.subr.mxu0 0.0
    %3261 = vmatpush1.msra.mxu0 0.0
    %3262 = vmatprep.subr.mxu0 0.0
    %3263 = vmatpush1.msra.mxu0 0.0
    %3264 = vmatprep.subr.mxu0 0.0
    %3265 = vmatpush1.msra.mxu0 0.0
    %3266 = vmatprep.subr.mxu0 0.0
    %3267 = vmatpush1.msra.mxu0 0.0
    %3268 = vmatprep.subr.mxu0 0.0
    %3269 = vmatpush1.msra.mxu0 0.0
    %3270 = vmatprep.subr.mxu0 0.0
    %3271 = vmatpush1.msra.mxu0 0.0
    %3272 = vmatprep.subr.mxu0 0.0
    %3273 = vmatpush1.msra.mxu0 0.0
    %3274 = vmatprep.subr.mxu0 0.0
    %3275 = vmatpush1.msra.mxu0 0.0
    %3276 = vmatprep.mubr.f32.mxu0 0.0
    %3277 = vmatmul.mubr.f32.gmra.mrb[0].mxu0 %v3189
    %v3278 = vpop.f32.mrb[0].mxu0
    %v3279 = vadd.f32 %v3186, %v3278
    %v3280 = vpop.f32.mrb[0].mxu0
    %3281 = vmatprep.mubr.f32.mxu0 0.0
    %3282 = vmatmul.mubr.f32.gmra.mrb[0].mxu0 %v3192
    %v3283 = vpop.f32.mrb[0].mxu0
    %v3284 = vadd.f32 %v3186, %v3283
    %v3285 = vpop.f32.mrb[0].mxu0
    %3286 = vmatprep.mubr.f32.mxu0 0.0
    %3287 = vmatmul.mubr.f32.gmra.mrb[0].mxu0 %v3195
    %v3288 = vpop.f32.mrb[0].mxu0
    %v3289 = vadd.f32 %v3186, %v3288
    %v3290 = vpop.f32.mrb[0].mxu0
    %3291 = vmatprep.mubr.f32.mxu0 0.0
    %3292 = vmatmul.mubr.f32.gmra.mrb[0].mxu0 %v3198
    %v3293 = vpop.f32.mrb[0].mxu0
    %v3294 = vadd.f32 %v3186, %v3293
    %v3295 = vpop.f32.mrb[0].mxu0
    %3296 = vmatprep.mubr.f32.mxu0 0.0
    %3297 = vmatmul.mubr.f32.gmra.mrb[0].mxu0 %v3201
    %v3298 = vpop.f32.mrb[0].mxu0
    %v3299 = vadd.f32 %v3186, %v3298
    %v3300 = vpop.f32.mrb[0].mxu0
    %3301 = vmatprep.mubr.f32.mxu0 0.0
    %3302 = vmatmul.mubr.f32.gmra.mrb[0].mxu0 %v3204
    %v3303 = vpop.f32.mrb[0].mxu0
    %v3304 = vadd.f32 %v3186, %v3303
    %v3305 = vpop.f32.mrb[0].mxu0
    %3306 = vmatprep.mubr.f32.mxu0 0.0
    %3307 = vmatmul.mubr.f32.gmra.mrb[0].mxu0 %v3207
    %v3308 = vpop.f32.mrb[0].mxu0
    %v3309 = vadd.f32 %v3186, %v3308
    %v3310 = vpop.f32.mrb[0].mxu0
    %3311 = vmatprep.mubr.f32.mxu0 0.0
    %3312 = vmatmul.mubr.f32.gmra.mrb[0].mxu0 %v3210
    %v3313 = vpop.f32.mrb[0].mxu0
    %v3314 = vadd.f32 %v3186, %v3313
    %v3315 = vpop.f32.mrb[0].mxu0
    %3316 = vdwg.mxu0
    %v3318 = vlaneseq
    %v3319 = vshrl.u32 %v3318, 7
    %v3320 = vsub.s32 0, %v3319
    %v3321 = vrot.slane %v3173, %v3320
    %v3323 = vadd.f32 %v3321, 0.0
    %v3324 = vmul.f32 %v3279, 0.35355338
    %v3325 = vmul.f32 %v3284, 0.35355338
    %v3326 = vmul.f32 %v3289, 0.35355338
    %v3327 = vmul.f32 %v3294, 0.35355338
    %v3328 = vmul.f32 %v3299, 0.35355338
    %v3329 = vmul.f32 %v3304, 0.35355338
    %v3330 = vmul.f32 %v3309, 0.35355338
    %v3331 = vmul.f32 %v3314, 0.35355338
    %3340 = vrot.lane.b32.xlu0 %v3279, 96
    %v3341 = vpop.permute.xlu0 %3340
    %3342 = vrot.lane.b32.xlu0 %v3284, 96
    %v3343 = vpop.permute.xlu0 %3342
    %3344 = vrot.lane.b32.xlu0 %v3289, 96
    %v3345 = vpop.permute.xlu0 %3344
    %3346 = vrot.lane.b32.xlu0 %v3294, 96
    %v3347 = vpop.permute.xlu0 %3346
    %3348 = vrot.lane.b32.xlu0 %v3299, 96
    %v3349 = vpop.permute.xlu0 %3348
    %3350 = vrot.lane.b32.xlu0 %v3304, 96
    %v3351 = vpop.permute.xlu0 %3350
    %3352 = vrot.lane.b32.xlu0 %v3309, 96
    %v3353 = vpop.permute.xlu0 %3352
    %3354 = vrot.lane.b32.xlu0 %v3314, 96
    %v3355 = vpop.permute.xlu0 %3354
    %v3357 = vsel %vm417, %v3324, 0
    %v3360 = vsel %vm417, %v3325, 0
    %v3363 = vsel %vm417, %v3326, 0
    %v3366 = vsel %vm417, %v3327, 0
    %v3369 = vsel %vm417, %v3328, 0
    %v3372 = vsel %vm417, %v3329, 0
    %v3375 = vsel %vm417, %v3330, 0
    %v3378 = vsel %vm417, %v3331, 0
    %v3380 = vsel %vm417, %v3341, 0
    %v3382 = vsel %vm417, %v3343, 0
    %v3384 = vsel %vm417, %v3345, 0
    %v3386 = vsel %vm417, %v3347, 0
    %v3388 = vsel %vm417, %v3349, 0
    %v3390 = vsel %vm417, %v3351, 0
    %v3392 = vsel %vm417, %v3353, 0
    %v3394 = vsel %vm417, %v3355, 0
    %3396 = vmatprep.subr.mxu0 0.0
    %3397 = vmatpush1.xpose.msra.mxu0 %v3380
    %3398 = vmatprep.subr.mxu0 0.0
    %3399 = vmatpush1.xpose.msra.mxu0 %v3382
    %3400 = vmatprep.subr.mxu0 0.0
    %3401 = vmatpush1.xpose.msra.mxu0 %v3384
    %3402 = vmatprep.subr.mxu0 0.0
    %3403 = vmatpush1.xpose.msra.mxu0 %v3386
    %3404 = vmatprep.subr.mxu0 0.0
    %3405 = vmatpush1.xpose.msra.mxu0 %v3388
    %3406 = vmatprep.subr.mxu0 0.0
    %3407 = vmatpush1.xpose.msra.mxu0 %v3390
    %3408 = vmatprep.subr.mxu0 0.0
    %3409 = vmatpush1.xpose.msra.mxu0 %v3392
    %3410 = vmatprep.subr.mxu0 0.0
    %3411 = vmatpush1.xpose.msra.mxu0 %v3394
    %3412 = vmatprep.subr.mxu0 0.0
    %3413 = vmatpush1.xpose.msra.mxu0 0.0
    %3414 = vmatprep.subr.mxu0 0.0
    %3415 = vmatpush1.xpose.msra.mxu0 0.0
    %3416 = vmatprep.subr.mxu0 0.0
    %3417 = vmatpush1.xpose.msra.mxu0 0.0
    %3418 = vmatprep.subr.mxu0 0.0
    %3419 = vmatpush1.xpose.msra.mxu0 0.0
    %3420 = vmatprep.subr.mxu0 0.0
    %3421 = vmatpush1.xpose.msra.mxu0 0.0
    %3422 = vmatprep.subr.mxu0 0.0
    %3423 = vmatpush1.xpose.msra.mxu0 0.0
    %3424 = vmatprep.subr.mxu0 0.0
    %3425 = vmatpush1.xpose.msra.mxu0 0.0
    %3426 = vmatprep.subr.mxu0 0.0
    %3427 = vmatpush1.xpose.msra.mxu0 0.0
    %3428 = vmatprep.subr.mxu0 0.0
    %3429 = vmatpush1.xpose.msra.mxu0 0.0
    %3430 = vmatprep.subr.mxu0 0.0
    %3431 = vmatpush1.xpose.msra.mxu0 0.0
    %3432 = vmatprep.subr.mxu0 0.0
    %3433 = vmatpush1.xpose.msra.mxu0 0.0
    %3434 = vmatprep.subr.mxu0 0.0
    %3435 = vmatpush1.xpose.msra.mxu0 0.0
    %3436 = vmatprep.subr.mxu0 0.0
    %3437 = vmatpush1.xpose.msra.mxu0 0.0
    %3438 = vmatprep.subr.mxu0 0.0
    %3439 = vmatpush1.xpose.msra.mxu0 0.0
    %3440 = vmatprep.subr.mxu0 0.0
    %3441 = vmatpush1.xpose.msra.mxu0 0.0
    %3442 = vmatprep.subr.mxu0 0.0
    %3443 = vmatpush1.xpose.msra.mxu0 0.0
    %3444 = vmatprep.subr.mxu0 0.0
    %3445 = vmatpush1.xpose.msra.mxu0 0.0
    %3446 = vmatprep.subr.mxu0 0.0
    %3447 = vmatpush1.xpose.msra.mxu0 0.0
    %3448 = vmatprep.subr.mxu0 0.0
    %3449 = vmatpush1.xpose.msra.mxu0 0.0
    %3450 = vmatprep.subr.mxu0 0.0
    %3451 = vmatpush1.xpose.msra.mxu0 0.0
    %3452 = vmatprep.subr.mxu0 0.0
    %3453 = vmatpush1.xpose.msra.mxu0 0.0
    %3454 = vmatprep.subr.mxu0 0.0
    %3455 = vmatpush1.xpose.msra.mxu0 0.0
    %3456 = vmatprep.subr.mxu0 0.0
    %3457 = vmatpush1.xpose.msra.mxu0 0.0
    %3458 = vmatprep.subr.mxu0 0.0
    %3459 = vmatpush1.xpose.msra.mxu0 0.0
    %3460 = vmatprep.mubr.f32.mxu0 0.0
    %3461 = vmatmul.mubr.f32.gmra.mrb[0].mxu0 %v3357
    %v3462 = vpop.f32.mrb[0].mxu0
    %v3463 = vadd.f32 0.0, %v3462
    %v3464 = vpop.f32.mrb[0].mxu0
    %3465 = vmatprep.mubr.f32.mxu0 0.0
    %3466 = vmatmul.mubr.f32.gmra.mrb[0].mxu0 %v3360
    %v3467 = vpop.f32.mrb[0].mxu0
    %v3468 = vadd.f32 0.0, %v3467
    %v3469 = vpop.f32.mrb[0].mxu0
    %3470 = vmatprep.mubr.f32.mxu0 0.0
    %3471 = vmatmul.mubr.f32.gmra.mrb[0].mxu0 %v3363
    %v3472 = vpop.f32.mrb[0].mxu0
    %v3473 = vadd.f32 0.0, %v3472
    %v3474 = vpop.f32.mrb[0].mxu0
    %3475 = vmatprep.mubr.f32.mxu0 0.0
    %3476 = vmatmul.mubr.f32.gmra.mrb[0].mxu0 %v3366
    %v3477 = vpop.f32.mrb[0].mxu0
    %v3478 = vadd.f32 0.0, %v3477
    %v3479 = vpop.f32.mrb[0].mxu0
    %3480 = vmatprep.mubr.f32.mxu0 0.0
    %3481 = vmatmul.mubr.f32.gmra.mrb[0].mxu0 %v3369
    %v3482 = vpop.f32.mrb[0].mxu0
    %v3483 = vadd.f32 0.0, %v3482
    %v3484 = vpop.f32.mrb[0].mxu0
    %3485 = vmatprep.mubr.f32.mxu0 0.0
    %3486 = vmatmul.mubr.f32.gmra.mrb[0].mxu0 %v3372
    %v3487 = vpop.f32.mrb[0].mxu0
    %v3488 = vadd.f32 0.0, %v3487
    %v3489 = vpop.f32.mrb[0].mxu0
    %3490 = vmatprep.mubr.f32.mxu0 0.0
    %3491 = vmatmul.mubr.f32.gmra.mrb[0].mxu0 %v3375
    %v3492 = vpop.f32.mrb[0].mxu0
    %v3493 = vadd.f32 0.0, %v3492
    %v3494 = vpop.f32.mrb[0].mxu0
    %3495 = vmatprep.mubr.f32.mxu0 0.0
    %3496 = vmatmul.mubr.f32.gmra.mrb[0].mxu0 %v3378
    %v3497 = vpop.f32.mrb[0].mxu0
    %v3498 = vadd.f32 0.0, %v3497
    %v3499 = vpop.f32.mrb[0].mxu0
    %3500 = vdwg.mxu0
    %v3501 = vsel %vm563, %v3463, -inf
    %3502 = vmax.xlane.f32.xlu0 %v3501
    %v3503 = vpop.xlane.xlu0 %3502
    %v3504 = vsel %vm563, %v3468, -inf
    %3505 = vmax.xlane.f32.xlu0 %v3504
    %v3506 = vpop.xlane.xlu0 %3505
    %v3507 = vsel %vm563, %v3473, -inf
    %3508 = vmax.xlane.f32.xlu0 %v3507
    %v3509 = vpop.xlane.xlu0 %3508
    %v3510 = vsel %vm563, %v3478, -inf
    %3511 = vmax.xlane.f32.xlu0 %v3510
    %v3512 = vpop.xlane.xlu0 %3511
    %v3513 = vsel %vm563, %v3483, -inf
    %3514 = vmax.xlane.f32.xlu0 %v3513
    %v3515 = vpop.xlane.xlu0 %3514
    %v3516 = vsel %vm563, %v3488, -inf
    %3517 = vmax.xlane.f32.xlu0 %v3516
    %v3518 = vpop.xlane.xlu0 %3517
    %v3519 = vsel %vm563, %v3493, -inf
    %3520 = vmax.xlane.f32.xlu0 %v3519
    %v3521 = vpop.xlane.xlu0 %3520
    %v3522 = vsel %vm563, %v3498, -inf
    %3523 = vmax.xlane.f32.xlu0 %v3522
    %v3524 = vpop.xlane.xlu0 %3523
    %v3525 = vsub.f32 %v3463, %v3503
    %v3526 = vsub.f32 %v3468, %v3506
    %v3527 = vsub.f32 %v3473, %v3509
    %v3528 = vsub.f32 %v3478, %v3512
    %v3529 = vsub.f32 %v3483, %v3515
    %v3530 = vsub.f32 %v3488, %v3518
    %v3531 = vsub.f32 %v3493, %v3521
    %v3532 = vsub.f32 %v3498, %v3524
    %v3533 = vmul.f32 %v3525, 1.442695
    %v3534 = vpow.pop %v3533
    %v3535 = vmul.f32 %v3526, 1.442695
    %v3536 = vpow.pop %v3535
    %v3537 = vmul.f32 %v3527, 1.442695
    %v3538 = vpow.pop %v3537
    %v3539 = vmul.f32 %v3528, 1.442695
    %v3540 = vpow.pop %v3539
    %v3541 = vmul.f32 %v3529, 1.442695
    %v3542 = vpow.pop %v3541
    %v3543 = vmul.f32 %v3530, 1.442695
    %v3544 = vpow.pop %v3543
    %v3545 = vmul.f32 %v3531, 1.442695
    %v3546 = vpow.pop %v3545
    %v3547 = vmul.f32 %v3532, 1.442695
    %v3548 = vpow.pop %v3547
    %v3549 = vsel %vm563, %v3534, 0.0
    %3550 = vadd.xlane.f32.xlu0 %v3549
    %v3551 = vpop.xlane.xlu0 %3550
    %v3552 = vsel %vm563, %v3536, 0.0
    %3553 = vadd.xlane.f32.xlu0 %v3552
    %v3554 = vpop.xlane.xlu0 %3553
    %v3555 = vsel %vm563, %v3538, 0.0
    %3556 = vadd.xlane.f32.xlu0 %v3555
    %v3557 = vpop.xlane.xlu0 %3556
    %v3558 = vsel %vm563, %v3540, 0.0
    %3559 = vadd.xlane.f32.xlu0 %v3558
    %v3560 = vpop.xlane.xlu0 %3559
    %v3561 = vsel %vm563, %v3542, 0.0
    %3562 = vadd.xlane.f32.xlu0 %v3561
    %v3563 = vpop.xlane.xlu0 %3562
    %v3564 = vsel %vm563, %v3544, 0.0
    %3565 = vadd.xlane.f32.xlu0 %v3564
    %v3566 = vpop.xlane.xlu0 %3565
    %v3567 = vsel %vm563, %v3546, 0.0
    %3568 = vadd.xlane.f32.xlu0 %v3567
    %v3569 = vpop.xlane.xlu0 %3568
    %v3570 = vsel %vm563, %v3548, 0.0
    %3571 = vadd.xlane.f32.xlu0 %v3570
    %v3572 = vpop.xlane.xlu0 %3571
    %v3573 = vrcp.pop %v3551
    %v3574 = vrcp.pop %v3554
    %v3575 = vrcp.pop %v3557
    %v3576 = vrcp.pop %v3560
    %v3577 = vrcp.pop %v3563
    %v3578 = vrcp.pop %v3566
    %v3579 = vrcp.pop %v3569
    %v3580 = vrcp.pop %v3572
    %v3581 = vmul.f32 %v3534, %v3573
    %v3582 = vmul.f32 %v3536, %v3574
    %v3583 = vmul.f32 %v3538, %v3575
    %v3584 = vmul.f32 %v3540, %v3576
    %v3585 = vmul.f32 %v3542, %v3577
    %v3586 = vmul.f32 %v3544, %v3578
    %v3587 = vmul.f32 %v3546, %v3579
    %v3588 = vmul.f32 %v3548, %v3580
    %3589 = vrot.lane.b32.xlu0 %v3279, 64
    %v3590 = vpop.permute.xlu0 %3589
    %3591 = vrot.lane.b32.xlu0 %v3284, 64
    %v3592 = vpop.permute.xlu0 %3591
    %3593 = vrot.lane.b32.xlu0 %v3289, 64
    %v3594 = vpop.permute.xlu0 %3593
    %3595 = vrot.lane.b32.xlu0 %v3294, 64
    %v3596 = vpop.permute.xlu0 %3595
    %3597 = vrot.lane.b32.xlu0 %v3299, 64
    %v3598 = vpop.permute.xlu0 %3597
    %3599 = vrot.lane.b32.xlu0 %v3304, 64
    %v3600 = vpop.permute.xlu0 %3599
    %3601 = vrot.lane.b32.xlu0 %v3309, 64
    %v3602 = vpop.permute.xlu0 %3601
    %3603 = vrot.lane.b32.xlu0 %v3314, 64
    %v3604 = vpop.permute.xlu0 %3603
    %v3614 = vsel %vm563, %v3581, 0
    %v3617 = vsel %vm563, %v3582, 0
    %v3620 = vsel %vm563, %v3583, 0
    %v3623 = vsel %vm563, %v3584, 0
    %v3626 = vsel %vm563, %v3585, 0
    %v3629 = vsel %vm563, %v3586, 0
    %v3632 = vsel %vm563, %v3587, 0
    %v3635 = vsel %vm563, %v3588, 0
    %3637 = vmatprep.subr.mxu0 0.0
    %3638 = vmatpush1.msra.mxu0 %v3590
    %3639 = vmatprep.subr.mxu0 0.0
    %3640 = vmatpush1.msra.mxu0 %v3592
    %3641 = vmatprep.subr.mxu0 0.0
    %3642 = vmatpush1.msra.mxu0 %v3594
    %3643 = vmatprep.subr.mxu0 0.0
    %3644 = vmatpush1.msra.mxu0 %v3596
    %3645 = vmatprep.subr.mxu0 0.0
    %3646 = vmatpush1.msra.mxu0 %v3598
    %3647 = vmatprep.subr.mxu0 0.0
    %3648 = vmatpush1.msra.mxu0 %v3600
    %3649 = vmatprep.subr.mxu0 0.0
    %3650 = vmatpush1.msra.mxu0 %v3602
    %3651 = vmatprep.subr.mxu0 0.0
    %3652 = vmatpush1.msra.mxu0 %v3604
    %3653 = vmatprep.subr.mxu0 0.0
    %3654 = vmatpush1.msra.mxu0 0.0
    %3655 = vmatprep.subr.mxu0 0.0
    %3656 = vmatpush1.msra.mxu0 0.0
    %3657 = vmatprep.subr.mxu0 0.0
    %3658 = vmatpush1.msra.mxu0 0.0
    %3659 = vmatprep.subr.mxu0 0.0
    %3660 = vmatpush1.msra.mxu0 0.0
    %3661 = vmatprep.subr.mxu0 0.0
    %3662 = vmatpush1.msra.mxu0 0.0
    %3663 = vmatprep.subr.mxu0 0.0
    %3664 = vmatpush1.msra.mxu0 0.0
    %3665 = vmatprep.subr.mxu0 0.0
    %3666 = vmatpush1.msra.mxu0 0.0
    %3667 = vmatprep.subr.mxu0 0.0
    %3668 = vmatpush1.msra.mxu0 0.0
    %3669 = vmatprep.subr.mxu0 0.0
    %3670 = vmatpush1.msra.mxu0 0.0
    %3671 = vmatprep.subr.mxu0 0.0
    %3672 = vmatpush1.msra.mxu0 0.0
    %3673 = vmatprep.subr.mxu0 0.0
    %3674 = vmatpush1.msra.mxu0 0.0
    %3675 = vmatprep.subr.mxu0 0.0
    %3676 = vmatpush1.msra.mxu0 0.0
    %3677 = vmatprep.subr.mxu0 0.0
    %3678 = vmatpush1.msra.mxu0 0.0
    %3679 = vmatprep.subr.mxu0 0.0
    %3680 = vmatpush1.msra.mxu0 0.0
    %3681 = vmatprep.subr.mxu0 0.0
    %3682 = vmatpush1.msra.mxu0 0.0
    %3683 = vmatprep.subr.mxu0 0.0
    %3684 = vmatpush1.msra.mxu0 0.0
    %3685 = vmatprep.subr.mxu0 0.0
    %3686 = vmatpush1.msra.mxu0 0.0
    %3687 = vmatprep.subr.mxu0 0.0
    %3688 = vmatpush1.msra.mxu0 0.0
    %3689 = vmatprep.subr.mxu0 0.0
    %3690 = vmatpush1.msra.mxu0 0.0
    %3691 = vmatprep.subr.mxu0 0.0
    %3692 = vmatpush1.msra.mxu0 0.0
    %3693 = vmatprep.subr.mxu0 0.0
    %3694 = vmatpush1.msra.mxu0 0.0
    %3695 = vmatprep.subr.mxu0 0.0
    %3696 = vmatpush1.msra.mxu0 0.0
    %3697 = vmatprep.subr.mxu0 0.0
    %3698 = vmatpush1.msra.mxu0 0.0
    %3699 = vmatprep.subr.mxu0 0.0
    %3700 = vmatpush1.msra.mxu0 0.0
    %3701 = vmatprep.mubr.f32.mxu0 0.0
    %3702 = vmatmul.mubr.f32.gmra.mrb[0].mxu0 %v3614
    %v3703 = vpop.f32.mrb[0].mxu0
    %v3704 = vadd.f32 0.0, %v3703
    %v3705 = vpop.f32.mrb[0].mxu0
    %3706 = vmatprep.mubr.f32.mxu0 0.0
    %3707 = vmatmul.mubr.f32.gmra.mrb[0].mxu0 %v3617
    %v3708 = vpop.f32.mrb[0].mxu0
    %v3709 = vadd.f32 0.0, %v3708
    %v3710 = vpop.f32.mrb[0].mxu0
    %3711 = vmatprep.mubr.f32.mxu0 0.0
    %3712 = vmatmul.mubr.f32.gmra.mrb[0].mxu0 %v3620
    %v3713 = vpop.f32.mrb[0].mxu0
    %v3714 = vadd.f32 0.0, %v3713
    %v3715 = vpop.f32.mrb[0].mxu0
    %3716 = vmatprep.mubr.f32.mxu0 0.0
    %3717 = vmatmul.mubr.f32.gmra.mrb[0].mxu0 %v3623
    %v3718 = vpop.f32.mrb[0].mxu0
    %v3719 = vadd.f32 0.0, %v3718
    %v3720 = vpop.f32.mrb[0].mxu0
    %3721 = vmatprep.mubr.f32.mxu0 0.0
    %3722 = vmatmul.mubr.f32.gmra.mrb[0].mxu0 %v3626
    %v3723 = vpop.f32.mrb[0].mxu0
    %v3724 = vadd.f32 0.0, %v3723
    %v3725 = vpop.f32.mrb[0].mxu0
    %3726 = vmatprep.mubr.f32.mxu0 0.0
    %3727 = vmatmul.mubr.f32.gmra.mrb[0].mxu0 %v3629
    %v3728 = vpop.f32.mrb[0].mxu0
    %v3729 = vadd.f32 0.0, %v3728
    %v3730 = vpop.f32.mrb[0].mxu0
    %3731 = vmatprep.mubr.f32.mxu0 0.0
    %3732 = vmatmul.mubr.f32.gmra.mrb[0].mxu0 %v3632
    %v3733 = vpop.f32.mrb[0].mxu0
    %v3734 = vadd.f32 0.0, %v3733
    %v3735 = vpop.f32.mrb[0].mxu0
    %3736 = vmatprep.mubr.f32.mxu0 0.0
    %3737 = vmatmul.mubr.f32.gmra.mrb[0].mxu0 %v3635
    %v3738 = vpop.f32.mrb[0].mxu0
    %v3739 = vadd.f32 0.0, %v3738
    %v3740 = vpop.f32.mrb[0].mxu0
    %3741 = vdwg.mxu0
    %v3743 = vsel %vm417, %v3704, 0
    %v3746 = vsel %vm417, %v3709, 0
    %v3749 = vsel %vm417, %v3714, 0
    %v3752 = vsel %vm417, %v3719, 0
    %v3755 = vsel %vm417, %v3724, 0
    %v3758 = vsel %vm417, %v3729, 0
    %v3761 = vsel %vm417, %v3734, 0
    %v3764 = vsel %vm417, %v3739, 0
    %3766 = vmatprep.subr.mxu0 0.0
    %3767 = vmatpush1.msra.mxu0 %v3168
    %3768 = vmatprep.subr.mxu0 0.0
    %3769 = vmatpush1.msra.mxu0 0.0
    %3770 = vmatprep.subr.mxu0 0.0
    %3771 = vmatpush1.msra.mxu0 0.0
    %3772 = vmatprep.subr.mxu0 0.0
    %3773 = vmatpush1.msra.mxu0 0.0
    %3774 = vmatprep.subr.mxu0 0.0
    %3775 = vmatpush1.msra.mxu0 0.0
    %3776 = vmatprep.subr.mxu0 0.0
    %3777 = vmatpush1.msra.mxu0 0.0
    %3778 = vmatprep.subr.mxu0 0.0
    %3779 = vmatpush1.msra.mxu0 0.0
    %3780 = vmatprep.subr.mxu0 0.0
    %3781 = vmatpush1.msra.mxu0 0.0
    %3782 = vmatprep.subr.mxu0 0.0
    %3783 = vmatpush1.msra.mxu0 0.0
    %3784 = vmatprep.subr.mxu0 0.0
    %3785 = vmatpush1.msra.mxu0 0.0
    %3786 = vmatprep.subr.mxu0 0.0
    %3787 = vmatpush1.msra.mxu0 0.0
    %3788 = vmatprep.subr.mxu0 0.0
    %3789 = vmatpush1.msra.mxu0 0.0
    %3790 = vmatprep.subr.mxu0 0.0
    %3791 = vmatpush1.msra.mxu0 0.0
    %3792 = vmatprep.subr.mxu0 0.0
    %3793 = vmatpush1.msra.mxu0 0.0
    %3794 = vmatprep.subr.mxu0 0.0
    %3795 = vmatpush1.msra.mxu0 0.0
    %3796 = vmatprep.subr.mxu0 0.0
    %3797 = vmatpush1.msra.mxu0 0.0
    %3798 = vmatprep.subr.mxu0 0.0
    %3799 = vmatpush1.msra.mxu0 0.0
    %3800 = vmatprep.subr.mxu0 0.0
    %3801 = vmatpush1.msra.mxu0 0.0
    %3802 = vmatprep.subr.mxu0 0.0
    %3803 = vmatpush1.msra.mxu0 0.0
    %3804 = vmatprep.subr.mxu0 0.0
    %3805 = vmatpush1.msra.mxu0 0.0
    %3806 = vmatprep.subr.mxu0 0.0
    %3807 = vmatpush1.msra.mxu0 0.0
    %3808 = vmatprep.subr.mxu0 0.0
    %3809 = vmatpush1.msra.mxu0 0.0
    %3810 = vmatprep.subr.mxu0 0.0
    %3811 = vmatpush1.msra.mxu0 0.0
    %3812 = vmatprep.subr.mxu0 0.0
    %3813 = vmatpush1.msra.mxu0 0.0
    %3814 = vmatprep.subr.mxu0 0.0
    %3815 = vmatpush1.msra.mxu0 0.0
    %3816 = vmatprep.subr.mxu0 0.0
    %3817 = vmatpush1.msra.mxu0 0.0
    %3818 = vmatprep.subr.mxu0 0.0
    %3819 = vmatpush1.msra.mxu0 0.0
    %3820 = vmatprep.subr.mxu0 0.0
    %3821 = vmatpush1.msra.mxu0 0.0
    %3822 = vmatprep.subr.mxu0 0.0
    %3823 = vmatpush1.msra.mxu0 0.0
    %3824 = vmatprep.subr.mxu0 0.0
    %3825 = vmatpush1.msra.mxu0 0.0
    %3826 = vmatprep.subr.mxu0 0.0
    %3827 = vmatpush1.msra.mxu0 0.0
    %3828 = vmatprep.subr.mxu0 0.0
    %3829 = vmatpush1.msra.mxu0 0.0
    %3830 = vmatprep.mubr.f32.mxu0 0.0
    %3831 = vmatmul.mubr.f32.gmra.mrb[0].mxu0 %v3743
    %v3832 = vpop.f32.mrb[0].mxu0
    %v3833 = vadd.f32 0.0, %v3832
    %v3834 = vpop.f32.mrb[0].mxu0
    %3835 = vmatprep.mubr.f32.mxu0 0.0
    %3836 = vmatmul.mubr.f32.gmra.mrb[0].mxu0 %v3746
    %v3837 = vpop.f32.mrb[0].mxu0
    %v3838 = vadd.f32 0.0, %v3837
    %v3839 = vpop.f32.mrb[0].mxu0
    %3840 = vmatprep.mubr.f32.mxu0 0.0
    %3841 = vmatmul.mubr.f32.gmra.mrb[0].mxu0 %v3749
    %v3842 = vpop.f32.mrb[0].mxu0
    %v3843 = vadd.f32 0.0, %v3842
    %v3844 = vpop.f32.mrb[0].mxu0
    %3845 = vmatprep.mubr.f32.mxu0 0.0
    %3846 = vmatmul.mubr.f32.gmra.mrb[0].mxu0 %v3752
    %v3847 = vpop.f32.mrb[0].mxu0
    %v3848 = vadd.f32 0.0, %v3847
    %v3849 = vpop.f32.mrb[0].mxu0
    %3850 = vmatprep.mubr.f32.mxu0 0.0
    %3851 = vmatmul.mubr.f32.gmra.mrb[0].mxu0 %v3755
    %v3852 = vpop.f32.mrb[0].mxu0
    %v3853 = vadd.f32 0.0, %v3852
    %v3854 = vpop.f32.mrb[0].mxu0
    %3855 = vmatprep.mubr.f32.mxu0 0.0
    %3856 = vmatmul.mubr.f32.gmra.mrb[0].mxu0 %v3758
    %v3857 = vpop.f32.mrb[0].mxu0
    %v3858 = vadd.f32 0.0, %v3857
    %v3859 = vpop.f32.mrb[0].mxu0
    %3860 = vmatprep.mubr.f32.mxu0 0.0
    %3861 = vmatmul.mubr.f32.gmra.mrb[0].mxu0 %v3761
    %v3862 = vpop.f32.mrb[0].mxu0
    %v3863 = vadd.f32 0.0, %v3862
    %v3864 = vpop.f32.mrb[0].mxu0
    %3865 = vmatprep.mubr.f32.mxu0 0.0
    %3866 = vmatmul.mubr.f32.gmra.mrb[0].mxu0 %v3764
    %v3867 = vpop.f32.mrb[0].mxu0
    %v3868 = vadd.f32 0.0, %v3867
    %v3869 = vpop.f32.mrb[0].mxu0
    %3870 = vdwg.mxu0
    %v3871 = vadd.f32 %v3323, %v3833
    %v3872 = vadd.f32 %v3323, %v3838
    %v3873 = vadd.f32 %v3323, %v3843
    %v3874 = vadd.f32 %v3323, %v3848
    %v3875 = vadd.f32 %v3323, %v3853
    %v3876 = vadd.f32 %v3323, %v3858
    %v3877 = vadd.f32 %v3323, %v3863
    %v3878 = vadd.f32 %v3323, %v3868
    %3879 = vrot.lane.b32.xlu0 %v3324, 120
    %v3880 = vpop.permute.xlu0 %3879
    %3881 = vrot.lane.b32.xlu0 %v3325, 120
    %v3882 = vpop.permute.xlu0 %3881
    %3883 = vrot.lane.b32.xlu0 %v3326, 120
    %v3884 = vpop.permute.xlu0 %3883
    %3885 = vrot.lane.b32.xlu0 %v3327, 120
    %v3886 = vpop.permute.xlu0 %3885
    %3887 = vrot.lane.b32.xlu0 %v3328, 120
    %v3888 = vpop.permute.xlu0 %3887
    %3889 = vrot.lane.b32.xlu0 %v3329, 120
    %v3890 = vpop.permute.xlu0 %3889
    %3891 = vrot.lane.b32.xlu0 %v3330, 120
    %v3892 = vpop.permute.xlu0 %3891
    %3893 = vrot.lane.b32.xlu0 %v3331, 120
    %v3894 = vpop.permute.xlu0 %3893
    %3895 = vrot.lane.b32.xlu0 %v3279, 88
    %v3896 = vpop.permute.xlu0 %3895
    %3897 = vrot.lane.b32.xlu0 %v3284, 88
    %v3898 = vpop.permute.xlu0 %3897
    %3899 = vrot.lane.b32.xlu0 %v3289, 88
    %v3900 = vpop.permute.xlu0 %3899
    %3901 = vrot.lane.b32.xlu0 %v3294, 88
    %v3902 = vpop.permute.xlu0 %3901
    %3903 = vrot.lane.b32.xlu0 %v3299, 88
    %v3904 = vpop.permute.xlu0 %3903
    %3905 = vrot.lane.b32.xlu0 %v3304, 88
    %v3906 = vpop.permute.xlu0 %3905
    %3907 = vrot.lane.b32.xlu0 %v3309, 88
    %v3908 = vpop.permute.xlu0 %3907
    %3909 = vrot.lane.b32.xlu0 %v3314, 88
    %v3910 = vpop.permute.xlu0 %3909
    %v3911 = vsel %vm417, %v3880, 0
    %v3913 = vsel %vm417, %v3882, 0
    %v3915 = vsel %vm417, %v3884, 0
    %v3917 = vsel %vm417, %v3886, 0
    %v3919 = vsel %vm417, %v3888, 0
    %v3921 = vsel %vm417, %v3890, 0
    %v3923 = vsel %vm417, %v3892, 0
    %v3925 = vsel %vm417, %v3894, 0
    %v3927 = vsel %vm417, %v3896, 0
    %v3929 = vsel %vm417, %v3898, 0
    %v3931 = vsel %vm417, %v3900, 0
    %v3933 = vsel %vm417, %v3902, 0
    %v3935 = vsel %vm417, %v3904, 0
    %v3937 = vsel %vm417, %v3906, 0
    %v3939 = vsel %vm417, %v3908, 0
    %v3941 = vsel %vm417, %v3910, 0
    %3943 = vmatprep.subr.mxu0 0.0
    %3944 = vmatpush1.xpose.msra.mxu0 %v3927
    %3945 = vmatprep.subr.mxu0 0.0
    %3946 = vmatpush1.xpose.msra.mxu0 %v3929
    %3947 = vmatprep.subr.mxu0 0.0
    %3948 = vmatpush1.xpose.msra.mxu0 %v3931
    %3949 = vmatprep.subr.mxu0 0.0
    %3950 = vmatpush1.xpose.msra.mxu0 %v3933
    %3951 = vmatprep.subr.mxu0 0.0
    %3952 = vmatpush1.xpose.msra.mxu0 %v3935
    %3953 = vmatprep.subr.mxu0 0.0
    %3954 = vmatpush1.xpose.msra.mxu0 %v3937
    %3955 = vmatprep.subr.mxu0 0.0
    %3956 = vmatpush1.xpose.msra.mxu0 %v3939
    %3957 = vmatprep.subr.mxu0 0.0
    %3958 = vmatpush1.xpose.msra.mxu0 %v3941
    %3959 = vmatprep.subr.mxu0 0.0
    %3960 = vmatpush1.xpose.msra.mxu0 0.0
    %3961 = vmatprep.subr.mxu0 0.0
    %3962 = vmatpush1.xpose.msra.mxu0 0.0
    %3963 = vmatprep.subr.mxu0 0.0
    %3964 = vmatpush1.xpose.msra.mxu0 0.0
    %3965 = vmatprep.subr.mxu0 0.0
    %3966 = vmatpush1.xpose.msra.mxu0 0.0
    %3967 = vmatprep.subr.mxu0 0.0
    %3968 = vmatpush1.xpose.msra.mxu0 0.0
    %3969 = vmatprep.subr.mxu0 0.0
    %3970 = vmatpush1.xpose.msra.mxu0 0.0
    %3971 = vmatprep.subr.mxu0 0.0
    %3972 = vmatpush1.xpose.msra.mxu0 0.0
    %3973 = vmatprep.subr.mxu0 0.0
    %3974 = vmatpush1.xpose.msra.mxu0 0.0
    %3975 = vmatprep.subr.mxu0 0.0
    %3976 = vmatpush1.xpose.msra.mxu0 0.0
    %3977 = vmatprep.subr.mxu0 0.0
    %3978 = vmatpush1.xpose.msra.mxu0 0.0
    %3979 = vmatprep.subr.mxu0 0.0
    %3980 = vmatpush1.xpose.msra.mxu0 0.0
    %3981 = vmatprep.subr.mxu0 0.0
    %3982 = vmatpush1.xpose.msra.mxu0 0.0
    %3983 = vmatprep.subr.mxu0 0.0
    %3984 = vmatpush1.xpose.msra.mxu0 0.0
    %3985 = vmatprep.subr.mxu0 0.0
    %3986 = vmatpush1.xpose.msra.mxu0 0.0
    %3987 = vmatprep.subr.mxu0 0.0
    %3988 = vmatpush1.xpose.msra.mxu0 0.0
    %3989 = vmatprep.subr.mxu0 0.0
    %3990 = vmatpush1.xpose.msra.mxu0 0.0
    %3991 = vmatprep.subr.mxu0 0.0
    %3992 = vmatpush1.xpose.msra.mxu0 0.0
    %3993 = vmatprep.subr.mxu0 0.0
    %3994 = vmatpush1.xpose.msra.mxu0 0.0
    %3995 = vmatprep.subr.mxu0 0.0
    %3996 = vmatpush1.xpose.msra.mxu0 0.0
    %3997 = vmatprep.subr.mxu0 0.0
    %3998 = vmatpush1.xpose.msra.mxu0 0.0
    %3999 = vmatprep.subr.mxu0 0.0
    %4000 = vmatpush1.xpose.msra.mxu0 0.0
    %4001 = vmatprep.subr.mxu0 0.0
    %4002 = vmatpush1.xpose.msra.mxu0 0.0
    %4003 = vmatprep.subr.mxu0 0.0
    %4004 = vmatpush1.xpose.msra.mxu0 0.0
    %4005 = vmatprep.subr.mxu0 0.0
    %4006 = vmatpush1.xpose.msra.mxu0 0.0
    %4007 = vmatprep.mubr.f32.mxu0 0.0
    %4008 = vmatmul.mubr.f32.gmra.mrb[0].mxu0 %v3911
    %v4009 = vpop.f32.mrb[0].mxu0
    %v4010 = vadd.f32 0.0, %v4009
    %v4011 = vpop.f32.mrb[0].mxu0
    %4012 = vmatprep.mubr.f32.mxu0 0.0
    %4013 = vmatmul.mubr.f32.gmra.mrb[0].mxu0 %v3913
    %v4014 = vpop.f32.mrb[0].mxu0
    %v4015 = vadd.f32 0.0, %v4014
    %v4016 = vpop.f32.mrb[0].mxu0
    %4017 = vmatprep.mubr.f32.mxu0 0.0
    %4018 = vmatmul.mubr.f32.gmra.mrb[0].mxu0 %v3915
    %v4019 = vpop.f32.mrb[0].mxu0
    %v4020 = vadd.f32 0.0, %v4019
    %v4021 = vpop.f32.mrb[0].mxu0
    %4022 = vmatprep.mubr.f32.mxu0 0.0
    %4023 = vmatmul.mubr.f32.gmra.mrb[0].mxu0 %v3917
    %v4024 = vpop.f32.mrb[0].mxu0
    %v4025 = vadd.f32 0.0, %v4024
    %v4026 = vpop.f32.mrb[0].mxu0
    %4027 = vmatprep.mubr.f32.mxu0 0.0
    %4028 = vmatmul.mubr.f32.gmra.mrb[0].mxu0 %v3919
    %v4029 = vpop.f32.mrb[0].mxu0
    %v4030 = vadd.f32 0.0, %v4029
    %v4031 = vpop.f32.mrb[0].mxu0
    %4032 = vmatprep.mubr.f32.mxu0 0.0
    %4033 = vmatmul.mubr.f32.gmra.mrb[0].mxu0 %v3921
    %v4034 = vpop.f32.mrb[0].mxu0
    %v4035 = vadd.f32 0.0, %v4034
    %v4036 = vpop.f32.mrb[0].mxu0
    %4037 = vmatprep.mubr.f32.mxu0 0.0
    %4038 = vmatmul.mubr.f32.gmra.mrb[0].mxu0 %v3923
    %v4039 = vpop.f32.mrb[0].mxu0
    %v4040 = vadd.f32 0.0, %v4039
    %v4041 = vpop.f32.mrb[0].mxu0
    %4042 = vmatprep.mubr.f32.mxu0 0.0
    %4043 = vmatmul.mubr.f32.gmra.mrb[0].mxu0 %v3925
    %v4044 = vpop.f32.mrb[0].mxu0
    %v4045 = vadd.f32 0.0, %v4044
    %v4046 = vpop.f32.mrb[0].mxu0
    %4047 = vdwg.mxu0
    %v4048 = vsel %vm563, %v4010, -inf
    %4049 = vmax.xlane.f32.xlu0 %v4048
    %v4050 = vpop.xlane.xlu0 %4049
    %v4051 = vsel %vm563, %v4015, -inf
    %4052 = vmax.xlane.f32.xlu0 %v4051
    %v4053 = vpop.xlane.xlu0 %4052
    %v4054 = vsel %vm563, %v4020, -inf
    %4055 = vmax.xlane.f32.xlu0 %v4054
    %v4056 = vpop.xlane.xlu0 %4055
    %v4057 = vsel %vm563, %v4025, -inf
    %4058 = vmax.xlane.f32.xlu0 %v4057
    %v4059 = vpop.xlane.xlu0 %4058
    %v4060 = vsel %vm563, %v4030, -inf
    %4061 = vmax.xlane.f32.xlu0 %v4060
    %v4062 = vpop.xlane.xlu0 %4061
    %v4063 = vsel %vm563, %v4035, -inf
    %4064 = vmax.xlane.f32.xlu0 %v4063
    %v4065 = vpop.xlane.xlu0 %4064
    %v4066 = vsel %vm563, %v4040, -inf
    %4067 = vmax.xlane.f32.xlu0 %v4066
    %v4068 = vpop.xlane.xlu0 %4067
    %v4069 = vsel %vm563, %v4045, -inf
    %4070 = vmax.xlane.f32.xlu0 %v4069
    %v4071 = vpop.xlane.xlu0 %4070
    %v4072 = vsub.f32 %v4010, %v4050
    %v4073 = vsub.f32 %v4015, %v4053
    %v4074 = vsub.f32 %v4020, %v4056
    %v4075 = vsub.f32 %v4025, %v4059
    %v4076 = vsub.f32 %v4030, %v4062
    %v4077 = vsub.f32 %v4035, %v4065
    %v4078 = vsub.f32 %v4040, %v4068
    %v4079 = vsub.f32 %v4045, %v4071
    %v4080 = vmul.f32 %v4072, 1.442695
    %v4081 = vpow.pop %v4080
    %v4082 = vmul.f32 %v4073, 1.442695
    %v4083 = vpow.pop %v4082
    %v4084 = vmul.f32 %v4074, 1.442695
    %v4085 = vpow.pop %v4084
    %v4086 = vmul.f32 %v4075, 1.442695
    %v4087 = vpow.pop %v4086
    %v4088 = vmul.f32 %v4076, 1.442695
    %v4089 = vpow.pop %v4088
    %v4090 = vmul.f32 %v4077, 1.442695
    %v4091 = vpow.pop %v4090
    %v4092 = vmul.f32 %v4078, 1.442695
    %v4093 = vpow.pop %v4092
    %v4094 = vmul.f32 %v4079, 1.442695
    %v4095 = vpow.pop %v4094
    %v4096 = vsel %vm563, %v4081, 0.0
    %4097 = vadd.xlane.f32.xlu0 %v4096
    %v4098 = vpop.xlane.xlu0 %4097
    %v4099 = vsel %vm563, %v4083, 0.0
    %4100 = vadd.xlane.f32.xlu0 %v4099
    %v4101 = vpop.xlane.xlu0 %4100
    %v4102 = vsel %vm563, %v4085, 0.0
    %4103 = vadd.xlane.f32.xlu0 %v4102
    %v4104 = vpop.xlane.xlu0 %4103
    %v4105 = vsel %vm563, %v4087, 0.0
    %4106 = vadd.xlane.f32.xlu0 %v4105
    %v4107 = vpop.xlane.xlu0 %4106
    %v4108 = vsel %vm563, %v4089, 0.0
    %4109 = vadd.xlane.f32.xlu0 %v4108
    %v4110 = vpop.xlane.xlu0 %4109
    %v4111 = vsel %vm563, %v4091, 0.0
    %4112 = vadd.xlane.f32.xlu0 %v4111
    %v4113 = vpop.xlane.xlu0 %4112
    %v4114 = vsel %vm563, %v4093, 0.0
    %4115 = vadd.xlane.f32.xlu0 %v4114
    %v4116 = vpop.xlane.xlu0 %4115
    %v4117 = vsel %vm563, %v4095, 0.0
    %4118 = vadd.xlane.f32.xlu0 %v4117
    %v4119 = vpop.xlane.xlu0 %4118
    %v4120 = vrcp.pop %v4098
    %v4121 = vrcp.pop %v4101
    %v4122 = vrcp.pop %v4104
    %v4123 = vrcp.pop %v4107
    %v4124 = vrcp.pop %v4110
    %v4125 = vrcp.pop %v4113
    %v4126 = vrcp.pop %v4116
    %v4127 = vrcp.pop %v4119
    %v4128 = vmul.f32 %v4081, %v4120
    %v4129 = vmul.f32 %v4083, %v4121
    %v4130 = vmul.f32 %v4085, %v4122
    %v4131 = vmul.f32 %v4087, %v4123
    %v4132 = vmul.f32 %v4089, %v4124
    %v4133 = vmul.f32 %v4091, %v4125
    %v4134 = vmul.f32 %v4093, %v4126
    %v4135 = vmul.f32 %v4095, %v4127
    %4136 = vrot.lane.b32.xlu0 %v3279, 56
    %v4137 = vpop.permute.xlu0 %4136
    %4138 = vrot.lane.b32.xlu0 %v3284, 56
    %v4139 = vpop.permute.xlu0 %4138
    %4140 = vrot.lane.b32.xlu0 %v3289, 56
    %v4141 = vpop.permute.xlu0 %4140
    %4142 = vrot.lane.b32.xlu0 %v3294, 56
    %v4143 = vpop.permute.xlu0 %4142
    %4144 = vrot.lane.b32.xlu0 %v3299, 56
    %v4145 = vpop.permute.xlu0 %4144
    %4146 = vrot.lane.b32.xlu0 %v3304, 56
    %v4147 = vpop.permute.xlu0 %4146
    %4148 = vrot.lane.b32.xlu0 %v3309, 56
    %v4149 = vpop.permute.xlu0 %4148
    %4150 = vrot.lane.b32.xlu0 %v3314, 56
    %v4151 = vpop.permute.xlu0 %4150
    %v4161 = vsel %vm563, %v4128, 0
    %v4164 = vsel %vm563, %v4129, 0
    %v4167 = vsel %vm563, %v4130, 0
    %v4170 = vsel %vm563, %v4131, 0
    %v4173 = vsel %vm563, %v4132, 0
    %v4176 = vsel %vm563, %v4133, 0
    %v4179 = vsel %vm563, %v4134, 0
    %v4182 = vsel %vm563, %v4135, 0
    %4184 = vmatprep.subr.mxu0 0.0
    %4185 = vmatpush1.msra.mxu0 %v4137
    %4186 = vmatprep.subr.mxu0 0.0
    %4187 = vmatpush1.msra.mxu0 %v4139
    %4188 = vmatprep.subr.mxu0 0.0
    %4189 = vmatpush1.msra.mxu0 %v4141
    %4190 = vmatprep.subr.mxu0 0.0
    %4191 = vmatpush1.msra.mxu0 %v4143
    %4192 = vmatprep.subr.mxu0 0.0
    %4193 = vmatpush1.msra.mxu0 %v4145
    %4194 = vmatprep.subr.mxu0 0.0
    %4195 = vmatpush1.msra.mxu0 %v4147
    %4196 = vmatprep.subr.mxu0 0.0
    %4197 = vmatpush1.msra.mxu0 %v4149
    %4198 = vmatprep.subr.mxu0 0.0
    %4199 = vmatpush1.msra.mxu0 %v4151
    %4200 = vmatprep.subr.mxu0 0.0
    %4201 = vmatpush1.msra.mxu0 0.0
    %4202 = vmatprep.subr.mxu0 0.0
    %4203 = vmatpush1.msra.mxu0 0.0
    %4204 = vmatprep.subr.mxu0 0.0
    %4205 = vmatpush1.msra.mxu0 0.0
    %4206 = vmatprep.subr.mxu0 0.0
    %4207 = vmatpush1.msra.mxu0 0.0
    %4208 = vmatprep.subr.mxu0 0.0
    %4209 = vmatpush1.msra.mxu0 0.0
    %4210 = vmatprep.subr.mxu0 0.0
    %4211 = vmatpush1.msra.mxu0 0.0
    %4212 = vmatprep.subr.mxu0 0.0
    %4213 = vmatpush1.msra.mxu0 0.0
    %4214 = vmatprep.subr.mxu0 0.0
    %4215 = vmatpush1.msra.mxu0 0.0
    %4216 = vmatprep.subr.mxu0 0.0
    %4217 = vmatpush1.msra.mxu0 0.0
    %4218 = vmatprep.subr.mxu0 0.0
    %4219 = vmatpush1.msra.mxu0 0.0
    %4220 = vmatprep.subr.mxu0 0.0
    %4221 = vmatpush1.msra.mxu0 0.0
    %4222 = vmatprep.subr.mxu0 0.0
    %4223 = vmatpush1.msra.mxu0 0.0
    %4224 = vmatprep.subr.mxu0 0.0
    %4225 = vmatpush1.msra.mxu0 0.0
    %4226 = vmatprep.subr.mxu0 0.0
    %4227 = vmatpush1.msra.mxu0 0.0
    %4228 = vmatprep.subr.mxu0 0.0
    %4229 = vmatpush1.msra.mxu0 0.0
    %4230 = vmatprep.subr.mxu0 0.0
    %4231 = vmatpush1.msra.mxu0 0.0
    %4232 = vmatprep.subr.mxu0 0.0
    %4233 = vmatpush1.msra.mxu0 0.0
    %4234 = vmatprep.subr.mxu0 0.0
    %4235 = vmatpush1.msra.mxu0 0.0
    %4236 = vmatprep.subr.mxu0 0.0
    %4237 = vmatpush1.msra.mxu0 0.0
    %4238 = vmatprep.subr.mxu0 0.0
    %4239 = vmatpush1.msra.mxu0 0.0
    %4240 = vmatprep.subr.mxu0 0.0
    %4241 = vmatpush1.msra.mxu0 0.0
    %4242 = vmatprep.subr.mxu0 0.0
    %4243 = vmatpush1.msra.mxu0 0.0
    %4244 = vmatprep.subr.mxu0 0.0
    %4245 = vmatpush1.msra.mxu0 0.0
    %4246 = vmatprep.subr.mxu0 0.0
    %4247 = vmatpush1.msra.mxu0 0.0
    %4248 = vmatprep.mubr.f32.mxu0 0.0
    %4249 = vmatmul.mubr.f32.gmra.mrb[0].mxu0 %v4161
    %v4250 = vpop.f32.mrb[0].mxu0
    %v4251 = vadd.f32 0.0, %v4250
    %v4252 = vpop.f32.mrb[0].mxu0
    %4253 = vmatprep.mubr.f32.mxu0 0.0
    %4254 = vmatmul.mubr.f32.gmra.mrb[0].mxu0 %v4164
    %v4255 = vpop.f32.mrb[0].mxu0
    %v4256 = vadd.f32 0.0, %v4255
    %v4257 = vpop.f32.mrb[0].mxu0
    %4258 = vmatprep.mubr.f32.mxu0 0.0
    %4259 = vmatmul.mubr.f32.gmra.mrb[0].mxu0 %v4167
    %v4260 = vpop.f32.mrb[0].mxu0
    %v4261 = vadd.f32 0.0, %v4260
    %v4262 = vpop.f32.mrb[0].mxu0
    %4263 = vmatprep.mubr.f32.mxu0 0.0
    %4264 = vmatmul.mubr.f32.gmra.mrb[0].mxu0 %v4170
    %v4265 = vpop.f32.mrb[0].mxu0
    %v4266 = vadd.f32 0.0, %v4265
    %v4267 = vpop.f32.mrb[0].mxu0
    %4268 = vmatprep.mubr.f32.mxu0 0.0
    %4269 = vmatmul.mubr.f32.gmra.mrb[0].mxu0 %v4173
    %v4270 = vpop.f32.mrb[0].mxu0
    %v4271 = vadd.f32 0.0, %v4270
    %v4272 = vpop.f32.mrb[0].mxu0
    %4273 = vmatprep.mubr.f32.mxu0 0.0
    %4274 = vmatmul.mubr.f32.gmra.mrb[0].mxu0 %v4176
    %v4275 = vpop.f32.mrb[0].mxu0
    %v4276 = vadd.f32 0.0, %v4275
    %v4277 = vpop.f32.mrb[0].mxu0
    %4278 = vmatprep.mubr.f32.mxu0 0.0
    %4279 = vmatmul.mubr.f32.gmra.mrb[0].mxu0 %v4179
    %v4280 = vpop.f32.mrb[0].mxu0
    %v4281 = vadd.f32 0.0, %v4280
    %v4282 = vpop.f32.mrb[0].mxu0
    %4283 = vmatprep.mubr.f32.mxu0 0.0
    %4284 = vmatmul.mubr.f32.gmra.mrb[0].mxu0 %v4182
    %v4285 = vpop.f32.mrb[0].mxu0
    %v4286 = vadd.f32 0.0, %v4285
    %v4287 = vpop.f32.mrb[0].mxu0
    %4288 = vdwg.mxu0
    %v4290 = vsel %vm417, %v4251, 0
    %v4293 = vsel %vm417, %v4256, 0
    %v4296 = vsel %vm417, %v4261, 0
    %v4299 = vsel %vm417, %v4266, 0
    %v4302 = vsel %vm417, %v4271, 0
    %v4305 = vsel %vm417, %v4276, 0
    %v4308 = vsel %vm417, %v4281, 0
    %v4311 = vsel %vm417, %v4286, 0
    %4313 = vmatprep.subr.mxu0 0.0
    %4314 = vmatpush1.msra.mxu0 %v3169
    %4315 = vmatprep.subr.mxu0 0.0
    %4316 = vmatpush1.msra.mxu0 0.0
    %4317 = vmatprep.subr.mxu0 0.0
    %4318 = vmatpush1.msra.mxu0 0.0
    %4319 = vmatprep.subr.mxu0 0.0
    %4320 = vmatpush1.msra.mxu0 0.0
    %4321 = vmatprep.subr.mxu0 0.0
    %4322 = vmatpush1.msra.mxu0 0.0
    %4323 = vmatprep.subr.mxu0 0.0
    %4324 = vmatpush1.msra.mxu0 0.0
    %4325 = vmatprep.subr.mxu0 0.0
    %4326 = vmatpush1.msra.mxu0 0.0
    %4327 = vmatprep.subr.mxu0 0.0
    %4328 = vmatpush1.msra.mxu0 0.0
    %4329 = vmatprep.subr.mxu0 0.0
    %4330 = vmatpush1.msra.mxu0 0.0
    %4331 = vmatprep.subr.mxu0 0.0
    %4332 = vmatpush1.msra.mxu0 0.0
    %4333 = vmatprep.subr.mxu0 0.0
    %4334 = vmatpush1.msra.mxu0 0.0
    %4335 = vmatprep.subr.mxu0 0.0
    %4336 = vmatpush1.msra.mxu0 0.0
    %4337 = vmatprep.subr.mxu0 0.0
    %4338 = vmatpush1.msra.mxu0 0.0
    %4339 = vmatprep.subr.mxu0 0.0
    %4340 = vmatpush1.msra.mxu0 0.0
    %4341 = vmatprep.subr.mxu0 0.0
    %4342 = vmatpush1.msra.mxu0 0.0
    %4343 = vmatprep.subr.mxu0 0.0
    %4344 = vmatpush1.msra.mxu0 0.0
    %4345 = vmatprep.subr.mxu0 0.0
    %4346 = vmatpush1.msra.mxu0 0.0
    %4347 = vmatprep.subr.mxu0 0.0
    %4348 = vmatpush1.msra.mxu0 0.0
    %4349 = vmatprep.subr.mxu0 0.0
    %4350 = vmatpush1.msra.mxu0 0.0
    %4351 = vmatprep.subr.mxu0 0.0
    %4352 = vmatpush1.msra.mxu0 0.0
    %4353 = vmatprep.subr.mxu0 0.0
    %4354 = vmatpush1.msra.mxu0 0.0
    %4355 = vmatprep.subr.mxu0 0.0
    %4356 = vmatpush1.msra.mxu0 0.0
    %4357 = vmatprep.subr.mxu0 0.0
    %4358 = vmatpush1.msra.mxu0 0.0
    %4359 = vmatprep.subr.mxu0 0.0
    %4360 = vmatpush1.msra.mxu0 0.0
    %4361 = vmatprep.subr.mxu0 0.0
    %4362 = vmatpush1.msra.mxu0 0.0
    %4363 = vmatprep.subr.mxu0 0.0
    %4364 = vmatpush1.msra.mxu0 0.0
    %4365 = vmatprep.subr.mxu0 0.0
    %4366 = vmatpush1.msra.mxu0 0.0
    %4367 = vmatprep.subr.mxu0 0.0
    %4368 = vmatpush1.msra.mxu0 0.0
    %4369 = vmatprep.subr.mxu0 0.0
    %4370 = vmatpush1.msra.mxu0 0.0
    %4371 = vmatprep.subr.mxu0 0.0
    %4372 = vmatpush1.msra.mxu0 0.0
    %4373 = vmatprep.subr.mxu0 0.0
    %4374 = vmatpush1.msra.mxu0 0.0
    %4375 = vmatprep.subr.mxu0 0.0
    %4376 = vmatpush1.msra.mxu0 0.0
    %4377 = vmatprep.mubr.f32.mxu0 0.0
    %4378 = vmatmul.mubr.f32.gmra.mrb[0].mxu0 %v4290
    %v4379 = vpop.f32.mrb[0].mxu0
    %v4380 = vadd.f32 0.0, %v4379
    %v4381 = vpop.f32.mrb[0].mxu0
    %4382 = vmatprep.mubr.f32.mxu0 0.0
    %4383 = vmatmul.mubr.f32.gmra.mrb[0].mxu0 %v4293
    %v4384 = vpop.f32.mrb[0].mxu0
    %v4385 = vadd.f32 0.0, %v4384
    %v4386 = vpop.f32.mrb[0].mxu0
    %4387 = vmatprep.mubr.f32.mxu0 0.0
    %4388 = vmatmul.mubr.f32.gmra.mrb[0].mxu0 %v4296
    %v4389 = vpop.f32.mrb[0].mxu0
    %v4390 = vadd.f32 0.0, %v4389
    %v4391 = vpop.f32.mrb[0].mxu0
    %4392 = vmatprep.mubr.f32.mxu0 0.0
    %4393 = vmatmul.mubr.f32.gmra.mrb[0].mxu0 %v4299
    %v4394 = vpop.f32.mrb[0].mxu0
    %v4395 = vadd.f32 0.0, %v4394
    %v4396 = vpop.f32.mrb[0].mxu0
    %4397 = vmatprep.mubr.f32.mxu0 0.0
    %4398 = vmatmul.mubr.f32.gmra.mrb[0].mxu0 %v4302
    %v4399 = vpop.f32.mrb[0].mxu0
    %v4400 = vadd.f32 0.0, %v4399
    %v4401 = vpop.f32.mrb[0].mxu0
    %4402 = vmatprep.mubr.f32.mxu0 0.0
    %4403 = vmatmul.mubr.f32.gmra.mrb[0].mxu0 %v4305
    %v4404 = vpop.f32.mrb[0].mxu0
    %v4405 = vadd.f32 0.0, %v4404
    %v4406 = vpop.f32.mrb[0].mxu0
    %4407 = vmatprep.mubr.f32.mxu0 0.0
    %4408 = vmatmul.mubr.f32.gmra.mrb[0].mxu0 %v4308
    %v4409 = vpop.f32.mrb[0].mxu0
    %v4410 = vadd.f32 0.0, %v4409
    %v4411 = vpop.f32.mrb[0].mxu0
    %4412 = vmatprep.mubr.f32.mxu0 0.0
    %4413 = vmatmul.mubr.f32.gmra.mrb[0].mxu0 %v4311
    %v4414 = vpop.f32.mrb[0].mxu0
    %v4415 = vadd.f32 0.0, %v4414
    %v4416 = vpop.f32.mrb[0].mxu0
    %4417 = vdwg.mxu0
    %v4418 = vadd.f32 %v3871, %v4380
    %v4419 = vadd.f32 %v3872, %v4385
    %v4420 = vadd.f32 %v3873, %v4390
    %v4421 = vadd.f32 %v3874, %v4395
    %v4422 = vadd.f32 %v3875, %v4400
    %v4423 = vadd.f32 %v3876, %v4405
    %v4424 = vadd.f32 %v3877, %v4410
    %v4425 = vadd.f32 %v3878, %v4415
    %4426 = vrot.lane.b32.xlu0 %v3324, 112
    %v4427 = vpop.permute.xlu0 %4426
    %4428 = vrot.lane.b32.xlu0 %v3325, 112
    %v4429 = vpop.permute.xlu0 %4428
    %4430 = vrot.lane.b32.xlu0 %v3326, 112
    %v4431 = vpop.permute.xlu0 %4430
    %4432 = vrot.lane.b32.xlu0 %v3327, 112
    %v4433 = vpop.permute.xlu0 %4432
    %4434 = vrot.lane.b32.xlu0 %v3328, 112
    %v4435 = vpop.permute.xlu0 %4434
    %4436 = vrot.lane.b32.xlu0 %v3329, 112
    %v4437 = vpop.permute.xlu0 %4436
    %4438 = vrot.lane.b32.xlu0 %v3330, 112
    %v4439 = vpop.permute.xlu0 %4438
    %4440 = vrot.lane.b32.xlu0 %v3331, 112
    %v4441 = vpop.permute.xlu0 %4440
    %4442 = vrot.lane.b32.xlu0 %v3279, 80
    %v4443 = vpop.permute.xlu0 %4442
    %4444 = vrot.lane.b32.xlu0 %v3284, 80
    %v4445 = vpop.permute.xlu0 %4444
    %4446 = vrot.lane.b32.xlu0 %v3289, 80
    %v4447 = vpop.permute.xlu0 %4446
    %4448 = vrot.lane.b32.xlu0 %v3294, 80
    %v4449 = vpop.permute.xlu0 %4448
    %4450 = vrot.lane.b32.xlu0 %v3299, 80
    %v4451 = vpop.permute.xlu0 %4450
    %4452 = vrot.lane.b32.xlu0 %v3304, 80
    %v4453 = vpop.permute.xlu0 %4452
    %4454 = vrot.lane.b32.xlu0 %v3309, 80
    %v4455 = vpop.permute.xlu0 %4454
    %4456 = vrot.lane.b32.xlu0 %v3314, 80
    %v4457 = vpop.permute.xlu0 %4456
    %v4458 = vsel %vm417, %v4427, 0
    %v4460 = vsel %vm417, %v4429, 0
    %v4462 = vsel %vm417, %v4431, 0
    %v4464 = vsel %vm417, %v4433, 0
    %v4466 = vsel %vm417, %v4435, 0
    %v4468 = vsel %vm417, %v4437, 0
    %v4470 = vsel %vm417, %v4439, 0
    %v4472 = vsel %vm417, %v4441, 0
    %v4474 = vsel %vm417, %v4443, 0
    %v4476 = vsel %vm417, %v4445, 0
    %v4478 = vsel %vm417, %v4447, 0
    %v4480 = vsel %vm417, %v4449, 0
    %v4482 = vsel %vm417, %v4451, 0
    %v4484 = vsel %vm417, %v4453, 0
    %v4486 = vsel %vm417, %v4455, 0
    %v4488 = vsel %vm417, %v4457, 0
    %4490 = vmatprep.subr.mxu0 0.0
    %4491 = vmatpush1.xpose.msra.mxu0 %v4474
    %4492 = vmatprep.subr.mxu0 0.0
    %4493 = vmatpush1.xpose.msra.mxu0 %v4476
    %4494 = vmatprep.subr.mxu0 0.0
    %4495 = vmatpush1.xpose.msra.mxu0 %v4478
    %4496 = vmatprep.subr.mxu0 0.0
    %4497 = vmatpush1.xpose.msra.mxu0 %v4480
    %4498 = vmatprep.subr.mxu0 0.0
    %4499 = vmatpush1.xpose.msra.mxu0 %v4482
    %4500 = vmatprep.subr.mxu0 0.0
    %4501 = vmatpush1.xpose.msra.mxu0 %v4484
    %4502 = vmatprep.subr.mxu0 0.0
    %4503 = vmatpush1.xpose.msra.mxu0 %v4486
    %4504 = vmatprep.subr.mxu0 0.0
    %4505 = vmatpush1.xpose.msra.mxu0 %v4488
    %4506 = vmatprep.subr.mxu0 0.0
    %4507 = vmatpush1.xpose.msra.mxu0 0.0
    %4508 = vmatprep.subr.mxu0 0.0
    %4509 = vmatpush1.xpose.msra.mxu0 0.0
    %4510 = vmatprep.subr.mxu0 0.0
    %4511 = vmatpush1.xpose.msra.mxu0 0.0
    %4512 = vmatprep.subr.mxu0 0.0
    %4513 = vmatpush1.xpose.msra.mxu0 0.0
    %4514 = vmatprep.subr.mxu0 0.0
    %4515 = vmatpush1.xpose.msra.mxu0 0.0
    %4516 = vmatprep.subr.mxu0 0.0
    %4517 = vmatpush1.xpose.msra.mxu0 0.0
    %4518 = vmatprep.subr.mxu0 0.0
    %4519 = vmatpush1.xpose.msra.mxu0 0.0
    %4520 = vmatprep.subr.mxu0 0.0
    %4521 = vmatpush1.xpose.msra.mxu0 0.0
    %4522 = vmatprep.subr.mxu0 0.0
    %4523 = vmatpush1.xpose.msra.mxu0 0.0
    %4524 = vmatprep.subr.mxu0 0.0
    %4525 = vmatpush1.xpose.msra.mxu0 0.0
    %4526 = vmatprep.subr.mxu0 0.0
    %4527 = vmatpush1.xpose.msra.mxu0 0.0
    %4528 = vmatprep.subr.mxu0 0.0
    %4529 = vmatpush1.xpose.msra.mxu0 0.0
    %4530 = vmatprep.subr.mxu0 0.0
    %4531 = vmatpush1.xpose.msra.mxu0 0.0
    %4532 = vmatprep.subr.mxu0 0.0
    %4533 = vmatpush1.xpose.msra.mxu0 0.0
    %4534 = vmatprep.subr.mxu0 0.0
    %4535 = vmatpush1.xpose.msra.mxu0 0.0
    %4536 = vmatprep.subr.mxu0 0.0
    %4537 = vmatpush1.xpose.msra.mxu0 0.0
    %4538 = vmatprep.subr.mxu0 0.0
    %4539 = vmatpush1.xpose.msra.mxu0 0.0
    %4540 = vmatprep.subr.mxu0 0.0
    %4541 = vmatpush1.xpose.msra.mxu0 0.0
    %4542 = vmatprep.subr.mxu0 0.0
    %4543 = vmatpush1.xpose.msra.mxu0 0.0
    %4544 = vmatprep.subr.mxu0 0.0
    %4545 = vmatpush1.xpose.msra.mxu0 0.0
    %4546 = vmatprep.subr.mxu0 0.0
    %4547 = vmatpush1.xpose.msra.mxu0 0.0
    %4548 = vmatprep.subr.mxu0 0.0
    %4549 = vmatpush1.xpose.msra.mxu0 0.0
    %4550 = vmatprep.subr.mxu0 0.0
    %4551 = vmatpush1.xpose.msra.mxu0 0.0
    %4552 = vmatprep.subr.mxu0 0.0
    %4553 = vmatpush1.xpose.msra.mxu0 0.0
    %4554 = vmatprep.mubr.f32.mxu0 0.0
    %4555 = vmatmul.mubr.f32.gmra.mrb[0].mxu0 %v4458
    %v4556 = vpop.f32.mrb[0].mxu0
    %v4557 = vadd.f32 0.0, %v4556
    %v4558 = vpop.f32.mrb[0].mxu0
    %4559 = vmatprep.mubr.f32.mxu0 0.0
    %4560 = vmatmul.mubr.f32.gmra.mrb[0].mxu0 %v4460
    %v4561 = vpop.f32.mrb[0].mxu0
    %v4562 = vadd.f32 0.0, %v4561
    %v4563 = vpop.f32.mrb[0].mxu0
    %4564 = vmatprep.mubr.f32.mxu0 0.0
    %4565 = vmatmul.mubr.f32.gmra.mrb[0].mxu0 %v4462
    %v4566 = vpop.f32.mrb[0].mxu0
    %v4567 = vadd.f32 0.0, %v4566
    %v4568 = vpop.f32.mrb[0].mxu0
    %4569 = vmatprep.mubr.f32.mxu0 0.0
    %4570 = vmatmul.mubr.f32.gmra.mrb[0].mxu0 %v4464
    %v4571 = vpop.f32.mrb[0].mxu0
    %v4572 = vadd.f32 0.0, %v4571
    %v4573 = vpop.f32.mrb[0].mxu0
    %4574 = vmatprep.mubr.f32.mxu0 0.0
    %4575 = vmatmul.mubr.f32.gmra.mrb[0].mxu0 %v4466
    %v4576 = vpop.f32.mrb[0].mxu0
    %v4577 = vadd.f32 0.0, %v4576
    %v4578 = vpop.f32.mrb[0].mxu0
    %4579 = vmatprep.mubr.f32.mxu0 0.0
    %4580 = vmatmul.mubr.f32.gmra.mrb[0].mxu0 %v4468
    %v4581 = vpop.f32.mrb[0].mxu0
    %v4582 = vadd.f32 0.0, %v4581
    %v4583 = vpop.f32.mrb[0].mxu0
    %4584 = vmatprep.mubr.f32.mxu0 0.0
    %4585 = vmatmul.mubr.f32.gmra.mrb[0].mxu0 %v4470
    %v4586 = vpop.f32.mrb[0].mxu0
    %v4587 = vadd.f32 0.0, %v4586
    %v4588 = vpop.f32.mrb[0].mxu0
    %4589 = vmatprep.mubr.f32.mxu0 0.0
    %4590 = vmatmul.mubr.f32.gmra.mrb[0].mxu0 %v4472
    %v4591 = vpop.f32.mrb[0].mxu0
    %v4592 = vadd.f32 0.0, %v4591
    %v4593 = vpop.f32.mrb[0].mxu0
    %4594 = vdwg.mxu0
    %v4595 = vsel %vm563, %v4557, -inf
    %4596 = vmax.xlane.f32.xlu0 %v4595
    %v4597 = vpop.xlane.xlu0 %4596
    %v4598 = vsel %vm563, %v4562, -inf
    %4599 = vmax.xlane.f32.xlu0 %v4598
    %v4600 = vpop.xlane.xlu0 %4599
    %v4601 = vsel %vm563, %v4567, -inf
    %4602 = vmax.xlane.f32.xlu0 %v4601
    %v4603 = vpop.xlane.xlu0 %4602
    %v4604 = vsel %vm563, %v4572, -inf
    %4605 = vmax.xlane.f32.xlu0 %v4604
    %v4606 = vpop.xlane.xlu0 %4605
    %v4607 = vsel %vm563, %v4577, -inf
    %4608 = vmax.xlane.f32.xlu0 %v4607
    %v4609 = vpop.xlane.xlu0 %4608
    %v4610 = vsel %vm563, %v4582, -inf
    %4611 = vmax.xlane.f32.xlu0 %v4610
    %v4612 = vpop.xlane.xlu0 %4611
    %v4613 = vsel %vm563, %v4587, -inf
    %4614 = vmax.xlane.f32.xlu0 %v4613
    %v4615 = vpop.xlane.xlu0 %4614
    %v4616 = vsel %vm563, %v4592, -inf
    %4617 = vmax.xlane.f32.xlu0 %v4616
    %v4618 = vpop.xlane.xlu0 %4617
    %v4619 = vsub.f32 %v4557, %v4597
    %v4620 = vsub.f32 %v4562, %v4600
    %v4621 = vsub.f32 %v4567, %v4603
    %v4622 = vsub.f32 %v4572, %v4606
    %v4623 = vsub.f32 %v4577, %v4609
    %v4624 = vsub.f32 %v4582, %v4612
    %v4625 = vsub.f32 %v4587, %v4615
    %v4626 = vsub.f32 %v4592, %v4618
    %v4627 = vmul.f32 %v4619, 1.442695
    %v4628 = vpow.pop %v4627
    %v4629 = vmul.f32 %v4620, 1.442695
    %v4630 = vpow.pop %v4629
    %v4631 = vmul.f32 %v4621, 1.442695
    %v4632 = vpow.pop %v4631
    %v4633 = vmul.f32 %v4622, 1.442695
    %v4634 = vpow.pop %v4633
    %v4635 = vmul.f32 %v4623, 1.442695
    %v4636 = vpow.pop %v4635
    %v4637 = vmul.f32 %v4624, 1.442695
    %v4638 = vpow.pop %v4637
    %v4639 = vmul.f32 %v4625, 1.442695
    %v4640 = vpow.pop %v4639
    %v4641 = vmul.f32 %v4626, 1.442695
    %v4642 = vpow.pop %v4641
    %v4643 = vsel %vm563, %v4628, 0.0
    %4644 = vadd.xlane.f32.xlu0 %v4643
    %v4645 = vpop.xlane.xlu0 %4644
    %v4646 = vsel %vm563, %v4630, 0.0
    %4647 = vadd.xlane.f32.xlu0 %v4646
    %v4648 = vpop.xlane.xlu0 %4647
    %v4649 = vsel %vm563, %v4632, 0.0
    %4650 = vadd.xlane.f32.xlu0 %v4649
    %v4651 = vpop.xlane.xlu0 %4650
    %v4652 = vsel %vm563, %v4634, 0.0
    %4653 = vadd.xlane.f32.xlu0 %v4652
    %v4654 = vpop.xlane.xlu0 %4653
    %v4655 = vsel %vm563, %v4636, 0.0
    %4656 = vadd.xlane.f32.xlu0 %v4655
    %v4657 = vpop.xlane.xlu0 %4656
    %v4658 = vsel %vm563, %v4638, 0.0
    %4659 = vadd.xlane.f32.xlu0 %v4658
    %v4660 = vpop.xlane.xlu0 %4659
    %v4661 = vsel %vm563, %v4640, 0.0
    %4662 = vadd.xlane.f32.xlu0 %v4661
    %v4663 = vpop.xlane.xlu0 %4662
    %v4664 = vsel %vm563, %v4642, 0.0
    %4665 = vadd.xlane.f32.xlu0 %v4664
    %v4666 = vpop.xlane.xlu0 %4665
    %v4667 = vrcp.pop %v4645
    %v4668 = vrcp.pop %v4648
    %v4669 = vrcp.pop %v4651
    %v4670 = vrcp.pop %v4654
    %v4671 = vrcp.pop %v4657
    %v4672 = vrcp.pop %v4660
    %v4673 = vrcp.pop %v4663
    %v4674 = vrcp.pop %v4666
    %v4675 = vmul.f32 %v4628, %v4667
    %v4676 = vmul.f32 %v4630, %v4668
    %v4677 = vmul.f32 %v4632, %v4669
    %v4678 = vmul.f32 %v4634, %v4670
    %v4679 = vmul.f32 %v4636, %v4671
    %v4680 = vmul.f32 %v4638, %v4672
    %v4681 = vmul.f32 %v4640, %v4673
    %v4682 = vmul.f32 %v4642, %v4674
    %4683 = vrot.lane.b32.xlu0 %v3279, 48
    %v4684 = vpop.permute.xlu0 %4683
    %4685 = vrot.lane.b32.xlu0 %v3284, 48
    %v4686 = vpop.permute.xlu0 %4685
    %4687 = vrot.lane.b32.xlu0 %v3289, 48
    %v4688 = vpop.permute.xlu0 %4687
    %4689 = vrot.lane.b32.xlu0 %v3294, 48
    %v4690 = vpop.permute.xlu0 %4689
    %4691 = vrot.lane.b32.xlu0 %v3299, 48
    %v4692 = vpop.permute.xlu0 %4691
    %4693 = vrot.lane.b32.xlu0 %v3304, 48
    %v4694 = vpop.permute.xlu0 %4693
    %4695 = vrot.lane.b32.xlu0 %v3309, 48
    %v4696 = vpop.permute.xlu0 %4695
    %4697 = vrot.lane.b32.xlu0 %v3314, 48
    %v4698 = vpop.permute.xlu0 %4697
    %v4708 = vsel %vm563, %v4675, 0
    %v4711 = vsel %vm563, %v4676, 0
    %v4714 = vsel %vm563, %v4677, 0
    %v4717 = vsel %vm563, %v4678, 0
    %v4720 = vsel %vm563, %v4679, 0
    %v4723 = vsel %vm563, %v4680, 0
    %v4726 = vsel %vm563, %v4681, 0
    %v4729 = vsel %vm563, %v4682, 0
    %4731 = vmatprep.subr.mxu0 0.0
    %4732 = vmatpush1.msra.mxu0 %v4684
    %4733 = vmatprep.subr.mxu0 0.0
    %4734 = vmatpush1.msra.mxu0 %v4686
    %4735 = vmatprep.subr.mxu0 0.0
    %4736 = vmatpush1.msra.mxu0 %v4688
    %4737 = vmatprep.subr.mxu0 0.0
    %4738 = vmatpush1.msra.mxu0 %v4690
    %4739 = vmatprep.subr.mxu0 0.0
    %4740 = vmatpush1.msra.mxu0 %v4692
    %4741 = vmatprep.subr.mxu0 0.0
    %4742 = vmatpush1.msra.mxu0 %v4694
    %4743 = vmatprep.subr.mxu0 0.0
    %4744 = vmatpush1.msra.mxu0 %v4696
    %4745 = vmatprep.subr.mxu0 0.0
    %4746 = vmatpush1.msra.mxu0 %v4698
    %4747 = vmatprep.subr.mxu0 0.0
    %4748 = vmatpush1.msra.mxu0 0.0
    %4749 = vmatprep.subr.mxu0 0.0
    %4750 = vmatpush1.msra.mxu0 0.0
    %4751 = vmatprep.subr.mxu0 0.0
    %4752 = vmatpush1.msra.mxu0 0.0
    %4753 = vmatprep.subr.mxu0 0.0
    %4754 = vmatpush1.msra.mxu0 0.0
    %4755 = vmatprep.subr.mxu0 0.0
    %4756 = vmatpush1.msra.mxu0 0.0
    %4757 = vmatprep.subr.mxu0 0.0
    %4758 = vmatpush1.msra.mxu0 0.0
    %4759 = vmatprep.subr.mxu0 0.0
    %4760 = vmatpush1.msra.mxu0 0.0
    %4761 = vmatprep.subr.mxu0 0.0
    %4762 = vmatpush1.msra.mxu0 0.0
    %4763 = vmatprep.subr.mxu0 0.0
    %4764 = vmatpush1.msra.mxu0 0.0
    %4765 = vmatprep.subr.mxu0 0.0
    %4766 = vmatpush1.msra.mxu0 0.0
    %4767 = vmatprep.subr.mxu0 0.0
    %4768 = vmatpush1.msra.mxu0 0.0
    %4769 = vmatprep.subr.mxu0 0.0
    %4770 = vmatpush1.msra.mxu0 0.0
    %4771 = vmatprep.subr.mxu0 0.0
    %4772 = vmatpush1.msra.mxu0 0.0
    %4773 = vmatprep.subr.mxu0 0.0
    %4774 = vmatpush1.msra.mxu0 0.0
    %4775 = vmatprep.subr.mxu0 0.0
    %4776 = vmatpush1.msra.mxu0 0.0
    %4777 = vmatprep.subr.mxu0 0.0
    %4778 = vmatpush1.msra.mxu0 0.0
    %4779 = vmatprep.subr.mxu0 0.0
    %4780 = vmatpush1.msra.mxu0 0.0
    %4781 = vmatprep.subr.mxu0 0.0
    %4782 = vmatpush1.msra.mxu0 0.0
    %4783 = vmatprep.subr.mxu0 0.0
    %4784 = vmatpush1.msra.mxu0 0.0
    %4785 = vmatprep.subr.mxu0 0.0
    %4786 = vmatpush1.msra.mxu0 0.0
    %4787 = vmatprep.subr.mxu0 0.0
    %4788 = vmatpush1.msra.mxu0 0.0
    %4789 = vmatprep.subr.mxu0 0.0
    %4790 = vmatpush1.msra.mxu0 0.0
    %4791 = vmatprep.subr.mxu0 0.0
    %4792 = vmatpush1.msra.mxu0 0.0
    %4793 = vmatprep.subr.mxu0 0.0
    %4794 = vmatpush1.msra.mxu0 0.0
    %4795 = vmatprep.mubr.f32.mxu0 0.0
    %4796 = vmatmul.mubr.f32.gmra.mrb[0].mxu0 %v4708
    %v4797 = vpop.f32.mrb[0].mxu0
    %v4798 = vadd.f32 0.0, %v4797
    %v4799 = vpop.f32.mrb[0].mxu0
    %4800 = vmatprep.mubr.f32.mxu0 0.0
    %4801 = vmatmul.mubr.f32.gmra.mrb[0].mxu0 %v4711
    %v4802 = vpop.f32.mrb[0].mxu0
    %v4803 = vadd.f32 0.0, %v4802
    %v4804 = vpop.f32.mrb[0].mxu0
    %4805 = vmatprep.mubr.f32.mxu0 0.0
    %4806 = vmatmul.mubr.f32.gmra.mrb[0].mxu0 %v4714
    %v4807 = vpop.f32.mrb[0].mxu0
    %v4808 = vadd.f32 0.0, %v4807
    %v4809 = vpop.f32.mrb[0].mxu0
    %4810 = vmatprep.mubr.f32.mxu0 0.0
    %4811 = vmatmul.mubr.f32.gmra.mrb[0].mxu0 %v4717
    %v4812 = vpop.f32.mrb[0].mxu0
    %v4813 = vadd.f32 0.0, %v4812
    %v4814 = vpop.f32.mrb[0].mxu0
    %4815 = vmatprep.mubr.f32.mxu0 0.0
    %4816 = vmatmul.mubr.f32.gmra.mrb[0].mxu0 %v4720
    %v4817 = vpop.f32.mrb[0].mxu0
    %v4818 = vadd.f32 0.0, %v4817
    %v4819 = vpop.f32.mrb[0].mxu0
    %4820 = vmatprep.mubr.f32.mxu0 0.0
    %4821 = vmatmul.mubr.f32.gmra.mrb[0].mxu0 %v4723
    %v4822 = vpop.f32.mrb[0].mxu0
    %v4823 = vadd.f32 0.0, %v4822
    %v4824 = vpop.f32.mrb[0].mxu0
    %4825 = vmatprep.mubr.f32.mxu0 0.0
    %4826 = vmatmul.mubr.f32.gmra.mrb[0].mxu0 %v4726
    %v4827 = vpop.f32.mrb[0].mxu0
    %v4828 = vadd.f32 0.0, %v4827
    %v4829 = vpop.f32.mrb[0].mxu0
    %4830 = vmatprep.mubr.f32.mxu0 0.0
    %4831 = vmatmul.mubr.f32.gmra.mrb[0].mxu0 %v4729
    %v4832 = vpop.f32.mrb[0].mxu0
    %v4833 = vadd.f32 0.0, %v4832
    %v4834 = vpop.f32.mrb[0].mxu0
    %4835 = vdwg.mxu0
    %v4837 = vsel %vm417, %v4798, 0
    %v4840 = vsel %vm417, %v4803, 0
    %v4843 = vsel %vm417, %v4808, 0
    %v4846 = vsel %vm417, %v4813, 0
    %v4849 = vsel %vm417, %v4818, 0
    %v4852 = vsel %vm417, %v4823, 0
    %v4855 = vsel %vm417, %v4828, 0
    %v4858 = vsel %vm417, %v4833, 0
    %4860 = vmatprep.subr.mxu0 0.0
    %4861 = vmatpush1.msra.mxu0 %v3170
    %4862 = vmatprep.subr.mxu0 0.0
    %4863 = vmatpush1.msra.mxu0 0.0
    %4864 = vmatprep.subr.mxu0 0.0
    %4865 = vmatpush1.msra.mxu0 0.0
    %4866 = vmatprep.subr.mxu0 0.0
    %4867 = vmatpush1.msra.mxu0 0.0
    %4868 = vmatprep.subr.mxu0 0.0
    %4869 = vmatpush1.msra.mxu0 0.0
    %4870 = vmatprep.subr.mxu0 0.0
    %4871 = vmatpush1.msra.mxu0 0.0
    %4872 = vmatprep.subr.mxu0 0.0
    %4873 = vmatpush1.msra.mxu0 0.0
    %4874 = vmatprep.subr.mxu0 0.0
    %4875 = vmatpush1.msra.mxu0 0.0
    %4876 = vmatprep.subr.mxu0 0.0
    %4877 = vmatpush1.msra.mxu0 0.0
    %4878 = vmatprep.subr.mxu0 0.0
    %4879 = vmatpush1.msra.mxu0 0.0
    %4880 = vmatprep.subr.mxu0 0.0
    %4881 = vmatpush1.msra.mxu0 0.0
    %4882 = vmatprep.subr.mxu0 0.0
    %4883 = vmatpush1.msra.mxu0 0.0
    %4884 = vmatprep.subr.mxu0 0.0
    %4885 = vmatpush1.msra.mxu0 0.0
    %4886 = vmatprep.subr.mxu0 0.0
    %4887 = vmatpush1.msra.mxu0 0.0
    %4888 = vmatprep.subr.mxu0 0.0
    %4889 = vmatpush1.msra.mxu0 0.0
    %4890 = vmatprep.subr.mxu0 0.0
    %4891 = vmatpush1.msra.mxu0 0.0
    %4892 = vmatprep.subr.mxu0 0.0
    %4893 = vmatpush1.msra.mxu0 0.0
    %4894 = vmatprep.subr.mxu0 0.0
    %4895 = vmatpush1.msra.mxu0 0.0
    %4896 = vmatprep.subr.mxu0 0.0
    %4897 = vmatpush1.msra.mxu0 0.0
    %4898 = vmatprep.subr.mxu0 0.0
    %4899 = vmatpush1.msra.mxu0 0.0
    %4900 = vmatprep.subr.mxu0 0.0
    %4901 = vmatpush1.msra.mxu0 0.0
    %4902 = vmatprep.subr.mxu0 0.0
    %4903 = vmatpush1.msra.mxu0 0.0
    %4904 = vmatprep.subr.mxu0 0.0
    %4905 = vmatpush1.msra.mxu0 0.0
    %4906 = vmatprep.subr.mxu0 0.0
    %4907 = vmatpush1.msra.mxu0 0.0
    %4908 = vmatprep.subr.mxu0 0.0
    %4909 = vmatpush1.msra.mxu0 0.0
    %4910 = vmatprep.subr.mxu0 0.0
    %4911 = vmatpush1.msra.mxu0 0.0
    %4912 = vmatprep.subr.mxu0 0.0
    %4913 = vmatpush1.msra.mxu0 0.0
    %4914 = vmatprep.subr.mxu0 0.0
    %4915 = vmatpush1.msra.mxu0 0.0
    %4916 = vmatprep.subr.mxu0 0.0
    %4917 = vmatpush1.msra.mxu0 0.0
    %4918 = vmatprep.subr.mxu0 0.0
    %4919 = vmatpush1.msra.mxu0 0.0
    %4920 = vmatprep.subr.mxu0 0.0
    %4921 = vmatpush1.msra.mxu0 0.0
    %4922 = vmatprep.subr.mxu0 0.0
    %4923 = vmatpush1.msra.mxu0 0.0
    %4924 = vmatprep.mubr.f32.mxu0 0.0
    %4925 = vmatmul.mubr.f32.gmra.mrb[0].mxu0 %v4837
    %v4926 = vpop.f32.mrb[0].mxu0
    %v4927 = vadd.f32 0.0, %v4926
    %v4928 = vpop.f32.mrb[0].mxu0
    %4929 = vmatprep.mubr.f32.mxu0 0.0
    %4930 = vmatmul.mubr.f32.gmra.mrb[0].mxu0 %v4840
    %v4931 = vpop.f32.mrb[0].mxu0
    %v4932 = vadd.f32 0.0, %v4931
    %v4933 = vpop.f32.mrb[0].mxu0
    %4934 = vmatprep.mubr.f32.mxu0 0.0
    %4935 = vmatmul.mubr.f32.gmra.mrb[0].mxu0 %v4843
    %v4936 = vpop.f32.mrb[0].mxu0
    %v4937 = vadd.f32 0.0, %v4936
    %v4938 = vpop.f32.mrb[0].mxu0
    %4939 = vmatprep.mubr.f32.mxu0 0.0
    %4940 = vmatmul.mubr.f32.gmra.mrb[0].mxu0 %v4846
    %v4941 = vpop.f32.mrb[0].mxu0
    %v4942 = vadd.f32 0.0, %v4941
    %v4943 = vpop.f32.mrb[0].mxu0
    %4944 = vmatprep.mubr.f32.mxu0 0.0
    %4945 = vmatmul.mubr.f32.gmra.mrb[0].mxu0 %v4849
    %v4946 = vpop.f32.mrb[0].mxu0
    %v4947 = vadd.f32 0.0, %v4946
    %v4948 = vpop.f32.mrb[0].mxu0
    %4949 = vmatprep.mubr.f32.mxu0 0.0
    %4950 = vmatmul.mubr.f32.gmra.mrb[0].mxu0 %v4852
    %v4951 = vpop.f32.mrb[0].mxu0
    %v4952 = vadd.f32 0.0, %v4951
    %v4953 = vpop.f32.mrb[0].mxu0
    %4954 = vmatprep.mubr.f32.mxu0 0.0
    %4955 = vmatmul.mubr.f32.gmra.mrb[0].mxu0 %v4855
    %v4956 = vpop.f32.mrb[0].mxu0
    %v4957 = vadd.f32 0.0, %v4956
    %v4958 = vpop.f32.mrb[0].mxu0
    %4959 = vmatprep.mubr.f32.mxu0 0.0
    %4960 = vmatmul.mubr.f32.gmra.mrb[0].mxu0 %v4858
    %v4961 = vpop.f32.mrb[0].mxu0
    %v4962 = vadd.f32 0.0, %v4961
    %v4963 = vpop.f32.mrb[0].mxu0
    %4964 = vdwg.mxu0
    %v4965 = vadd.f32 %v4418, %v4927
    %v4966 = vadd.f32 %v4419, %v4932
    %v4967 = vadd.f32 %v4420, %v4937
    %v4968 = vadd.f32 %v4421, %v4942
    %v4969 = vadd.f32 %v4422, %v4947
    %v4970 = vadd.f32 %v4423, %v4952
    %v4971 = vadd.f32 %v4424, %v4957
    %v4972 = vadd.f32 %v4425, %v4962
    %4973 = vrot.lane.b32.xlu0 %v3324, 104
    %v4974 = vpop.permute.xlu0 %4973
    %4975 = vrot.lane.b32.xlu0 %v3325, 104
    %v4976 = vpop.permute.xlu0 %4975
    %4977 = vrot.lane.b32.xlu0 %v3326, 104
    %v4978 = vpop.permute.xlu0 %4977
    %4979 = vrot.lane.b32.xlu0 %v3327, 104
    %v4980 = vpop.permute.xlu0 %4979
    %4981 = vrot.lane.b32.xlu0 %v3328, 104
    %v4982 = vpop.permute.xlu0 %4981
    %4983 = vrot.lane.b32.xlu0 %v3329, 104
    %v4984 = vpop.permute.xlu0 %4983
    %4985 = vrot.lane.b32.xlu0 %v3330, 104
    %v4986 = vpop.permute.xlu0 %4985
    %4987 = vrot.lane.b32.xlu0 %v3331, 104
    %v4988 = vpop.permute.xlu0 %4987
    %4989 = vrot.lane.b32.xlu0 %v3279, 72
    %v4990 = vpop.permute.xlu0 %4989
    %4991 = vrot.lane.b32.xlu0 %v3284, 72
    %v4992 = vpop.permute.xlu0 %4991
    %4993 = vrot.lane.b32.xlu0 %v3289, 72
    %v4994 = vpop.permute.xlu0 %4993
    %4995 = vrot.lane.b32.xlu0 %v3294, 72
    %v4996 = vpop.permute.xlu0 %4995
    %4997 = vrot.lane.b32.xlu0 %v3299, 72
    %v4998 = vpop.permute.xlu0 %4997
    %4999 = vrot.lane.b32.xlu0 %v3304, 72
    %v5000 = vpop.permute.xlu0 %4999
    %5001 = vrot.lane.b32.xlu0 %v3309, 72
    %v5002 = vpop.permute.xlu0 %5001
    %5003 = vrot.lane.b32.xlu0 %v3314, 72
    %v5004 = vpop.permute.xlu0 %5003
    %v5005 = vsel %vm417, %v4974, 0
    %v5007 = vsel %vm417, %v4976, 0
    %v5009 = vsel %vm417, %v4978, 0
    %v5011 = vsel %vm417, %v4980, 0
    %v5013 = vsel %vm417, %v4982, 0
    %v5015 = vsel %vm417, %v4984, 0
    %v5017 = vsel %vm417, %v4986, 0
    %v5019 = vsel %vm417, %v4988, 0
    %v5021 = vsel %vm417, %v4990, 0
    %v5023 = vsel %vm417, %v4992, 0
    %v5025 = vsel %vm417, %v4994, 0
    %v5027 = vsel %vm417, %v4996, 0
    %v5029 = vsel %vm417, %v4998, 0
    %v5031 = vsel %vm417, %v5000, 0
    %v5033 = vsel %vm417, %v5002, 0
    %v5035 = vsel %vm417, %v5004, 0
    %5037 = vmatprep.subr.mxu0 0.0
    %5038 = vmatpush1.xpose.msra.mxu0 %v5021
    %5039 = vmatprep.subr.mxu0 0.0
    %5040 = vmatpush1.xpose.msra.mxu0 %v5023
    %5041 = vmatprep.subr.mxu0 0.0
    %5042 = vmatpush1.xpose.msra.mxu0 %v5025
    %5043 = vmatprep.subr.mxu0 0.0
    %5044 = vmatpush1.xpose.msra.mxu0 %v5027
    %5045 = vmatprep.subr.mxu0 0.0
    %5046 = vmatpush1.xpose.msra.mxu0 %v5029
    %5047 = vmatprep.subr.mxu0 0.0
    %5048 = vmatpush1.xpose.msra.mxu0 %v5031
    %5049 = vmatprep.subr.mxu0 0.0
    %5050 = vmatpush1.xpose.msra.mxu0 %v5033
    %5051 = vmatprep.subr.mxu0 0.0
    %5052 = vmatpush1.xpose.msra.mxu0 %v5035
    %5053 = vmatprep.subr.mxu0 0.0
    %5054 = vmatpush1.xpose.msra.mxu0 0.0
    %5055 = vmatprep.subr.mxu0 0.0
    %5056 = vmatpush1.xpose.msra.mxu0 0.0
    %5057 = vmatprep.subr.mxu0 0.0
    %5058 = vmatpush1.xpose.msra.mxu0 0.0
    %5059 = vmatprep.subr.mxu0 0.0
    %5060 = vmatpush1.xpose.msra.mxu0 0.0
    %5061 = vmatprep.subr.mxu0 0.0
    %5062 = vmatpush1.xpose.msra.mxu0 0.0
    %5063 = vmatprep.subr.mxu0 0.0
    %5064 = vmatpush1.xpose.msra.mxu0 0.0
    %5065 = vmatprep.subr.mxu0 0.0
    %5066 = vmatpush1.xpose.msra.mxu0 0.0
    %5067 = vmatprep.subr.mxu0 0.0
    %5068 = vmatpush1.xpose.msra.mxu0 0.0
    %5069 = vmatprep.subr.mxu0 0.0
    %5070 = vmatpush1.xpose.msra.mxu0 0.0
    %5071 = vmatprep.subr.mxu0 0.0
    %5072 = vmatpush1.xpose.msra.mxu0 0.0
    %5073 = vmatprep.subr.mxu0 0.0
    %5074 = vmatpush1.xpose.msra.mxu0 0.0
    %5075 = vmatprep.subr.mxu0 0.0
    %5076 = vmatpush1.xpose.msra.mxu0 0.0
    %5077 = vmatprep.subr.mxu0 0.0
    %5078 = vmatpush1.xpose.msra.mxu0 0.0
    %5079 = vmatprep.subr.mxu0 0.0
    %5080 = vmatpush1.xpose.msra.mxu0 0.0
    %5081 = vmatprep.subr.mxu0 0.0
    %5082 = vmatpush1.xpose.msra.mxu0 0.0
    %5083 = vmatprep.subr.mxu0 0.0
    %5084 = vmatpush1.xpose.msra.mxu0 0.0
    %5085 = vmatprep.subr.mxu0 0.0
    %5086 = vmatpush1.xpose.msra.mxu0 0.0
    %5087 = vmatprep.subr.mxu0 0.0
    %5088 = vmatpush1.xpose.msra.mxu0 0.0
    %5089 = vmatprep.subr.mxu0 0.0
    %5090 = vmatpush1.xpose.msra.mxu0 0.0
    %5091 = vmatprep.subr.mxu0 0.0
    %5092 = vmatpush1.xpose.msra.mxu0 0.0
    %5093 = vmatprep.subr.mxu0 0.0
    %5094 = vmatpush1.xpose.msra.mxu0 0.0
    %5095 = vmatprep.subr.mxu0 0.0
    %5096 = vmatpush1.xpose.msra.mxu0 0.0
    %5097 = vmatprep.subr.mxu0 0.0
    %5098 = vmatpush1.xpose.msra.mxu0 0.0
    %5099 = vmatprep.subr.mxu0 0.0
    %5100 = vmatpush1.xpose.msra.mxu0 0.0
    %5101 = vmatprep.mubr.f32.mxu0 0.0
    %5102 = vmatmul.mubr.f32.gmra.mrb[0].mxu0 %v5005
    %v5103 = vpop.f32.mrb[0].mxu0
    %v5104 = vadd.f32 0.0, %v5103
    %v5105 = vpop.f32.mrb[0].mxu0
    %5106 = vmatprep.mubr.f32.mxu0 0.0
    %5107 = vmatmul.mubr.f32.gmra.mrb[0].mxu0 %v5007
    %v5108 = vpop.f32.mrb[0].mxu0
    %v5109 = vadd.f32 0.0, %v5108
    %v5110 = vpop.f32.mrb[0].mxu0
    %5111 = vmatprep.mubr.f32.mxu0 0.0
    %5112 = vmatmul.mubr.f32.gmra.mrb[0].mxu0 %v5009
    %v5113 = vpop.f32.mrb[0].mxu0
    %v5114 = vadd.f32 0.0, %v5113
    %v5115 = vpop.f32.mrb[0].mxu0
    %5116 = vmatprep.mubr.f32.mxu0 0.0
    %5117 = vmatmul.mubr.f32.gmra.mrb[0].mxu0 %v5011
    %v5118 = vpop.f32.mrb[0].mxu0
    %v5119 = vadd.f32 0.0, %v5118
    %v5120 = vpop.f32.mrb[0].mxu0
    %5121 = vmatprep.mubr.f32.mxu0 0.0
    %5122 = vmatmul.mubr.f32.gmra.mrb[0].mxu0 %v5013
    %v5123 = vpop.f32.mrb[0].mxu0
    %v5124 = vadd.f32 0.0, %v5123
    %v5125 = vpop.f32.mrb[0].mxu0
    %5126 = vmatprep.mubr.f32.mxu0 0.0
    %5127 = vmatmul.mubr.f32.gmra.mrb[0].mxu0 %v5015
    %v5128 = vpop.f32.mrb[0].mxu0
    %v5129 = vadd.f32 0.0, %v5128
    %v5130 = vpop.f32.mrb[0].mxu0
    %5131 = vmatprep.mubr.f32.mxu0 0.0
    %5132 = vmatmul.mubr.f32.gmra.mrb[0].mxu0 %v5017
    %v5133 = vpop.f32.mrb[0].mxu0
    %v5134 = vadd.f32 0.0, %v5133
    %v5135 = vpop.f32.mrb[0].mxu0
    %5136 = vmatprep.mubr.f32.mxu0 0.0
    %5137 = vmatmul.mubr.f32.gmra.mrb[0].mxu0 %v5019
    %v5138 = vpop.f32.mrb[0].mxu0
    %v5139 = vadd.f32 0.0, %v5138
    %v5140 = vpop.f32.mrb[0].mxu0
    %5141 = vdwg.mxu0
    %v5142 = vsel %vm563, %v5104, -inf
    %5143 = vmax.xlane.f32.xlu0 %v5142
    %v5144 = vpop.xlane.xlu0 %5143
    %v5145 = vsel %vm563, %v5109, -inf
    %5146 = vmax.xlane.f32.xlu0 %v5145
    %v5147 = vpop.xlane.xlu0 %5146
    %v5148 = vsel %vm563, %v5114, -inf
    %5149 = vmax.xlane.f32.xlu0 %v5148
    %v5150 = vpop.xlane.xlu0 %5149
    %v5151 = vsel %vm563, %v5119, -inf
    %5152 = vmax.xlane.f32.xlu0 %v5151
    %v5153 = vpop.xlane.xlu0 %5152
    %v5154 = vsel %vm563, %v5124, -inf
    %5155 = vmax.xlane.f32.xlu0 %v5154
    %v5156 = vpop.xlane.xlu0 %5155
    %v5157 = vsel %vm563, %v5129, -inf
    %5158 = vmax.xlane.f32.xlu0 %v5157
    %v5159 = vpop.xlane.xlu0 %5158
    %v5160 = vsel %vm563, %v5134, -inf
    %5161 = vmax.xlane.f32.xlu0 %v5160
    %v5162 = vpop.xlane.xlu0 %5161
    %v5163 = vsel %vm563, %v5139, -inf
    %5164 = vmax.xlane.f32.xlu0 %v5163
    %v5165 = vpop.xlane.xlu0 %5164
    %v5166 = vsub.f32 %v5104, %v5144
    %v5167 = vsub.f32 %v5109, %v5147
    %v5168 = vsub.f32 %v5114, %v5150
    %v5169 = vsub.f32 %v5119, %v5153
    %v5170 = vsub.f32 %v5124, %v5156
    %v5171 = vsub.f32 %v5129, %v5159
    %v5172 = vsub.f32 %v5134, %v5162
    %v5173 = vsub.f32 %v5139, %v5165
    %v5174 = vmul.f32 %v5166, 1.442695
    %v5175 = vpow.pop %v5174
    %v5176 = vmul.f32 %v5167, 1.442695
    %v5177 = vpow.pop %v5176
    %v5178 = vmul.f32 %v5168, 1.442695
    %v5179 = vpow.pop %v5178
    %v5180 = vmul.f32 %v5169, 1.442695
    %v5181 = vpow.pop %v5180
    %v5182 = vmul.f32 %v5170, 1.442695
    %v5183 = vpow.pop %v5182
    %v5184 = vmul.f32 %v5171, 1.442695
    %v5185 = vpow.pop %v5184
    %v5186 = vmul.f32 %v5172, 1.442695
    %v5187 = vpow.pop %v5186
    %v5188 = vmul.f32 %v5173, 1.442695
    %v5189 = vpow.pop %v5188
    %v5190 = vsel %vm563, %v5175, 0.0
    %5191 = vadd.xlane.f32.xlu0 %v5190
    %v5192 = vpop.xlane.xlu0 %5191
    %v5193 = vsel %vm563, %v5177, 0.0
    %5194 = vadd.xlane.f32.xlu0 %v5193
    %v5195 = vpop.xlane.xlu0 %5194
    %v5196 = vsel %vm563, %v5179, 0.0
    %5197 = vadd.xlane.f32.xlu0 %v5196
    %v5198 = vpop.xlane.xlu0 %5197
    %v5199 = vsel %vm563, %v5181, 0.0
    %5200 = vadd.xlane.f32.xlu0 %v5199
    %v5201 = vpop.xlane.xlu0 %5200
    %v5202 = vsel %vm563, %v5183, 0.0
    %5203 = vadd.xlane.f32.xlu0 %v5202
    %v5204 = vpop.xlane.xlu0 %5203
    %v5205 = vsel %vm563, %v5185, 0.0
    %5206 = vadd.xlane.f32.xlu0 %v5205
    %v5207 = vpop.xlane.xlu0 %5206
    %v5208 = vsel %vm563, %v5187, 0.0
    %5209 = vadd.xlane.f32.xlu0 %v5208
    %v5210 = vpop.xlane.xlu0 %5209
    %v5211 = vsel %vm563, %v5189, 0.0
    %5212 = vadd.xlane.f32.xlu0 %v5211
    %v5213 = vpop.xlane.xlu0 %5212
    %v5214 = vrcp.pop %v5192
    %v5215 = vrcp.pop %v5195
    %v5216 = vrcp.pop %v5198
    %v5217 = vrcp.pop %v5201
    %v5218 = vrcp.pop %v5204
    %v5219 = vrcp.pop %v5207
    %v5220 = vrcp.pop %v5210
    %v5221 = vrcp.pop %v5213
    %v5222 = vmul.f32 %v5175, %v5214
    %v5223 = vmul.f32 %v5177, %v5215
    %v5224 = vmul.f32 %v5179, %v5216
    %v5225 = vmul.f32 %v5181, %v5217
    %v5226 = vmul.f32 %v5183, %v5218
    %v5227 = vmul.f32 %v5185, %v5219
    %v5228 = vmul.f32 %v5187, %v5220
    %v5229 = vmul.f32 %v5189, %v5221
    %5230 = vrot.lane.b32.xlu0 %v3279, 40
    %v5231 = vpop.permute.xlu0 %5230
    %5232 = vrot.lane.b32.xlu0 %v3284, 40
    %v5233 = vpop.permute.xlu0 %5232
    %5234 = vrot.lane.b32.xlu0 %v3289, 40
    %v5235 = vpop.permute.xlu0 %5234
    %5236 = vrot.lane.b32.xlu0 %v3294, 40
    %v5237 = vpop.permute.xlu0 %5236
    %5238 = vrot.lane.b32.xlu0 %v3299, 40
    %v5239 = vpop.permute.xlu0 %5238
    %5240 = vrot.lane.b32.xlu0 %v3304, 40
    %v5241 = vpop.permute.xlu0 %5240
    %5242 = vrot.lane.b32.xlu0 %v3309, 40
    %v5243 = vpop.permute.xlu0 %5242
    %5244 = vrot.lane.b32.xlu0 %v3314, 40
    %v5245 = vpop.permute.xlu0 %5244
    %v5255 = vsel %vm563, %v5222, 0
    %v5258 = vsel %vm563, %v5223, 0
    %v5261 = vsel %vm563, %v5224, 0
    %v5264 = vsel %vm563, %v5225, 0
    %v5267 = vsel %vm563, %v5226, 0
    %v5270 = vsel %vm563, %v5227, 0
    %v5273 = vsel %vm563, %v5228, 0
    %v5276 = vsel %vm563, %v5229, 0
    %5278 = vmatprep.subr.mxu0 0.0
    %5279 = vmatpush1.msra.mxu0 %v5231
    %5280 = vmatprep.subr.mxu0 0.0
    %5281 = vmatpush1.msra.mxu0 %v5233
    %5282 = vmatprep.subr.mxu0 0.0
    %5283 = vmatpush1.msra.mxu0 %v5235
    %5284 = vmatprep.subr.mxu0 0.0
    %5285 = vmatpush1.msra.mxu0 %v5237
    %5286 = vmatprep.subr.mxu0 0.0
    %5287 = vmatpush1.msra.mxu0 %v5239
    %5288 = vmatprep.subr.mxu0 0.0
    %5289 = vmatpush1.msra.mxu0 %v5241
    %5290 = vmatprep.subr.mxu0 0.0
    %5291 = vmatpush1.msra.mxu0 %v5243
    %5292 = vmatprep.subr.mxu0 0.0
    %5293 = vmatpush1.msra.mxu0 %v5245
    %5294 = vmatprep.subr.mxu0 0.0
    %5295 = vmatpush1.msra.mxu0 0.0
    %5296 = vmatprep.subr.mxu0 0.0
    %5297 = vmatpush1.msra.mxu0 0.0
    %5298 = vmatprep.subr.mxu0 0.0
    %5299 = vmatpush1.msra.mxu0 0.0
    %5300 = vmatprep.subr.mxu0 0.0
    %5301 = vmatpush1.msra.mxu0 0.0
    %5302 = vmatprep.subr.mxu0 0.0
    %5303 = vmatpush1.msra.mxu0 0.0
    %5304 = vmatprep.subr.mxu0 0.0
    %5305 = vmatpush1.msra.mxu0 0.0
    %5306 = vmatprep.subr.mxu0 0.0
    %5307 = vmatpush1.msra.mxu0 0.0
    %5308 = vmatprep.subr.mxu0 0.0
    %5309 = vmatpush1.msra.mxu0 0.0
    %5310 = vmatprep.subr.mxu0 0.0
    %5311 = vmatpush1.msra.mxu0 0.0
    %5312 = vmatprep.subr.mxu0 0.0
    %5313 = vmatpush1.msra.mxu0 0.0
    %5314 = vmatprep.subr.mxu0 0.0
    %5315 = vmatpush1.msra.mxu0 0.0
    %5316 = vmatprep.subr.mxu0 0.0
    %5317 = vmatpush1.msra.mxu0 0.0
    %5318 = vmatprep.subr.mxu0 0.0
    %5319 = vmatpush1.msra.mxu0 0.0
    %5320 = vmatprep.subr.mxu0 0.0
    %5321 = vmatpush1.msra.mxu0 0.0
    %5322 = vmatprep.subr.mxu0 0.0
    %5323 = vmatpush1.msra.mxu0 0.0
    %5324 = vmatprep.subr.mxu0 0.0
    %5325 = vmatpush1.msra.mxu0 0.0
    %5326 = vmatprep.subr.mxu0 0.0
    %5327 = vmatpush1.msra.mxu0 0.0
    %5328 = vmatprep.subr.mxu0 0.0
    %5329 = vmatpush1.msra.mxu0 0.0
    %5330 = vmatprep.subr.mxu0 0.0
    %5331 = vmatpush1.msra.mxu0 0.0
    %5332 = vmatprep.subr.mxu0 0.0
    %5333 = vmatpush1.msra.mxu0 0.0
    %5334 = vmatprep.subr.mxu0 0.0
    %5335 = vmatpush1.msra.mxu0 0.0
    %5336 = vmatprep.subr.mxu0 0.0
    %5337 = vmatpush1.msra.mxu0 0.0
    %5338 = vmatprep.subr.mxu0 0.0
    %5339 = vmatpush1.msra.mxu0 0.0
    %5340 = vmatprep.subr.mxu0 0.0
    %5341 = vmatpush1.msra.mxu0 0.0
    %5342 = vmatprep.mubr.f32.mxu0 0.0
    %5343 = vmatmul.mubr.f32.gmra.mrb[0].mxu0 %v5255
    %v5344 = vpop.f32.mrb[0].mxu0
    %v5345 = vadd.f32 0.0, %v5344
    %v5346 = vpop.f32.mrb[0].mxu0
    %5347 = vmatprep.mubr.f32.mxu0 0.0
    %5348 = vmatmul.mubr.f32.gmra.mrb[0].mxu0 %v5258
    %v5349 = vpop.f32.mrb[0].mxu0
    %v5350 = vadd.f32 0.0, %v5349
    %v5351 = vpop.f32.mrb[0].mxu0
    %5352 = vmatprep.mubr.f32.mxu0 0.0
    %5353 = vmatmul.mubr.f32.gmra.mrb[0].mxu0 %v5261
    %v5354 = vpop.f32.mrb[0].mxu0
    %v5355 = vadd.f32 0.0, %v5354
    %v5356 = vpop.f32.mrb[0].mxu0
    %5357 = vmatprep.mubr.f32.mxu0 0.0
    %5358 = vmatmul.mubr.f32.gmra.mrb[0].mxu0 %v5264
    %v5359 = vpop.f32.mrb[0].mxu0
    %v5360 = vadd.f32 0.0, %v5359
    %v5361 = vpop.f32.mrb[0].mxu0
    %5362 = vmatprep.mubr.f32.mxu0 0.0
    %5363 = vmatmul.mubr.f32.gmra.mrb[0].mxu0 %v5267
    %v5364 = vpop.f32.mrb[0].mxu0
    %v5365 = vadd.f32 0.0, %v5364
    %v5366 = vpop.f32.mrb[0].mxu0
    %5367 = vmatprep.mubr.f32.mxu0 0.0
    %5368 = vmatmul.mubr.f32.gmra.mrb[0].mxu0 %v5270
    %v5369 = vpop.f32.mrb[0].mxu0
    %v5370 = vadd.f32 0.0, %v5369
    %v5371 = vpop.f32.mrb[0].mxu0
    %5372 = vmatprep.mubr.f32.mxu0 0.0
    %5373 = vmatmul.mubr.f32.gmra.mrb[0].mxu0 %v5273
    %v5374 = vpop.f32.mrb[0].mxu0
    %v5375 = vadd.f32 0.0, %v5374
    %v5376 = vpop.f32.mrb[0].mxu0
    %5377 = vmatprep.mubr.f32.mxu0 0.0
    %5378 = vmatmul.mubr.f32.gmra.mrb[0].mxu0 %v5276
    %v5379 = vpop.f32.mrb[0].mxu0
    %v5380 = vadd.f32 0.0, %v5379
    %v5381 = vpop.f32.mrb[0].mxu0
    %5382 = vdwg.mxu0
    %v5384 = vsel %vm417, %v5345, 0
    %v5387 = vsel %vm417, %v5350, 0
    %v5390 = vsel %vm417, %v5355, 0
    %v5393 = vsel %vm417, %v5360, 0
    %v5396 = vsel %vm417, %v5365, 0
    %v5399 = vsel %vm417, %v5370, 0
    %v5402 = vsel %vm417, %v5375, 0
    %v5405 = vsel %vm417, %v5380, 0
    %5407 = vmatprep.subr.mxu0 0.0
    %5408 = vmatpush1.msra.mxu0 %v3171
    %5409 = vmatprep.subr.mxu0 0.0
    %5410 = vmatpush1.msra.mxu0 0.0
    %5411 = vmatprep.subr.mxu0 0.0
    %5412 = vmatpush1.msra.mxu0 0.0
    %5413 = vmatprep.subr.mxu0 0.0
    %5414 = vmatpush1.msra.mxu0 0.0
    %5415 = vmatprep.subr.mxu0 0.0
    %5416 = vmatpush1.msra.mxu0 0.0
    %5417 = vmatprep.subr.mxu0 0.0
    %5418 = vmatpush1.msra.mxu0 0.0
    %5419 = vmatprep.subr.mxu0 0.0
    %5420 = vmatpush1.msra.mxu0 0.0
    %5421 = vmatprep.subr.mxu0 0.0
    %5422 = vmatpush1.msra.mxu0 0.0
    %5423 = vmatprep.subr.mxu0 0.0
    %5424 = vmatpush1.msra.mxu0 0.0
    %5425 = vmatprep.subr.mxu0 0.0
    %5426 = vmatpush1.msra.mxu0 0.0
    %5427 = vmatprep.subr.mxu0 0.0
    %5428 = vmatpush1.msra.mxu0 0.0
    %5429 = vmatprep.subr.mxu0 0.0
    %5430 = vmatpush1.msra.mxu0 0.0
    %5431 = vmatprep.subr.mxu0 0.0
    %5432 = vmatpush1.msra.mxu0 0.0
    %5433 = vmatprep.subr.mxu0 0.0
    %5434 = vmatpush1.msra.mxu0 0.0
    %5435 = vmatprep.subr.mxu0 0.0
    %5436 = vmatpush1.msra.mxu0 0.0
    %5437 = vmatprep.subr.mxu0 0.0
    %5438 = vmatpush1.msra.mxu0 0.0
    %5439 = vmatprep.subr.mxu0 0.0
    %5440 = vmatpush1.msra.mxu0 0.0
    %5441 = vmatprep.subr.mxu0 0.0
    %5442 = vmatpush1.msra.mxu0 0.0
    %5443 = vmatprep.subr.mxu0 0.0
    %5444 = vmatpush1.msra.mxu0 0.0
    %5445 = vmatprep.subr.mxu0 0.0
    %5446 = vmatpush1.msra.mxu0 0.0
    %5447 = vmatprep.subr.mxu0 0.0
    %5448 = vmatpush1.msra.mxu0 0.0
    %5449 = vmatprep.subr.mxu0 0.0
    %5450 = vmatpush1.msra.mxu0 0.0
    %5451 = vmatprep.subr.mxu0 0.0
    %5452 = vmatpush1.msra.mxu0 0.0
    %5453 = vmatprep.subr.mxu0 0.0
    %5454 = vmatpush1.msra.mxu0 0.0
    %5455 = vmatprep.subr.mxu0 0.0
    %5456 = vmatpush1.msra.mxu0 0.0
    %5457 = vmatprep.subr.mxu0 0.0
    %5458 = vmatpush1.msra.mxu0 0.0
    %5459 = vmatprep.subr.mxu0 0.0
    %5460 = vmatpush1.msra.mxu0 0.0
    %5461 = vmatprep.subr.mxu0 0.0
    %5462 = vmatpush1.msra.mxu0 0.0
    %5463 = vmatprep.subr.mxu0 0.0
    %5464 = vmatpush1.msra.mxu0 0.0
    %5465 = vmatprep.subr.mxu0 0.0
    %5466 = vmatpush1.msra.mxu0 0.0
    %5467 = vmatprep.subr.mxu0 0.0
    %5468 = vmatpush1.msra.mxu0 0.0
    %5469 = vmatprep.subr.mxu0 0.0
    %5470 = vmatpush1.msra.mxu0 0.0
    %5471 = vmatprep.mubr.f32.mxu0 0.0
    %5472 = vmatmul.mubr.f32.gmra.mrb[0].mxu0 %v5384
    %v5473 = vpop.f32.mrb[0].mxu0
    %v5474 = vadd.f32 0.0, %v5473
    %v5475 = vpop.f32.mrb[0].mxu0
    %5476 = vmatprep.mubr.f32.mxu0 0.0
    %5477 = vmatmul.mubr.f32.gmra.mrb[0].mxu0 %v5387
    %v5478 = vpop.f32.mrb[0].mxu0
    %v5479 = vadd.f32 0.0, %v5478
    %v5480 = vpop.f32.mrb[0].mxu0
    %5481 = vmatprep.mubr.f32.mxu0 0.0
    %5482 = vmatmul.mubr.f32.gmra.mrb[0].mxu0 %v5390
    %v5483 = vpop.f32.mrb[0].mxu0
    %v5484 = vadd.f32 0.0, %v5483
    %v5485 = vpop.f32.mrb[0].mxu0
    %5486 = vmatprep.mubr.f32.mxu0 0.0
    %5487 = vmatmul.mubr.f32.gmra.mrb[0].mxu0 %v5393
    %v5488 = vpop.f32.mrb[0].mxu0
    %v5489 = vadd.f32 0.0, %v5488
    %v5490 = vpop.f32.mrb[0].mxu0
    %5491 = vmatprep.mubr.f32.mxu0 0.0
    %5492 = vmatmul.mubr.f32.gmra.mrb[0].mxu0 %v5396
    %v5493 = vpop.f32.mrb[0].mxu0
    %v5494 = vadd.f32 0.0, %v5493
    %v5495 = vpop.f32.mrb[0].mxu0
    %5496 = vmatprep.mubr.f32.mxu0 0.0
    %5497 = vmatmul.mubr.f32.gmra.mrb[0].mxu0 %v5399
    %v5498 = vpop.f32.mrb[0].mxu0
    %v5499 = vadd.f32 0.0, %v5498
    %v5500 = vpop.f32.mrb[0].mxu0
    %5501 = vmatprep.mubr.f32.mxu0 0.0
    %5502 = vmatmul.mubr.f32.gmra.mrb[0].mxu0 %v5402
    %v5503 = vpop.f32.mrb[0].mxu0
    %v5504 = vadd.f32 0.0, %v5503
    %v5505 = vpop.f32.mrb[0].mxu0
    %5506 = vmatprep.mubr.f32.mxu0 0.0
    %5507 = vmatmul.mubr.f32.gmra.mrb[0].mxu0 %v5405
    %v5508 = vpop.f32.mrb[0].mxu0
    %v5509 = vadd.f32 0.0, %v5508
    %v5510 = vpop.f32.mrb[0].mxu0
    %5511 = vdwg.mxu0
    %v5512 = vadd.f32 %v4965, %v5474
    %v5513 = vadd.f32 %v4966, %v5479
    %v5514 = vadd.f32 %v4967, %v5484
    %v5515 = vadd.f32 %v4968, %v5489
    %v5516 = vadd.f32 %v4969, %v5494
    %v5517 = vadd.f32 %v4970, %v5499
    %v5518 = vadd.f32 %v4971, %v5504
    %v5519 = vadd.f32 %v4972, %v5509
    %v5520 = vadd.f32 %v3152, %v5512
    %v5521 = vadd.f32 %v3153, %v5513
    %v5522 = vadd.f32 %v3154, %v5514
    %v5523 = vadd.f32 %v3155, %v5515
    %v5524 = vadd.f32 %v3156, %v5516
    %v5525 = vadd.f32 %v3157, %v5517
    %v5526 = vadd.f32 %v3158, %v5518
    %v5527 = vadd.f32 %v3159, %v5519
    %s5528 = scalar_lea.vmem %s8, 1
    %v5529 = vld [vmem:[%s5528] sm:$0x1]
    %s5530 = scalar_lea.vmem %s9, 1
    %v5531 = vld [vmem:[%s5530] sm:$0x1]
    %v5532 = vsel %vm95, %v5520, 0.0
    %5533 = vadd.xlane.f32.xlu0 %v5532
    %v5534 = vpop.xlane.xlu0 %5533
    %v5535 = vsel %vm95, %v5521, 0.0
    %5536 = vadd.xlane.f32.xlu0 %v5535
    %v5537 = vpop.xlane.xlu0 %5536
    %v5538 = vsel %vm95, %v5522, 0.0
    %5539 = vadd.xlane.f32.xlu0 %v5538
    %v5540 = vpop.xlane.xlu0 %5539
    %v5541 = vsel %vm95, %v5523, 0.0
    %5542 = vadd.xlane.f32.xlu0 %v5541
    %v5543 = vpop.xlane.xlu0 %5542
    %v5544 = vsel %vm95, %v5524, 0.0
    %5545 = vadd.xlane.f32.xlu0 %v5544
    %v5546 = vpop.xlane.xlu0 %5545
    %v5547 = vsel %vm95, %v5525, 0.0
    %5548 = vadd.xlane.f32.xlu0 %v5547
    %v5549 = vpop.xlane.xlu0 %5548
    %v5550 = vsel %vm95, %v5526, 0.0
    %5551 = vadd.xlane.f32.xlu0 %v5550
    %v5552 = vpop.xlane.xlu0 %5551
    %v5553 = vsel %vm95, %v5527, 0.0
    %5554 = vadd.xlane.f32.xlu0 %v5553
    %v5555 = vpop.xlane.xlu0 %5554
    %v5556 = vmul.f32 %v5534, %v2617
    %v5557 = vmul.f32 %v5537, %v2617
    %v5558 = vmul.f32 %v5540, %v2617
    %v5559 = vmul.f32 %v5543, %v2617
    %v5560 = vmul.f32 %v5546, %v2617
    %v5561 = vmul.f32 %v5549, %v2617
    %v5562 = vmul.f32 %v5552, %v2617
    %v5563 = vmul.f32 %v5555, %v2617
    %v5564 = vsub.f32 %v5520, %v5556
    %v5565 = vsub.f32 %v5521, %v5557
    %v5566 = vsub.f32 %v5522, %v5558
    %v5567 = vsub.f32 %v5523, %v5559
    %v5568 = vsub.f32 %v5524, %v5560
    %v5569 = vsub.f32 %v5525, %v5561
    %v5570 = vsub.f32 %v5526, %v5562
    %v5571 = vsub.f32 %v5527, %v5563
    %v5572 = vmul.f32 %v5564, %v5564
    %v5573 = vmul.f32 %v5565, %v5565
    %v5574 = vmul.f32 %v5566, %v5566
    %v5575 = vmul.f32 %v5567, %v5567
    %v5576 = vmul.f32 %v5568, %v5568
    %v5577 = vmul.f32 %v5569, %v5569
    %v5578 = vmul.f32 %v5570, %v5570
    %v5579 = vmul.f32 %v5571, %v5571
    %v5580 = vsel %vm95, %v5572, 0.0
    %5581 = vadd.xlane.f32.xlu0 %v5580
    %v5582 = vpop.xlane.xlu0 %5581
    %v5583 = vsel %vm95, %v5573, 0.0
    %5584 = vadd.xlane.f32.xlu0 %v5583
    %v5585 = vpop.xlane.xlu0 %5584
    %v5586 = vsel %vm95, %v5574, 0.0
    %5587 = vadd.xlane.f32.xlu0 %v5586
    %v5588 = vpop.xlane.xlu0 %5587
    %v5589 = vsel %vm95, %v5575, 0.0
    %5590 = vadd.xlane.f32.xlu0 %v5589
    %v5591 = vpop.xlane.xlu0 %5590
    %v5592 = vsel %vm95, %v5576, 0.0
    %5593 = vadd.xlane.f32.xlu0 %v5592
    %v5594 = vpop.xlane.xlu0 %5593
    %v5595 = vsel %vm95, %v5577, 0.0
    %5596 = vadd.xlane.f32.xlu0 %v5595
    %v5597 = vpop.xlane.xlu0 %5596
    %v5598 = vsel %vm95, %v5578, 0.0
    %5599 = vadd.xlane.f32.xlu0 %v5598
    %v5600 = vpop.xlane.xlu0 %5599
    %v5601 = vsel %vm95, %v5579, 0.0
    %5602 = vadd.xlane.f32.xlu0 %v5601
    %v5603 = vpop.xlane.xlu0 %5602
    %v5604 = vmul.f32 %v5582, %v2617
    %v5605 = vmul.f32 %v5585, %v2617
    %v5606 = vmul.f32 %v5588, %v2617
    %v5607 = vmul.f32 %v5591, %v2617
    %v5608 = vmul.f32 %v5594, %v2617
    %v5609 = vmul.f32 %v5597, %v2617
    %v5610 = vmul.f32 %v5600, %v2617
    %v5611 = vmul.f32 %v5603, %v2617
    %v5612 = vadd.f32 %v5604, 1e-05
    %v5613 = vadd.f32 %v5605, 1e-05
    %v5614 = vadd.f32 %v5606, 1e-05
    %v5615 = vadd.f32 %v5607, 1e-05
    %v5616 = vadd.f32 %v5608, 1e-05
    %v5617 = vadd.f32 %v5609, 1e-05
    %v5618 = vadd.f32 %v5610, 1e-05
    %v5619 = vadd.f32 %v5611, 1e-05
    %v5620 = vrsqrt.pop %v5612
    %v5621 = vrsqrt.pop %v5613
    %v5622 = vrsqrt.pop %v5614
    %v5623 = vrsqrt.pop %v5615
    %v5624 = vrsqrt.pop %v5616
    %v5625 = vrsqrt.pop %v5617
    %v5626 = vrsqrt.pop %v5618
    %v5627 = vrsqrt.pop %v5619
    %v5628 = vmul.f32 %v5564, %v5620
    %v5629 = vmul.f32 %v5565, %v5621
    %v5630 = vmul.f32 %v5566, %v5622
    %v5631 = vmul.f32 %v5567, %v5623
    %v5632 = vmul.f32 %v5568, %v5624
    %v5633 = vmul.f32 %v5569, %v5625
    %v5634 = vmul.f32 %v5570, %v5626
    %v5635 = vmul.f32 %v5571, %v5627
    %v5637 = vlaneseq
    %v5638 = vshrl.u32 %v5637, 7
    %v5639 = vsub.s32 0, %v5638
    %v5640 = vrot.slane %v5529, %v5639
    %v5642 = vmul.f32 %v5628, %v5640
    %v5643 = vmul.f32 %v5629, %v5640
    %v5644 = vmul.f32 %v5630, %v5640
    %v5645 = vmul.f32 %v5631, %v5640
    %v5646 = vmul.f32 %v5632, %v5640
    %v5647 = vmul.f32 %v5633, %v5640
    %v5648 = vmul.f32 %v5634, %v5640
    %v5649 = vmul.f32 %v5635, %v5640
    %v5651 = vlaneseq
    %v5652 = vshrl.u32 %v5651, 7
    %v5653 = vsub.s32 0, %v5652
    %v5654 = vrot.slane %v5531, %v5653
    %v5656 = vadd.f32 %v5642, %v5654
    %v5657 = vadd.f32 %v5643, %v5654
    %v5658 = vadd.f32 %v5644, %v5654
    %v5659 = vadd.f32 %v5645, %v5654
    %v5660 = vadd.f32 %v5646, %v5654
    %v5661 = vadd.f32 %v5647, %v5654
    %v5662 = vadd.f32 %v5648, %v5654
    %v5663 = vadd.f32 %v5649, %v5654
    %s5664 = scalar_lea.vmem %s10, 32
    %v5665 = vld [vmem:[%s5664] sm:$0xff]
    %v5666 = vld [vmem:[%s5664 + $0x8] sm:$0xff]
    %v5667 = vld [vmem:[%s5664 + $0x10] sm:$0xff]
    %v5668 = vld [vmem:[%s5664 + $0x18] sm:$0xff]
    %s5669 = scalar_lea.vmem %s11, 1
    %v5670 = vld [vmem:[%s5669] sm:$0x1]
    %v5672 = vlaneseq
    %v5673 = vshrl.u32 %v5672, 7
    %v5674 = vsub.s32 0, %v5673
    %v5675 = vrot.slane %v5670, %v5674
    %v5678 = vsel %vm95, %v5656, 0
    %v5681 = vsel %vm95, %v5657, 0
    %v5684 = vsel %vm95, %v5658, 0
    %v5687 = vsel %vm95, %v5659, 0
    %v5690 = vsel %vm95, %v5660, 0
    %v5693 = vsel %vm95, %v5661, 0
    %v5696 = vsel %vm95, %v5662, 0
    %v5699 = vsel %vm95, %v5663, 0
    %5701 = vmatprep.subr.mxu0 0.0
    %5702 = vmatpush1.msra.mxu0 %v5665
    %5703 = vmatprep.subr.mxu0 0.0
    %5704 = vmatpush1.msra.mxu0 %v5666
    %5705 = vmatprep.subr.mxu0 0.0
    %5706 = vmatpush1.msra.mxu0 %v5667
    %5707 = vmatprep.subr.mxu0 0.0
    %5708 = vmatpush1.msra.mxu0 %v5668
    %5709 = vmatprep.subr.mxu0 0.0
    %5710 = vmatpush1.msra.mxu0 0.0
    %5711 = vmatprep.subr.mxu0 0.0
    %5712 = vmatpush1.msra.mxu0 0.0
    %5713 = vmatprep.subr.mxu0 0.0
    %5714 = vmatpush1.msra.mxu0 0.0
    %5715 = vmatprep.subr.mxu0 0.0
    %5716 = vmatpush1.msra.mxu0 0.0
    %5717 = vmatprep.subr.mxu0 0.0
    %5718 = vmatpush1.msra.mxu0 0.0
    %5719 = vmatprep.subr.mxu0 0.0
    %5720 = vmatpush1.msra.mxu0 0.0
    %5721 = vmatprep.subr.mxu0 0.0
    %5722 = vmatpush1.msra.mxu0 0.0
    %5723 = vmatprep.subr.mxu0 0.0
    %5724 = vmatpush1.msra.mxu0 0.0
    %5725 = vmatprep.subr.mxu0 0.0
    %5726 = vmatpush1.msra.mxu0 0.0
    %5727 = vmatprep.subr.mxu0 0.0
    %5728 = vmatpush1.msra.mxu0 0.0
    %5729 = vmatprep.subr.mxu0 0.0
    %5730 = vmatpush1.msra.mxu0 0.0
    %5731 = vmatprep.subr.mxu0 0.0
    %5732 = vmatpush1.msra.mxu0 0.0
    %5733 = vmatprep.subr.mxu0 0.0
    %5734 = vmatpush1.msra.mxu0 0.0
    %5735 = vmatprep.subr.mxu0 0.0
    %5736 = vmatpush1.msra.mxu0 0.0
    %5737 = vmatprep.subr.mxu0 0.0
    %5738 = vmatpush1.msra.mxu0 0.0
    %5739 = vmatprep.subr.mxu0 0.0
    %5740 = vmatpush1.msra.mxu0 0.0
    %5741 = vmatprep.subr.mxu0 0.0
    %5742 = vmatpush1.msra.mxu0 0.0
    %5743 = vmatprep.subr.mxu0 0.0
    %5744 = vmatpush1.msra.mxu0 0.0
    %5745 = vmatprep.subr.mxu0 0.0
    %5746 = vmatpush1.msra.mxu0 0.0
    %5747 = vmatprep.subr.mxu0 0.0
    %5748 = vmatpush1.msra.mxu0 0.0
    %5749 = vmatprep.subr.mxu0 0.0
    %5750 = vmatpush1.msra.mxu0 0.0
    %5751 = vmatprep.subr.mxu0 0.0
    %5752 = vmatpush1.msra.mxu0 0.0
    %5753 = vmatprep.subr.mxu0 0.0
    %5754 = vmatpush1.msra.mxu0 0.0
    %5755 = vmatprep.subr.mxu0 0.0
    %5756 = vmatpush1.msra.mxu0 0.0
    %5757 = vmatprep.subr.mxu0 0.0
    %5758 = vmatpush1.msra.mxu0 0.0
    %5759 = vmatprep.subr.mxu0 0.0
    %5760 = vmatpush1.msra.mxu0 0.0
    %5761 = vmatprep.subr.mxu0 0.0
    %5762 = vmatpush1.msra.mxu0 0.0
    %5763 = vmatprep.subr.mxu0 0.0
    %5764 = vmatpush1.msra.mxu0 0.0
    %5765 = vmatprep.mubr.f32.mxu0 0.0
    %5766 = vmatmul.mubr.f32.gmra.mrb[0].mxu0 %v5678
    %v5767 = vpop.f32.mrb[0].mxu0
    %v5768 = vadd.f32 %v5675, %v5767
    %v5769 = vpop.f32.mrb[0].mxu0
    %5770 = vmatprep.mubr.f32.mxu0 0.0
    %5771 = vmatmul.mubr.f32.gmra.mrb[0].mxu0 %v5681
    %v5772 = vpop.f32.mrb[0].mxu0
    %v5773 = vadd.f32 %v5675, %v5772
    %v5774 = vpop.f32.mrb[0].mxu0
    %5775 = vmatprep.mubr.f32.mxu0 0.0
    %5776 = vmatmul.mubr.f32.gmra.mrb[0].mxu0 %v5684
    %v5777 = vpop.f32.mrb[0].mxu0
    %v5778 = vadd.f32 %v5675, %v5777
    %v5779 = vpop.f32.mrb[0].mxu0
    %5780 = vmatprep.mubr.f32.mxu0 0.0
    %5781 = vmatmul.mubr.f32.gmra.mrb[0].mxu0 %v5687
    %v5782 = vpop.f32.mrb[0].mxu0
    %v5783 = vadd.f32 %v5675, %v5782
    %v5784 = vpop.f32.mrb[0].mxu0
    %5785 = vmatprep.mubr.f32.mxu0 0.0
    %5786 = vmatmul.mubr.f32.gmra.mrb[0].mxu0 %v5690
    %v5787 = vpop.f32.mrb[0].mxu0
    %v5788 = vadd.f32 %v5675, %v5787
    %v5789 = vpop.f32.mrb[0].mxu0
    %5790 = vmatprep.mubr.f32.mxu0 0.0
    %5791 = vmatmul.mubr.f32.gmra.mrb[0].mxu0 %v5693
    %v5792 = vpop.f32.mrb[0].mxu0
    %v5793 = vadd.f32 %v5675, %v5792
    %v5794 = vpop.f32.mrb[0].mxu0
    %5795 = vmatprep.mubr.f32.mxu0 0.0
    %5796 = vmatmul.mubr.f32.gmra.mrb[0].mxu0 %v5696
    %v5797 = vpop.f32.mrb[0].mxu0
    %v5798 = vadd.f32 %v5675, %v5797
    %v5799 = vpop.f32.mrb[0].mxu0
    %5800 = vmatprep.mubr.f32.mxu0 0.0
    %5801 = vmatmul.mubr.f32.gmra.mrb[0].mxu0 %v5699
    %v5802 = vpop.f32.mrb[0].mxu0
    %v5803 = vadd.f32 %v5675, %v5802
    %v5804 = vpop.f32.mrb[0].mxu0
    %5805 = vdwg.mxu0
    %v5806 = vmax.f32 %v5768, 0.0
    %v5807 = vmax.f32 %v5773, 0.0
    %v5808 = vmax.f32 %v5778, 0.0
    %v5809 = vmax.f32 %v5783, 0.0
    %v5810 = vmax.f32 %v5788, 0.0
    %v5811 = vmax.f32 %v5793, 0.0
    %v5812 = vmax.f32 %v5798, 0.0
    %v5813 = vmax.f32 %v5803, 0.0
    %s5814 = scalar_lea.vmem %s12, 64
    %v5815 = vld [vmem:[%s5814] sm:$0xff]
    %v5816 = vld [vmem:[%s5814 + $0x8] sm:$0xff]
    %v5817 = vld [vmem:[%s5814 + $0x10] sm:$0xff]
    %v5818 = vld [vmem:[%s5814 + $0x18] sm:$0xff]
    %v5819 = vld [vmem:[%s5814 + $0x20] sm:$0xff]
    %v5820 = vld [vmem:[%s5814 + $0x28] sm:$0xff]
    %v5821 = vld [vmem:[%s5814 + $0x30] sm:$0xff]
    %v5822 = vld [vmem:[%s5814 + $0x38] sm:$0xff]
    %s5823 = scalar_lea.vmem %s13, 1
    %v5824 = vld [vmem:[%s5823] sm:$0x1]
    %v5826 = vlaneseq
    %v5827 = vshrl.u32 %v5826, 7
    %v5828 = vsub.s32 0, %v5827
    %v5829 = vrot.slane %v5824, %v5828
    %v5832 = vsel %vm563, %v5806, 0
    %v5835 = vsel %vm563, %v5807, 0
    %v5838 = vsel %vm563, %v5808, 0
    %v5841 = vsel %vm563, %v5809, 0
    %v5844 = vsel %vm563, %v5810, 0
    %v5847 = vsel %vm563, %v5811, 0
    %v5850 = vsel %vm563, %v5812, 0
    %v5853 = vsel %vm563, %v5813, 0
    %5855 = vmatprep.subr.mxu0 0.0
    %5856 = vmatpush1.msra.mxu0 %v5815
    %5857 = vmatprep.subr.mxu0 0.0
    %5858 = vmatpush1.msra.mxu0 %v5816
    %5859 = vmatprep.subr.mxu0 0.0
    %5860 = vmatpush1.msra.mxu0 %v5817
    %5861 = vmatprep.subr.mxu0 0.0
    %5862 = vmatpush1.msra.mxu0 %v5818
    %5863 = vmatprep.subr.mxu0 0.0
    %5864 = vmatpush1.msra.mxu0 %v5819
    %5865 = vmatprep.subr.mxu0 0.0
    %5866 = vmatpush1.msra.mxu0 %v5820
    %5867 = vmatprep.subr.mxu0 0.0
    %5868 = vmatpush1.msra.mxu0 %v5821
    %5869 = vmatprep.subr.mxu0 0.0
    %5870 = vmatpush1.msra.mxu0 %v5822
    %5871 = vmatprep.subr.mxu0 0.0
    %5872 = vmatpush1.msra.mxu0 0.0
    %5873 = vmatprep.subr.mxu0 0.0
    %5874 = vmatpush1.msra.mxu0 0.0
    %5875 = vmatprep.subr.mxu0 0.0
    %5876 = vmatpush1.msra.mxu0 0.0
    %5877 = vmatprep.subr.mxu0 0.0
    %5878 = vmatpush1.msra.mxu0 0.0
    %5879 = vmatprep.subr.mxu0 0.0
    %5880 = vmatpush1.msra.mxu0 0.0
    %5881 = vmatprep.subr.mxu0 0.0
    %5882 = vmatpush1.msra.mxu0 0.0
    %5883 = vmatprep.subr.mxu0 0.0
    %5884 = vmatpush1.msra.mxu0 0.0
    %5885 = vmatprep.subr.mxu0 0.0
    %5886 = vmatpush1.msra.mxu0 0.0
    %5887 = vmatprep.subr.mxu0 0.0
    %5888 = vmatpush1.msra.mxu0 0.0
    %5889 = vmatprep.subr.mxu0 0.0
    %5890 = vmatpush1.msra.mxu0 0.0
    %5891 = vmatprep.subr.mxu0 0.0
    %5892 = vmatpush1.msra.mxu0 0.0
    %5893 = vmatprep.subr.mxu0 0.0
    %5894 = vmatpush1.msra.mxu0 0.0
    %5895 = vmatprep.subr.mxu0 0.0
    %5896 = vmatpush1.msra.mxu0 0.0
    %5897 = vmatprep.subr.mxu0 0.0
    %5898 = vmatpush1.msra.mxu0 0.0
    %5899 = vmatprep.subr.mxu0 0.0
    %5900 = vmatpush1.msra.mxu0 0.0
    %5901 = vmatprep.subr.mxu0 0.0
    %5902 = vmatpush1.msra.mxu0 0.0
    %5903 = vmatprep.subr.mxu0 0.0
    %5904 = vmatpush1.msra.mxu0 0.0
    %5905 = vmatprep.subr.mxu0 0.0
    %5906 = vmatpush1.msra.mxu0 0.0
    %5907 = vmatprep.subr.mxu0 0.0
    %5908 = vmatpush1.msra.mxu0 0.0
    %5909 = vmatprep.subr.mxu0 0.0
    %5910 = vmatpush1.msra.mxu0 0.0
    %5911 = vmatprep.subr.mxu0 0.0
    %5912 = vmatpush1.msra.mxu0 0.0
    %5913 = vmatprep.subr.mxu0 0.0
    %5914 = vmatpush1.msra.mxu0 0.0
    %5915 = vmatprep.subr.mxu0 0.0
    %5916 = vmatpush1.msra.mxu0 0.0
    %5917 = vmatprep.subr.mxu0 0.0
    %5918 = vmatpush1.msra.mxu0 0.0
    %5919 = vmatprep.mubr.f32.mxu0 0.0
    %5920 = vmatmul.mubr.f32.gmra.mrb[0].mxu0 %v5832
    %v5921 = vpop.f32.mrb[0].mxu0
    %v5922 = vadd.f32 %v5829, %v5921
    %v5923 = vpop.f32.mrb[0].mxu0
    %5924 = vmatprep.mubr.f32.mxu0 0.0
    %5925 = vmatmul.mubr.f32.gmra.mrb[0].mxu0 %v5835
    %v5926 = vpop.f32.mrb[0].mxu0
    %v5927 = vadd.f32 %v5829, %v5926
    %v5928 = vpop.f32.mrb[0].mxu0
    %5929 = vmatprep.mubr.f32.mxu0 0.0
    %5930 = vmatmul.mubr.f32.gmra.mrb[0].mxu0 %v5838
    %v5931 = vpop.f32.mrb[0].mxu0
    %v5932 = vadd.f32 %v5829, %v5931
    %v5933 = vpop.f32.mrb[0].mxu0
    %5934 = vmatprep.mubr.f32.mxu0 0.0
    %5935 = vmatmul.mubr.f32.gmra.mrb[0].mxu0 %v5841
    %v5936 = vpop.f32.mrb[0].mxu0
    %v5937 = vadd.f32 %v5829, %v5936
    %v5938 = vpop.f32.mrb[0].mxu0
    %5939 = vmatprep.mubr.f32.mxu0 0.0
    %5940 = vmatmul.mubr.f32.gmra.mrb[0].mxu0 %v5844
    %v5941 = vpop.f32.mrb[0].mxu0
    %v5942 = vadd.f32 %v5829, %v5941
    %v5943 = vpop.f32.mrb[0].mxu0
    %5944 = vmatprep.mubr.f32.mxu0 0.0
    %5945 = vmatmul.mubr.f32.gmra.mrb[0].mxu0 %v5847
    %v5946 = vpop.f32.mrb[0].mxu0
    %v5947 = vadd.f32 %v5829, %v5946
    %v5948 = vpop.f32.mrb[0].mxu0
    %5949 = vmatprep.mubr.f32.mxu0 0.0
    %5950 = vmatmul.mubr.f32.gmra.mrb[0].mxu0 %v5850
    %v5951 = vpop.f32.mrb[0].mxu0
    %v5952 = vadd.f32 %v5829, %v5951
    %v5953 = vpop.f32.mrb[0].mxu0
    %5954 = vmatprep.mubr.f32.mxu0 0.0
    %5955 = vmatmul.mubr.f32.gmra.mrb[0].mxu0 %v5853
    %v5956 = vpop.f32.mrb[0].mxu0
    %v5957 = vadd.f32 %v5829, %v5956
    %v5958 = vpop.f32.mrb[0].mxu0
    %5959 = vdwg.mxu0
    %v5960 = vadd.f32 %v5656, %v5922
    %v5961 = vadd.f32 %v5657, %v5927
    %v5962 = vadd.f32 %v5658, %v5932
    %v5963 = vadd.f32 %v5659, %v5937
    %v5964 = vadd.f32 %v5660, %v5942
    %v5965 = vadd.f32 %v5661, %v5947
    %v5966 = vadd.f32 %v5662, %v5952
    %v5967 = vadd.f32 %v5663, %v5957
    %s5968 = scalar_lea.vmem %s14, 1
    %v5969 = vld [vmem:[%s5968] sm:$0x1]
    %s5970 = scalar_lea.vmem %s15, 1
    %v5971 = vld [vmem:[%s5970] sm:$0x1]
    %v5972 = vsel %vm95, %v5960, 0.0
    %5973 = vadd.xlane.f32.xlu0 %v5972
    %v5974 = vpop.xlane.xlu0 %5973
    %v5975 = vsel %vm95, %v5961, 0.0
    %5976 = vadd.xlane.f32.xlu0 %v5975
    %v5977 = vpop.xlane.xlu0 %5976
    %v5978 = vsel %vm95, %v5962, 0.0
    %5979 = vadd.xlane.f32.xlu0 %v5978
    %v5980 = vpop.xlane.xlu0 %5979
    %v5981 = vsel %vm95, %v5963, 0.0
    %5982 = vadd.xlane.f32.xlu0 %v5981
    %v5983 = vpop.xlane.xlu0 %5982
    %v5984 = vsel %vm95, %v5964, 0.0
    %5985 = vadd.xlane.f32.xlu0 %v5984
    %v5986 = vpop.xlane.xlu0 %5985
    %v5987 = vsel %vm95, %v5965, 0.0
    %5988 = vadd.xlane.f32.xlu0 %v5987
    %v5989 = vpop.xlane.xlu0 %5988
    %v5990 = vsel %vm95, %v5966, 0.0
    %5991 = vadd.xlane.f32.xlu0 %v5990
    %v5992 = vpop.xlane.xlu0 %5991
    %v5993 = vsel %vm95, %v5967, 0.0
    %5994 = vadd.xlane.f32.xlu0 %v5993
    %v5995 = vpop.xlane.xlu0 %5994
    %v5996 = vmul.f32 %v5974, %v2617
    %v5997 = vmul.f32 %v5977, %v2617
    %v5998 = vmul.f32 %v5980, %v2617
    %v5999 = vmul.f32 %v5983, %v2617
    %v6000 = vmul.f32 %v5986, %v2617
    %v6001 = vmul.f32 %v5989, %v2617
    %v6002 = vmul.f32 %v5992, %v2617
    %v6003 = vmul.f32 %v5995, %v2617
    %v6004 = vsub.f32 %v5960, %v5996
    %v6005 = vsub.f32 %v5961, %v5997
    %v6006 = vsub.f32 %v5962, %v5998
    %v6007 = vsub.f32 %v5963, %v5999
    %v6008 = vsub.f32 %v5964, %v6000
    %v6009 = vsub.f32 %v5965, %v6001
    %v6010 = vsub.f32 %v5966, %v6002
    %v6011 = vsub.f32 %v5967, %v6003
    %v6012 = vmul.f32 %v6004, %v6004
    %v6013 = vmul.f32 %v6005, %v6005
    %v6014 = vmul.f32 %v6006, %v6006
    %v6015 = vmul.f32 %v6007, %v6007
    %v6016 = vmul.f32 %v6008, %v6008
    %v6017 = vmul.f32 %v6009, %v6009
    %v6018 = vmul.f32 %v6010, %v6010
    %v6019 = vmul.f32 %v6011, %v6011
    %v6020 = vsel %vm95, %v6012, 0.0
    %6021 = vadd.xlane.f32.xlu0 %v6020
    %v6022 = vpop.xlane.xlu0 %6021
    %v6023 = vsel %vm95, %v6013, 0.0
    %6024 = vadd.xlane.f32.xlu0 %v6023
    %v6025 = vpop.xlane.xlu0 %6024
    %v6026 = vsel %vm95, %v6014, 0.0
    %6027 = vadd.xlane.f32.xlu0 %v6026
    %v6028 = vpop.xlane.xlu0 %6027
    %v6029 = vsel %vm95, %v6015, 0.0
    %6030 = vadd.xlane.f32.xlu0 %v6029
    %v6031 = vpop.xlane.xlu0 %6030
    %v6032 = vsel %vm95, %v6016, 0.0
    %6033 = vadd.xlane.f32.xlu0 %v6032
    %v6034 = vpop.xlane.xlu0 %6033
    %v6035 = vsel %vm95, %v6017, 0.0
    %6036 = vadd.xlane.f32.xlu0 %v6035
    %v6037 = vpop.xlane.xlu0 %6036
    %v6038 = vsel %vm95, %v6018, 0.0
    %6039 = vadd.xlane.f32.xlu0 %v6038
    %v6040 = vpop.xlane.xlu0 %6039
    %v6041 = vsel %vm95, %v6019, 0.0
    %6042 = vadd.xlane.f32.xlu0 %v6041
    %v6043 = vpop.xlane.xlu0 %6042
    %v6044 = vmul.f32 %v6022, %v2617
    %v6045 = vmul.f32 %v6025, %v2617
    %v6046 = vmul.f32 %v6028, %v2617
    %v6047 = vmul.f32 %v6031, %v2617
    %v6048 = vmul.f32 %v6034, %v2617
    %v6049 = vmul.f32 %v6037, %v2617
    %v6050 = vmul.f32 %v6040, %v2617
    %v6051 = vmul.f32 %v6043, %v2617
    %v6052 = vadd.f32 %v6044, 1e-05
    %v6053 = vadd.f32 %v6045, 1e-05
    %v6054 = vadd.f32 %v6046, 1e-05
    %v6055 = vadd.f32 %v6047, 1e-05
    %v6056 = vadd.f32 %v6048, 1e-05
    %v6057 = vadd.f32 %v6049, 1e-05
    %v6058 = vadd.f32 %v6050, 1e-05
    %v6059 = vadd.f32 %v6051, 1e-05
    %v6060 = vrsqrt.pop %v6052
    %v6061 = vrsqrt.pop %v6053
    %v6062 = vrsqrt.pop %v6054
    %v6063 = vrsqrt.pop %v6055
    %v6064 = vrsqrt.pop %v6056
    %v6065 = vrsqrt.pop %v6057
    %v6066 = vrsqrt.pop %v6058
    %v6067 = vrsqrt.pop %v6059
    %v6068 = vmul.f32 %v6004, %v6060
    %v6069 = vmul.f32 %v6005, %v6061
    %v6070 = vmul.f32 %v6006, %v6062
    %v6071 = vmul.f32 %v6007, %v6063
    %v6072 = vmul.f32 %v6008, %v6064
    %v6073 = vmul.f32 %v6009, %v6065
    %v6074 = vmul.f32 %v6010, %v6066
    %v6075 = vmul.f32 %v6011, %v6067
    %v6077 = vlaneseq
    %v6078 = vshrl.u32 %v6077, 7
    %v6079 = vsub.s32 0, %v6078
    %v6080 = vrot.slane %v5969, %v6079
    %v6082 = vmul.f32 %v6068, %v6080
    %v6083 = vmul.f32 %v6069, %v6080
    %v6084 = vmul.f32 %v6070, %v6080
    %v6085 = vmul.f32 %v6071, %v6080
    %v6086 = vmul.f32 %v6072, %v6080
    %v6087 = vmul.f32 %v6073, %v6080
    %v6088 = vmul.f32 %v6074, %v6080
    %v6089 = vmul.f32 %v6075, %v6080
    %v6091 = vlaneseq
    %v6092 = vshrl.u32 %v6091, 7
    %v6093 = vsub.s32 0, %v6092
    %v6094 = vrot.slane %v5971, %v6093
    %v6096 = vadd.f32 %v6082, %v6094
    %v6097 = vadd.f32 %v6083, %v6094
    %v6098 = vadd.f32 %v6084, %v6094
    %v6099 = vadd.f32 %v6085, %v6094
    %v6100 = vadd.f32 %v6086, %v6094
    %v6101 = vadd.f32 %v6087, %v6094
    %v6102 = vadd.f32 %v6088, %v6094
    %v6103 = vadd.f32 %v6089, %v6094
    %6104 = vst.msk [vmem:[%s20] sm:$0xff] %vm95, %v6096
    %6105 = vst.msk [vmem:[%s20 + $0x8] sm:$0xff] %vm95, %v6097
    %6106 = vst.msk [vmem:[%s20 + $0x10] sm:$0xff] %vm95, %v6098
    %6107 = vst.msk [vmem:[%s20 + $0x18] sm:$0xff] %vm95, %v6099
    %6108 = vst.msk [vmem:[%s20 + $0x20] sm:$0xff] %vm95, %v6100
    %6109 = vst.msk [vmem:[%s20 + $0x28] sm:$0xff] %vm95, %v6101
    %6110 = vst.msk [vmem:[%s20 + $0x30] sm:$0xff] %vm95, %v6102
    %6111 = vst.msk [vmem:[%s20 + $0x38] sm:$0xff] %vm95, %v6103
    %v6112 = vld [vmem:[%s16] sm:$0xff]
    %v6113 = vld [vmem:[%s16 + $0x8] sm:$0xff]
    %v6114 = vld [vmem:[%s16 + $0x10] sm:$0xff]
    %v6115 = vld [vmem:[%s16 + $0x18] sm:$0xff]
    %v6116 = vld [vmem:[%s17] sm:$0x1]
    %v6118 = vlaneseq
    %v6119 = vshrl.u32 %v6118, 7
    %v6120 = vsub.s32 0, %v6119
    %v6121 = vrot.slane %v6116, %v6120
    %v6124 = vsel %vm95, %v6096, 0
    %v6127 = vsel %vm95, %v6097, 0
    %v6130 = vsel %vm95, %v6098, 0
    %v6133 = vsel %vm95, %v6099, 0
    %v6136 = vsel %vm95, %v6100, 0
    %v6139 = vsel %vm95, %v6101, 0
    %v6142 = vsel %vm95, %v6102, 0
    %v6145 = vsel %vm95, %v6103, 0
    %6147 = vmatprep.subr.mxu0 0.0
    %6148 = vmatpush1.msra.mxu0 %v6112
    %6149 = vmatprep.subr.mxu0 0.0
    %6150 = vmatpush1.msra.mxu0 %v6113
    %6151 = vmatprep.subr.mxu0 0.0
    %6152 = vmatpush1.msra.mxu0 %v6114
    %6153 = vmatprep.subr.mxu0 0.0
    %6154 = vmatpush1.msra.mxu0 %v6115
    %6155 = vmatprep.subr.mxu0 0.0
    %6156 = vmatpush1.msra.mxu0 0.0
    %6157 = vmatprep.subr.mxu0 0.0
    %6158 = vmatpush1.msra.mxu0 0.0
    %6159 = vmatprep.subr.mxu0 0.0
    %6160 = vmatpush1.msra.mxu0 0.0
    %6161 = vmatprep.subr.mxu0 0.0
    %6162 = vmatpush1.msra.mxu0 0.0
    %6163 = vmatprep.subr.mxu0 0.0
    %6164 = vmatpush1.msra.mxu0 0.0
    %6165 = vmatprep.subr.mxu0 0.0
    %6166 = vmatpush1.msra.mxu0 0.0
    %6167 = vmatprep.subr.mxu0 0.0
    %6168 = vmatpush1.msra.mxu0 0.0
    %6169 = vmatprep.subr.mxu0 0.0
    %6170 = vmatpush1.msra.mxu0 0.0
    %6171 = vmatprep.subr.mxu0 0.0
    %6172 = vmatpush1.msra.mxu0 0.0
    %6173 = vmatprep.subr.mxu0 0.0
    %6174 = vmatpush1.msra.mxu0 0.0
    %6175 = vmatprep.subr.mxu0 0.0
    %6176 = vmatpush1.msra.mxu0 0.0
    %6177 = vmatprep.subr.mxu0 0.0
    %6178 = vmatpush1.msra.mxu0 0.0
    %6179 = vmatprep.subr.mxu0 0.0
    %6180 = vmatpush1.msra.mxu0 0.0
    %6181 = vmatprep.subr.mxu0 0.0
    %6182 = vmatpush1.msra.mxu0 0.0
    %6183 = vmatprep.subr.mxu0 0.0
    %6184 = vmatpush1.msra.mxu0 0.0
    %6185 = vmatprep.subr.mxu0 0.0
    %6186 = vmatpush1.msra.mxu0 0.0
    %6187 = vmatprep.subr.mxu0 0.0
    %6188 = vmatpush1.msra.mxu0 0.0
    %6189 = vmatprep.subr.mxu0 0.0
    %6190 = vmatpush1.msra.mxu0 0.0
    %6191 = vmatprep.subr.mxu0 0.0
    %6192 = vmatpush1.msra.mxu0 0.0
    %6193 = vmatprep.subr.mxu0 0.0
    %6194 = vmatpush1.msra.mxu0 0.0
    %6195 = vmatprep.subr.mxu0 0.0
    %6196 = vmatpush1.msra.mxu0 0.0
    %6197 = vmatprep.subr.mxu0 0.0
    %6198 = vmatpush1.msra.mxu0 0.0
    %6199 = vmatprep.subr.mxu0 0.0
    %6200 = vmatpush1.msra.mxu0 0.0
    %6201 = vmatprep.subr.mxu0 0.0
    %6202 = vmatpush1.msra.mxu0 0.0
    %6203 = vmatprep.subr.mxu0 0.0
    %6204 = vmatpush1.msra.mxu0 0.0
    %6205 = vmatprep.subr.mxu0 0.0
    %6206 = vmatpush1.msra.mxu0 0.0
    %6207 = vmatprep.subr.mxu0 0.0
    %6208 = vmatpush1.msra.mxu0 0.0
    %6209 = vmatprep.subr.mxu0 0.0
    %6210 = vmatpush1.msra.mxu0 0.0
    %6211 = vmatprep.mubr.f32.mxu0 0.0
    %6212 = vmatmul.mubr.f32.gmra.mrb[0].mxu0 %v6124
    %v6213 = vpop.f32.mrb[0].mxu0
    %v6214 = vadd.f32 %v6121, %v6213
    %v6215 = vpop.f32.mrb[0].mxu0
    %6216 = vmatprep.mubr.f32.mxu0 0.0
    %6217 = vmatmul.mubr.f32.gmra.mrb[0].mxu0 %v6127
    %v6218 = vpop.f32.mrb[0].mxu0
    %v6219 = vadd.f32 %v6121, %v6218
    %v6220 = vpop.f32.mrb[0].mxu0
    %6221 = vmatprep.mubr.f32.mxu0 0.0
    %6222 = vmatmul.mubr.f32.gmra.mrb[0].mxu0 %v6130
    %v6223 = vpop.f32.mrb[0].mxu0
    %v6224 = vadd.f32 %v6121, %v6223
    %v6225 = vpop.f32.mrb[0].mxu0
    %6226 = vmatprep.mubr.f32.mxu0 0.0
    %6227 = vmatmul.mubr.f32.gmra.mrb[0].mxu0 %v6133
    %v6228 = vpop.f32.mrb[0].mxu0
    %v6229 = vadd.f32 %v6121, %v6228
    %v6230 = vpop.f32.mrb[0].mxu0
    %6231 = vmatprep.mubr.f32.mxu0 0.0
    %6232 = vmatmul.mubr.f32.gmra.mrb[0].mxu0 %v6136
    %v6233 = vpop.f32.mrb[0].mxu0
    %v6234 = vadd.f32 %v6121, %v6233
    %v6235 = vpop.f32.mrb[0].mxu0
    %6236 = vmatprep.mubr.f32.mxu0 0.0
    %6237 = vmatmul.mubr.f32.gmra.mrb[0].mxu0 %v6139
    %v6238 = vpop.f32.mrb[0].mxu0
    %v6239 = vadd.f32 %v6121, %v6238
    %v6240 = vpop.f32.mrb[0].mxu0
    %6241 = vmatprep.mubr.f32.mxu0 0.0
    %6242 = vmatmul.mubr.f32.gmra.mrb[0].mxu0 %v6142
    %v6243 = vpop.f32.mrb[0].mxu0
    %v6244 = vadd.f32 %v6121, %v6243
    %v6245 = vpop.f32.mrb[0].mxu0
    %6246 = vmatprep.mubr.f32.mxu0 0.0
    %6247 = vmatmul.mubr.f32.gmra.mrb[0].mxu0 %v6145
    %v6248 = vpop.f32.mrb[0].mxu0
    %v6249 = vadd.f32 %v6121, %v6248
    %v6250 = vpop.f32.mrb[0].mxu0
    %6251 = vdwg.mxu0
    %v6252 = vmax.f32 %v6214, 0.0
    %v6253 = vmax.f32 %v6219, 0.0
    %v6254 = vmax.f32 %v6224, 0.0
    %v6255 = vmax.f32 %v6229, 0.0
    %v6256 = vmax.f32 %v6234, 0.0
    %v6257 = vmax.f32 %v6239, 0.0
    %v6258 = vmax.f32 %v6244, 0.0
    %v6259 = vmax.f32 %v6249, 0.0
    %v6260 = vld [vmem:[%s18] sm:$0xff]
    %v6261 = vld [vmem:[%s18 + $0x8] sm:$0xff]
    %v6262 = vld [vmem:[%s18 + $0x10] sm:$0xff]
    %v6263 = vld [vmem:[%s18 + $0x18] sm:$0xff]
    %v6264 = vld [vmem:[%s19] sm:$0x1]
    %v6266 = vlaneseq
    %v6267 = vshrl.u32 %v6266, 7
    %v6268 = vsub.s32 0, %v6267
    %v6269 = vrot.slane %v6264, %v6268
    %v6272 = vsel %vm95, %v6252, 0
    %v6275 = vsel %vm95, %v6253, 0
    %v6278 = vsel %vm95, %v6254, 0
    %v6281 = vsel %vm95, %v6255, 0
    %v6284 = vsel %vm95, %v6256, 0
    %v6287 = vsel %vm95, %v6257, 0
    %v6290 = vsel %vm95, %v6258, 0
    %v6293 = vsel %vm95, %v6259, 0
    %6295 = vmatprep.subr.mxu0 0.0
    %6296 = vmatpush1.msra.mxu0 %v6260
    %6297 = vmatprep.subr.mxu0 0.0
    %6298 = vmatpush1.msra.mxu0 %v6261
    %6299 = vmatprep.subr.mxu0 0.0
    %6300 = vmatpush1.msra.mxu0 %v6262
    %6301 = vmatprep.subr.mxu0 0.0
    %6302 = vmatpush1.msra.mxu0 %v6263
    %6303 = vmatprep.subr.mxu0 0.0
    %6304 = vmatpush1.msra.mxu0 0.0
    %6305 = vmatprep.subr.mxu0 0.0
    %6306 = vmatpush1.msra.mxu0 0.0
    %6307 = vmatprep.subr.mxu0 0.0
    %6308 = vmatpush1.msra.mxu0 0.0
    %6309 = vmatprep.subr.mxu0 0.0
    %6310 = vmatpush1.msra.mxu0 0.0
    %6311 = vmatprep.subr.mxu0 0.0
    %6312 = vmatpush1.msra.mxu0 0.0
    %6313 = vmatprep.subr.mxu0 0.0
    %6314 = vmatpush1.msra.mxu0 0.0
    %6315 = vmatprep.subr.mxu0 0.0
    %6316 = vmatpush1.msra.mxu0 0.0
    %6317 = vmatprep.subr.mxu0 0.0
    %6318 = vmatpush1.msra.mxu0 0.0
    %6319 = vmatprep.subr.mxu0 0.0
    %6320 = vmatpush1.msra.mxu0 0.0
    %6321 = vmatprep.subr.mxu0 0.0
    %6322 = vmatpush1.msra.mxu0 0.0
    %6323 = vmatprep.subr.mxu0 0.0
    %6324 = vmatpush1.msra.mxu0 0.0
    %6325 = vmatprep.subr.mxu0 0.0
    %6326 = vmatpush1.msra.mxu0 0.0
    %6327 = vmatprep.subr.mxu0 0.0
    %6328 = vmatpush1.msra.mxu0 0.0
    %6329 = vmatprep.subr.mxu0 0.0
    %6330 = vmatpush1.msra.mxu0 0.0
    %6331 = vmatprep.subr.mxu0 0.0
    %6332 = vmatpush1.msra.mxu0 0.0
    %6333 = vmatprep.subr.mxu0 0.0
    %6334 = vmatpush1.msra.mxu0 0.0
    %6335 = vmatprep.subr.mxu0 0.0
    %6336 = vmatpush1.msra.mxu0 0.0
    %6337 = vmatprep.subr.mxu0 0.0
    %6338 = vmatpush1.msra.mxu0 0.0
    %6339 = vmatprep.subr.mxu0 0.0
    %6340 = vmatpush1.msra.mxu0 0.0
    %6341 = vmatprep.subr.mxu0 0.0
    %6342 = vmatpush1.msra.mxu0 0.0
    %6343 = vmatprep.subr.mxu0 0.0
    %6344 = vmatpush1.msra.mxu0 0.0
    %6345 = vmatprep.subr.mxu0 0.0
    %6346 = vmatpush1.msra.mxu0 0.0
    %6347 = vmatprep.subr.mxu0 0.0
    %6348 = vmatpush1.msra.mxu0 0.0
    %6349 = vmatprep.subr.mxu0 0.0
    %6350 = vmatpush1.msra.mxu0 0.0
    %6351 = vmatprep.subr.mxu0 0.0
    %6352 = vmatpush1.msra.mxu0 0.0
    %6353 = vmatprep.subr.mxu0 0.0
    %6354 = vmatpush1.msra.mxu0 0.0
    %6355 = vmatprep.subr.mxu0 0.0
    %6356 = vmatpush1.msra.mxu0 0.0
    %6357 = vmatprep.subr.mxu0 0.0
    %6358 = vmatpush1.msra.mxu0 0.0
    %6359 = vmatprep.mubr.f32.mxu0 0.0
    %6360 = vmatmul.mubr.f32.gmra.mrb[0].mxu0 %v6272
    %v6361 = vpop.f32.mrb[0].mxu0
    %v6362 = vadd.f32 %v6269, %v6361
    %v6363 = vpop.f32.mrb[0].mxu0
    %6364 = vmatprep.mubr.f32.mxu0 0.0
    %6365 = vmatmul.mubr.f32.gmra.mrb[0].mxu0 %v6275
    %v6366 = vpop.f32.mrb[0].mxu0
    %v6367 = vadd.f32 %v6269, %v6366
    %v6368 = vpop.f32.mrb[0].mxu0
    %6369 = vmatprep.mubr.f32.mxu0 0.0
    %6370 = vmatmul.mubr.f32.gmra.mrb[0].mxu0 %v6278
    %v6371 = vpop.f32.mrb[0].mxu0
    %v6372 = vadd.f32 %v6269, %v6371
    %v6373 = vpop.f32.mrb[0].mxu0
    %6374 = vmatprep.mubr.f32.mxu0 0.0
    %6375 = vmatmul.mubr.f32.gmra.mrb[0].mxu0 %v6281
    %v6376 = vpop.f32.mrb[0].mxu0
    %v6377 = vadd.f32 %v6269, %v6376
    %v6378 = vpop.f32.mrb[0].mxu0
    %6379 = vmatprep.mubr.f32.mxu0 0.0
    %6380 = vmatmul.mubr.f32.gmra.mrb[0].mxu0 %v6284
    %v6381 = vpop.f32.mrb[0].mxu0
    %v6382 = vadd.f32 %v6269, %v6381
    %v6383 = vpop.f32.mrb[0].mxu0
    %6384 = vmatprep.mubr.f32.mxu0 0.0
    %6385 = vmatmul.mubr.f32.gmra.mrb[0].mxu0 %v6287
    %v6386 = vpop.f32.mrb[0].mxu0
    %v6387 = vadd.f32 %v6269, %v6386
    %v6388 = vpop.f32.mrb[0].mxu0
    %6389 = vmatprep.mubr.f32.mxu0 0.0
    %6390 = vmatmul.mubr.f32.gmra.mrb[0].mxu0 %v6290
    %v6391 = vpop.f32.mrb[0].mxu0
    %v6392 = vadd.f32 %v6269, %v6391
    %v6393 = vpop.f32.mrb[0].mxu0
    %6394 = vmatprep.mubr.f32.mxu0 0.0
    %6395 = vmatmul.mubr.f32.gmra.mrb[0].mxu0 %v6293
    %v6396 = vpop.f32.mrb[0].mxu0
    %v6397 = vadd.f32 %v6269, %v6396
    %v6398 = vpop.f32.mrb[0].mxu0
    %6399 = vdwg.mxu0
    %v6400 = vxor.u32 %v6362, 2147483648
    %v6401 = vxor.u32 %v6367, 2147483648
    %v6402 = vxor.u32 %v6372, 2147483648
    %v6403 = vxor.u32 %v6377, 2147483648
    %v6404 = vxor.u32 %v6382, 2147483648
    %v6405 = vxor.u32 %v6387, 2147483648
    %v6406 = vxor.u32 %v6392, 2147483648
    %v6407 = vxor.u32 %v6397, 2147483648
    %v6408 = vmul.f32 %v6400, 1.442695
    %v6409 = vpow.pop %v6408
    %v6410 = vmul.f32 %v6401, 1.442695
    %v6411 = vpow.pop %v6410
    %v6412 = vmul.f32 %v6402, 1.442695
    %v6413 = vpow.pop %v6412
    %v6414 = vmul.f32 %v6403, 1.442695
    %v6415 = vpow.pop %v6414
    %v6416 = vmul.f32 %v6404, 1.442695
    %v6417 = vpow.pop %v6416
    %v6418 = vmul.f32 %v6405, 1.442695
    %v6419 = vpow.pop %v6418
    %v6420 = vmul.f32 %v6406, 1.442695
    %v6421 = vpow.pop %v6420
    %v6422 = vmul.f32 %v6407, 1.442695
    %v6423 = vpow.pop %v6422
    %v6424 = vadd.f32 %v6409, 1.0
    %v6425 = vadd.f32 %v6411, 1.0
    %v6426 = vadd.f32 %v6413, 1.0
    %v6427 = vadd.f32 %v6415, 1.0
    %v6428 = vadd.f32 %v6417, 1.0
    %v6429 = vadd.f32 %v6419, 1.0
    %v6430 = vadd.f32 %v6421, 1.0
    %v6431 = vadd.f32 %v6423, 1.0
    %v6432 = vrcp.pop %v6424
    %v6433 = vmul.f32 1.0, %v6432
    %v6434 = vrcp.pop %v6425
    %v6435 = vmul.f32 1.0, %v6434
    %v6436 = vrcp.pop %v6426
    %v6437 = vmul.f32 1.0, %v6436
    %v6438 = vrcp.pop %v6427
    %v6439 = vmul.f32 1.0, %v6438
    %v6440 = vrcp.pop %v6428
    %v6441 = vmul.f32 1.0, %v6440
    %v6442 = vrcp.pop %v6429
    %v6443 = vmul.f32 1.0, %v6442
    %v6444 = vrcp.pop %v6430
    %v6445 = vmul.f32 1.0, %v6444
    %v6446 = vrcp.pop %v6431
    %v6447 = vmul.f32 1.0, %v6446
    %6448 = vst [vmem:[#allocation2] sm:$0xff] %v6433
    %6449 = vst [vmem:[#allocation2 + $0x8] sm:$0xff] %v6435
    %6450 = vst [vmem:[#allocation2 + $0x10] sm:$0xff] %v6437
    %6451 = vst [vmem:[#allocation2 + $0x18] sm:$0xff] %v6439
    %6452 = vst [vmem:[#allocation2 + $0x20] sm:$0xff] %v6441
    %6453 = vst [vmem:[#allocation2 + $0x28] sm:$0xff] %v6443
    %6454 = vst [vmem:[#allocation2 + $0x30] sm:$0xff] %v6445
    %6455 = vst [vmem:[#allocation2 + $0x38] sm:$0xff] %v6447
    // Predicated region
    $region82: #{tpu_custom_call.1} parent=1 // pred_check
      _
    $region83: #{tpu_custom_call.1} parent=1 // pred_check_branch
      %6457 = sbr.rel (0) target = $region85
    $region84: #{tpu_custom_call.1} parent=1 // pred_region
      _
    $region85: #{tpu_custom_call.1} parent=1 // pred_fallthru
      _
    // Predicated region
    $region86: #{tpu_custom_call.1} parent=1 // pred_check
      _
    $region87: #{tpu_custom_call.1} parent=1 // pred_check_branch
      %6459 = sbr.rel (0) target = $region89
    $region88: #{tpu_custom_call.1} parent=1 // pred_region
      %s6461 = ssub.s32 1024, 1024
      %6462 = vsyncadd [#allocation3], %s6461
      %s6463 = sshll.u32 [#allocation2], 4
      %s6464 = int_to_ptr.vmem [resolvable:$true] %s6463
      %6469 = dma.vmem_to_hbm [thread:$0]  %s6464, 1024, %s21, [#allocation3], 128, 128, 8
    $region89: #{tpu_custom_call.1} parent=1 // pred_fallthru
      _
    // Predicated region
    $region90: #{tpu_custom_call.1} parent=1 // pred_check
      _
    $region91: #{tpu_custom_call.1} parent=1 // pred_check_branch
      %6471 = sbr.rel (0) target = $region93
    $region92: #{tpu_custom_call.1} parent=1 // pred_region
      _
    $region93: #{tpu_custom_call.1} parent=1 // pred_fallthru
      _
    // Predicated region
    $region94: #{tpu_custom_call.1} parent=1 // pred_check
      _
    $region95: #{tpu_custom_call.1} parent=1 // pred_check_branch
      %6473 = sbr.rel (0) target = $region97
    $region96: #{tpu_custom_call.1} parent=1 // pred_region
      %6474 = dma.done [#allocation3], 1024
    $region97: #{tpu_custom_call.1} parent=1 // pred_fallthru
      _
    %6475 = vsyncpa [#allocation3], 1

</llo_original>
